<compile_context>
chip_gen: v6e
topology: v6e:2x2x1
jax: 0.10.0
libtpu: 0.0.40
codegen_flags: <defaults>
</compile_context>

<pallas_src>
import numpy as np
import jax
import jax.numpy as jnp
from jax import lax
from jax.experimental import pallas as pl
from jax.experimental.pallas import tpu as pltpu

_HID_PER_HEAD = 16
_HEADS = (("thetaphi", 2), ("poweratio", 1), ("power", 1), ("delay", 1), ("losn", 3))
_N_OUT = sum(n for _, n in _HEADS)          # 8 fused output channels
_N_HID = _HID_PER_HEAD * len(_HEADS)        # 80 fused hidden channels
_LOS_LO = sum(n for _, n in _HEADS[:-1])    # losn occupies fused channels [5, 8)

_TAPS = tuple((dy, dx) for dy in (-1, 0, 1) for dx in (-1, 0, 1))   # t = (dy+1)*3+(dx+1)


def _make_fused_kernel(H, W, Cin):
    HW = H * W
    PAD = W + 1                      # halo rows so every tap window stays in-bounds
    HID, OUT, LO = _N_HID, _N_OUT, _LOS_LO
    TB = (((1,), (1,)), ((), ()))    # contract last dims of both operands (A @ B.T)

    def kernel(x_ref, eye_ref, mplus_ref, mminus_ref, w1_ref, b1_ref,
               w2_ref, b2_ref, o_ref, xpad_ref, hpad_ref):
        f32 = jnp.float32

        # (Cin, HW) -> spatial-major (HW, Cin) via MXU identity matmul; keeps the
        # wrapper free of XLA transposes and all tap windows on the sublane axis.
        x_sm = lax.dot_general(eye_ref[...], x_ref[0], TB,
                               preferred_element_type=f32)            # (HW, Cin)

        # Stage into zero-padded flat buffer; only the halos are zeroed.
        xpad_ref[0:PAD, :] = jnp.zeros((PAD, Cin), f32)
        xpad_ref[PAD + HW:PAD + HW + PAD, :] = jnp.zeros((PAD, Cin), f32)
        xpad_ref[PAD:PAD + HW, :] = x_sm

        mplus = mplus_ref[...]     # (HW,1): 0 where col == W-1 (taps with dx=+1)
        mminus = mminus_ref[...]   # (HW,1): 0 where col == 0   (taps with dx=-1)

        # ---- layer 1: fused Cin -> 80 conv, 9 shifted-window matmuls ---------
        acc1 = jnp.broadcast_to(b1_ref[...], (HW, HID))               # (HW, 80)
        for t, (dy, dx) in enumerate(_TAPS):
            start = PAD + dy * W + dx
            patch = xpad_ref[start:start + HW, :]                     # (HW, Cin)
            if dx == 1:
                patch = patch * mplus
            elif dx == -1:
                patch = patch * mminus
            acc1 = acc1 + jnp.dot(patch, w1_ref[t],
                                  preferred_element_type=f32)         # (HW, 80)
        hid = jnp.maximum(acc1, 0.0)

        # ---- stage hidden activations (never touch HBM) ----------------------
        hpad_ref[0:PAD, :] = jnp.zeros((PAD, HID), f32)
        hpad_ref[PAD + HW:PAD + HW + PAD, :] = jnp.zeros((PAD, HID), f32)
        hpad_ref[PAD:PAD + HW, :] = hid

        # ---- layer 2: fused block-diagonal 80 -> 8 conv, (8, HW) accumulator -
        acc2 = jnp.broadcast_to(b2_ref[...], (OUT, HW))               # (8, HW)
        for t, (dy, dx) in enumerate(_TAPS):
            start = PAD + dy * W + dx
            patch = hpad_ref[start:start + HW, :]                     # (HW, 80)
            if dx == 1:
                patch = patch * mplus
            elif dx == -1:
                patch = patch * mminus
            acc2 = acc2 + lax.dot_general(w2_ref[t], patch, TB,
                                          preferred_element_type=f32)  # (8, HW)

        # One lane-dense (8, HW) store, then -log_softmax fix-up on losn rows.
        o_ref[0] = acc2
        rows = [o_ref[0, c:c + 1, :] for c in range(LO, OUT)]         # 3 x (1, HW)
        m = rows[0]
        for r in rows[1:]:
            m = jnp.maximum(m, r)
        s = jnp.exp(rows[0] - m)
        for r in rows[1:]:
            s = s + jnp.exp(r - m)
        lse = jnp.log(s) + m
        for c, r in zip(range(LO, OUT), rows):
            o_ref[0, c:c + 1, :] = lse - r                            # -log_softmax

    return kernel


def _spatial_constants(H, W):
    """Trace-time constants: identity for the MXU transpose + column-wrap masks."""
    HW = H * W
    eye = jnp.asarray(np.eye(HW, dtype=np.float32))
    col = np.arange(HW, dtype=np.int64) % W
    mplus = jnp.asarray((col != (W - 1)).astype(np.float32).reshape(HW, 1))
    mminus = jnp.asarray((col != 0).astype(np.float32).reshape(HW, 1))
    return eye, mplus, mminus


def _fused_forward(x2d, params, H, W):
    """Single fused Pallas call. x2d: (B, Cin, H*W) -> (B, 8, H*W)."""
    B, Cin, HW = x2d.shape
    eye, mplus, mminus = _spatial_constants(H, W)
    padlen = HW + 2 * (W + 1)

    grid_spec = pltpu.PrefetchScalarGridSpec(
        num_scalar_prefetch=0,
        grid=(B,),
        in_specs=[
            pl.BlockSpec((1, Cin, HW), lambda b: (b, 0, 0)),           # x (per batch)
            pl.BlockSpec((HW, HW), lambda b: (0, 0)),                  # identity (resident)
            pl.BlockSpec((HW, 1), lambda b: (0, 0)),                   # mask dx=+1
            pl.BlockSpec((HW, 1), lambda b: (0, 0)),                   # mask dx=-1
            pl.BlockSpec((9, Cin, _N_HID), lambda b: (0, 0, 0)),       # w1 per-tap
            pl.BlockSpec((1, _N_HID), lambda b: (0, 0)),               # b1
            pl.BlockSpec((9, _N_OUT, _N_HID), lambda b: (0, 0, 0)),    # w2 per-tap
            pl.BlockSpec((_N_OUT, 1), lambda b: (0, 0)),               # b2
        ],
        out_specs=pl.BlockSpec((1, _N_OUT, HW), lambda b: (b, 0, 0)),
        scratch_shapes=[
            pltpu.VMEM((padlen, Cin), jnp.float32),     # padded spatial-major input
            pltpu.VMEM((padlen, _N_HID), jnp.float32),  # padded spatial-major hidden
        ],
    )
    return pl.pallas_call(
        _make_fused_kernel(H, W, Cin),
        out_shape=jax.ShapeDtypeStruct((B, _N_OUT, HW), jnp.float32),
        grid_spec=grid_spec,
        compiler_params=pltpu.CompilerParams(
            dimension_semantics=("parallel",)),
    )(x2d, eye, mplus, mminus,
      params["w1"], params["b1"], params["w2"], params["b2"])


@jax.jit
def net2_forward_nchw(x_nchw, params):
    """Mirrors net2.forward; accepts/returns PyTorch NCHW layout."""
    B, Cin, H, W = x_nchw.shape
    x2d = x_nchw.reshape(B, Cin, H * W)            # metadata-only reshape (no transpose)
    y = _fused_forward(x2d, params, H, W)          # (B, 8, H*W)
    y = y.reshape(B, _N_OUT, H, W)                 # metadata-only reshape
    thetaphi = y[:, 0:2]
    poweratio = y[:, 2:3]
    power = y[:, 3:4]
    delay = y[:, 4:5]
    los = y[:, 5:8]
    return thetaphi, poweratio, power, delay, los


def init_params(key, in_channels):
    """Deterministic synthetic parameters.

    Per-branch HWIO conv params are generated, kept for the reference, and fused
    into matmul-friendly forms: w1 (9, Cin, 80), b1 (1, 80),
    block-diagonal w2 (9, 8, 80), b2 (8, 1).
    """
    Cin = in_channels

    def conv_init(k, cin, cout):
        kw, kb = jax.random.split(k)
        bound = float(1.0 / np.sqrt(cin * 9.0))
        w = jax.random.uniform(kw, (3, 3, cin, cout), jnp.float32, -bound, bound)  # HWIO
        b = jax.random.uniform(kb, (cout,), jnp.float32, -bound, bound)
        return w, b

    keys = jax.random.split(key, 2 * len(_HEADS))
    ref_heads = []
    w1_blocks, b1_list = [], []
    w2_fused = jnp.zeros((9, _N_OUT, _N_HID), jnp.float32)
    b2_fused = jnp.zeros((_N_OUT,), jnp.float32)
    off = 0
    for i, (_, nout) in enumerate(_HEADS):
        w1h, b1h = conv_init(keys[2 * i], Cin, _HID_PER_HEAD)
        w2h, b2h = conv_init(keys[2 * i + 1], _HID_PER_HEAD, nout)
        ref_heads.append((w1h, b1h, w2h, b2h))
        # layer-1 per-tap (9, Cin, 16): [t, c, o] = w1h[ky, kx, c, o]
        w1_blocks.append(w1h.reshape(9, Cin, _HID_PER_HEAD))
        b1_list.append(b1h)
        # layer-2 per-tap block-diagonal (9, 8, 80): [t, o_glob, i_glob]
        w2_t = jnp.transpose(w2h, (0, 1, 3, 2)).reshape(9, nout, _HID_PER_HEAD)
        h0 = _HID_PER_HEAD * i
        w2_fused = w2_fused.at[:, off:off + nout, h0:h0 + _HID_PER_HEAD].set(w2_t)
        b2_fused = b2_fused.at[off:off + nout].set(b2h)
        off += nout

    params = dict(
        w1=jnp.concatenate(w1_blocks, axis=2),                    # (9, Cin, 80)
        b1=jnp.concatenate(b1_list, axis=0).reshape(1, _N_HID),   # (1, 80)
        w2=w2_fused,                                               # (9, 8, 80)
        b2=b2_fused.reshape(_N_OUT, 1),                            # (8, 1)
    )
    return params, ref_heads


# ---------------------------- pure-JAX reference ----------------------------
def _conv3x3_ref(x_nchw, w_hwio, b):
    out = lax.conv_general_dilated(
        x_nchw, w_hwio, window_strides=(1, 1), padding=((1, 1), (1, 1)),
        dimension_numbers=("NCHW", "HWIO", "NCHW"),
        precision=lax.Precision.HIGHEST)
    return out + b.reshape(1, -1, 1, 1)


def net2_reference_nchw(x, ref_heads):
    outs = []
    for (w1h, b1h, w2h, b2h) in ref_heads:
        h = jax.nn.relu(_conv3x3_ref(x, w1h, b1h))
        outs.append(_conv3x3_ref(h, w2h, b2h))
    thetaphi, poweratio, power, delay, losn = outs
    los = -jax.nn.log_softmax(losn, axis=1)
    return thetaphi, poweratio, power, delay, los


if __name__ == "__main__":
    B, Cin, H, W = 2, 4, 16, 16
    key = jax.random.PRNGKey(0)
    kx_, kp_ = jax.random.split(key)
    x = jax.random.normal(kx_, (B, Cin, H, W), jnp.float32)   # NCHW input
    params, ref_heads = init_params(kp_, Cin)

    outs = net2_forward_nchw(x, params)
    outs = jax.block_until_ready(outs)

    expected = [(B, 2, H, W), (B, 1, H, W), (B, 1, H, W), (B, 1, H, W), (B, 3, H, W)]
    for o, s in zip(outs, expected):
        assert o.shape == s, (o.shape, s)

    refs = net2_reference_nchw(x, ref_heads)
    for o, r in zip(outs, refs):
        err = float(jnp.max(jnp.abs(o - r)))
        assert err < 1e-3, err

    print("KERNEL_OK")
</pallas_src>

<mosaic_0001>
module attributes {stable_mosaic.version = 11 : i64} {
  func.func @kernel(%arg0: i32, %arg1: memref<1x4x256xf32, #tpu.memory_space<vmem>>, %arg2: memref<256x256xf32, #tpu.memory_space<vmem>>, %arg3: memref<256x1xf32, #tpu.memory_space<vmem>>, %arg4: memref<256x1xf32, #tpu.memory_space<vmem>>, %arg5: memref<9x4x80xf32, #tpu.memory_space<vmem>>, %arg6: memref<1x80xf32, #tpu.memory_space<vmem>>, %arg7: memref<9x8x80xf32, #tpu.memory_space<vmem>>, %arg8: memref<8x1xf32, #tpu.memory_space<vmem>>, %arg9: memref<1x8x256xf32, #tpu.memory_space<vmem>>, %arg10: memref<290x4xf32, #tpu.memory_space<vmem>>, %arg11: memref<290x80xf32, #tpu.memory_space<vmem>>) attributes {dimension_semantics = [#tpu.dimension_semantics<parallel>], iteration_bounds = array<i64: 2>, scalar_prefetch = 0 : i64, scratch_operands = 2 : i64, tpu.core_type = #tpu.core_type<tc>, window_params = [{transform_indices = @transform_0, window_bounds = array<i64: 1, 4, 256>}, {pipeline_mode = #tpu.pipeline_mode<synchronous>, transform_indices = @transform_1, window_bounds = array<i64: 256, 256>}, {pipeline_mode = #tpu.pipeline_mode<synchronous>, transform_indices = @transform_2, window_bounds = array<i64: 256, 1>}, {pipeline_mode = #tpu.pipeline_mode<synchronous>, transform_indices = @transform_3, window_bounds = array<i64: 256, 1>}, {pipeline_mode = #tpu.pipeline_mode<synchronous>, transform_indices = @transform_4, window_bounds = array<i64: 9, 4, 80>}, {pipeline_mode = #tpu.pipeline_mode<synchronous>, transform_indices = @transform_5, window_bounds = array<i64: 1, 80>}, {pipeline_mode = #tpu.pipeline_mode<synchronous>, transform_indices = @transform_6, window_bounds = array<i64: 9, 8, 80>}, {pipeline_mode = #tpu.pipeline_mode<synchronous>, transform_indices = @transform_7, window_bounds = array<i64: 8, 1>}, {transform_indices = @transform_8, window_bounds = array<i64: 1, 8, 256>}]} {
    %c0 = arith.constant 0 : index
    %c0_0 = arith.constant 0 : index
    %0 = vector.load %arg2[%c0, %c0_0] : memref<256x256xf32, #tpu.memory_space<vmem>>, vector<256x256xf32>
    %c0_1 = arith.constant 0 : index
    %c0_2 = arith.constant 0 : index
    %c0_3 = arith.constant 0 : index
    %1 = vector.load %arg1[%c0_1, %c0_2, %c0_3] : memref<1x4x256xf32, #tpu.memory_space<vmem>>, vector<1x4x256xf32>
    %2 = vector.shape_cast %1 : vector<1x4x256xf32> to vector<4x256xf32>
    %cst = arith.constant dense<0.000000e+00> : vector<256x4xf32>
    %3 = tpu.matmul %0, %2, %cst {dimension_numbers = #tpu.dot_dimension_numbers<[1], [1], [0], [0], [0, 0, 1, 0], [], []>} : vector<256x256xf32>, vector<4x256xf32>, vector<256x4xf32> -> vector<256x4xf32>
    %cst_4 = arith.constant 0.000000e+00 : f32
    %4 = vector.broadcast %cst_4 : f32 to vector<17x4xf32>
    %c0_5 = arith.constant 0 : index
    %c0_6 = arith.constant 0 : index
    %5 = vector.load %arg10[%c0_5, %c0_6] : memref<290x4xf32, #tpu.memory_space<vmem>>, vector<17x4xf32>
    tpu.vector_store %arg10[%c0_5, %c0_6], %4 {strides = array<i32>} : memref<290x4xf32, #tpu.memory_space<vmem>>, vector<17x4xf32>,
    %cst_7 = arith.constant 0.000000e+00 : f32
    %6 = vector.broadcast %cst_7 : f32 to vector<17x4xf32>
    %c273 = arith.constant 273 : index
    %c0_8 = arith.constant 0 : index
    %7 = vector.load %arg10[%c273, %c0_8] : memref<290x4xf32, #tpu.memory_space<vmem>>, vector<17x4xf32>
    tpu.vector_store %arg10[%c273, %c0_8], %6 {strides = array<i32>} : memref<290x4xf32, #tpu.memory_space<vmem>>, vector<17x4xf32>,
    %c17 = arith.constant 17 : index
    %c0_9 = arith.constant 0 : index
    %8 = vector.load %arg10[%c17, %c0_9] : memref<290x4xf32, #tpu.memory_space<vmem>>, vector<256x4xf32>
    tpu.vector_store %arg10[%c17, %c0_9], %3 {strides = array<i32>} : memref<290x4xf32, #tpu.memory_space<vmem>>, vector<256x4xf32>,
    %c0_10 = arith.constant 0 : index
    %c0_11 = arith.constant 0 : index
    %9 = vector.load %arg3[%c0_10, %c0_11] : memref<256x1xf32, #tpu.memory_space<vmem>>, vector<256x1xf32>
    %c0_12 = arith.constant 0 : index
    %c0_13 = arith.constant 0 : index
    %10 = vector.load %arg4[%c0_12, %c0_13] : memref<256x1xf32, #tpu.memory_space<vmem>>, vector<256x1xf32>
    %c0_14 = arith.constant 0 : index
    %c0_15 = arith.constant 0 : index
    %11 = vector.load %arg6[%c0_14, %c0_15] : memref<1x80xf32, #tpu.memory_space<vmem>>, vector<1x80xf32>
    %12 = vector.shape_cast %11 : vector<1x80xf32> to vector<1x80xf32>
    %13 = vector.broadcast %12 : vector<1x80xf32> to vector<256x80xf32>
    %c0_16 = arith.constant 0 : index
    %c0_17 = arith.constant 0 : index
    %14 = vector.load %arg10[%c0_16, %c0_17] : memref<290x4xf32, #tpu.memory_space<vmem>>, vector<256x4xf32>
    %15 = vector.broadcast %10 : vector<256x1xf32> to vector<256x4xf32>
    %16 = arith.mulf %14, %15 : vector<256x4xf32>
    %c0_18 = arith.constant 0 : index
    %c0_19 = arith.constant 0 : index
    %c0_20 = arith.constant 0 : index
    %17 = vector.load %arg5[%c0_18, %c0_19, %c0_20] : memref<9x4x80xf32, #tpu.memory_space<vmem>>, vector<1x4x80xf32>
    %18 = vector.shape_cast %17 : vector<1x4x80xf32> to vector<4x80xf32>
    %cst_21 = arith.constant dense<0.000000e+00> : vector<256x80xf32>
    %19 = tpu.matmul %16, %18, %cst_21 {dimension_numbers = #tpu.dot_dimension_numbers<[1], [0], [0], [1], [0, 0, 1, 1], [], []>} : vector<256x4xf32>, vector<4x80xf32>, vector<256x80xf32> -> vector<256x80xf32>
    %20 = arith.addf %13, %19 : vector<256x80xf32>
    %c1 = arith.constant 1 : index
    %c0_22 = arith.constant 0 : index
    %21 = vector.load %arg10[%c1, %c0_22] : memref<290x4xf32, #tpu.memory_space<vmem>>, vector<256x4xf32>
    %c1_23 = arith.constant 1 : index
    %c0_24 = arith.constant 0 : index
    %c0_25 = arith.constant 0 : index
    %22 = vector.load %arg5[%c1_23, %c0_24, %c0_25] : memref<9x4x80xf32, #tpu.memory_space<vmem>>, vector<1x4x80xf32>
    %23 = vector.shape_cast %22 : vector<1x4x80xf32> to vector<4x80xf32>
    %cst_26 = arith.constant dense<0.000000e+00> : vector<256x80xf32>
    %24 = tpu.matmul %21, %23, %cst_26 {dimension_numbers = #tpu.dot_dimension_numbers<[1], [0], [0], [1], [0, 0, 1, 1], [], []>} : vector<256x4xf32>, vector<4x80xf32>, vector<256x80xf32> -> vector<256x80xf32>
    %25 = arith.addf %20, %24 : vector<256x80xf32>
    %c2 = arith.constant 2 : index
    %c0_27 = arith.constant 0 : index
    %26 = vector.load %arg10[%c2, %c0_27] : memref<290x4xf32, #tpu.memory_space<vmem>>, vector<256x4xf32>
    %27 = vector.broadcast %9 : vector<256x1xf32> to vector<256x4xf32>
    %28 = arith.mulf %26, %27 : vector<256x4xf32>
    %c2_28 = arith.constant 2 : index
    %c0_29 = arith.constant 0 : index
    %c0_30 = arith.constant 0 : index
    %29 = vector.load %arg5[%c2_28, %c0_29, %c0_30] : memref<9x4x80xf32, #tpu.memory_space<vmem>>, vector<1x4x80xf32>
    %30 = vector.shape_cast %29 : vector<1x4x80xf32> to vector<4x80xf32>
    %cst_31 = arith.constant dense<0.000000e+00> : vector<256x80xf32>
    %31 = tpu.matmul %28, %30, %cst_31 {dimension_numbers = #tpu.dot_dimension_numbers<[1], [0], [0], [1], [0, 0, 1, 1], [], []>} : vector<256x4xf32>, vector<4x80xf32>, vector<256x80xf32> -> vector<256x80xf32>
    %32 = arith.addf %25, %31 : vector<256x80xf32>
    %c16 = arith.constant 16 : index
    %c0_32 = arith.constant 0 : index
    %33 = vector.load %arg10[%c16, %c0_32] : memref<290x4xf32, #tpu.memory_space<vmem>>, vector<256x4xf32>
    %34 = vector.broadcast %10 : vector<256x1xf32> to vector<256x4xf32>
    %35 = arith.mulf %33, %34 : vector<256x4xf32>
    %c3 = arith.constant 3 : index
    %c0_33 = arith.constant 0 : index
    %c0_34 = arith.constant 0 : index
    %36 = vector.load %arg5[%c3, %c0_33, %c0_34] : memref<9x4x80xf32, #tpu.memory_space<vmem>>, vector<1x4x80xf32>
    %37 = vector.shape_cast %36 : vector<1x4x80xf32> to vector<4x80xf32>
    %cst_35 = arith.constant dense<0.000000e+00> : vector<256x80xf32>
    %38 = tpu.matmul %35, %37, %cst_35 {dimension_numbers = #tpu.dot_dimension_numbers<[1], [0], [0], [1], [0, 0, 1, 1], [], []>} : vector<256x4xf32>, vector<4x80xf32>, vector<256x80xf32> -> vector<256x80xf32>
    %39 = arith.addf %32, %38 : vector<256x80xf32>
    %c17_36 = arith.constant 17 : index
    %c0_37 = arith.constant 0 : index
    %40 = vector.load %arg10[%c17_36, %c0_37] : memref<290x4xf32, #tpu.memory_space<vmem>>, vector<256x4xf32>
    %c4 = arith.constant 4 : index
    %c0_38 = arith.constant 0 : index
    %c0_39 = arith.constant 0 : index
    %41 = vector.load %arg5[%c4, %c0_38, %c0_39] : memref<9x4x80xf32, #tpu.memory_space<vmem>>, vector<1x4x80xf32>
    %42 = vector.shape_cast %41 : vector<1x4x80xf32> to vector<4x80xf32>
    %cst_40 = arith.constant dense<0.000000e+00> : vector<256x80xf32>
    %43 = tpu.matmul %40, %42, %cst_40 {dimension_numbers = #tpu.dot_dimension_numbers<[1], [0], [0], [1], [0, 0, 1, 1], [], []>} : vector<256x4xf32>, vector<4x80xf32>, vector<256x80xf32> -> vector<256x80xf32>
    %44 = arith.addf %39, %43 : vector<256x80xf32>
    %c18 = arith.constant 18 : index
    %c0_41 = arith.constant 0 : index
    %45 = vector.load %arg10[%c18, %c0_41] : memref<290x4xf32, #tpu.memory_space<vmem>>, vector<256x4xf32>
    %46 = vector.broadcast %9 : vector<256x1xf32> to vector<256x4xf32>
    %47 = arith.mulf %45, %46 : vector<256x4xf32>
    %c5 = arith.constant 5 : index
    %c0_42 = arith.constant 0 : index
    %c0_43 = arith.constant 0 : index
    %48 = vector.load %arg5[%c5, %c0_42, %c0_43] : memref<9x4x80xf32, #tpu.memory_space<vmem>>, vector<1x4x80xf32>
    %49 = vector.shape_cast %48 : vector<1x4x80xf32> to vector<4x80xf32>
    %cst_44 = arith.constant dense<0.000000e+00> : vector<256x80xf32>
    %50 = tpu.matmul %47, %49, %cst_44 {dimension_numbers = #tpu.dot_dimension_numbers<[1], [0], [0], [1], [0, 0, 1, 1], [], []>} : vector<256x4xf32>, vector<4x80xf32>, vector<256x80xf32> -> vector<256x80xf32>
    %51 = arith.addf %44, %50 : vector<256x80xf32>
    %c32 = arith.constant 32 : index
    %c0_45 = arith.constant 0 : index
    %52 = vector.load %arg10[%c32, %c0_45] : memref<290x4xf32, #tpu.memory_space<vmem>>, vector<256x4xf32>
    %53 = vector.broadcast %10 : vector<256x1xf32> to vector<256x4xf32>
    %54 = arith.mulf %52, %53 : vector<256x4xf32>
    %c6 = arith.constant 6 : index
    %c0_46 = arith.constant 0 : index
    %c0_47 = arith.constant 0 : index
    %55 = vector.load %arg5[%c6, %c0_46, %c0_47] : memref<9x4x80xf32, #tpu.memory_space<vmem>>, vector<1x4x80xf32>
    %56 = vector.shape_cast %55 : vector<1x4x80xf32> to vector<4x80xf32>
    %cst_48 = arith.constant dense<0.000000e+00> : vector<256x80xf32>
    %57 = tpu.matmul %54, %56, %cst_48 {dimension_numbers = #tpu.dot_dimension_numbers<[1], [0], [0], [1], [0, 0, 1, 1], [], []>} : vector<256x4xf32>, vector<4x80xf32>, vector<256x80xf32> -> vector<256x80xf32>
    %58 = arith.addf %51, %57 : vector<256x80xf32>
    %c33 = arith.constant 33 : index
    %c0_49 = arith.constant 0 : index
    %59 = vector.load %arg10[%c33, %c0_49] : memref<290x4xf32, #tpu.memory_space<vmem>>, vector<256x4xf32>
    %c7 = arith.constant 7 : index
    %c0_50 = arith.constant 0 : index
    %c0_51 = arith.constant 0 : index
    %60 = vector.load %arg5[%c7, %c0_50, %c0_51] : memref<9x4x80xf32, #tpu.memory_space<vmem>>, vector<1x4x80xf32>
    %61 = vector.shape_cast %60 : vector<1x4x80xf32> to vector<4x80xf32>
    %cst_52 = arith.constant dense<0.000000e+00> : vector<256x80xf32>
    %62 = tpu.matmul %59, %61, %cst_52 {dimension_numbers = #tpu.dot_dimension_numbers<[1], [0], [0], [1], [0, 0, 1, 1], [], []>} : vector<256x4xf32>, vector<4x80xf32>, vector<256x80xf32> -> vector<256x80xf32>
    %63 = arith.addf %58, %62 : vector<256x80xf32>
    %c34 = arith.constant 34 : index
    %c0_53 = arith.constant 0 : index
    %64 = vector.load %arg10[%c34, %c0_53] : memref<290x4xf32, #tpu.memory_space<vmem>>, vector<256x4xf32>
    %65 = vector.broadcast %9 : vector<256x1xf32> to vector<256x4xf32>
    %66 = arith.mulf %64, %65 : vector<256x4xf32>
    %c8 = arith.constant 8 : index
    %c0_54 = arith.constant 0 : index
    %c0_55 = arith.constant 0 : index
    %67 = vector.load %arg5[%c8, %c0_54, %c0_55] : memref<9x4x80xf32, #tpu.memory_space<vmem>>, vector<1x4x80xf32>
    %68 = vector.shape_cast %67 : vector<1x4x80xf32> to vector<4x80xf32>
    %cst_56 = arith.constant dense<0.000000e+00> : vector<256x80xf32>
    %69 = tpu.matmul %66, %68, %cst_56 {dimension_numbers = #tpu.dot_dimension_numbers<[1], [0], [0], [1], [0, 0, 1, 1], [], []>} : vector<256x4xf32>, vector<4x80xf32>, vector<256x80xf32> -> vector<256x80xf32>
    %70 = arith.addf %63, %69 : vector<256x80xf32>
    %cst_57 = arith.constant 0.000000e+00 : f32
    %71 = vector.broadcast %cst_57 : f32 to vector<256x80xf32>
    %72 = arith.maximumf %70, %71 : vector<256x80xf32>
    %cst_58 = arith.constant 0.000000e+00 : f32
    %73 = vector.broadcast %cst_58 : f32 to vector<17x80xf32>
    %c0_59 = arith.constant 0 : index
    %c0_60 = arith.constant 0 : index
    %74 = vector.load %arg11[%c0_59, %c0_60] : memref<290x80xf32, #tpu.memory_space<vmem>>, vector<17x80xf32>
    tpu.vector_store %arg11[%c0_59, %c0_60], %73 {strides = array<i32>} : memref<290x80xf32, #tpu.memory_space<vmem>>, vector<17x80xf32>,
    %cst_61 = arith.constant 0.000000e+00 : f32
    %75 = vector.broadcast %cst_61 : f32 to vector<17x80xf32>
    %c273_62 = arith.constant 273 : index
    %c0_63 = arith.constant 0 : index
    %76 = vector.load %arg11[%c273_62, %c0_63] : memref<290x80xf32, #tpu.memory_space<vmem>>, vector<17x80xf32>
    tpu.vector_store %arg11[%c273_62, %c0_63], %75 {strides = array<i32>} : memref<290x80xf32, #tpu.memory_space<vmem>>, vector<17x80xf32>,
    %c17_64 = arith.constant 17 : index
    %c0_65 = arith.constant 0 : index
    %77 = vector.load %arg11[%c17_64, %c0_65] : memref<290x80xf32, #tpu.memory_space<vmem>>, vector<256x80xf32>
    tpu.vector_store %arg11[%c17_64, %c0_65], %72 {strides = array<i32>} : memref<290x80xf32, #tpu.memory_space<vmem>>, vector<256x80xf32>,
    %c0_66 = arith.constant 0 : index
    %c0_67 = arith.constant 0 : index
    %78 = vector.load %arg8[%c0_66, %c0_67] : memref<8x1xf32, #tpu.memory_space<vmem>>, vector<8x1xf32>
    %79 = vector.shape_cast %78 : vector<8x1xf32> to vector<8x1xf32>
    %80 = vector.broadcast %79 : vector<8x1xf32> to vector<8x256xf32>
    %c0_68 = arith.constant 0 : index
    %c0_69 = arith.constant 0 : index
    %81 = vector.load %arg11[%c0_68, %c0_69] : memref<290x80xf32, #tpu.memory_space<vmem>>, vector<256x80xf32>
    %82 = vector.broadcast %10 : vector<256x1xf32> to vector<256x80xf32>
    %83 = arith.mulf %81, %82 : vector<256x80xf32>
    %c0_70 = arith.constant 0 : index
    %c0_71 = arith.constant 0 : index
    %c0_72 = arith.constant 0 : index
    %84 = vector.load %arg7[%c0_70, %c0_71, %c0_72] : memref<9x8x80xf32, #tpu.memory_space<vmem>>, vector<1x8x80xf32>
    %85 = vector.shape_cast %84 : vector<1x8x80xf32> to vector<8x80xf32>
    %cst_73 = arith.constant dense<0.000000e+00> : vector<8x256xf32>
    %86 = tpu.matmul %85, %83, %cst_73 {dimension_numbers = #tpu.dot_dimension_numbers<[1], [1], [0], [0], [0, 0, 1, 0], [], []>} : vector<8x80xf32>, vector<256x80xf32>, vector<8x256xf32> -> vector<8x256xf32>
    %87 = arith.addf %80, %86 : vector<8x256xf32>
    %c1_74 = arith.constant 1 : index
    %c0_75 = arith.constant 0 : index
    %88 = vector.load %arg11[%c1_74, %c0_75] : memref<290x80xf32, #tpu.memory_space<vmem>>, vector<256x80xf32>
    %c1_76 = arith.constant 1 : index
    %c0_77 = arith.constant 0 : index
    %c0_78 = arith.constant 0 : index
    %89 = vector.load %arg7[%c1_76, %c0_77, %c0_78] : memref<9x8x80xf32, #tpu.memory_space<vmem>>, vector<1x8x80xf32>
    %90 = vector.shape_cast %89 : vector<1x8x80xf32> to vector<8x80xf32>
    %cst_79 = arith.constant dense<0.000000e+00> : vector<8x256xf32>
    %91 = tpu.matmul %90, %88, %cst_79 {dimension_numbers = #tpu.dot_dimension_numbers<[1], [1], [0], [0], [0, 0, 1, 0], [], []>} : vector<8x80xf32>, vector<256x80xf32>, vector<8x256xf32> -> vector<8x256xf32>
    %92 = arith.addf %87, %91 : vector<8x256xf32>
    %c2_80 = arith.constant 2 : index
    %c0_81 = arith.constant 0 : index
    %93 = vector.load %arg11[%c2_80, %c0_81] : memref<290x80xf32, #tpu.memory_space<vmem>>, vector<256x80xf32>
    %94 = vector.broadcast %9 : vector<256x1xf32> to vector<256x80xf32>
    %95 = arith.mulf %93, %94 : vector<256x80xf32>
    %c2_82 = arith.constant 2 : index
    %c0_83 = arith.constant 0 : index
    %c0_84 = arith.constant 0 : index
    %96 = vector.load %arg7[%c2_82, %c0_83, %c0_84] : memref<9x8x80xf32, #tpu.memory_space<vmem>>, vector<1x8x80xf32>
    %97 = vector.shape_cast %96 : vector<1x8x80xf32> to vector<8x80xf32>
    %cst_85 = arith.constant dense<0.000000e+00> : vector<8x256xf32>
    %98 = tpu.matmul %97, %95, %cst_85 {dimension_numbers = #tpu.dot_dimension_numbers<[1], [1], [0], [0], [0, 0, 1, 0], [], []>} : vector<8x80xf32>, vector<256x80xf32>, vector<8x256xf32> -> vector<8x256xf32>
    %99 = arith.addf %92, %98 : vector<8x256xf32>
    %c16_86 = arith.constant 16 : index
    %c0_87 = arith.constant 0 : index
    %100 = vector.load %arg11[%c16_86, %c0_87] : memref<290x80xf32, #tpu.memory_space<vmem>>, vector<256x80xf32>
    %101 = vector.broadcast %10 : vector<256x1xf32> to vector<256x80xf32>
    %102 = arith.mulf %100, %101 : vector<256x80xf32>
    %c3_88 = arith.constant 3 : index
    %c0_89 = arith.constant 0 : index
    %c0_90 = arith.constant 0 : index
    %103 = vector.load %arg7[%c3_88, %c0_89, %c0_90] : memref<9x8x80xf32, #tpu.memory_space<vmem>>, vector<1x8x80xf32>
    %104 = vector.shape_cast %103 : vector<1x8x80xf32> to vector<8x80xf32>
    %cst_91 = arith.constant dense<0.000000e+00> : vector<8x256xf32>
    %105 = tpu.matmul %104, %102, %cst_91 {dimension_numbers = #tpu.dot_dimension_numbers<[1], [1], [0], [0], [0, 0, 1, 0], [], []>} : vector<8x80xf32>, vector<256x80xf32>, vector<8x256xf32> -> vector<8x256xf32>
    %106 = arith.addf %99, %105 : vector<8x256xf32>
    %c17_92 = arith.constant 17 : index
    %c0_93 = arith.constant 0 : index
    %107 = vector.load %arg11[%c17_92, %c0_93] : memref<290x80xf32, #tpu.memory_space<vmem>>, vector<256x80xf32>
    %c4_94 = arith.constant 4 : index
    %c0_95 = arith.constant 0 : index
    %c0_96 = arith.constant 0 : index
    %108 = vector.load %arg7[%c4_94, %c0_95, %c0_96] : memref<9x8x80xf32, #tpu.memory_space<vmem>>, vector<1x8x80xf32>
    %109 = vector.shape_cast %108 : vector<1x8x80xf32> to vector<8x80xf32>
    %cst_97 = arith.constant dense<0.000000e+00> : vector<8x256xf32>
    %110 = tpu.matmul %109, %107, %cst_97 {dimension_numbers = #tpu.dot_dimension_numbers<[1], [1], [0], [0], [0, 0, 1, 0], [], []>} : vector<8x80xf32>, vector<256x80xf32>, vector<8x256xf32> -> vector<8x256xf32>
    %111 = arith.addf %106, %110 : vector<8x256xf32>
    %c18_98 = arith.constant 18 : index
    %c0_99 = arith.constant 0 : index
    %112 = vector.load %arg11[%c18_98, %c0_99] : memref<290x80xf32, #tpu.memory_space<vmem>>, vector<256x80xf32>
    %113 = vector.broadcast %9 : vector<256x1xf32> to vector<256x80xf32>
    %114 = arith.mulf %112, %113 : vector<256x80xf32>
    %c5_100 = arith.constant 5 : index
    %c0_101 = arith.constant 0 : index
    %c0_102 = arith.constant 0 : index
    %115 = vector.load %arg7[%c5_100, %c0_101, %c0_102] : memref<9x8x80xf32, #tpu.memory_space<vmem>>, vector<1x8x80xf32>
    %116 = vector.shape_cast %115 : vector<1x8x80xf32> to vector<8x80xf32>
    %cst_103 = arith.constant dense<0.000000e+00> : vector<8x256xf32>
    %117 = tpu.matmul %116, %114, %cst_103 {dimension_numbers = #tpu.dot_dimension_numbers<[1], [1], [0], [0], [0, 0, 1, 0], [], []>} : vector<8x80xf32>, vector<256x80xf32>, vector<8x256xf32> -> vector<8x256xf32>
    %118 = arith.addf %111, %117 : vector<8x256xf32>
    %c32_104 = arith.constant 32 : index
    %c0_105 = arith.constant 0 : index
    %119 = vector.load %arg11[%c32_104, %c0_105] : memref<290x80xf32, #tpu.memory_space<vmem>>, vector<256x80xf32>
    %120 = vector.broadcast %10 : vector<256x1xf32> to vector<256x80xf32>
    %121 = arith.mulf %119, %120 : vector<256x80xf32>
    %c6_106 = arith.constant 6 : index
    %c0_107 = arith.constant 0 : index
    %c0_108 = arith.constant 0 : index
    %122 = vector.load %arg7[%c6_106, %c0_107, %c0_108] : memref<9x8x80xf32, #tpu.memory_space<vmem>>, vector<1x8x80xf32>
    %123 = vector.shape_cast %122 : vector<1x8x80xf32> to vector<8x80xf32>
    %cst_109 = arith.constant dense<0.000000e+00> : vector<8x256xf32>
    %124 = tpu.matmul %123, %121, %cst_109 {dimension_numbers = #tpu.dot_dimension_numbers<[1], [1], [0], [0], [0, 0, 1, 0], [], []>} : vector<8x80xf32>, vector<256x80xf32>, vector<8x256xf32> -> vector<8x256xf32>
    %125 = arith.addf %118, %124 : vector<8x256xf32>
    %c33_110 = arith.constant 33 : index
    %c0_111 = arith.constant 0 : index
    %126 = vector.load %arg11[%c33_110, %c0_111] : memref<290x80xf32, #tpu.memory_space<vmem>>, vector<256x80xf32>
    %c7_112 = arith.constant 7 : index
    %c0_113 = arith.constant 0 : index
    %c0_114 = arith.constant 0 : index
    %127 = vector.load %arg7[%c7_112, %c0_113, %c0_114] : memref<9x8x80xf32, #tpu.memory_space<vmem>>, vector<1x8x80xf32>
    %128 = vector.shape_cast %127 : vector<1x8x80xf32> to vector<8x80xf32>
    %cst_115 = arith.constant dense<0.000000e+00> : vector<8x256xf32>
    %129 = tpu.matmul %128, %126, %cst_115 {dimension_numbers = #tpu.dot_dimension_numbers<[1], [1], [0], [0], [0, 0, 1, 0], [], []>} : vector<8x80xf32>, vector<256x80xf32>, vector<8x256xf32> -> vector<8x256xf32>
    %130 = arith.addf %125, %129 : vector<8x256xf32>
    %c34_116 = arith.constant 34 : index
    %c0_117 = arith.constant 0 : index
    %131 = vector.load %arg11[%c34_116, %c0_117] : memref<290x80xf32, #tpu.memory_space<vmem>>, vector<256x80xf32>
    %132 = vector.broadcast %9 : vector<256x1xf32> to vector<256x80xf32>
    %133 = arith.mulf %131, %132 : vector<256x80xf32>
    %c8_118 = arith.constant 8 : index
    %c0_119 = arith.constant 0 : index
    %c0_120 = arith.constant 0 : index
    %134 = vector.load %arg7[%c8_118, %c0_119, %c0_120] : memref<9x8x80xf32, #tpu.memory_space<vmem>>, vector<1x8x80xf32>
    %135 = vector.shape_cast %134 : vector<1x8x80xf32> to vector<8x80xf32>
    %cst_121 = arith.constant dense<0.000000e+00> : vector<8x256xf32>
    %136 = tpu.matmul %135, %133, %cst_121 {dimension_numbers = #tpu.dot_dimension_numbers<[1], [1], [0], [0], [0, 0, 1, 0], [], []>} : vector<8x80xf32>, vector<256x80xf32>, vector<8x256xf32> -> vector<8x256xf32>
    %137 = arith.addf %130, %136 : vector<8x256xf32>
    %c0_122 = arith.constant 0 : index
    %c0_123 = arith.constant 0 : index
    %c0_124 = arith.constant 0 : index
    %138 = vector.load %arg9[%c0_122, %c0_123, %c0_124] : memref<1x8x256xf32, #tpu.memory_space<vmem>>, vector<1x8x256xf32>
    %139 = vector.shape_cast %138 : vector<1x8x256xf32> to vector<8x256xf32>
    %140 = vector.shape_cast %137 : vector<8x256xf32> to vector<1x8x256xf32>
    tpu.vector_store %arg9[%c0_122, %c0_123, %c0_124], %140 {strides = array<i32>} : memref<1x8x256xf32, #tpu.memory_space<vmem>>, vector<1x8x256xf32>,
    %c0_125 = arith.constant 0 : index
    %c5_126 = arith.constant 5 : index
    %c0_127 = arith.constant 0 : index
    %141 = vector.load %arg9[%c0_125, %c5_126, %c0_127] : memref<1x8x256xf32, #tpu.memory_space<vmem>>, vector<1x1x256xf32>
    %142 = vector.shape_cast %141 : vector<1x1x256xf32> to vector<1x256xf32>
    %c0_128 = arith.constant 0 : index
    %c6_129 = arith.constant 6 : index
    %c0_130 = arith.constant 0 : index
    %143 = vector.load %arg9[%c0_128, %c6_129, %c0_130] : memref<1x8x256xf32, #tpu.memory_space<vmem>>, vector<1x1x256xf32>
    %144 = vector.shape_cast %143 : vector<1x1x256xf32> to vector<1x256xf32>
    %c0_131 = arith.constant 0 : index
    %c7_132 = arith.constant 7 : index
    %c0_133 = arith.constant 0 : index
    %145 = vector.load %arg9[%c0_131, %c7_132, %c0_133] : memref<1x8x256xf32, #tpu.memory_space<vmem>>, vector<1x1x256xf32>
    %146 = vector.shape_cast %145 : vector<1x1x256xf32> to vector<1x256xf32>
    %147 = arith.maximumf %142, %144 : vector<1x256xf32>
    %148 = arith.maximumf %147, %146 : vector<1x256xf32>
    %149 = arith.subf %142, %148 : vector<1x256xf32>
    %150 = math.exp %149 : vector<1x256xf32>
    %151 = arith.subf %144, %148 : vector<1x256xf32>
    %152 = math.exp %151 : vector<1x256xf32>
    %153 = arith.addf %150, %152 : vector<1x256xf32>
    %154 = arith.subf %146, %148 : vector<1x256xf32>
    %155 = math.exp %154 : vector<1x256xf32>
    %156 = arith.addf %153, %155 : vector<1x256xf32>
    %157 = math.log %156 : vector<1x256xf32>
    %158 = arith.addf %157, %148 : vector<1x256xf32>
    %159 = arith.subf %158, %142 : vector<1x256xf32>
    %c0_134 = arith.constant 0 : index
    %c5_135 = arith.constant 5 : index
    %c0_136 = arith.constant 0 : index
    %160 = vector.load %arg9[%c0_134, %c5_135, %c0_136] : memref<1x8x256xf32, #tpu.memory_space<vmem>>, vector<1x1x256xf32>
    %161 = vector.shape_cast %160 : vector<1x1x256xf32> to vector<1x256xf32>
    %162 = vector.shape_cast %159 : vector<1x256xf32> to vector<1x1x256xf32>
    tpu.vector_store %arg9[%c0_134, %c5_135, %c0_136], %162 {strides = array<i32>} : memref<1x8x256xf32, #tpu.memory_space<vmem>>, vector<1x1x256xf32>,
    %163 = arith.subf %158, %144 : vector<1x256xf32>
    %c0_137 = arith.constant 0 : index
    %c6_138 = arith.constant 6 : index
    %c0_139 = arith.constant 0 : index
    %164 = vector.load %arg9[%c0_137, %c6_138, %c0_139] : memref<1x8x256xf32, #tpu.memory_space<vmem>>, vector<1x1x256xf32>
    %165 = vector.shape_cast %164 : vector<1x1x256xf32> to vector<1x256xf32>
    %166 = vector.shape_cast %163 : vector<1x256xf32> to vector<1x1x256xf32>
    tpu.vector_store %arg9[%c0_137, %c6_138, %c0_139], %166 {strides = array<i32>} : memref<1x8x256xf32, #tpu.memory_space<vmem>>, vector<1x1x256xf32>,
    %167 = arith.subf %158, %146 : vector<1x256xf32>
    %c0_140 = arith.constant 0 : index
    %c7_141 = arith.constant 7 : index
    %c0_142 = arith.constant 0 : index
    %168 = vector.load %arg9[%c0_140, %c7_141, %c0_142] : memref<1x8x256xf32, #tpu.memory_space<vmem>>, vector<1x1x256xf32>
    %169 = vector.shape_cast %168 : vector<1x1x256xf32> to vector<1x256xf32>
    %170 = vector.shape_cast %167 : vector<1x256xf32> to vector<1x1x256xf32>
    tpu.vector_store %arg9[%c0_140, %c7_141, %c0_142], %170 {strides = array<i32>} : memref<1x8x256xf32, #tpu.memory_space<vmem>>, vector<1x1x256xf32>,
    return
  }
  func.func @transform_0(%arg0: i32) -> (i32, i32, i32) {
    %c0_i32 = arith.constant 0 : i32
    %c0_i32_0 = arith.constant 0 : i32
    %c0_i32_1 = arith.constant 0 : i32
    return %arg0, %c0_i32, %c0_i32_0 : i32, i32, i32
  }
  func.func @transform_1(%arg0: i32) -> (i32, i32) {
    %c0_i32 = arith.constant 0 : i32
    %c0_i32_0 = arith.constant 0 : i32
    %c0_i32_1 = arith.constant 0 : i32
    return %c0_i32, %c0_i32_0 : i32, i32
  }
  func.func @transform_2(%arg0: i32) -> (i32, i32) {
    %c0_i32 = arith.constant 0 : i32
    %c0_i32_0 = arith.constant 0 : i32
    %c0_i32_1 = arith.constant 0 : i32
    return %c0_i32, %c0_i32_0 : i32, i32
  }
  func.func @transform_3(%arg0: i32) -> (i32, i32) {
    %c0_i32 = arith.constant 0 : i32
    %c0_i32_0 = arith.constant 0 : i32
    %c0_i32_1 = arith.constant 0 : i32
    return %c0_i32, %c0_i32_0 : i32, i32
  }
  func.func @transform_4(%arg0: i32) -> (i32, i32, i32) {
    %c0_i32 = arith.constant 0 : i32
    %c0_i32_0 = arith.constant 0 : i32
    %c0_i32_1 = arith.constant 0 : i32
    %c0_i32_2 = arith.constant 0 : i32
    return %c0_i32, %c0_i32_0, %c0_i32_1 : i32, i32, i32
  }
  func.func @transform_5(%arg0: i32) -> (i32, i32) {
    %c0_i32 = arith.constant 0 : i32
    %c0_i32_0 = arith.constant 0 : i32
    %c0_i32_1 = arith.constant 0 : i32
    return %c0_i32, %c0_i32_0 : i32, i32
  }
  func.func @transform_6(%arg0: i32) -> (i32, i32, i32) {
    %c0_i32 = arith.constant 0 : i32
    %c0_i32_0 = arith.constant 0 : i32
    %c0_i32_1 = arith.constant 0 : i32
    %c0_i32_2 = arith.constant 0 : i32
    return %c0_i32, %c0_i32_0, %c0_i32_1 : i32, i32, i32
  }
  func.func @transform_7(%arg0: i32) -> (i32, i32) {
    %c0_i32 = arith.constant 0 : i32
    %c0_i32_0 = arith.constant 0 : i32
    %c0_i32_1 = arith.constant 0 : i32
    return %c0_i32, %c0_i32_0 : i32, i32
  }
  func.func @transform_8(%arg0: i32) -> (i32, i32, i32) {
    %c0_i32 = arith.constant 0 : i32
    %c0_i32_0 = arith.constant 0 : i32
    %c0_i32_1 = arith.constant 0 : i32
    return %arg0, %c0_i32, %c0_i32_0 : i32, i32, i32
  }
}

</mosaic_0001>

<llo_original>
// kernel: net2_forward_nchw.1
$region0: #{net2_forward_nchw.1}
  #allocation0 [shape = 'u32[]', space=smem, size = 0x4, offset = 0x4, fixed_abs, tag = 'smem constant byte address 0x4 - core index']
  #allocation1 [shape = 'u32[144,128]{1,0:T(1,128)}', space=vmem, size = 0x12000, scoped, tag = 'internal scratch']
  #allocation2 [shape = 'f32[290,4]{1,0:T(8,128)}', space=vmem, size = 0x25000, scoped, tag = 'scratch operand']
  #allocation3 [shape = 'f32[290,80]{1,0:T(8,128)}', space=vmem, size = 0x25000, scoped, tag = 'scratch operand']
  %s0 = inlined_call_operand.vmem [shape: f32[2,4,256], index: 0, kind: input, shape index: {}]
  %s1 = inlined_call_operand.hbm [shape: f32[256,256], index: 1, kind: input, shape index: {}]
  %s2 = inlined_call_operand.hbm [shape: f32[256,1], index: 2, kind: input, shape index: {}]
  %s3 = inlined_call_operand.hbm [shape: f32[256,1], index: 3, kind: input, shape index: {}]
  %s4 = inlined_call_operand.vmem [shape: f32[9,4,80], index: 4, kind: input, shape index: {}]
  %s5 = inlined_call_operand.vmem [shape: f32[1,80], index: 5, kind: input, shape index: {}]
  %s6 = inlined_call_operand.vmem [shape: f32[9,8,80], index: 6, kind: input, shape index: {}]
  %s7 = inlined_call_operand.vmem [shape: f32[8,1], index: 7, kind: input, shape index: {}]
  %s8 = inlined_call_operand.vmem [shape: f32[2,8,256], index: 8, kind: output, shape index: {}]
  %s9 = sld [smem:[#allocation0]]
  $region77: #{net2_forward_nchw.1} parent=0
    _
  %s11 = ssub.s32 1, %s9
  %s12 = scalar_select 0, %s11, %s9
  $region1: #{net2_forward_nchw.1} parent=0
    #allocation4 [shape = 'u8[262144]{0}', space=vmem, size = 0x40000, scoped, tag = 'input window, operand 1, single buffered']
    #allocation5 [shape = 's32[2]{0}', space=sflag, size = 0x8, scoped, tag = 'scoped memory for net2_forward_nchw.1']
    #allocation6 [shape = 'u8[131072]{0}', space=vmem, size = 0x20000, scoped, tag = 'input window, operand 2, single buffered']
    #allocation7 [shape = 's32[1]{0}', space=sflag, size = 0x4, scoped, tag = 'scoped memory for net2_forward_nchw.1']
    #allocation8 [shape = 'u8[131072]{0}', space=vmem, size = 0x20000, scoped, tag = 'input window, operand 3, single buffered']
    %13 = vsyncpa [#allocation5], 0
    %14 = vsyncpa [#allocation7], 0
    loop: start=0, step=1, limit=4
    $region2: #{net2_forward_nchw.1} parent=1 // loop_pre_header
      _
    $region3: #{net2_forward_nchw.1} parent=1 // loop_header
      %s16 = sphi 0, %s20
      %p17 = scmp.ge.s32.totalorder %s16, 4
      %s26 = sphi 0, %s28
      %s29 = sphi 0, %s26
      %s30 = sphi 0, %s29
      %s46 = sphi 0, %s30
      %s50 = sphi 0, %s50
      %s52 = sphi 0, %s50
      %s53 = sphi 0, %s52
      %s67 = sphi 0, %s53
      %s71 = sphi 0, %s71
      %s73 = sphi 0, %s71
      %s74 = sphi 0, %s73
      %s88 = sphi 0, %s74
      %s92 = sphi 0, %s92
      %s94 = sphi 0, %s92
      %s95 = sphi 0, %s94
      %s109 = sphi 0, %s95
      %s113 = sphi 0, %s113
      %s115 = sphi 0, %s113
      %s116 = sphi 0, %s115
      %s130 = sphi 0, %s116
      %s134 = sphi 0, %s134
      %s136 = sphi 0, %s134
      %s137 = sphi 0, %s136
      %s151 = sphi 0, %s137
      %s155 = sphi 0, %s155
      %s157 = sphi 0, %s155
      %s158 = sphi 0, %s157
      %s172 = sphi 0, %s158
      %s176 = sphi 0, %s176
      %s178 = sphi 0, %s176
      %s179 = sphi 0, %s178
      %s193 = sphi 0, %s179
      %s199 = sphi 0, %s201
      %s202 = sphi 0, %s199
      %s203 = sphi 0, %s202
      %s219 = sphi 0, %s203
    $region4: #{net2_forward_nchw.1} parent=1 // loop_header_branch
      %19 = sbr.rel (%p17) target = $region8
    $region5: #{net2_forward_nchw.1} parent=1 // loop_body
      %s21 = ssub.s32 %s16, 1
      %s22 = ssub.s32 %s16, 2
      %s23 = sadd.s32 %s16, 1
      %s24 = ssub.s32 %s16, %s23
      %p25 = scmp.eq.s32.totalorder %s24, 0
      %s27 = sadd.s32 %s26, 1
      %s28 = scalar_select %p25, %s26, %s27
      %p31 = pneg %p25
      %p32 = scmp.eq.s32.totalorder %s16, 1
      %p33 = por %p31, %p32
      %p34 = scmp.ne.s32.totalorder %s26, %s29
      %p35 = scmp.eq.s32.totalorder %s16, 0
      %p36 = por %p34, %p35
      %p37 = scmp.ne.s32.totalorder %s26, %s29
      %p38 = scmp.eq.s32.totalorder %s21, 1
      %p39 = por %p37, %p38
      %p40 = scmp.ne.s32.totalorder %s29, %s30
      %p41 = scmp.eq.s32.totalorder %s21, 0
      %p42 = por %p40, %p41
      %p43 = scmp.ne.s32.totalorder %s29, %s30
      %p44 = scmp.eq.s32.totalorder %s22, 1
      %p45 = por %p43, %p44
      %p47 = scmp.ne.s32.totalorder %s30, %s46
      %p48 = scmp.eq.s32.totalorder %s22, 0
      %p49 = por %p47, %p48
      %s51 = sadd.s32 %s50, 1
      %p54 = scmp.eq.s32.totalorder %s16, 1
      %p55 = scmp.ne.s32.totalorder %s50, %s52
      %p56 = scmp.eq.s32.totalorder %s16, 0
      %p57 = por %p55, %p56
      %p58 = scmp.ne.s32.totalorder %s50, %s52
      %p59 = scmp.eq.s32.totalorder %s21, 1
      %p60 = por %p58, %p59
      %p61 = scmp.ne.s32.totalorder %s52, %s53
      %p62 = scmp.eq.s32.totalorder %s21, 0
      %p63 = por %p61, %p62
      %p64 = scmp.ne.s32.totalorder %s52, %s53
      %p65 = scmp.eq.s32.totalorder %s22, 1
      %p66 = por %p64, %p65
      %p68 = scmp.ne.s32.totalorder %s53, %s67
      %p69 = scmp.eq.s32.totalorder %s22, 0
      %p70 = por %p68, %p69
      %s72 = sadd.s32 %s71, 1
      %p75 = scmp.eq.s32.totalorder %s16, 1
      %p76 = scmp.ne.s32.totalorder %s71, %s73
      %p77 = scmp.eq.s32.totalorder %s16, 0
      %p78 = por %p76, %p77
      %p79 = scmp.ne.s32.totalorder %s71, %s73
      %p80 = scmp.eq.s32.totalorder %s21, 1
      %p81 = por %p79, %p80
      %p82 = scmp.ne.s32.totalorder %s73, %s74
      %p83 = scmp.eq.s32.totalorder %s21, 0
      %p84 = por %p82, %p83
      %p85 = scmp.ne.s32.totalorder %s73, %s74
      %p86 = scmp.eq.s32.totalorder %s22, 1
      %p87 = por %p85, %p86
      %p89 = scmp.ne.s32.totalorder %s74, %s88
      %p90 = scmp.eq.s32.totalorder %s22, 0
      %p91 = por %p89, %p90
      %s93 = sadd.s32 %s92, 1
      %p96 = scmp.eq.s32.totalorder %s16, 1
      %p97 = scmp.ne.s32.totalorder %s92, %s94
      %p98 = scmp.eq.s32.totalorder %s16, 0
      %p99 = por %p97, %p98
      %p100 = scmp.ne.s32.totalorder %s92, %s94
      %p101 = scmp.eq.s32.totalorder %s21, 1
      %p102 = por %p100, %p101
      %p103 = scmp.ne.s32.totalorder %s94, %s95
      %p104 = scmp.eq.s32.totalorder %s21, 0
      %p105 = por %p103, %p104
      %p106 = scmp.ne.s32.totalorder %s94, %s95
      %p107 = scmp.eq.s32.totalorder %s22, 1
      %p108 = por %p106, %p107
      %p110 = scmp.ne.s32.totalorder %s95, %s109
      %p111 = scmp.eq.s32.totalorder %s22, 0
      %p112 = por %p110, %p111
      %s114 = sadd.s32 %s113, 1
      %p117 = scmp.eq.s32.totalorder %s16, 1
      %p118 = scmp.ne.s32.totalorder %s113, %s115
      %p119 = scmp.eq.s32.totalorder %s16, 0
      %p120 = por %p118, %p119
      %p121 = scmp.ne.s32.totalorder %s113, %s115
      %p122 = scmp.eq.s32.totalorder %s21, 1
      %p123 = por %p121, %p122
      %p124 = scmp.ne.s32.totalorder %s115, %s116
      %p125 = scmp.eq.s32.totalorder %s21, 0
      %p126 = por %p124, %p125
      %p127 = scmp.ne.s32.totalorder %s115, %s116
      %p128 = scmp.eq.s32.totalorder %s22, 1
      %p129 = por %p127, %p128
      %p131 = scmp.ne.s32.totalorder %s116, %s130
      %p132 = scmp.eq.s32.totalorder %s22, 0
      %p133 = por %p131, %p132
      %s135 = sadd.s32 %s134, 1
      %p138 = scmp.eq.s32.totalorder %s16, 1
      %p139 = scmp.ne.s32.totalorder %s134, %s136
      %p140 = scmp.eq.s32.totalorder %s16, 0
      %p141 = por %p139, %p140
      %p142 = scmp.ne.s32.totalorder %s134, %s136
      %p143 = scmp.eq.s32.totalorder %s21, 1
      %p144 = por %p142, %p143
      %p145 = scmp.ne.s32.totalorder %s136, %s137
      %p146 = scmp.eq.s32.totalorder %s21, 0
      %p147 = por %p145, %p146
      %p148 = scmp.ne.s32.totalorder %s136, %s137
      %p149 = scmp.eq.s32.totalorder %s22, 1
      %p150 = por %p148, %p149
      %p152 = scmp.ne.s32.totalorder %s137, %s151
      %p153 = scmp.eq.s32.totalorder %s22, 0
      %p154 = por %p152, %p153
      %s156 = sadd.s32 %s155, 1
      %p159 = scmp.eq.s32.totalorder %s16, 1
      %p160 = scmp.ne.s32.totalorder %s155, %s157
      %p161 = scmp.eq.s32.totalorder %s16, 0
      %p162 = por %p160, %p161
      %p163 = scmp.ne.s32.totalorder %s155, %s157
      %p164 = scmp.eq.s32.totalorder %s21, 1
      %p165 = por %p163, %p164
      %p166 = scmp.ne.s32.totalorder %s157, %s158
      %p167 = scmp.eq.s32.totalorder %s21, 0
      %p168 = por %p166, %p167
      %p169 = scmp.ne.s32.totalorder %s157, %s158
      %p170 = scmp.eq.s32.totalorder %s22, 1
      %p171 = por %p169, %p170
      %p173 = scmp.ne.s32.totalorder %s158, %s172
      %p174 = scmp.eq.s32.totalorder %s22, 0
      %p175 = por %p173, %p174
      %s177 = sadd.s32 %s176, 1
      %p180 = scmp.eq.s32.totalorder %s16, 1
      %p181 = scmp.ne.s32.totalorder %s176, %s178
      %p182 = scmp.eq.s32.totalorder %s16, 0
      %p183 = por %p181, %p182
      %p184 = scmp.ne.s32.totalorder %s176, %s178
      %p185 = scmp.eq.s32.totalorder %s21, 1
      %p186 = por %p184, %p185
      %p187 = scmp.ne.s32.totalorder %s178, %s179
      %p188 = scmp.eq.s32.totalorder %s21, 0
      %p189 = por %p187, %p188
      %p190 = scmp.ne.s32.totalorder %s178, %s179
      %p191 = scmp.eq.s32.totalorder %s22, 1
      %p192 = por %p190, %p191
      %p194 = scmp.ne.s32.totalorder %s179, %s193
      %p195 = scmp.eq.s32.totalorder %s22, 0
      %p196 = por %p194, %p195
      %s197 = ssub.s32 %s16, %s23
      %p198 = scmp.eq.s32.totalorder %s197, 0
      %s200 = sadd.s32 %s199, 1
      %s201 = scalar_select %p198, %s199, %s200
      %p204 = pneg %p198
      %p205 = scmp.eq.s32.totalorder %s16, 1
      %p206 = por %p204, %p205
      %p207 = scmp.ne.s32.totalorder %s199, %s202
      %p208 = scmp.eq.s32.totalorder %s16, 0
      %p209 = por %p207, %p208
      %p210 = scmp.ne.s32.totalorder %s199, %s202
      %p211 = scmp.eq.s32.totalorder %s21, 1
      %p212 = por %p210, %p211
      %p213 = scmp.ne.s32.totalorder %s202, %s203
      %p214 = scmp.eq.s32.totalorder %s21, 0
      %p215 = por %p213, %p214
      %p216 = scmp.ne.s32.totalorder %s202, %s203
      %p217 = scmp.eq.s32.totalorder %s22, 1
      %p218 = por %p216, %p217
      %p220 = scmp.ne.s32.totalorder %s203, %s219
      %p221 = scmp.eq.s32.totalorder %s22, 0
      %p222 = por %p220, %p221
      %p223 = scmp.le.s32.totalorder 1, %s16
      %p224 = scmp.lt.s32.totalorder %s16, 3
      %p225 = pnand %p223, %p224
      %p226 = pneg %p225
      // Predicated region
      $region9: #{net2_forward_nchw.1} parent=5 // pred_check
        _
      $region10: #{net2_forward_nchw.1} parent=5 // pred_check_branch
        %228 = sbr.rel (%p225) target = $region12
      $region11: #{net2_forward_nchw.1} parent=5 // pred_region
        %s229 = ssub.s32 %s16, 1
        // Predicated region
        $region13: #{net2_forward_nchw.1} parent=11 // pred_check
          %p230 = pneg %p63
        $region14: #{net2_forward_nchw.1} parent=11 // pred_check_branch
          %232 = sbr.rel (%p230) target = $region16
        $region15: #{net2_forward_nchw.1} parent=11 // pred_region
          %s234 = ssub.s32 8192, 8192
          %235 = vsyncadd [#allocation5], %s234
          %s236 = sshll.u32 [#allocation4], 4
          %s237 = int_to_ptr.vmem [resolvable:$true] %s236
          %242 = dma.hbm_to_vmem [thread:$0]  %s1, 8192, %s237, [#allocation5], 256, 256, 16
        $region16: #{net2_forward_nchw.1} parent=11 // pred_fallthru
          _
        // Predicated region
        $region17: #{net2_forward_nchw.1} parent=11 // pred_check
          %p243 = pneg %p84
        $region18: #{net2_forward_nchw.1} parent=11 // pred_check_branch
          %245 = sbr.rel (%p243) target = $region20
        $region19: #{net2_forward_nchw.1} parent=11 // pred_region
          %s247 = ssub.s32 4096, 4096
          %248 = vsyncadd [#allocation7], %s247
          %s249 = sshll.u32 [#allocation6], 4
          %s250 = int_to_ptr.vmem [resolvable:$true] %s249
          %255 = dma.hbm_to_vmem [thread:$0]  %s2, 4096, %s250, [#allocation7], 128, 128, 8
        $region20: #{net2_forward_nchw.1} parent=11 // pred_fallthru
          _
        // Predicated region
        $region21: #{net2_forward_nchw.1} parent=11 // pred_check
          %p256 = pneg %p105
        $region22: #{net2_forward_nchw.1} parent=11 // pred_check_branch
          %258 = sbr.rel (%p256) target = $region24
        $region23: #{net2_forward_nchw.1} parent=11 // pred_region
          %s260 = ssub.s32 4096, 4096
          %261 = vsyncadd [#allocation7], %s260
          %s262 = sshll.u32 [#allocation8], 4
          %s263 = int_to_ptr.vmem [resolvable:$true] %s262
          %268 = dma.hbm_to_vmem [thread:$0]  %s3, 4096, %s263, [#allocation7], 128, 128, 8
        $region24: #{net2_forward_nchw.1} parent=11 // pred_fallthru
          _
        // Predicated region
        $region25: #{net2_forward_nchw.1} parent=11 // pred_check
          %p269 = pneg %p126
        $region26: #{net2_forward_nchw.1} parent=11 // pred_check_branch
          %271 = sbr.rel (%p269) target = $region28
        $region27: #{net2_forward_nchw.1} parent=11 // pred_region
          _
        $region28: #{net2_forward_nchw.1} parent=11 // pred_fallthru
          _
        // Predicated region
        $region29: #{net2_forward_nchw.1} parent=11 // pred_check
          %p272 = pneg %p147
        $region30: #{net2_forward_nchw.1} parent=11 // pred_check_branch
          %274 = sbr.rel (%p272) target = $region32
        $region31: #{net2_forward_nchw.1} parent=11 // pred_region
          _
        $region32: #{net2_forward_nchw.1} parent=11 // pred_fallthru
          _
        // Predicated region
        $region33: #{net2_forward_nchw.1} parent=11 // pred_check
          %p275 = pneg %p168
        $region34: #{net2_forward_nchw.1} parent=11 // pred_check_branch
          %277 = sbr.rel (%p275) target = $region36
        $region35: #{net2_forward_nchw.1} parent=11 // pred_region
          _
        $region36: #{net2_forward_nchw.1} parent=11 // pred_fallthru
          _
        // Predicated region
        $region37: #{net2_forward_nchw.1} parent=11 // pred_check
          %p278 = pneg %p189
        $region38: #{net2_forward_nchw.1} parent=11 // pred_check_branch
          %280 = sbr.rel (%p278) target = $region40
        $region39: #{net2_forward_nchw.1} parent=11 // pred_region
          _
        $region40: #{net2_forward_nchw.1} parent=11 // pred_fallthru
          _
      $region12: #{net2_forward_nchw.1} parent=5 // pred_fallthru
        _
      %p281 = scmp.lt.s32.totalorder %s16, 2
      // Predicated region
      $region41: #{net2_forward_nchw.1} parent=5 // pred_check
        %p282 = pneg %p281
      $region42: #{net2_forward_nchw.1} parent=5 // pred_check_branch
        %284 = sbr.rel (%p282) target = $region44
      $region43: #{net2_forward_nchw.1} parent=5 // pred_region
        // Predicated region
        $region45: #{net2_forward_nchw.1} parent=43 // pred_check
          %p285 = pneg %p36
        $region46: #{net2_forward_nchw.1} parent=43 // pred_check_branch
          %287 = sbr.rel (%p285) target = $region48
        $region47: #{net2_forward_nchw.1} parent=43 // pred_region
          %p288 = scmp.lt.s32.totalorder %s16, 1
          %s289 = scalar_select %p288, %s16, 1
          %s290 = smul.addr %s289, 2
          %s291 = smul.addr %s290, 4
          %s292 = scalar_lea.vmem %s0, %s291
        $region48: #{net2_forward_nchw.1} parent=43 // pred_fallthru
          _
      $region44: #{net2_forward_nchw.1} parent=5 // pred_fallthru
        _
      %p293 = scmp.le.s32.totalorder 1, %s16
      %p294 = scmp.lt.s32.totalorder %s16, 3
      %p295 = pnand %p293, %p294
      %p296 = pneg %p295
      // Predicated region
      $region49: #{net2_forward_nchw.1} parent=5 // pred_check
        _
      $region50: #{net2_forward_nchw.1} parent=5 // pred_check_branch
        %298 = sbr.rel (%p295) target = $region52
      $region51: #{net2_forward_nchw.1} parent=5 // pred_region
        %s299 = ssub.s32 %s16, 1
        // Predicated region
        $region53: #{net2_forward_nchw.1} parent=51 // pred_check
          %p300 = pneg %p63
        $region54: #{net2_forward_nchw.1} parent=51 // pred_check_branch
          %302 = sbr.rel (%p300) target = $region56
        $region55: #{net2_forward_nchw.1} parent=51 // pred_region
          %303 = dma.done [#allocation5], 8192
        $region56: #{net2_forward_nchw.1} parent=51 // pred_fallthru
          _
        // Predicated region
        $region57: #{net2_forward_nchw.1} parent=51 // pred_check
          %p304 = pneg %p84
        $region58: #{net2_forward_nchw.1} parent=51 // pred_check_branch
          %306 = sbr.rel (%p304) target = $region60
        $region59: #{net2_forward_nchw.1} parent=51 // pred_region
          %307 = dma.done [#allocation7], 4096
        $region60: #{net2_forward_nchw.1} parent=51 // pred_fallthru
          _
        // Predicated region
        $region61: #{net2_forward_nchw.1} parent=51 // pred_check
          %p308 = pneg %p105
        $region62: #{net2_forward_nchw.1} parent=51 // pred_check_branch
          %310 = sbr.rel (%p308) target = $region64
        $region63: #{net2_forward_nchw.1} parent=51 // pred_region
          %311 = dma.done [#allocation7], 4096
        $region64: #{net2_forward_nchw.1} parent=51 // pred_fallthru
          _
        %p312 = scmp.lt.s32.totalorder %s21, 1
        %s313 = scalar_select %p312, %s21, 1
        %s314 = smul.addr %s313, 2
        %s315 = smul.addr %s314, 4
        %s316 = scalar_lea.vmem %s0, %s315
        %p317 = pneg %p42
        %p318 = pneg %p39
        %p319 = pneg %p63
        %p320 = pneg %p60
        %p321 = pneg %p84
        %p322 = pneg %p81
        %p323 = pneg %p105
        %p324 = pneg %p102
        %p325 = pneg %p126
        %p326 = pneg %p123
        %p327 = pneg %p147
        %p328 = pneg %p144
        %p329 = pneg %p168
        %p330 = pneg %p165
        %p331 = pneg %p189
        %p332 = pneg %p186
        %p333 = pneg %p215
        %p334 = pneg %p212
        %p335 = scmp.lt.s32.totalorder %s21, 1
        %s336 = scalar_select %p335, %s21, 1
        %s337 = smul.addr %s336, 2
        %s338 = smul.addr %s337, 8
        %s339 = scalar_lea.vmem %s8, %s338
        %p340 = scmp.lt.s32.totalorder %s21, 1
        %s341 = scalar_select %p340, %s21, 1
        %s342 = smul.addr %s341, 2
        %s343 = smul.addr %s342, 4
        %s344 = scalar_lea.vmem %s0, %s343
        %p345 = scmp.lt.s32.totalorder %s21, 1
        %s346 = scalar_select %p345, %s21, 1
        %s347 = smul.addr %s346, 2
        %s348 = smul.addr %s347, 8
        %s349 = scalar_lea.vmem %s8, %s348
        %v350 = vld [vmem:[#allocation4] sm:$0xff]
        %v351 = vld [vmem:[#allocation4 + $0x8] sm:$0xff]
        %v352 = vld [vmem:[#allocation4 + $0x10] sm:$0xff]
        %v353 = vld [vmem:[#allocation4 + $0x18] sm:$0xff]
        %v354 = vld [vmem:[#allocation4 + $0x20] sm:$0xff]
        %v355 = vld [vmem:[#allocation4 + $0x28] sm:$0xff]
        %v356 = vld [vmem:[#allocation4 + $0x30] sm:$0xff]
        %v357 = vld [vmem:[#allocation4 + $0x38] sm:$0xff]
        %v358 = vld [vmem:[#allocation4 + $0x40] sm:$0xff]
        %v359 = vld [vmem:[#allocation4 + $0x48] sm:$0xff]
        %v360 = vld [vmem:[#allocation4 + $0x50] sm:$0xff]
        %v361 = vld [vmem:[#allocation4 + $0x58] sm:$0xff]
        %v362 = vld [vmem:[#allocation4 + $0x60] sm:$0xff]
        %v363 = vld [vmem:[#allocation4 + $0x68] sm:$0xff]
        %v364 = vld [vmem:[#allocation4 + $0x70] sm:$0xff]
        %v365 = vld [vmem:[#allocation4 + $0x78] sm:$0xff]
        %v366 = vld [vmem:[#allocation4 + $0x80] sm:$0xff]
        %v367 = vld [vmem:[#allocation4 + $0x88] sm:$0xff]
        %v368 = vld [vmem:[#allocation4 + $0x90] sm:$0xff]
        %v369 = vld [vmem:[#allocation4 + $0x98] sm:$0xff]
        %v370 = vld [vmem:[#allocation4 + $0xa0] sm:$0xff]
        %v371 = vld [vmem:[#allocation4 + $0xa8] sm:$0xff]
        %v372 = vld [vmem:[#allocation4 + $0xb0] sm:$0xff]
        %v373 = vld [vmem:[#allocation4 + $0xb8] sm:$0xff]
        %v374 = vld [vmem:[#allocation4 + $0xc0] sm:$0xff]
        %v375 = vld [vmem:[#allocation4 + $0xc8] sm:$0xff]
        %v376 = vld [vmem:[#allocation4 + $0xd0] sm:$0xff]
        %v377 = vld [vmem:[#allocation4 + $0xd8] sm:$0xff]
        %v378 = vld [vmem:[#allocation4 + $0xe0] sm:$0xff]
        %v379 = vld [vmem:[#allocation4 + $0xe8] sm:$0xff]
        %v380 = vld [vmem:[#allocation4 + $0xf0] sm:$0xff]
        %v381 = vld [vmem:[#allocation4 + $0xf8] sm:$0xff]
        %v382 = vld [vmem:[#allocation4 + $0x100] sm:$0xff]
        %v383 = vld [vmem:[#allocation4 + $0x108] sm:$0xff]
        %v384 = vld [vmem:[#allocation4 + $0x110] sm:$0xff]
        %v385 = vld [vmem:[#allocation4 + $0x118] sm:$0xff]
        %v386 = vld [vmem:[#allocation4 + $0x120] sm:$0xff]
        %v387 = vld [vmem:[#allocation4 + $0x128] sm:$0xff]
        %v388 = vld [vmem:[#allocation4 + $0x130] sm:$0xff]
        %v389 = vld [vmem:[#allocation4 + $0x138] sm:$0xff]
        %v390 = vld [vmem:[#allocation4 + $0x140] sm:$0xff]
        %v391 = vld [vmem:[#allocation4 + $0x148] sm:$0xff]
        %v392 = vld [vmem:[#allocation4 + $0x150] sm:$0xff]
        %v393 = vld [vmem:[#allocation4 + $0x158] sm:$0xff]
        %v394 = vld [vmem:[#allocation4 + $0x160] sm:$0xff]
        %v395 = vld [vmem:[#allocation4 + $0x168] sm:$0xff]
        %v396 = vld [vmem:[#allocation4 + $0x170] sm:$0xff]
        %v397 = vld [vmem:[#allocation4 + $0x178] sm:$0xff]
        %v398 = vld [vmem:[#allocation4 + $0x180] sm:$0xff]
        %v399 = vld [vmem:[#allocation4 + $0x188] sm:$0xff]
        %v400 = vld [vmem:[#allocation4 + $0x190] sm:$0xff]
        %v401 = vld [vmem:[#allocation4 + $0x198] sm:$0xff]
        %v402 = vld [vmem:[#allocation4 + $0x1a0] sm:$0xff]
        %v403 = vld [vmem:[#allocation4 + $0x1a8] sm:$0xff]
        %v404 = vld [vmem:[#allocation4 + $0x1b0] sm:$0xff]
        %v405 = vld [vmem:[#allocation4 + $0x1b8] sm:$0xff]
        %v406 = vld [vmem:[#allocation4 + $0x1c0] sm:$0xff]
        %v407 = vld [vmem:[#allocation4 + $0x1c8] sm:$0xff]
        %v408 = vld [vmem:[#allocation4 + $0x1d0] sm:$0xff]
        %v409 = vld [vmem:[#allocation4 + $0x1d8] sm:$0xff]
        %v410 = vld [vmem:[#allocation4 + $0x1e0] sm:$0xff]
        %v411 = vld [vmem:[#allocation4 + $0x1e8] sm:$0xff]
        %v412 = vld [vmem:[#allocation4 + $0x1f0] sm:$0xff]
        %v413 = vld [vmem:[#allocation4 + $0x1f8] sm:$0xff]
        %v414 = vld [vmem:[%s344] sm:$0xff]
        %v416 = vcombine.high %v414, %v414
        %418 = vmatprep.subr.mxu0 0.0
        %419 = vmatpush1.xpose.msra.mxu0 0.0
        %420 = vmatprep.subr.mxu0 0.0
        %421 = vmatpush1.xpose.msra.mxu0 0.0
        %422 = vmatprep.subr.mxu0 0.0
        %423 = vmatpush1.xpose.msra.mxu0 0.0
        %424 = vmatprep.subr.mxu0 0.0
        %425 = vmatpush1.xpose.msra.mxu0 0.0
        %426 = vmatprep.subr.mxu0 0.0
        %427 = vmatpush1.xpose.msra.mxu0 0.0
        %428 = vmatprep.subr.mxu0 0.0
        %429 = vmatpush1.xpose.msra.mxu0 0.0
        %430 = vmatprep.subr.mxu0 0.0
        %431 = vmatpush1.xpose.msra.mxu0 0.0
        %432 = vmatprep.subr.mxu0 0.0
        %433 = vmatpush1.xpose.msra.mxu0 0.0
        %434 = vmatprep.subr.mxu0 0.0
        %435 = vmatpush1.xpose.msra.mxu0 0.0
        %436 = vmatprep.subr.mxu0 0.0
        %437 = vmatpush1.xpose.msra.mxu0 0.0
        %438 = vmatprep.subr.mxu0 0.0
        %439 = vmatpush1.xpose.msra.mxu0 0.0
        %440 = vmatprep.subr.mxu0 0.0
        %441 = vmatpush1.xpose.msra.mxu0 0.0
        %442 = vmatprep.subr.mxu0 0.0
        %443 = vmatpush1.xpose.msra.mxu0 0.0
        %444 = vmatprep.subr.mxu0 0.0
        %445 = vmatpush1.xpose.msra.mxu0 0.0
        %446 = vmatprep.subr.mxu0 0.0
        %447 = vmatpush1.xpose.msra.mxu0 0.0
        %448 = vmatprep.subr.mxu0 %v416
        %449 = vmatpush1.xpose.msra.mxu0 %v414
        %450 = vmatprep.subr.mxu0 0.0
        %451 = vmatpush2.xpose.msra.mxu0 0.0
        %452 = vmatprep.subr.mxu0 0.0
        %453 = vmatpush2.xpose.msra.mxu0 0.0
        %454 = vmatprep.subr.mxu0 0.0
        %455 = vmatpush2.xpose.msra.mxu0 0.0
        %456 = vmatprep.subr.mxu0 0.0
        %457 = vmatpush2.xpose.msra.mxu0 0.0
        %458 = vmatprep.subr.mxu0 0.0
        %459 = vmatpush2.xpose.msra.mxu0 0.0
        %460 = vmatprep.subr.mxu0 0.0
        %461 = vmatpush2.xpose.msra.mxu0 0.0
        %462 = vmatprep.subr.mxu0 0.0
        %463 = vmatpush2.xpose.msra.mxu0 0.0
        %464 = vmatprep.subr.mxu0 0.0
        %465 = vmatpush2.xpose.msra.mxu0 0.0
        %466 = vmatprep.subr.mxu0 0.0
        %467 = vmatpush2.xpose.msra.mxu0 0.0
        %468 = vmatprep.subr.mxu0 0.0
        %469 = vmatpush2.xpose.msra.mxu0 0.0
        %470 = vmatprep.subr.mxu0 0.0
        %471 = vmatpush2.xpose.msra.mxu0 0.0
        %472 = vmatprep.subr.mxu0 0.0
        %473 = vmatpush2.xpose.msra.mxu0 0.0
        %474 = vmatprep.subr.mxu0 0.0
        %475 = vmatpush2.xpose.msra.mxu0 0.0
        %476 = vmatprep.subr.mxu0 0.0
        %477 = vmatpush2.xpose.msra.mxu0 0.0
        %478 = vmatprep.subr.mxu0 0.0
        %479 = vmatpush2.xpose.msra.mxu0 0.0
        %480 = vmatprep.subr.mxu0 0.0
        %481 = vmatpush2.xpose.msra.mxu0 0.0
        %482 = vmatprep.mubr.f32.mxu0 %v351
        %483 = vmatmul.mubr.f32.gmra.mxu0 %v350
        %v484 = vpop.f32.mrf.mxu0
        %v485 = vadd.f32 0.0, %v484
        %v486 = vpop.f32.mrf.mxu0
        %487 = vmatprep.mubr.f32.mxu0 %v353
        %488 = vmatmul.mubr.f32.gmra.mxu0 %v352
        %v489 = vpop.f32.mrf.mxu0
        %v490 = vadd.f32 0.0, %v489
        %v491 = vpop.f32.mrf.mxu0
        %492 = vmatprep.mubr.f32.mxu0 %v355
        %493 = vmatmul.mubr.f32.gmra.mxu0 %v354
        %v494 = vpop.f32.mrf.mxu0
        %v495 = vadd.f32 0.0, %v494
        %v496 = vpop.f32.mrf.mxu0
        %497 = vmatprep.mubr.f32.mxu0 %v357
        %498 = vmatmul.mubr.f32.gmra.mxu0 %v356
        %v499 = vpop.f32.mrf.mxu0
        %v500 = vadd.f32 0.0, %v499
        %v501 = vpop.f32.mrf.mxu0
        %502 = vmatprep.mubr.f32.mxu0 %v359
        %503 = vmatmul.mubr.f32.gmra.mxu0 %v358
        %v504 = vpop.f32.mrf.mxu0
        %v505 = vadd.f32 0.0, %v504
        %v506 = vpop.f32.mrf.mxu0
        %507 = vmatprep.mubr.f32.mxu0 %v361
        %508 = vmatmul.mubr.f32.gmra.mxu0 %v360
        %v509 = vpop.f32.mrf.mxu0
        %v510 = vadd.f32 0.0, %v509
        %v511 = vpop.f32.mrf.mxu0
        %512 = vmatprep.mubr.f32.mxu0 %v363
        %513 = vmatmul.mubr.f32.gmra.mxu0 %v362
        %v514 = vpop.f32.mrf.mxu0
        %v515 = vadd.f32 0.0, %v514
        %v516 = vpop.f32.mrf.mxu0
        %517 = vmatprep.mubr.f32.mxu0 %v365
        %518 = vmatmul.mubr.f32.gmra.mxu0 %v364
        %v519 = vpop.f32.mrf.mxu0
        %v520 = vadd.f32 0.0, %v519
        %v521 = vpop.f32.mrf.mxu0
        %522 = vmatprep.mubr.f32.mxu0 %v367
        %523 = vmatmul.mubr.f32.gmra.mxu0 %v366
        %v524 = vpop.f32.mrf.mxu0
        %v525 = vadd.f32 0.0, %v524
        %v526 = vpop.f32.mrf.mxu0
        %527 = vmatprep.mubr.f32.mxu0 %v369
        %528 = vmatmul.mubr.f32.gmra.mxu0 %v368
        %v529 = vpop.f32.mrf.mxu0
        %v530 = vadd.f32 0.0, %v529
        %v531 = vpop.f32.mrf.mxu0
        %532 = vmatprep.mubr.f32.mxu0 %v371
        %533 = vmatmul.mubr.f32.gmra.mxu0 %v370
        %v534 = vpop.f32.mrf.mxu0
        %v535 = vadd.f32 0.0, %v534
        %v536 = vpop.f32.mrf.mxu0
        %537 = vmatprep.mubr.f32.mxu0 %v373
        %538 = vmatmul.mubr.f32.gmra.mxu0 %v372
        %v539 = vpop.f32.mrf.mxu0
        %v540 = vadd.f32 0.0, %v539
        %v541 = vpop.f32.mrf.mxu0
        %542 = vmatprep.mubr.f32.mxu0 %v375
        %543 = vmatmul.mubr.f32.gmra.mxu0 %v374
        %v544 = vpop.f32.mrf.mxu0
        %v545 = vadd.f32 0.0, %v544
        %v546 = vpop.f32.mrf.mxu0
        %547 = vmatprep.mubr.f32.mxu0 %v377
        %548 = vmatmul.mubr.f32.gmra.mxu0 %v376
        %v549 = vpop.f32.mrf.mxu0
        %v550 = vadd.f32 0.0, %v549
        %v551 = vpop.f32.mrf.mxu0
        %552 = vmatprep.mubr.f32.mxu0 %v379
        %553 = vmatmul.mubr.f32.gmra.mxu0 %v378
        %v554 = vpop.f32.mrf.mxu0
        %v555 = vadd.f32 0.0, %v554
        %v556 = vpop.f32.mrf.mxu0
        %557 = vmatprep.mubr.f32.mxu0 %v381
        %558 = vmatmul.mubr.f32.gmra.mxu0 %v380
        %v559 = vpop.f32.mrf.mxu0
        %v560 = vadd.f32 0.0, %v559
        %v561 = vpop.f32.mrf.mxu0
        %562 = vmatprep.mubr.f32.mxu0 %v383
        %563 = vmatmul.mubr.f32.gmra.mxu0 %v382
        %v564 = vpop.f32.mrf.mxu0
        %v565 = vadd.f32 0.0, %v564
        %v566 = vpop.f32.mrf.mxu0
        %567 = vmatprep.mubr.f32.mxu0 %v385
        %568 = vmatmul.mubr.f32.gmra.mxu0 %v384
        %v569 = vpop.f32.mrf.mxu0
        %v570 = vadd.f32 0.0, %v569
        %v571 = vpop.f32.mrf.mxu0
        %572 = vmatprep.mubr.f32.mxu0 %v387
        %573 = vmatmul.mubr.f32.gmra.mxu0 %v386
        %v574 = vpop.f32.mrf.mxu0
        %v575 = vadd.f32 0.0, %v574
        %v576 = vpop.f32.mrf.mxu0
        %577 = vmatprep.mubr.f32.mxu0 %v389
        %578 = vmatmul.mubr.f32.gmra.mxu0 %v388
        %v579 = vpop.f32.mrf.mxu0
        %v580 = vadd.f32 0.0, %v579
        %v581 = vpop.f32.mrf.mxu0
        %582 = vmatprep.mubr.f32.mxu0 %v391
        %583 = vmatmul.mubr.f32.gmra.mxu0 %v390
        %v584 = vpop.f32.mrf.mxu0
        %v585 = vadd.f32 0.0, %v584
        %v586 = vpop.f32.mrf.mxu0
        %587 = vmatprep.mubr.f32.mxu0 %v393
        %588 = vmatmul.mubr.f32.gmra.mxu0 %v392
        %v589 = vpop.f32.mrf.mxu0
        %v590 = vadd.f32 0.0, %v589
        %v591 = vpop.f32.mrf.mxu0
        %592 = vmatprep.mubr.f32.mxu0 %v395
        %593 = vmatmul.mubr.f32.gmra.mxu0 %v394
        %v594 = vpop.f32.mrf.mxu0
        %v595 = vadd.f32 0.0, %v594
        %v596 = vpop.f32.mrf.mxu0
        %597 = vmatprep.mubr.f32.mxu0 %v397
        %598 = vmatmul.mubr.f32.gmra.mxu0 %v396
        %v599 = vpop.f32.mrf.mxu0
        %v600 = vadd.f32 0.0, %v599
        %v601 = vpop.f32.mrf.mxu0
        %602 = vmatprep.mubr.f32.mxu0 %v399
        %603 = vmatmul.mubr.f32.gmra.mxu0 %v398
        %v604 = vpop.f32.mrf.mxu0
        %v605 = vadd.f32 0.0, %v604
        %v606 = vpop.f32.mrf.mxu0
        %607 = vmatprep.mubr.f32.mxu0 %v401
        %608 = vmatmul.mubr.f32.gmra.mxu0 %v400
        %v609 = vpop.f32.mrf.mxu0
        %v610 = vadd.f32 0.0, %v609
        %v611 = vpop.f32.mrf.mxu0
        %612 = vmatprep.mubr.f32.mxu0 %v403
        %613 = vmatmul.mubr.f32.gmra.mxu0 %v402
        %v614 = vpop.f32.mrf.mxu0
        %v615 = vadd.f32 0.0, %v614
        %v616 = vpop.f32.mrf.mxu0
        %617 = vmatprep.mubr.f32.mxu0 %v405
        %618 = vmatmul.mubr.f32.gmra.mxu0 %v404
        %v619 = vpop.f32.mrf.mxu0
        %v620 = vadd.f32 0.0, %v619
        %v621 = vpop.f32.mrf.mxu0
        %622 = vmatprep.mubr.f32.mxu0 %v407
        %623 = vmatmul.mubr.f32.gmra.mxu0 %v406
        %v624 = vpop.f32.mrf.mxu0
        %v625 = vadd.f32 0.0, %v624
        %v626 = vpop.f32.mrf.mxu0
        %627 = vmatprep.mubr.f32.mxu0 %v409
        %628 = vmatmul.mubr.f32.gmra.mxu0 %v408
        %v629 = vpop.f32.mrf.mxu0
        %v630 = vadd.f32 0.0, %v629
        %v631 = vpop.f32.mrf.mxu0
        %632 = vmatprep.mubr.f32.mxu0 %v411
        %633 = vmatmul.mubr.f32.gmra.mxu0 %v410
        %v634 = vpop.f32.mrf.mxu0
        %v635 = vadd.f32 0.0, %v634
        %v636 = vpop.f32.mrf.mxu0
        %637 = vmatprep.mubr.f32.mxu0 %v413
        %638 = vmatmul.mubr.f32.gmra.mxu0 %v412
        %v639 = vpop.f32.mrf.mxu0
        %v640 = vadd.f32 0.0, %v639
        %v641 = vpop.f32.mrf.mxu0
        %642 = vdwg.mxu0
        %vm643 = vcmask 31744
        %644 = vst.msk [vmem:[#allocation2] sm:$0xff] %vm643, 0.0
        %645 = vst.msk [vmem:[#allocation2 + $0x8] sm:$0xff] %vm643, 0.0
        %vm646 = vcmask 24576
        %647 = vst.msk [vmem:[#allocation2 + $0x10] sm:$0x1] %vm646, 0.0
        %648 = vst.msk [vmem:[#allocation2 + $0x111] sm:$0xff] %vm643, 0.0
        %649 = vst.msk [vmem:[#allocation2 + $0x119] sm:$0xff] %vm643, 0.0
        %650 = vst.msk [vmem:[#allocation2 + $0x121] sm:$0x1] %vm646, 0.0
        %651 = vst.msk [vmem:[#allocation2 + $0x11] sm:$0xff] %vm643, %v485
        %652 = vst.msk [vmem:[#allocation2 + $0x19] sm:$0xff] %vm643, %v490
        %653 = vst.msk [vmem:[#allocation2 + $0x21] sm:$0xff] %vm643, %v495
        %654 = vst.msk [vmem:[#allocation2 + $0x29] sm:$0xff] %vm643, %v500
        %655 = vst.msk [vmem:[#allocation2 + $0x31] sm:$0xff] %vm643, %v505
        %656 = vst.msk [vmem:[#allocation2 + $0x39] sm:$0xff] %vm643, %v510
        %657 = vst.msk [vmem:[#allocation2 + $0x41] sm:$0xff] %vm643, %v515
        %658 = vst.msk [vmem:[#allocation2 + $0x49] sm:$0xff] %vm643, %v520
        %659 = vst.msk [vmem:[#allocation2 + $0x51] sm:$0xff] %vm643, %v525
        %660 = vst.msk [vmem:[#allocation2 + $0x59] sm:$0xff] %vm643, %v530
        %661 = vst.msk [vmem:[#allocation2 + $0x61] sm:$0xff] %vm643, %v535
        %662 = vst.msk [vmem:[#allocation2 + $0x69] sm:$0xff] %vm643, %v540
        %663 = vst.msk [vmem:[#allocation2 + $0x71] sm:$0xff] %vm643, %v545
        %664 = vst.msk [vmem:[#allocation2 + $0x79] sm:$0xff] %vm643, %v550
        %665 = vst.msk [vmem:[#allocation2 + $0x81] sm:$0xff] %vm643, %v555
        %666 = vst.msk [vmem:[#allocation2 + $0x89] sm:$0xff] %vm643, %v560
        %667 = vst.msk [vmem:[#allocation2 + $0x91] sm:$0xff] %vm643, %v565
        %668 = vst.msk [vmem:[#allocation2 + $0x99] sm:$0xff] %vm643, %v570
        %669 = vst.msk [vmem:[#allocation2 + $0xa1] sm:$0xff] %vm643, %v575
        %670 = vst.msk [vmem:[#allocation2 + $0xa9] sm:$0xff] %vm643, %v580
        %671 = vst.msk [vmem:[#allocation2 + $0xb1] sm:$0xff] %vm643, %v585
        %672 = vst.msk [vmem:[#allocation2 + $0xb9] sm:$0xff] %vm643, %v590
        %673 = vst.msk [vmem:[#allocation2 + $0xc1] sm:$0xff] %vm643, %v595
        %674 = vst.msk [vmem:[#allocation2 + $0xc9] sm:$0xff] %vm643, %v600
        %675 = vst.msk [vmem:[#allocation2 + $0xd1] sm:$0xff] %vm643, %v605
        %676 = vst.msk [vmem:[#allocation2 + $0xd9] sm:$0xff] %vm643, %v610
        %677 = vst.msk [vmem:[#allocation2 + $0xe1] sm:$0xff] %vm643, %v615
        %678 = vst.msk [vmem:[#allocation2 + $0xe9] sm:$0xff] %vm643, %v620
        %679 = vst.msk [vmem:[#allocation2 + $0xf1] sm:$0xff] %vm643, %v625
        %680 = vst.msk [vmem:[#allocation2 + $0xf9] sm:$0xff] %vm643, %v630
        %681 = vst.msk [vmem:[#allocation2 + $0x101] sm:$0xff] %vm643, %v635
        %682 = vst.msk [vmem:[#allocation2 + $0x109] sm:$0xff] %vm643, %v640
        %v683 = vld [vmem:[#allocation6] sm:$0xff]
        %v684 = vld [vmem:[#allocation6 + $0x8] sm:$0xff]
        %v685 = vld [vmem:[#allocation6 + $0x10] sm:$0xff]
        %v686 = vld [vmem:[#allocation6 + $0x18] sm:$0xff]
        %v687 = vld [vmem:[#allocation6 + $0x20] sm:$0xff]
        %v688 = vld [vmem:[#allocation6 + $0x28] sm:$0xff]
        %v689 = vld [vmem:[#allocation6 + $0x30] sm:$0xff]
        %v690 = vld [vmem:[#allocation6 + $0x38] sm:$0xff]
        %v691 = vld [vmem:[#allocation6 + $0x40] sm:$0xff]
        %v692 = vld [vmem:[#allocation6 + $0x48] sm:$0xff]
        %v693 = vld [vmem:[#allocation6 + $0x50] sm:$0xff]
        %v694 = vld [vmem:[#allocation6 + $0x58] sm:$0xff]
        %v695 = vld [vmem:[#allocation6 + $0x60] sm:$0xff]
        %v696 = vld [vmem:[#allocation6 + $0x68] sm:$0xff]
        %v697 = vld [vmem:[#allocation6 + $0x70] sm:$0xff]
        %v698 = vld [vmem:[#allocation6 + $0x78] sm:$0xff]
        %v699 = vld [vmem:[#allocation6 + $0x80] sm:$0xff]
        %v700 = vld [vmem:[#allocation6 + $0x88] sm:$0xff]
        %v701 = vld [vmem:[#allocation6 + $0x90] sm:$0xff]
        %v702 = vld [vmem:[#allocation6 + $0x98] sm:$0xff]
        %v703 = vld [vmem:[#allocation6 + $0xa0] sm:$0xff]
        %v704 = vld [vmem:[#allocation6 + $0xa8] sm:$0xff]
        %v705 = vld [vmem:[#allocation6 + $0xb0] sm:$0xff]
        %v706 = vld [vmem:[#allocation6 + $0xb8] sm:$0xff]
        %v707 = vld [vmem:[#allocation6 + $0xc0] sm:$0xff]
        %v708 = vld [vmem:[#allocation6 + $0xc8] sm:$0xff]
        %v709 = vld [vmem:[#allocation6 + $0xd0] sm:$0xff]
        %v710 = vld [vmem:[#allocation6 + $0xd8] sm:$0xff]
        %v711 = vld [vmem:[#allocation6 + $0xe0] sm:$0xff]
        %v712 = vld [vmem:[#allocation6 + $0xe8] sm:$0xff]
        %v713 = vld [vmem:[#allocation6 + $0xf0] sm:$0xff]
        %v714 = vld [vmem:[#allocation6 + $0xf8] sm:$0xff]
        %v715 = vld [vmem:[#allocation8] sm:$0xff]
        %v716 = vld [vmem:[#allocation8 + $0x8] sm:$0xff]
        %v717 = vld [vmem:[#allocation8 + $0x10] sm:$0xff]
        %v718 = vld [vmem:[#allocation8 + $0x18] sm:$0xff]
        %v719 = vld [vmem:[#allocation8 + $0x20] sm:$0xff]
        %v720 = vld [vmem:[#allocation8 + $0x28] sm:$0xff]
        %v721 = vld [vmem:[#allocation8 + $0x30] sm:$0xff]
        %v722 = vld [vmem:[#allocation8 + $0x38] sm:$0xff]
        %v723 = vld [vmem:[#allocation8 + $0x40] sm:$0xff]
        %v724 = vld [vmem:[#allocation8 + $0x48] sm:$0xff]
        %v725 = vld [vmem:[#allocation8 + $0x50] sm:$0xff]
        %v726 = vld [vmem:[#allocation8 + $0x58] sm:$0xff]
        %v727 = vld [vmem:[#allocation8 + $0x60] sm:$0xff]
        %v728 = vld [vmem:[#allocation8 + $0x68] sm:$0xff]
        %v729 = vld [vmem:[#allocation8 + $0x70] sm:$0xff]
        %v730 = vld [vmem:[#allocation8 + $0x78] sm:$0xff]
        %v731 = vld [vmem:[#allocation8 + $0x80] sm:$0xff]
        %v732 = vld [vmem:[#allocation8 + $0x88] sm:$0xff]
        %v733 = vld [vmem:[#allocation8 + $0x90] sm:$0xff]
        %v734 = vld [vmem:[#allocation8 + $0x98] sm:$0xff]
        %v735 = vld [vmem:[#allocation8 + $0xa0] sm:$0xff]
        %v736 = vld [vmem:[#allocation8 + $0xa8] sm:$0xff]
        %v737 = vld [vmem:[#allocation8 + $0xb0] sm:$0xff]
        %v738 = vld [vmem:[#allocation8 + $0xb8] sm:$0xff]
        %v739 = vld [vmem:[#allocation8 + $0xc0] sm:$0xff]
        %v740 = vld [vmem:[#allocation8 + $0xc8] sm:$0xff]
        %v741 = vld [vmem:[#allocation8 + $0xd0] sm:$0xff]
        %v742 = vld [vmem:[#allocation8 + $0xd8] sm:$0xff]
        %v743 = vld [vmem:[#allocation8 + $0xe0] sm:$0xff]
        %v744 = vld [vmem:[#allocation8 + $0xe8] sm:$0xff]
        %v745 = vld [vmem:[#allocation8 + $0xf0] sm:$0xff]
        %v746 = vld [vmem:[#allocation8 + $0xf8] sm:$0xff]
        %v747 = vld [vmem:[%s5] sm:$0x1]
        %v749 = vlaneseq
        %v750 = vshrl.u32 %v749, 7
        %v751 = vsub.s32 0, %v750
        %v752 = vrot.slane %v747, %v751
        %v754 = vld [vmem:[#allocation2] sm:$0xff]
        %v755 = vld [vmem:[#allocation2 + $0x8] sm:$0xff]
        %v756 = vld [vmem:[#allocation2 + $0x10] sm:$0xff]
        %v757 = vld [vmem:[#allocation2 + $0x18] sm:$0xff]
        %v758 = vld [vmem:[#allocation2 + $0x20] sm:$0xff]
        %v759 = vld [vmem:[#allocation2 + $0x28] sm:$0xff]
        %v760 = vld [vmem:[#allocation2 + $0x30] sm:$0xff]
        %v761 = vld [vmem:[#allocation2 + $0x38] sm:$0xff]
        %v762 = vld [vmem:[#allocation2 + $0x40] sm:$0xff]
        %v763 = vld [vmem:[#allocation2 + $0x48] sm:$0xff]
        %v764 = vld [vmem:[#allocation2 + $0x50] sm:$0xff]
        %v765 = vld [vmem:[#allocation2 + $0x58] sm:$0xff]
        %v766 = vld [vmem:[#allocation2 + $0x60] sm:$0xff]
        %v767 = vld [vmem:[#allocation2 + $0x68] sm:$0xff]
        %v768 = vld [vmem:[#allocation2 + $0x70] sm:$0xff]
        %v769 = vld [vmem:[#allocation2 + $0x78] sm:$0xff]
        %v770 = vld [vmem:[#allocation2 + $0x80] sm:$0xff]
        %v771 = vld [vmem:[#allocation2 + $0x88] sm:$0xff]
        %v772 = vld [vmem:[#allocation2 + $0x90] sm:$0xff]
        %v773 = vld [vmem:[#allocation2 + $0x98] sm:$0xff]
        %v774 = vld [vmem:[#allocation2 + $0xa0] sm:$0xff]
        %v775 = vld [vmem:[#allocation2 + $0xa8] sm:$0xff]
        %v776 = vld [vmem:[#allocation2 + $0xb0] sm:$0xff]
        %v777 = vld [vmem:[#allocation2 + $0xb8] sm:$0xff]
        %v778 = vld [vmem:[#allocation2 + $0xc0] sm:$0xff]
        %v779 = vld [vmem:[#allocation2 + $0xc8] sm:$0xff]
        %v780 = vld [vmem:[#allocation2 + $0xd0] sm:$0xff]
        %v781 = vld [vmem:[#allocation2 + $0xd8] sm:$0xff]
        %v782 = vld [vmem:[#allocation2 + $0xe0] sm:$0xff]
        %v783 = vld [vmem:[#allocation2 + $0xe8] sm:$0xff]
        %v784 = vld [vmem:[#allocation2 + $0xf0] sm:$0xff]
        %v785 = vld [vmem:[#allocation2 + $0xf8] sm:$0xff]
        %787 = vset.pattern.permute.xlu0 0
        %788 = vperm.xlu0 %787, %v715
        %v789 = vpop.permute.xlu0 %788
        %792 = vset.pattern.permute.xlu0 0
        %793 = vperm.xlu0 %792, %v716
        %v794 = vpop.permute.xlu0 %793
        %797 = vset.pattern.permute.xlu0 0
        %798 = vperm.xlu0 %797, %v717
        %v799 = vpop.permute.xlu0 %798
        %802 = vset.pattern.permute.xlu0 0
        %803 = vperm.xlu0 %802, %v718
        %v804 = vpop.permute.xlu0 %803
        %807 = vset.pattern.permute.xlu0 0
        %808 = vperm.xlu0 %807, %v719
        %v809 = vpop.permute.xlu0 %808
        %812 = vset.pattern.permute.xlu0 0
        %813 = vperm.xlu0 %812, %v720
        %v814 = vpop.permute.xlu0 %813
        %817 = vset.pattern.permute.xlu0 0
        %818 = vperm.xlu0 %817, %v721
        %v819 = vpop.permute.xlu0 %818
        %822 = vset.pattern.permute.xlu0 0
        %823 = vperm.xlu0 %822, %v722
        %v824 = vpop.permute.xlu0 %823
        %827 = vset.pattern.permute.xlu0 0
        %828 = vperm.xlu0 %827, %v723
        %v829 = vpop.permute.xlu0 %828
        %832 = vset.pattern.permute.xlu0 0
        %833 = vperm.xlu0 %832, %v724
        %v834 = vpop.permute.xlu0 %833
        %837 = vset.pattern.permute.xlu0 0
        %838 = vperm.xlu0 %837, %v725
        %v839 = vpop.permute.xlu0 %838
        %842 = vset.pattern.permute.xlu0 0
        %843 = vperm.xlu0 %842, %v726
        %v844 = vpop.permute.xlu0 %843
        %847 = vset.pattern.permute.xlu0 0
        %848 = vperm.xlu0 %847, %v727
        %v849 = vpop.permute.xlu0 %848
        %852 = vset.pattern.permute.xlu0 0
        %853 = vperm.xlu0 %852, %v728
        %v854 = vpop.permute.xlu0 %853
        %857 = vset.pattern.permute.xlu0 0
        %858 = vperm.xlu0 %857, %v729
        %v859 = vpop.permute.xlu0 %858
        %862 = vset.pattern.permute.xlu0 0
        %863 = vperm.xlu0 %862, %v730
        %v864 = vpop.permute.xlu0 %863
        %867 = vset.pattern.permute.xlu0 0
        %868 = vperm.xlu0 %867, %v731
        %v869 = vpop.permute.xlu0 %868
        %872 = vset.pattern.permute.xlu0 0
        %873 = vperm.xlu0 %872, %v732
        %v874 = vpop.permute.xlu0 %873
        %877 = vset.pattern.permute.xlu0 0
        %878 = vperm.xlu0 %877, %v733
        %v879 = vpop.permute.xlu0 %878
        %882 = vset.pattern.permute.xlu0 0
        %883 = vperm.xlu0 %882, %v734
        %v884 = vpop.permute.xlu0 %883
        %887 = vset.pattern.permute.xlu0 0
        %888 = vperm.xlu0 %887, %v735
        %v889 = vpop.permute.xlu0 %888
        %892 = vset.pattern.permute.xlu0 0
        %893 = vperm.xlu0 %892, %v736
        %v894 = vpop.permute.xlu0 %893
        %897 = vset.pattern.permute.xlu0 0
        %898 = vperm.xlu0 %897, %v737
        %v899 = vpop.permute.xlu0 %898
        %902 = vset.pattern.permute.xlu0 0
        %903 = vperm.xlu0 %902, %v738
        %v904 = vpop.permute.xlu0 %903
        %907 = vset.pattern.permute.xlu0 0
        %908 = vperm.xlu0 %907, %v739
        %v909 = vpop.permute.xlu0 %908
        %912 = vset.pattern.permute.xlu0 0
        %913 = vperm.xlu0 %912, %v740
        %v914 = vpop.permute.xlu0 %913
        %917 = vset.pattern.permute.xlu0 0
        %918 = vperm.xlu0 %917, %v741
        %v919 = vpop.permute.xlu0 %918
        %922 = vset.pattern.permute.xlu0 0
        %923 = vperm.xlu0 %922, %v742
        %v924 = vpop.permute.xlu0 %923
        %927 = vset.pattern.permute.xlu0 0
        %928 = vperm.xlu0 %927, %v743
        %v929 = vpop.permute.xlu0 %928
        %932 = vset.pattern.permute.xlu0 0
        %933 = vperm.xlu0 %932, %v744
        %v934 = vpop.permute.xlu0 %933
        %937 = vset.pattern.permute.xlu0 0
        %938 = vperm.xlu0 %937, %v745
        %v939 = vpop.permute.xlu0 %938
        %942 = vset.pattern.permute.xlu0 0
        %943 = vperm.xlu0 %942, %v746
        %v944 = vpop.permute.xlu0 %943
        %v946 = vmul.f32 %v754, %v789
        %v947 = vmul.f32 %v755, %v794
        %v948 = vmul.f32 %v756, %v799
        %v949 = vmul.f32 %v757, %v804
        %v950 = vmul.f32 %v758, %v809
        %v951 = vmul.f32 %v759, %v814
        %v952 = vmul.f32 %v760, %v819
        %v953 = vmul.f32 %v761, %v824
        %v954 = vmul.f32 %v762, %v829
        %v955 = vmul.f32 %v763, %v834
        %v956 = vmul.f32 %v764, %v839
        %v957 = vmul.f32 %v765, %v844
        %v958 = vmul.f32 %v766, %v849
        %v959 = vmul.f32 %v767, %v854
        %v960 = vmul.f32 %v768, %v859
        %v961 = vmul.f32 %v769, %v864
        %v962 = vmul.f32 %v770, %v869
        %v963 = vmul.f32 %v771, %v874
        %v964 = vmul.f32 %v772, %v879
        %v965 = vmul.f32 %v773, %v884
        %v966 = vmul.f32 %v774, %v889
        %v967 = vmul.f32 %v775, %v894
        %v968 = vmul.f32 %v776, %v899
        %v969 = vmul.f32 %v777, %v904
        %v970 = vmul.f32 %v778, %v909
        %v971 = vmul.f32 %v779, %v914
        %v972 = vmul.f32 %v780, %v919
        %v973 = vmul.f32 %v781, %v924
        %v974 = vmul.f32 %v782, %v929
        %v975 = vmul.f32 %v783, %v934
        %v976 = vmul.f32 %v784, %v939
        %v977 = vmul.f32 %v785, %v944
        %v978 = vld [vmem:[%s4] sm:$0xf]
        %v980 = vsel %vm643, %v946, 0
        %v983 = vsel %vm643, %v947, 0
        %v986 = vsel %vm643, %v948, 0
        %v989 = vsel %vm643, %v949, 0
        %v992 = vsel %vm643, %v950, 0
        %v995 = vsel %vm643, %v951, 0
        %v998 = vsel %vm643, %v952, 0
        %v1001 = vsel %vm643, %v953, 0
        %v1004 = vsel %vm643, %v954, 0
        %v1007 = vsel %vm643, %v955, 0
        %v1010 = vsel %vm643, %v956, 0
        %v1013 = vsel %vm643, %v957, 0
        %v1016 = vsel %vm643, %v958, 0
        %v1019 = vsel %vm643, %v959, 0
        %v1022 = vsel %vm643, %v960, 0
        %v1025 = vsel %vm643, %v961, 0
        %v1028 = vsel %vm643, %v962, 0
        %v1031 = vsel %vm643, %v963, 0
        %v1034 = vsel %vm643, %v964, 0
        %v1037 = vsel %vm643, %v965, 0
        %v1040 = vsel %vm643, %v966, 0
        %v1043 = vsel %vm643, %v967, 0
        %v1046 = vsel %vm643, %v968, 0
        %v1049 = vsel %vm643, %v969, 0
        %v1052 = vsel %vm643, %v970, 0
        %v1055 = vsel %vm643, %v971, 0
        %v1058 = vsel %vm643, %v972, 0
        %v1061 = vsel %vm643, %v973, 0
        %v1064 = vsel %vm643, %v974, 0
        %v1067 = vsel %vm643, %v975, 0
        %v1070 = vsel %vm643, %v976, 0
        %v1073 = vsel %vm643, %v977, 0
        %vm1075 = vcmask 1043456
        %v1077 = vsel %vm1075, %v978, 0
        %1079 = vmatprep.subr.mxu0 0.0
        %1080 = vmatpush1.msra.mxu0 0.0
        %1081 = vmatprep.subr.mxu0 0.0
        %1082 = vmatpush1.msra.mxu0 0.0
        %1083 = vmatprep.subr.mxu0 0.0
        %1084 = vmatpush1.msra.mxu0 0.0
        %1085 = vmatprep.subr.mxu0 0.0
        %1086 = vmatpush1.msra.mxu0 0.0
        %1087 = vmatprep.subr.mxu0 0.0
        %1088 = vmatpush1.msra.mxu0 0.0
        %1089 = vmatprep.subr.mxu0 0.0
        %1090 = vmatpush1.msra.mxu0 0.0
        %1091 = vmatprep.subr.mxu0 0.0
        %1092 = vmatpush1.msra.mxu0 0.0
        %1093 = vmatprep.subr.mxu0 0.0
        %1094 = vmatpush1.msra.mxu0 0.0
        %1095 = vmatprep.subr.mxu0 0.0
        %1096 = vmatpush1.msra.mxu0 0.0
        %1097 = vmatprep.subr.mxu0 0.0
        %1098 = vmatpush1.msra.mxu0 0.0
        %1099 = vmatprep.subr.mxu0 0.0
        %1100 = vmatpush1.msra.mxu0 0.0
        %1101 = vmatprep.subr.mxu0 0.0
        %1102 = vmatpush1.msra.mxu0 0.0
        %1103 = vmatprep.subr.mxu0 0.0
        %1104 = vmatpush1.msra.mxu0 0.0
        %1105 = vmatprep.subr.mxu0 0.0
        %1106 = vmatpush1.msra.mxu0 0.0
        %1107 = vmatprep.subr.mxu0 0.0
        %1108 = vmatpush1.msra.mxu0 0.0
        %1109 = vmatprep.subr.mxu0 0.0
        %1110 = vmatpush1.msra.mxu0 %v1077
        %1111 = vmatprep.subr.mxu0 0.0
        %1112 = vmatpush2.msra.mxu0 0.0
        %1113 = vmatprep.subr.mxu0 0.0
        %1114 = vmatpush2.msra.mxu0 0.0
        %1115 = vmatprep.subr.mxu0 0.0
        %1116 = vmatpush2.msra.mxu0 0.0
        %1117 = vmatprep.subr.mxu0 0.0
        %1118 = vmatpush2.msra.mxu0 0.0
        %1119 = vmatprep.subr.mxu0 0.0
        %1120 = vmatpush2.msra.mxu0 0.0
        %1121 = vmatprep.subr.mxu0 0.0
        %1122 = vmatpush2.msra.mxu0 0.0
        %1123 = vmatprep.subr.mxu0 0.0
        %1124 = vmatpush2.msra.mxu0 0.0
        %1125 = vmatprep.subr.mxu0 0.0
        %1126 = vmatpush2.msra.mxu0 0.0
        %1127 = vmatprep.subr.mxu0 0.0
        %1128 = vmatpush2.msra.mxu0 0.0
        %1129 = vmatprep.subr.mxu0 0.0
        %1130 = vmatpush2.msra.mxu0 0.0
        %1131 = vmatprep.subr.mxu0 0.0
        %1132 = vmatpush2.msra.mxu0 0.0
        %1133 = vmatprep.subr.mxu0 0.0
        %1134 = vmatpush2.msra.mxu0 0.0
        %1135 = vmatprep.subr.mxu0 0.0
        %1136 = vmatpush2.msra.mxu0 0.0
        %1137 = vmatprep.subr.mxu0 0.0
        %1138 = vmatpush2.msra.mxu0 0.0
        %1139 = vmatprep.subr.mxu0 0.0
        %1140 = vmatpush2.msra.mxu0 0.0
        %1141 = vmatprep.subr.mxu0 0.0
        %1142 = vmatpush2.msra.mxu0 0.0
        %1143 = vmatprep.mubr.f32.mxu0 0.0
        %1144 = vmatmul.mubr.f32.gmra.mxu0 %v980
        %v1145 = vpop.f32.mrf.mxu0
        %v1146 = vadd.f32 0.0, %v1145
        %v1147 = vpop.f32.mrf.mxu0
        %1148 = vmatprep.mubr.f32.mxu0 0.0
        %1149 = vmatmul.mubr.f32.gmra.mxu0 %v983
        %v1150 = vpop.f32.mrf.mxu0
        %v1151 = vadd.f32 0.0, %v1150
        %v1152 = vpop.f32.mrf.mxu0
        %1153 = vmatprep.mubr.f32.mxu0 0.0
        %1154 = vmatmul.mubr.f32.gmra.mxu0 %v986
        %v1155 = vpop.f32.mrf.mxu0
        %v1156 = vadd.f32 0.0, %v1155
        %v1157 = vpop.f32.mrf.mxu0
        %1158 = vmatprep.mubr.f32.mxu0 0.0
        %1159 = vmatmul.mubr.f32.gmra.mxu0 %v989
        %v1160 = vpop.f32.mrf.mxu0
        %v1161 = vadd.f32 0.0, %v1160
        %v1162 = vpop.f32.mrf.mxu0
        %1163 = vmatprep.mubr.f32.mxu0 0.0
        %1164 = vmatmul.mubr.f32.gmra.mxu0 %v992
        %v1165 = vpop.f32.mrf.mxu0
        %v1166 = vadd.f32 0.0, %v1165
        %v1167 = vpop.f32.mrf.mxu0
        %1168 = vmatprep.mubr.f32.mxu0 0.0
        %1169 = vmatmul.mubr.f32.gmra.mxu0 %v995
        %v1170 = vpop.f32.mrf.mxu0
        %v1171 = vadd.f32 0.0, %v1170
        %v1172 = vpop.f32.mrf.mxu0
        %1173 = vmatprep.mubr.f32.mxu0 0.0
        %1174 = vmatmul.mubr.f32.gmra.mxu0 %v998
        %v1175 = vpop.f32.mrf.mxu0
        %v1176 = vadd.f32 0.0, %v1175
        %v1177 = vpop.f32.mrf.mxu0
        %1178 = vmatprep.mubr.f32.mxu0 0.0
        %1179 = vmatmul.mubr.f32.gmra.mxu0 %v1001
        %v1180 = vpop.f32.mrf.mxu0
        %v1181 = vadd.f32 0.0, %v1180
        %v1182 = vpop.f32.mrf.mxu0
        %1183 = vmatprep.mubr.f32.mxu0 0.0
        %1184 = vmatmul.mubr.f32.gmra.mxu0 %v1004
        %v1185 = vpop.f32.mrf.mxu0
        %v1186 = vadd.f32 0.0, %v1185
        %v1187 = vpop.f32.mrf.mxu0
        %1188 = vmatprep.mubr.f32.mxu0 0.0
        %1189 = vmatmul.mubr.f32.gmra.mxu0 %v1007
        %v1190 = vpop.f32.mrf.mxu0
        %v1191 = vadd.f32 0.0, %v1190
        %v1192 = vpop.f32.mrf.mxu0
        %1193 = vmatprep.mubr.f32.mxu0 0.0
        %1194 = vmatmul.mubr.f32.gmra.mxu0 %v1010
        %v1195 = vpop.f32.mrf.mxu0
        %v1196 = vadd.f32 0.0, %v1195
        %v1197 = vpop.f32.mrf.mxu0
        %1198 = vmatprep.mubr.f32.mxu0 0.0
        %1199 = vmatmul.mubr.f32.gmra.mxu0 %v1013
        %v1200 = vpop.f32.mrf.mxu0
        %v1201 = vadd.f32 0.0, %v1200
        %v1202 = vpop.f32.mrf.mxu0
        %1203 = vmatprep.mubr.f32.mxu0 0.0
        %1204 = vmatmul.mubr.f32.gmra.mxu0 %v1016
        %v1205 = vpop.f32.mrf.mxu0
        %v1206 = vadd.f32 0.0, %v1205
        %v1207 = vpop.f32.mrf.mxu0
        %1208 = vmatprep.mubr.f32.mxu0 0.0
        %1209 = vmatmul.mubr.f32.gmra.mxu0 %v1019
        %v1210 = vpop.f32.mrf.mxu0
        %v1211 = vadd.f32 0.0, %v1210
        %v1212 = vpop.f32.mrf.mxu0
        %1213 = vmatprep.mubr.f32.mxu0 0.0
        %1214 = vmatmul.mubr.f32.gmra.mxu0 %v1022
        %v1215 = vpop.f32.mrf.mxu0
        %v1216 = vadd.f32 0.0, %v1215
        %v1217 = vpop.f32.mrf.mxu0
        %1218 = vmatprep.mubr.f32.mxu0 0.0
        %1219 = vmatmul.mubr.f32.gmra.mxu0 %v1025
        %v1220 = vpop.f32.mrf.mxu0
        %v1221 = vadd.f32 0.0, %v1220
        %v1222 = vpop.f32.mrf.mxu0
        %1223 = vmatprep.mubr.f32.mxu0 0.0
        %1224 = vmatmul.mubr.f32.gmra.mxu0 %v1028
        %v1225 = vpop.f32.mrf.mxu0
        %v1226 = vadd.f32 0.0, %v1225
        %v1227 = vpop.f32.mrf.mxu0
        %1228 = vmatprep.mubr.f32.mxu0 0.0
        %1229 = vmatmul.mubr.f32.gmra.mxu0 %v1031
        %v1230 = vpop.f32.mrf.mxu0
        %v1231 = vadd.f32 0.0, %v1230
        %v1232 = vpop.f32.mrf.mxu0
        %1233 = vmatprep.mubr.f32.mxu0 0.0
        %1234 = vmatmul.mubr.f32.gmra.mxu0 %v1034
        %v1235 = vpop.f32.mrf.mxu0
        %v1236 = vadd.f32 0.0, %v1235
        %v1237 = vpop.f32.mrf.mxu0
        %1238 = vmatprep.mubr.f32.mxu0 0.0
        %1239 = vmatmul.mubr.f32.gmra.mxu0 %v1037
        %v1240 = vpop.f32.mrf.mxu0
        %v1241 = vadd.f32 0.0, %v1240
        %v1242 = vpop.f32.mrf.mxu0
        %1243 = vmatprep.mubr.f32.mxu0 0.0
        %1244 = vmatmul.mubr.f32.gmra.mxu0 %v1040
        %v1245 = vpop.f32.mrf.mxu0
        %v1246 = vadd.f32 0.0, %v1245
        %v1247 = vpop.f32.mrf.mxu0
        %1248 = vmatprep.mubr.f32.mxu0 0.0
        %1249 = vmatmul.mubr.f32.gmra.mxu0 %v1043
        %v1250 = vpop.f32.mrf.mxu0
        %v1251 = vadd.f32 0.0, %v1250
        %v1252 = vpop.f32.mrf.mxu0
        %1253 = vmatprep.mubr.f32.mxu0 0.0
        %1254 = vmatmul.mubr.f32.gmra.mxu0 %v1046
        %v1255 = vpop.f32.mrf.mxu0
        %v1256 = vadd.f32 0.0, %v1255
        %v1257 = vpop.f32.mrf.mxu0
        %1258 = vmatprep.mubr.f32.mxu0 0.0
        %1259 = vmatmul.mubr.f32.gmra.mxu0 %v1049
        %v1260 = vpop.f32.mrf.mxu0
        %v1261 = vadd.f32 0.0, %v1260
        %v1262 = vpop.f32.mrf.mxu0
        %1263 = vmatprep.mubr.f32.mxu0 0.0
        %1264 = vmatmul.mubr.f32.gmra.mxu0 %v1052
        %v1265 = vpop.f32.mrf.mxu0
        %v1266 = vadd.f32 0.0, %v1265
        %v1267 = vpop.f32.mrf.mxu0
        %1268 = vmatprep.mubr.f32.mxu0 0.0
        %1269 = vmatmul.mubr.f32.gmra.mxu0 %v1055
        %v1270 = vpop.f32.mrf.mxu0
        %v1271 = vadd.f32 0.0, %v1270
        %v1272 = vpop.f32.mrf.mxu0
        %1273 = vmatprep.mubr.f32.mxu0 0.0
        %1274 = vmatmul.mubr.f32.gmra.mxu0 %v1058
        %v1275 = vpop.f32.mrf.mxu0
        %v1276 = vadd.f32 0.0, %v1275
        %v1277 = vpop.f32.mrf.mxu0
        %1278 = vmatprep.mubr.f32.mxu0 0.0
        %1279 = vmatmul.mubr.f32.gmra.mxu0 %v1061
        %v1280 = vpop.f32.mrf.mxu0
        %v1281 = vadd.f32 0.0, %v1280
        %v1282 = vpop.f32.mrf.mxu0
        %1283 = vmatprep.mubr.f32.mxu0 0.0
        %1284 = vmatmul.mubr.f32.gmra.mxu0 %v1064
        %v1285 = vpop.f32.mrf.mxu0
        %v1286 = vadd.f32 0.0, %v1285
        %v1287 = vpop.f32.mrf.mxu0
        %1288 = vmatprep.mubr.f32.mxu0 0.0
        %1289 = vmatmul.mubr.f32.gmra.mxu0 %v1067
        %v1290 = vpop.f32.mrf.mxu0
        %v1291 = vadd.f32 0.0, %v1290
        %v1292 = vpop.f32.mrf.mxu0
        %1293 = vmatprep.mubr.f32.mxu0 0.0
        %1294 = vmatmul.mubr.f32.gmra.mxu0 %v1070
        %v1295 = vpop.f32.mrf.mxu0
        %v1296 = vadd.f32 0.0, %v1295
        %v1297 = vpop.f32.mrf.mxu0
        %1298 = vmatprep.mubr.f32.mxu0 0.0
        %1299 = vmatmul.mubr.f32.gmra.mxu0 %v1073
        %v1300 = vpop.f32.mrf.mxu0
        %v1301 = vadd.f32 0.0, %v1300
        %v1302 = vpop.f32.mrf.mxu0
        %1303 = vdwg.mxu0
        %v1304 = vadd.f32 %v752, %v1146
        %v1305 = vadd.f32 %v752, %v1151
        %v1306 = vadd.f32 %v752, %v1156
        %v1307 = vadd.f32 %v752, %v1161
        %v1308 = vadd.f32 %v752, %v1166
        %v1309 = vadd.f32 %v752, %v1171
        %v1310 = vadd.f32 %v752, %v1176
        %v1311 = vadd.f32 %v752, %v1181
        %v1312 = vadd.f32 %v752, %v1186
        %v1313 = vadd.f32 %v752, %v1191
        %v1314 = vadd.f32 %v752, %v1196
        %v1315 = vadd.f32 %v752, %v1201
        %v1316 = vadd.f32 %v752, %v1206
        %v1317 = vadd.f32 %v752, %v1211
        %v1318 = vadd.f32 %v752, %v1216
        %v1319 = vadd.f32 %v752, %v1221
        %v1320 = vadd.f32 %v752, %v1226
        %v1321 = vadd.f32 %v752, %v1231
        %v1322 = vadd.f32 %v752, %v1236
        %v1323 = vadd.f32 %v752, %v1241
        %v1324 = vadd.f32 %v752, %v1246
        %v1325 = vadd.f32 %v752, %v1251
        %v1326 = vadd.f32 %v752, %v1256
        %v1327 = vadd.f32 %v752, %v1261
        %v1328 = vadd.f32 %v752, %v1266
        %v1329 = vadd.f32 %v752, %v1271
        %v1330 = vadd.f32 %v752, %v1276
        %v1331 = vadd.f32 %v752, %v1281
        %v1332 = vadd.f32 %v752, %v1286
        %v1333 = vadd.f32 %v752, %v1291
        %v1334 = vadd.f32 %v752, %v1296
        %v1335 = vadd.f32 %v752, %v1301
        %v1336 = vld [vmem:[#allocation2 + $0x1] sm:$0xff]
        %v1337 = vld [vmem:[#allocation2 + $0x9] sm:$0xff]
        %v1338 = vld [vmem:[#allocation2 + $0x11] sm:$0xff]
        %v1339 = vld [vmem:[#allocation2 + $0x19] sm:$0xff]
        %v1340 = vld [vmem:[#allocation2 + $0x21] sm:$0xff]
        %v1341 = vld [vmem:[#allocation2 + $0x29] sm:$0xff]
        %v1342 = vld [vmem:[#allocation2 + $0x31] sm:$0xff]
        %v1343 = vld [vmem:[#allocation2 + $0x39] sm:$0xff]
        %v1344 = vld [vmem:[#allocation2 + $0x41] sm:$0xff]
        %v1345 = vld [vmem:[#allocation2 + $0x49] sm:$0xff]
        %v1346 = vld [vmem:[#allocation2 + $0x51] sm:$0xff]
        %v1347 = vld [vmem:[#allocation2 + $0x59] sm:$0xff]
        %v1348 = vld [vmem:[#allocation2 + $0x61] sm:$0xff]
        %v1349 = vld [vmem:[#allocation2 + $0x69] sm:$0xff]
        %v1350 = vld [vmem:[#allocation2 + $0x71] sm:$0xff]
        %v1351 = vld [vmem:[#allocation2 + $0x79] sm:$0xff]
        %v1352 = vld [vmem:[#allocation2 + $0x81] sm:$0xff]
        %v1353 = vld [vmem:[#allocation2 + $0x89] sm:$0xff]
        %v1354 = vld [vmem:[#allocation2 + $0x91] sm:$0xff]
        %v1355 = vld [vmem:[#allocation2 + $0x99] sm:$0xff]
        %v1356 = vld [vmem:[#allocation2 + $0xa1] sm:$0xff]
        %v1357 = vld [vmem:[#allocation2 + $0xa9] sm:$0xff]
        %v1358 = vld [vmem:[#allocation2 + $0xb1] sm:$0xff]
        %v1359 = vld [vmem:[#allocation2 + $0xb9] sm:$0xff]
        %v1360 = vld [vmem:[#allocation2 + $0xc1] sm:$0xff]
        %v1361 = vld [vmem:[#allocation2 + $0xc9] sm:$0xff]
        %v1362 = vld [vmem:[#allocation2 + $0xd1] sm:$0xff]
        %v1363 = vld [vmem:[#allocation2 + $0xd9] sm:$0xff]
        %v1364 = vld [vmem:[#allocation2 + $0xe1] sm:$0xff]
        %v1365 = vld [vmem:[#allocation2 + $0xe9] sm:$0xff]
        %v1366 = vld [vmem:[#allocation2 + $0xf1] sm:$0xff]
        %v1367 = vld [vmem:[#allocation2 + $0xf9] sm:$0xff]
        %s1368 = scalar_lea.vmem %s4, 4
        %v1369 = vld [vmem:[%s1368] sm:$0xf]
        %v1371 = vsel %vm643, %v1336, 0
        %v1374 = vsel %vm643, %v1337, 0
        %v1377 = vsel %vm643, %v1338, 0
        %v1380 = vsel %vm643, %v1339, 0
        %v1383 = vsel %vm643, %v1340, 0
        %v1386 = vsel %vm643, %v1341, 0
        %v1389 = vsel %vm643, %v1342, 0
        %v1392 = vsel %vm643, %v1343, 0
        %v1395 = vsel %vm643, %v1344, 0
        %v1398 = vsel %vm643, %v1345, 0
        %v1401 = vsel %vm643, %v1346, 0
        %v1404 = vsel %vm643, %v1347, 0
        %v1407 = vsel %vm643, %v1348, 0
        %v1410 = vsel %vm643, %v1349, 0
        %v1413 = vsel %vm643, %v1350, 0
        %v1416 = vsel %vm643, %v1351, 0
        %v1419 = vsel %vm643, %v1352, 0
        %v1422 = vsel %vm643, %v1353, 0
        %v1425 = vsel %vm643, %v1354, 0
        %v1428 = vsel %vm643, %v1355, 0
        %v1431 = vsel %vm643, %v1356, 0
        %v1434 = vsel %vm643, %v1357, 0
        %v1437 = vsel %vm643, %v1358, 0
        %v1440 = vsel %vm643, %v1359, 0
        %v1443 = vsel %vm643, %v1360, 0
        %v1446 = vsel %vm643, %v1361, 0
        %v1449 = vsel %vm643, %v1362, 0
        %v1452 = vsel %vm643, %v1363, 0
        %v1455 = vsel %vm643, %v1364, 0
        %v1458 = vsel %vm643, %v1365, 0
        %v1461 = vsel %vm643, %v1366, 0
        %v1464 = vsel %vm643, %v1367, 0
        %v1467 = vsel %vm1075, %v1369, 0
        %1469 = vmatprep.subr.mxu0 0.0
        %1470 = vmatpush1.msra.mxu0 0.0
        %1471 = vmatprep.subr.mxu0 0.0
        %1472 = vmatpush1.msra.mxu0 0.0
        %1473 = vmatprep.subr.mxu0 0.0
        %1474 = vmatpush1.msra.mxu0 0.0
        %1475 = vmatprep.subr.mxu0 0.0
        %1476 = vmatpush1.msra.mxu0 0.0
        %1477 = vmatprep.subr.mxu0 0.0
        %1478 = vmatpush1.msra.mxu0 0.0
        %1479 = vmatprep.subr.mxu0 0.0
        %1480 = vmatpush1.msra.mxu0 0.0
        %1481 = vmatprep.subr.mxu0 0.0
        %1482 = vmatpush1.msra.mxu0 0.0
        %1483 = vmatprep.subr.mxu0 0.0
        %1484 = vmatpush1.msra.mxu0 0.0
        %1485 = vmatprep.subr.mxu0 0.0
        %1486 = vmatpush1.msra.mxu0 0.0
        %1487 = vmatprep.subr.mxu0 0.0
        %1488 = vmatpush1.msra.mxu0 0.0
        %1489 = vmatprep.subr.mxu0 0.0
        %1490 = vmatpush1.msra.mxu0 0.0
        %1491 = vmatprep.subr.mxu0 0.0
        %1492 = vmatpush1.msra.mxu0 0.0
        %1493 = vmatprep.subr.mxu0 0.0
        %1494 = vmatpush1.msra.mxu0 0.0
        %1495 = vmatprep.subr.mxu0 0.0
        %1496 = vmatpush1.msra.mxu0 0.0
        %1497 = vmatprep.subr.mxu0 0.0
        %1498 = vmatpush1.msra.mxu0 0.0
        %1499 = vmatprep.subr.mxu0 0.0
        %1500 = vmatpush1.msra.mxu0 %v1467
        %1501 = vmatprep.subr.mxu0 0.0
        %1502 = vmatpush2.msra.mxu0 0.0
        %1503 = vmatprep.subr.mxu0 0.0
        %1504 = vmatpush2.msra.mxu0 0.0
        %1505 = vmatprep.subr.mxu0 0.0
        %1506 = vmatpush2.msra.mxu0 0.0
        %1507 = vmatprep.subr.mxu0 0.0
        %1508 = vmatpush2.msra.mxu0 0.0
        %1509 = vmatprep.subr.mxu0 0.0
        %1510 = vmatpush2.msra.mxu0 0.0
        %1511 = vmatprep.subr.mxu0 0.0
        %1512 = vmatpush2.msra.mxu0 0.0
        %1513 = vmatprep.subr.mxu0 0.0
        %1514 = vmatpush2.msra.mxu0 0.0
        %1515 = vmatprep.subr.mxu0 0.0
        %1516 = vmatpush2.msra.mxu0 0.0
        %1517 = vmatprep.subr.mxu0 0.0
        %1518 = vmatpush2.msra.mxu0 0.0
        %1519 = vmatprep.subr.mxu0 0.0
        %1520 = vmatpush2.msra.mxu0 0.0
        %1521 = vmatprep.subr.mxu0 0.0
        %1522 = vmatpush2.msra.mxu0 0.0
        %1523 = vmatprep.subr.mxu0 0.0
        %1524 = vmatpush2.msra.mxu0 0.0
        %1525 = vmatprep.subr.mxu0 0.0
        %1526 = vmatpush2.msra.mxu0 0.0
        %1527 = vmatprep.subr.mxu0 0.0
        %1528 = vmatpush2.msra.mxu0 0.0
        %1529 = vmatprep.subr.mxu0 0.0
        %1530 = vmatpush2.msra.mxu0 0.0
        %1531 = vmatprep.subr.mxu0 0.0
        %1532 = vmatpush2.msra.mxu0 0.0
        %1533 = vmatprep.mubr.f32.mxu0 0.0
        %1534 = vmatmul.mubr.f32.gmra.mxu0 %v1371
        %v1535 = vpop.f32.mrf.mxu0
        %v1536 = vadd.f32 0.0, %v1535
        %v1537 = vpop.f32.mrf.mxu0
        %1538 = vmatprep.mubr.f32.mxu0 0.0
        %1539 = vmatmul.mubr.f32.gmra.mxu0 %v1374
        %v1540 = vpop.f32.mrf.mxu0
        %v1541 = vadd.f32 0.0, %v1540
        %v1542 = vpop.f32.mrf.mxu0
        %1543 = vmatprep.mubr.f32.mxu0 0.0
        %1544 = vmatmul.mubr.f32.gmra.mxu0 %v1377
        %v1545 = vpop.f32.mrf.mxu0
        %v1546 = vadd.f32 0.0, %v1545
        %v1547 = vpop.f32.mrf.mxu0
        %1548 = vmatprep.mubr.f32.mxu0 0.0
        %1549 = vmatmul.mubr.f32.gmra.mxu0 %v1380
        %v1550 = vpop.f32.mrf.mxu0
        %v1551 = vadd.f32 0.0, %v1550
        %v1552 = vpop.f32.mrf.mxu0
        %1553 = vmatprep.mubr.f32.mxu0 0.0
        %1554 = vmatmul.mubr.f32.gmra.mxu0 %v1383
        %v1555 = vpop.f32.mrf.mxu0
        %v1556 = vadd.f32 0.0, %v1555
        %v1557 = vpop.f32.mrf.mxu0
        %1558 = vmatprep.mubr.f32.mxu0 0.0
        %1559 = vmatmul.mubr.f32.gmra.mxu0 %v1386
        %v1560 = vpop.f32.mrf.mxu0
        %v1561 = vadd.f32 0.0, %v1560
        %v1562 = vpop.f32.mrf.mxu0
        %1563 = vmatprep.mubr.f32.mxu0 0.0
        %1564 = vmatmul.mubr.f32.gmra.mxu0 %v1389
        %v1565 = vpop.f32.mrf.mxu0
        %v1566 = vadd.f32 0.0, %v1565
        %v1567 = vpop.f32.mrf.mxu0
        %1568 = vmatprep.mubr.f32.mxu0 0.0
        %1569 = vmatmul.mubr.f32.gmra.mxu0 %v1392
        %v1570 = vpop.f32.mrf.mxu0
        %v1571 = vadd.f32 0.0, %v1570
        %v1572 = vpop.f32.mrf.mxu0
        %1573 = vmatprep.mubr.f32.mxu0 0.0
        %1574 = vmatmul.mubr.f32.gmra.mxu0 %v1395
        %v1575 = vpop.f32.mrf.mxu0
        %v1576 = vadd.f32 0.0, %v1575
        %v1577 = vpop.f32.mrf.mxu0
        %1578 = vmatprep.mubr.f32.mxu0 0.0
        %1579 = vmatmul.mubr.f32.gmra.mxu0 %v1398
        %v1580 = vpop.f32.mrf.mxu0
        %v1581 = vadd.f32 0.0, %v1580
        %v1582 = vpop.f32.mrf.mxu0
        %1583 = vmatprep.mubr.f32.mxu0 0.0
        %1584 = vmatmul.mubr.f32.gmra.mxu0 %v1401
        %v1585 = vpop.f32.mrf.mxu0
        %v1586 = vadd.f32 0.0, %v1585
        %v1587 = vpop.f32.mrf.mxu0
        %1588 = vmatprep.mubr.f32.mxu0 0.0
        %1589 = vmatmul.mubr.f32.gmra.mxu0 %v1404
        %v1590 = vpop.f32.mrf.mxu0
        %v1591 = vadd.f32 0.0, %v1590
        %v1592 = vpop.f32.mrf.mxu0
        %1593 = vmatprep.mubr.f32.mxu0 0.0
        %1594 = vmatmul.mubr.f32.gmra.mxu0 %v1407
        %v1595 = vpop.f32.mrf.mxu0
        %v1596 = vadd.f32 0.0, %v1595
        %v1597 = vpop.f32.mrf.mxu0
        %1598 = vmatprep.mubr.f32.mxu0 0.0
        %1599 = vmatmul.mubr.f32.gmra.mxu0 %v1410
        %v1600 = vpop.f32.mrf.mxu0
        %v1601 = vadd.f32 0.0, %v1600
        %v1602 = vpop.f32.mrf.mxu0
        %1603 = vmatprep.mubr.f32.mxu0 0.0
        %1604 = vmatmul.mubr.f32.gmra.mxu0 %v1413
        %v1605 = vpop.f32.mrf.mxu0
        %v1606 = vadd.f32 0.0, %v1605
        %v1607 = vpop.f32.mrf.mxu0
        %1608 = vmatprep.mubr.f32.mxu0 0.0
        %1609 = vmatmul.mubr.f32.gmra.mxu0 %v1416
        %v1610 = vpop.f32.mrf.mxu0
        %v1611 = vadd.f32 0.0, %v1610
        %v1612 = vpop.f32.mrf.mxu0
        %1613 = vmatprep.mubr.f32.mxu0 0.0
        %1614 = vmatmul.mubr.f32.gmra.mxu0 %v1419
        %v1615 = vpop.f32.mrf.mxu0
        %v1616 = vadd.f32 0.0, %v1615
        %v1617 = vpop.f32.mrf.mxu0
        %1618 = vmatprep.mubr.f32.mxu0 0.0
        %1619 = vmatmul.mubr.f32.gmra.mxu0 %v1422
        %v1620 = vpop.f32.mrf.mxu0
        %v1621 = vadd.f32 0.0, %v1620
        %v1622 = vpop.f32.mrf.mxu0
        %1623 = vmatprep.mubr.f32.mxu0 0.0
        %1624 = vmatmul.mubr.f32.gmra.mxu0 %v1425
        %v1625 = vpop.f32.mrf.mxu0
        %v1626 = vadd.f32 0.0, %v1625
        %v1627 = vpop.f32.mrf.mxu0
        %1628 = vmatprep.mubr.f32.mxu0 0.0
        %1629 = vmatmul.mubr.f32.gmra.mxu0 %v1428
        %v1630 = vpop.f32.mrf.mxu0
        %v1631 = vadd.f32 0.0, %v1630
        %v1632 = vpop.f32.mrf.mxu0
        %1633 = vmatprep.mubr.f32.mxu0 0.0
        %1634 = vmatmul.mubr.f32.gmra.mxu0 %v1431
        %v1635 = vpop.f32.mrf.mxu0
        %v1636 = vadd.f32 0.0, %v1635
        %v1637 = vpop.f32.mrf.mxu0
        %1638 = vmatprep.mubr.f32.mxu0 0.0
        %1639 = vmatmul.mubr.f32.gmra.mxu0 %v1434
        %v1640 = vpop.f32.mrf.mxu0
        %v1641 = vadd.f32 0.0, %v1640
        %v1642 = vpop.f32.mrf.mxu0
        %1643 = vmatprep.mubr.f32.mxu0 0.0
        %1644 = vmatmul.mubr.f32.gmra.mxu0 %v1437
        %v1645 = vpop.f32.mrf.mxu0
        %v1646 = vadd.f32 0.0, %v1645
        %v1647 = vpop.f32.mrf.mxu0
        %1648 = vmatprep.mubr.f32.mxu0 0.0
        %1649 = vmatmul.mubr.f32.gmra.mxu0 %v1440
        %v1650 = vpop.f32.mrf.mxu0
        %v1651 = vadd.f32 0.0, %v1650
        %v1652 = vpop.f32.mrf.mxu0
        %1653 = vmatprep.mubr.f32.mxu0 0.0
        %1654 = vmatmul.mubr.f32.gmra.mxu0 %v1443
        %v1655 = vpop.f32.mrf.mxu0
        %v1656 = vadd.f32 0.0, %v1655
        %v1657 = vpop.f32.mrf.mxu0
        %1658 = vmatprep.mubr.f32.mxu0 0.0
        %1659 = vmatmul.mubr.f32.gmra.mxu0 %v1446
        %v1660 = vpop.f32.mrf.mxu0
        %v1661 = vadd.f32 0.0, %v1660
        %v1662 = vpop.f32.mrf.mxu0
        %1663 = vmatprep.mubr.f32.mxu0 0.0
        %1664 = vmatmul.mubr.f32.gmra.mxu0 %v1449
        %v1665 = vpop.f32.mrf.mxu0
        %v1666 = vadd.f32 0.0, %v1665
        %v1667 = vpop.f32.mrf.mxu0
        %1668 = vmatprep.mubr.f32.mxu0 0.0
        %1669 = vmatmul.mubr.f32.gmra.mxu0 %v1452
        %v1670 = vpop.f32.mrf.mxu0
        %v1671 = vadd.f32 0.0, %v1670
        %v1672 = vpop.f32.mrf.mxu0
        %1673 = vmatprep.mubr.f32.mxu0 0.0
        %1674 = vmatmul.mubr.f32.gmra.mxu0 %v1455
        %v1675 = vpop.f32.mrf.mxu0
        %v1676 = vadd.f32 0.0, %v1675
        %v1677 = vpop.f32.mrf.mxu0
        %1678 = vmatprep.mubr.f32.mxu0 0.0
        %1679 = vmatmul.mubr.f32.gmra.mxu0 %v1458
        %v1680 = vpop.f32.mrf.mxu0
        %v1681 = vadd.f32 0.0, %v1680
        %v1682 = vpop.f32.mrf.mxu0
        %1683 = vmatprep.mubr.f32.mxu0 0.0
        %1684 = vmatmul.mubr.f32.gmra.mxu0 %v1461
        %v1685 = vpop.f32.mrf.mxu0
        %v1686 = vadd.f32 0.0, %v1685
        %v1687 = vpop.f32.mrf.mxu0
        %1688 = vmatprep.mubr.f32.mxu0 0.0
        %1689 = vmatmul.mubr.f32.gmra.mxu0 %v1464
        %v1690 = vpop.f32.mrf.mxu0
        %v1691 = vadd.f32 0.0, %v1690
        %v1692 = vpop.f32.mrf.mxu0
        %1693 = vdwg.mxu0
        %v1694 = vadd.f32 %v1304, %v1536
        %v1695 = vadd.f32 %v1305, %v1541
        %v1696 = vadd.f32 %v1306, %v1546
        %v1697 = vadd.f32 %v1307, %v1551
        %v1698 = vadd.f32 %v1308, %v1556
        %v1699 = vadd.f32 %v1309, %v1561
        %v1700 = vadd.f32 %v1310, %v1566
        %v1701 = vadd.f32 %v1311, %v1571
        %v1702 = vadd.f32 %v1312, %v1576
        %v1703 = vadd.f32 %v1313, %v1581
        %v1704 = vadd.f32 %v1314, %v1586
        %v1705 = vadd.f32 %v1315, %v1591
        %v1706 = vadd.f32 %v1316, %v1596
        %v1707 = vadd.f32 %v1317, %v1601
        %v1708 = vadd.f32 %v1318, %v1606
        %v1709 = vadd.f32 %v1319, %v1611
        %v1710 = vadd.f32 %v1320, %v1616
        %v1711 = vadd.f32 %v1321, %v1621
        %v1712 = vadd.f32 %v1322, %v1626
        %v1713 = vadd.f32 %v1323, %v1631
        %v1714 = vadd.f32 %v1324, %v1636
        %v1715 = vadd.f32 %v1325, %v1641
        %v1716 = vadd.f32 %v1326, %v1646
        %v1717 = vadd.f32 %v1327, %v1651
        %v1718 = vadd.f32 %v1328, %v1656
        %v1719 = vadd.f32 %v1329, %v1661
        %v1720 = vadd.f32 %v1330, %v1666
        %v1721 = vadd.f32 %v1331, %v1671
        %v1722 = vadd.f32 %v1332, %v1676
        %v1723 = vadd.f32 %v1333, %v1681
        %v1724 = vadd.f32 %v1334, %v1686
        %v1725 = vadd.f32 %v1335, %v1691
        %v1726 = vld [vmem:[#allocation2 + $0x2] sm:$0xff]
        %v1727 = vld [vmem:[#allocation2 + $0xa] sm:$0xff]
        %v1728 = vld [vmem:[#allocation2 + $0x12] sm:$0xff]
        %v1729 = vld [vmem:[#allocation2 + $0x1a] sm:$0xff]
        %v1730 = vld [vmem:[#allocation2 + $0x22] sm:$0xff]
        %v1731 = vld [vmem:[#allocation2 + $0x2a] sm:$0xff]
        %v1732 = vld [vmem:[#allocation2 + $0x32] sm:$0xff]
        %v1733 = vld [vmem:[#allocation2 + $0x3a] sm:$0xff]
        %v1734 = vld [vmem:[#allocation2 + $0x42] sm:$0xff]
        %v1735 = vld [vmem:[#allocation2 + $0x4a] sm:$0xff]
        %v1736 = vld [vmem:[#allocation2 + $0x52] sm:$0xff]
        %v1737 = vld [vmem:[#allocation2 + $0x5a] sm:$0xff]
        %v1738 = vld [vmem:[#allocation2 + $0x62] sm:$0xff]
        %v1739 = vld [vmem:[#allocation2 + $0x6a] sm:$0xff]
        %v1740 = vld [vmem:[#allocation2 + $0x72] sm:$0xff]
        %v1741 = vld [vmem:[#allocation2 + $0x7a] sm:$0xff]
        %v1742 = vld [vmem:[#allocation2 + $0x82] sm:$0xff]
        %v1743 = vld [vmem:[#allocation2 + $0x8a] sm:$0xff]
        %v1744 = vld [vmem:[#allocation2 + $0x92] sm:$0xff]
        %v1745 = vld [vmem:[#allocation2 + $0x9a] sm:$0xff]
        %v1746 = vld [vmem:[#allocation2 + $0xa2] sm:$0xff]
        %v1747 = vld [vmem:[#allocation2 + $0xaa] sm:$0xff]
        %v1748 = vld [vmem:[#allocation2 + $0xb2] sm:$0xff]
        %v1749 = vld [vmem:[#allocation2 + $0xba] sm:$0xff]
        %v1750 = vld [vmem:[#allocation2 + $0xc2] sm:$0xff]
        %v1751 = vld [vmem:[#allocation2 + $0xca] sm:$0xff]
        %v1752 = vld [vmem:[#allocation2 + $0xd2] sm:$0xff]
        %v1753 = vld [vmem:[#allocation2 + $0xda] sm:$0xff]
        %v1754 = vld [vmem:[#allocation2 + $0xe2] sm:$0xff]
        %v1755 = vld [vmem:[#allocation2 + $0xea] sm:$0xff]
        %v1756 = vld [vmem:[#allocation2 + $0xf2] sm:$0xff]
        %v1757 = vld [vmem:[#allocation2 + $0xfa] sm:$0xff]
        %1759 = vset.pattern.permute.xlu0 0
        %1760 = vperm.xlu0 %1759, %v683
        %v1761 = vpop.permute.xlu0 %1760
        %1764 = vset.pattern.permute.xlu0 0
        %1765 = vperm.xlu0 %1764, %v684
        %v1766 = vpop.permute.xlu0 %1765
        %1769 = vset.pattern.permute.xlu0 0
        %1770 = vperm.xlu0 %1769, %v685
        %v1771 = vpop.permute.xlu0 %1770
        %1774 = vset.pattern.permute.xlu0 0
        %1775 = vperm.xlu0 %1774, %v686
        %v1776 = vpop.permute.xlu0 %1775
        %1779 = vset.pattern.permute.xlu0 0
        %1780 = vperm.xlu0 %1779, %v687
        %v1781 = vpop.permute.xlu0 %1780
        %1784 = vset.pattern.permute.xlu0 0
        %1785 = vperm.xlu0 %1784, %v688
        %v1786 = vpop.permute.xlu0 %1785
        %1789 = vset.pattern.permute.xlu0 0
        %1790 = vperm.xlu0 %1789, %v689
        %v1791 = vpop.permute.xlu0 %1790
        %1794 = vset.pattern.permute.xlu0 0
        %1795 = vperm.xlu0 %1794, %v690
        %v1796 = vpop.permute.xlu0 %1795
        %1799 = vset.pattern.permute.xlu0 0
        %1800 = vperm.xlu0 %1799, %v691
        %v1801 = vpop.permute.xlu0 %1800
        %1804 = vset.pattern.permute.xlu0 0
        %1805 = vperm.xlu0 %1804, %v692
        %v1806 = vpop.permute.xlu0 %1805
        %1809 = vset.pattern.permute.xlu0 0
        %1810 = vperm.xlu0 %1809, %v693
        %v1811 = vpop.permute.xlu0 %1810
        %1814 = vset.pattern.permute.xlu0 0
        %1815 = vperm.xlu0 %1814, %v694
        %v1816 = vpop.permute.xlu0 %1815
        %1819 = vset.pattern.permute.xlu0 0
        %1820 = vperm.xlu0 %1819, %v695
        %v1821 = vpop.permute.xlu0 %1820
        %1824 = vset.pattern.permute.xlu0 0
        %1825 = vperm.xlu0 %1824, %v696
        %v1826 = vpop.permute.xlu0 %1825
        %1829 = vset.pattern.permute.xlu0 0
        %1830 = vperm.xlu0 %1829, %v697
        %v1831 = vpop.permute.xlu0 %1830
        %1834 = vset.pattern.permute.xlu0 0
        %1835 = vperm.xlu0 %1834, %v698
        %v1836 = vpop.permute.xlu0 %1835
        %1839 = vset.pattern.permute.xlu0 0
        %1840 = vperm.xlu0 %1839, %v699
        %v1841 = vpop.permute.xlu0 %1840
        %1844 = vset.pattern.permute.xlu0 0
        %1845 = vperm.xlu0 %1844, %v700
        %v1846 = vpop.permute.xlu0 %1845
        %1849 = vset.pattern.permute.xlu0 0
        %1850 = vperm.xlu0 %1849, %v701
        %v1851 = vpop.permute.xlu0 %1850
        %1854 = vset.pattern.permute.xlu0 0
        %1855 = vperm.xlu0 %1854, %v702
        %v1856 = vpop.permute.xlu0 %1855
        %1859 = vset.pattern.permute.xlu0 0
        %1860 = vperm.xlu0 %1859, %v703
        %v1861 = vpop.permute.xlu0 %1860
        %1864 = vset.pattern.permute.xlu0 0
        %1865 = vperm.xlu0 %1864, %v704
        %v1866 = vpop.permute.xlu0 %1865
        %1869 = vset.pattern.permute.xlu0 0
        %1870 = vperm.xlu0 %1869, %v705
        %v1871 = vpop.permute.xlu0 %1870
        %1874 = vset.pattern.permute.xlu0 0
        %1875 = vperm.xlu0 %1874, %v706
        %v1876 = vpop.permute.xlu0 %1875
        %1879 = vset.pattern.permute.xlu0 0
        %1880 = vperm.xlu0 %1879, %v707
        %v1881 = vpop.permute.xlu0 %1880
        %1884 = vset.pattern.permute.xlu0 0
        %1885 = vperm.xlu0 %1884, %v708
        %v1886 = vpop.permute.xlu0 %1885
        %1889 = vset.pattern.permute.xlu0 0
        %1890 = vperm.xlu0 %1889, %v709
        %v1891 = vpop.permute.xlu0 %1890
        %1894 = vset.pattern.permute.xlu0 0
        %1895 = vperm.xlu0 %1894, %v710
        %v1896 = vpop.permute.xlu0 %1895
        %1899 = vset.pattern.permute.xlu0 0
        %1900 = vperm.xlu0 %1899, %v711
        %v1901 = vpop.permute.xlu0 %1900
        %1904 = vset.pattern.permute.xlu0 0
        %1905 = vperm.xlu0 %1904, %v712
        %v1906 = vpop.permute.xlu0 %1905
        %1909 = vset.pattern.permute.xlu0 0
        %1910 = vperm.xlu0 %1909, %v713
        %v1911 = vpop.permute.xlu0 %1910
        %1914 = vset.pattern.permute.xlu0 0
        %1915 = vperm.xlu0 %1914, %v714
        %v1916 = vpop.permute.xlu0 %1915
        %v1918 = vmul.f32 %v1726, %v1761
        %v1919 = vmul.f32 %v1727, %v1766
        %v1920 = vmul.f32 %v1728, %v1771
        %v1921 = vmul.f32 %v1729, %v1776
        %v1922 = vmul.f32 %v1730, %v1781
        %v1923 = vmul.f32 %v1731, %v1786
        %v1924 = vmul.f32 %v1732, %v1791
        %v1925 = vmul.f32 %v1733, %v1796
        %v1926 = vmul.f32 %v1734, %v1801
        %v1927 = vmul.f32 %v1735, %v1806
        %v1928 = vmul.f32 %v1736, %v1811
        %v1929 = vmul.f32 %v1737, %v1816
        %v1930 = vmul.f32 %v1738, %v1821
        %v1931 = vmul.f32 %v1739, %v1826
        %v1932 = vmul.f32 %v1740, %v1831
        %v1933 = vmul.f32 %v1741, %v1836
        %v1934 = vmul.f32 %v1742, %v1841
        %v1935 = vmul.f32 %v1743, %v1846
        %v1936 = vmul.f32 %v1744, %v1851
        %v1937 = vmul.f32 %v1745, %v1856
        %v1938 = vmul.f32 %v1746, %v1861
        %v1939 = vmul.f32 %v1747, %v1866
        %v1940 = vmul.f32 %v1748, %v1871
        %v1941 = vmul.f32 %v1749, %v1876
        %v1942 = vmul.f32 %v1750, %v1881
        %v1943 = vmul.f32 %v1751, %v1886
        %v1944 = vmul.f32 %v1752, %v1891
        %v1945 = vmul.f32 %v1753, %v1896
        %v1946 = vmul.f32 %v1754, %v1901
        %v1947 = vmul.f32 %v1755, %v1906
        %v1948 = vmul.f32 %v1756, %v1911
        %v1949 = vmul.f32 %v1757, %v1916
        %s1950 = scalar_lea.vmem %s4, 8
        %v1951 = vld [vmem:[%s1950] sm:$0xf]
        %v1953 = vsel %vm643, %v1918, 0
        %v1956 = vsel %vm643, %v1919, 0
        %v1959 = vsel %vm643, %v1920, 0
        %v1962 = vsel %vm643, %v1921, 0
        %v1965 = vsel %vm643, %v1922, 0
        %v1968 = vsel %vm643, %v1923, 0
        %v1971 = vsel %vm643, %v1924, 0
        %v1974 = vsel %vm643, %v1925, 0
        %v1977 = vsel %vm643, %v1926, 0
        %v1980 = vsel %vm643, %v1927, 0
        %v1983 = vsel %vm643, %v1928, 0
        %v1986 = vsel %vm643, %v1929, 0
        %v1989 = vsel %vm643, %v1930, 0
        %v1992 = vsel %vm643, %v1931, 0
        %v1995 = vsel %vm643, %v1932, 0
        %v1998 = vsel %vm643, %v1933, 0
        %v2001 = vsel %vm643, %v1934, 0
        %v2004 = vsel %vm643, %v1935, 0
        %v2007 = vsel %vm643, %v1936, 0
        %v2010 = vsel %vm643, %v1937, 0
        %v2013 = vsel %vm643, %v1938, 0
        %v2016 = vsel %vm643, %v1939, 0
        %v2019 = vsel %vm643, %v1940, 0
        %v2022 = vsel %vm643, %v1941, 0
        %v2025 = vsel %vm643, %v1942, 0
        %v2028 = vsel %vm643, %v1943, 0
        %v2031 = vsel %vm643, %v1944, 0
        %v2034 = vsel %vm643, %v1945, 0
        %v2037 = vsel %vm643, %v1946, 0
        %v2040 = vsel %vm643, %v1947, 0
        %v2043 = vsel %vm643, %v1948, 0
        %v2046 = vsel %vm643, %v1949, 0
        %v2049 = vsel %vm1075, %v1951, 0
        %2051 = vmatprep.subr.mxu0 0.0
        %2052 = vmatpush1.msra.mxu0 0.0
        %2053 = vmatprep.subr.mxu0 0.0
        %2054 = vmatpush1.msra.mxu0 0.0
        %2055 = vmatprep.subr.mxu0 0.0
        %2056 = vmatpush1.msra.mxu0 0.0
        %2057 = vmatprep.subr.mxu0 0.0
        %2058 = vmatpush1.msra.mxu0 0.0
        %2059 = vmatprep.subr.mxu0 0.0
        %2060 = vmatpush1.msra.mxu0 0.0
        %2061 = vmatprep.subr.mxu0 0.0
        %2062 = vmatpush1.msra.mxu0 0.0
        %2063 = vmatprep.subr.mxu0 0.0
        %2064 = vmatpush1.msra.mxu0 0.0
        %2065 = vmatprep.subr.mxu0 0.0
        %2066 = vmatpush1.msra.mxu0 0.0
        %2067 = vmatprep.subr.mxu0 0.0
        %2068 = vmatpush1.msra.mxu0 0.0
        %2069 = vmatprep.subr.mxu0 0.0
        %2070 = vmatpush1.msra.mxu0 0.0
        %2071 = vmatprep.subr.mxu0 0.0
        %2072 = vmatpush1.msra.mxu0 0.0
        %2073 = vmatprep.subr.mxu0 0.0
        %2074 = vmatpush1.msra.mxu0 0.0
        %2075 = vmatprep.subr.mxu0 0.0
        %2076 = vmatpush1.msra.mxu0 0.0
        %2077 = vmatprep.subr.mxu0 0.0
        %2078 = vmatpush1.msra.mxu0 0.0
        %2079 = vmatprep.subr.mxu0 0.0
        %2080 = vmatpush1.msra.mxu0 0.0
        %2081 = vmatprep.subr.mxu0 0.0
        %2082 = vmatpush1.msra.mxu0 %v2049
        %2083 = vmatprep.subr.mxu0 0.0
        %2084 = vmatpush2.msra.mxu0 0.0
        %2085 = vmatprep.subr.mxu0 0.0
        %2086 = vmatpush2.msra.mxu0 0.0
        %2087 = vmatprep.subr.mxu0 0.0
        %2088 = vmatpush2.msra.mxu0 0.0
        %2089 = vmatprep.subr.mxu0 0.0
        %2090 = vmatpush2.msra.mxu0 0.0
        %2091 = vmatprep.subr.mxu0 0.0
        %2092 = vmatpush2.msra.mxu0 0.0
        %2093 = vmatprep.subr.mxu0 0.0
        %2094 = vmatpush2.msra.mxu0 0.0
        %2095 = vmatprep.subr.mxu0 0.0
        %2096 = vmatpush2.msra.mxu0 0.0
        %2097 = vmatprep.subr.mxu0 0.0
        %2098 = vmatpush2.msra.mxu0 0.0
        %2099 = vmatprep.subr.mxu0 0.0
        %2100 = vmatpush2.msra.mxu0 0.0
        %2101 = vmatprep.subr.mxu0 0.0
        %2102 = vmatpush2.msra.mxu0 0.0
        %2103 = vmatprep.subr.mxu0 0.0
        %2104 = vmatpush2.msra.mxu0 0.0
        %2105 = vmatprep.subr.mxu0 0.0
        %2106 = vmatpush2.msra.mxu0 0.0
        %2107 = vmatprep.subr.mxu0 0.0
        %2108 = vmatpush2.msra.mxu0 0.0
        %2109 = vmatprep.subr.mxu0 0.0
        %2110 = vmatpush2.msra.mxu0 0.0
        %2111 = vmatprep.subr.mxu0 0.0
        %2112 = vmatpush2.msra.mxu0 0.0
        %2113 = vmatprep.subr.mxu0 0.0
        %2114 = vmatpush2.msra.mxu0 0.0
        %2115 = vmatprep.mubr.f32.mxu0 0.0
        %2116 = vmatmul.mubr.f32.gmra.mxu0 %v1953
        %v2117 = vpop.f32.mrf.mxu0
        %v2118 = vadd.f32 0.0, %v2117
        %v2119 = vpop.f32.mrf.mxu0
        %2120 = vmatprep.mubr.f32.mxu0 0.0
        %2121 = vmatmul.mubr.f32.gmra.mxu0 %v1956
        %v2122 = vpop.f32.mrf.mxu0
        %v2123 = vadd.f32 0.0, %v2122
        %v2124 = vpop.f32.mrf.mxu0
        %2125 = vmatprep.mubr.f32.mxu0 0.0
        %2126 = vmatmul.mubr.f32.gmra.mxu0 %v1959
        %v2127 = vpop.f32.mrf.mxu0
        %v2128 = vadd.f32 0.0, %v2127
        %v2129 = vpop.f32.mrf.mxu0
        %2130 = vmatprep.mubr.f32.mxu0 0.0
        %2131 = vmatmul.mubr.f32.gmra.mxu0 %v1962
        %v2132 = vpop.f32.mrf.mxu0
        %v2133 = vadd.f32 0.0, %v2132
        %v2134 = vpop.f32.mrf.mxu0
        %2135 = vmatprep.mubr.f32.mxu0 0.0
        %2136 = vmatmul.mubr.f32.gmra.mxu0 %v1965
        %v2137 = vpop.f32.mrf.mxu0
        %v2138 = vadd.f32 0.0, %v2137
        %v2139 = vpop.f32.mrf.mxu0
        %2140 = vmatprep.mubr.f32.mxu0 0.0
        %2141 = vmatmul.mubr.f32.gmra.mxu0 %v1968
        %v2142 = vpop.f32.mrf.mxu0
        %v2143 = vadd.f32 0.0, %v2142
        %v2144 = vpop.f32.mrf.mxu0
        %2145 = vmatprep.mubr.f32.mxu0 0.0
        %2146 = vmatmul.mubr.f32.gmra.mxu0 %v1971
        %v2147 = vpop.f32.mrf.mxu0
        %v2148 = vadd.f32 0.0, %v2147
        %v2149 = vpop.f32.mrf.mxu0
        %2150 = vmatprep.mubr.f32.mxu0 0.0
        %2151 = vmatmul.mubr.f32.gmra.mxu0 %v1974
        %v2152 = vpop.f32.mrf.mxu0
        %v2153 = vadd.f32 0.0, %v2152
        %v2154 = vpop.f32.mrf.mxu0
        %2155 = vmatprep.mubr.f32.mxu0 0.0
        %2156 = vmatmul.mubr.f32.gmra.mxu0 %v1977
        %v2157 = vpop.f32.mrf.mxu0
        %v2158 = vadd.f32 0.0, %v2157
        %v2159 = vpop.f32.mrf.mxu0
        %2160 = vmatprep.mubr.f32.mxu0 0.0
        %2161 = vmatmul.mubr.f32.gmra.mxu0 %v1980
        %v2162 = vpop.f32.mrf.mxu0
        %v2163 = vadd.f32 0.0, %v2162
        %v2164 = vpop.f32.mrf.mxu0
        %2165 = vmatprep.mubr.f32.mxu0 0.0
        %2166 = vmatmul.mubr.f32.gmra.mxu0 %v1983
        %v2167 = vpop.f32.mrf.mxu0
        %v2168 = vadd.f32 0.0, %v2167
        %v2169 = vpop.f32.mrf.mxu0
        %2170 = vmatprep.mubr.f32.mxu0 0.0
        %2171 = vmatmul.mubr.f32.gmra.mxu0 %v1986
        %v2172 = vpop.f32.mrf.mxu0
        %v2173 = vadd.f32 0.0, %v2172
        %v2174 = vpop.f32.mrf.mxu0
        %2175 = vmatprep.mubr.f32.mxu0 0.0
        %2176 = vmatmul.mubr.f32.gmra.mxu0 %v1989
        %v2177 = vpop.f32.mrf.mxu0
        %v2178 = vadd.f32 0.0, %v2177
        %v2179 = vpop.f32.mrf.mxu0
        %2180 = vmatprep.mubr.f32.mxu0 0.0
        %2181 = vmatmul.mubr.f32.gmra.mxu0 %v1992
        %v2182 = vpop.f32.mrf.mxu0
        %v2183 = vadd.f32 0.0, %v2182
        %v2184 = vpop.f32.mrf.mxu0
        %2185 = vmatprep.mubr.f32.mxu0 0.0
        %2186 = vmatmul.mubr.f32.gmra.mxu0 %v1995
        %v2187 = vpop.f32.mrf.mxu0
        %v2188 = vadd.f32 0.0, %v2187
        %v2189 = vpop.f32.mrf.mxu0
        %2190 = vmatprep.mubr.f32.mxu0 0.0
        %2191 = vmatmul.mubr.f32.gmra.mxu0 %v1998
        %v2192 = vpop.f32.mrf.mxu0
        %v2193 = vadd.f32 0.0, %v2192
        %v2194 = vpop.f32.mrf.mxu0
        %2195 = vmatprep.mubr.f32.mxu0 0.0
        %2196 = vmatmul.mubr.f32.gmra.mxu0 %v2001
        %v2197 = vpop.f32.mrf.mxu0
        %v2198 = vadd.f32 0.0, %v2197
        %v2199 = vpop.f32.mrf.mxu0
        %2200 = vmatprep.mubr.f32.mxu0 0.0
        %2201 = vmatmul.mubr.f32.gmra.mxu0 %v2004
        %v2202 = vpop.f32.mrf.mxu0
        %v2203 = vadd.f32 0.0, %v2202
        %v2204 = vpop.f32.mrf.mxu0
        %2205 = vmatprep.mubr.f32.mxu0 0.0
        %2206 = vmatmul.mubr.f32.gmra.mxu0 %v2007
        %v2207 = vpop.f32.mrf.mxu0
        %v2208 = vadd.f32 0.0, %v2207
        %v2209 = vpop.f32.mrf.mxu0
        %2210 = vmatprep.mubr.f32.mxu0 0.0
        %2211 = vmatmul.mubr.f32.gmra.mxu0 %v2010
        %v2212 = vpop.f32.mrf.mxu0
        %v2213 = vadd.f32 0.0, %v2212
        %v2214 = vpop.f32.mrf.mxu0
        %2215 = vmatprep.mubr.f32.mxu0 0.0
        %2216 = vmatmul.mubr.f32.gmra.mxu0 %v2013
        %v2217 = vpop.f32.mrf.mxu0
        %v2218 = vadd.f32 0.0, %v2217
        %v2219 = vpop.f32.mrf.mxu0
        %2220 = vmatprep.mubr.f32.mxu0 0.0
        %2221 = vmatmul.mubr.f32.gmra.mxu0 %v2016
        %v2222 = vpop.f32.mrf.mxu0
        %v2223 = vadd.f32 0.0, %v2222
        %v2224 = vpop.f32.mrf.mxu0
        %2225 = vmatprep.mubr.f32.mxu0 0.0
        %2226 = vmatmul.mubr.f32.gmra.mxu0 %v2019
        %v2227 = vpop.f32.mrf.mxu0
        %v2228 = vadd.f32 0.0, %v2227
        %v2229 = vpop.f32.mrf.mxu0
        %2230 = vmatprep.mubr.f32.mxu0 0.0
        %2231 = vmatmul.mubr.f32.gmra.mxu0 %v2022
        %v2232 = vpop.f32.mrf.mxu0
        %v2233 = vadd.f32 0.0, %v2232
        %v2234 = vpop.f32.mrf.mxu0
        %2235 = vmatprep.mubr.f32.mxu0 0.0
        %2236 = vmatmul.mubr.f32.gmra.mxu0 %v2025
        %v2237 = vpop.f32.mrf.mxu0
        %v2238 = vadd.f32 0.0, %v2237
        %v2239 = vpop.f32.mrf.mxu0
        %2240 = vmatprep.mubr.f32.mxu0 0.0
        %2241 = vmatmul.mubr.f32.gmra.mxu0 %v2028
        %v2242 = vpop.f32.mrf.mxu0
        %v2243 = vadd.f32 0.0, %v2242
        %v2244 = vpop.f32.mrf.mxu0
        %2245 = vmatprep.mubr.f32.mxu0 0.0
        %2246 = vmatmul.mubr.f32.gmra.mxu0 %v2031
        %v2247 = vpop.f32.mrf.mxu0
        %v2248 = vadd.f32 0.0, %v2247
        %v2249 = vpop.f32.mrf.mxu0
        %2250 = vmatprep.mubr.f32.mxu0 0.0
        %2251 = vmatmul.mubr.f32.gmra.mxu0 %v2034
        %v2252 = vpop.f32.mrf.mxu0
        %v2253 = vadd.f32 0.0, %v2252
        %v2254 = vpop.f32.mrf.mxu0
        %2255 = vmatprep.mubr.f32.mxu0 0.0
        %2256 = vmatmul.mubr.f32.gmra.mxu0 %v2037
        %v2257 = vpop.f32.mrf.mxu0
        %v2258 = vadd.f32 0.0, %v2257
        %v2259 = vpop.f32.mrf.mxu0
        %2260 = vmatprep.mubr.f32.mxu0 0.0
        %2261 = vmatmul.mubr.f32.gmra.mxu0 %v2040
        %v2262 = vpop.f32.mrf.mxu0
        %v2263 = vadd.f32 0.0, %v2262
        %v2264 = vpop.f32.mrf.mxu0
        %2265 = vmatprep.mubr.f32.mxu0 0.0
        %2266 = vmatmul.mubr.f32.gmra.mxu0 %v2043
        %v2267 = vpop.f32.mrf.mxu0
        %v2268 = vadd.f32 0.0, %v2267
        %v2269 = vpop.f32.mrf.mxu0
        %2270 = vmatprep.mubr.f32.mxu0 0.0
        %2271 = vmatmul.mubr.f32.gmra.mxu0 %v2046
        %v2272 = vpop.f32.mrf.mxu0
        %v2273 = vadd.f32 0.0, %v2272
        %v2274 = vpop.f32.mrf.mxu0
        %2275 = vdwg.mxu0
        %v2276 = vadd.f32 %v1694, %v2118
        %v2277 = vadd.f32 %v1695, %v2123
        %v2278 = vadd.f32 %v1696, %v2128
        %v2279 = vadd.f32 %v1697, %v2133
        %v2280 = vadd.f32 %v1698, %v2138
        %v2281 = vadd.f32 %v1699, %v2143
        %v2282 = vadd.f32 %v1700, %v2148
        %v2283 = vadd.f32 %v1701, %v2153
        %v2284 = vadd.f32 %v1702, %v2158
        %v2285 = vadd.f32 %v1703, %v2163
        %v2286 = vadd.f32 %v1704, %v2168
        %v2287 = vadd.f32 %v1705, %v2173
        %v2288 = vadd.f32 %v1706, %v2178
        %v2289 = vadd.f32 %v1707, %v2183
        %v2290 = vadd.f32 %v1708, %v2188
        %v2291 = vadd.f32 %v1709, %v2193
        %v2292 = vadd.f32 %v1710, %v2198
        %v2293 = vadd.f32 %v1711, %v2203
        %v2294 = vadd.f32 %v1712, %v2208
        %v2295 = vadd.f32 %v1713, %v2213
        %v2296 = vadd.f32 %v1714, %v2218
        %v2297 = vadd.f32 %v1715, %v2223
        %v2298 = vadd.f32 %v1716, %v2228
        %v2299 = vadd.f32 %v1717, %v2233
        %v2300 = vadd.f32 %v1718, %v2238
        %v2301 = vadd.f32 %v1719, %v2243
        %v2302 = vadd.f32 %v1720, %v2248
        %v2303 = vadd.f32 %v1721, %v2253
        %v2304 = vadd.f32 %v1722, %v2258
        %v2305 = vadd.f32 %v1723, %v2263
        %v2306 = vadd.f32 %v1724, %v2268
        %v2307 = vadd.f32 %v1725, %v2273
        %v2308 = vld [vmem:[#allocation2 + $0x10] sm:$0xff]
        %v2309 = vld [vmem:[#allocation2 + $0x18] sm:$0xff]
        %v2310 = vld [vmem:[#allocation2 + $0x20] sm:$0xff]
        %v2311 = vld [vmem:[#allocation2 + $0x28] sm:$0xff]
        %v2312 = vld [vmem:[#allocation2 + $0x30] sm:$0xff]
        %v2313 = vld [vmem:[#allocation2 + $0x38] sm:$0xff]
        %v2314 = vld [vmem:[#allocation2 + $0x40] sm:$0xff]
        %v2315 = vld [vmem:[#allocation2 + $0x48] sm:$0xff]
        %v2316 = vld [vmem:[#allocation2 + $0x50] sm:$0xff]
        %v2317 = vld [vmem:[#allocation2 + $0x58] sm:$0xff]
        %v2318 = vld [vmem:[#allocation2 + $0x60] sm:$0xff]
        %v2319 = vld [vmem:[#allocation2 + $0x68] sm:$0xff]
        %v2320 = vld [vmem:[#allocation2 + $0x70] sm:$0xff]
        %v2321 = vld [vmem:[#allocation2 + $0x78] sm:$0xff]
        %v2322 = vld [vmem:[#allocation2 + $0x80] sm:$0xff]
        %v2323 = vld [vmem:[#allocation2 + $0x88] sm:$0xff]
        %v2324 = vld [vmem:[#allocation2 + $0x90] sm:$0xff]
        %v2325 = vld [vmem:[#allocation2 + $0x98] sm:$0xff]
        %v2326 = vld [vmem:[#allocation2 + $0xa0] sm:$0xff]
        %v2327 = vld [vmem:[#allocation2 + $0xa8] sm:$0xff]
        %v2328 = vld [vmem:[#allocation2 + $0xb0] sm:$0xff]
        %v2329 = vld [vmem:[#allocation2 + $0xb8] sm:$0xff]
        %v2330 = vld [vmem:[#allocation2 + $0xc0] sm:$0xff]
        %v2331 = vld [vmem:[#allocation2 + $0xc8] sm:$0xff]
        %v2332 = vld [vmem:[#allocation2 + $0xd0] sm:$0xff]
        %v2333 = vld [vmem:[#allocation2 + $0xd8] sm:$0xff]
        %v2334 = vld [vmem:[#allocation2 + $0xe0] sm:$0xff]
        %v2335 = vld [vmem:[#allocation2 + $0xe8] sm:$0xff]
        %v2336 = vld [vmem:[#allocation2 + $0xf0] sm:$0xff]
        %v2337 = vld [vmem:[#allocation2 + $0xf8] sm:$0xff]
        %v2338 = vld [vmem:[#allocation2 + $0x100] sm:$0xff]
        %v2339 = vld [vmem:[#allocation2 + $0x108] sm:$0xff]
        %v2340 = vmul.f32 %v2308, %v789
        %v2341 = vmul.f32 %v2309, %v794
        %v2342 = vmul.f32 %v2310, %v799
        %v2343 = vmul.f32 %v2311, %v804
        %v2344 = vmul.f32 %v2312, %v809
        %v2345 = vmul.f32 %v2313, %v814
        %v2346 = vmul.f32 %v2314, %v819
        %v2347 = vmul.f32 %v2315, %v824
        %v2348 = vmul.f32 %v2316, %v829
        %v2349 = vmul.f32 %v2317, %v834
        %v2350 = vmul.f32 %v2318, %v839
        %v2351 = vmul.f32 %v2319, %v844
        %v2352 = vmul.f32 %v2320, %v849
        %v2353 = vmul.f32 %v2321, %v854
        %v2354 = vmul.f32 %v2322, %v859
        %v2355 = vmul.f32 %v2323, %v864
        %v2356 = vmul.f32 %v2324, %v869
        %v2357 = vmul.f32 %v2325, %v874
        %v2358 = vmul.f32 %v2326, %v879
        %v2359 = vmul.f32 %v2327, %v884
        %v2360 = vmul.f32 %v2328, %v889
        %v2361 = vmul.f32 %v2329, %v894
        %v2362 = vmul.f32 %v2330, %v899
        %v2363 = vmul.f32 %v2331, %v904
        %v2364 = vmul.f32 %v2332, %v909
        %v2365 = vmul.f32 %v2333, %v914
        %v2366 = vmul.f32 %v2334, %v919
        %v2367 = vmul.f32 %v2335, %v924
        %v2368 = vmul.f32 %v2336, %v929
        %v2369 = vmul.f32 %v2337, %v934
        %v2370 = vmul.f32 %v2338, %v939
        %v2371 = vmul.f32 %v2339, %v944
        %s2372 = scalar_lea.vmem %s4, 12
        %v2373 = vld [vmem:[%s2372] sm:$0xf]
        %v2375 = vsel %vm643, %v2340, 0
        %v2378 = vsel %vm643, %v2341, 0
        %v2381 = vsel %vm643, %v2342, 0
        %v2384 = vsel %vm643, %v2343, 0
        %v2387 = vsel %vm643, %v2344, 0
        %v2390 = vsel %vm643, %v2345, 0
        %v2393 = vsel %vm643, %v2346, 0
        %v2396 = vsel %vm643, %v2347, 0
        %v2399 = vsel %vm643, %v2348, 0
        %v2402 = vsel %vm643, %v2349, 0
        %v2405 = vsel %vm643, %v2350, 0
        %v2408 = vsel %vm643, %v2351, 0
        %v2411 = vsel %vm643, %v2352, 0
        %v2414 = vsel %vm643, %v2353, 0
        %v2417 = vsel %vm643, %v2354, 0
        %v2420 = vsel %vm643, %v2355, 0
        %v2423 = vsel %vm643, %v2356, 0
        %v2426 = vsel %vm643, %v2357, 0
        %v2429 = vsel %vm643, %v2358, 0
        %v2432 = vsel %vm643, %v2359, 0
        %v2435 = vsel %vm643, %v2360, 0
        %v2438 = vsel %vm643, %v2361, 0
        %v2441 = vsel %vm643, %v2362, 0
        %v2444 = vsel %vm643, %v2363, 0
        %v2447 = vsel %vm643, %v2364, 0
        %v2450 = vsel %vm643, %v2365, 0
        %v2453 = vsel %vm643, %v2366, 0
        %v2456 = vsel %vm643, %v2367, 0
        %v2459 = vsel %vm643, %v2368, 0
        %v2462 = vsel %vm643, %v2369, 0
        %v2465 = vsel %vm643, %v2370, 0
        %v2468 = vsel %vm643, %v2371, 0
        %v2471 = vsel %vm1075, %v2373, 0
        %2473 = vmatprep.subr.mxu0 0.0
        %2474 = vmatpush1.msra.mxu0 0.0
        %2475 = vmatprep.subr.mxu0 0.0
        %2476 = vmatpush1.msra.mxu0 0.0
        %2477 = vmatprep.subr.mxu0 0.0
        %2478 = vmatpush1.msra.mxu0 0.0
        %2479 = vmatprep.subr.mxu0 0.0
        %2480 = vmatpush1.msra.mxu0 0.0
        %2481 = vmatprep.subr.mxu0 0.0
        %2482 = vmatpush1.msra.mxu0 0.0
        %2483 = vmatprep.subr.mxu0 0.0
        %2484 = vmatpush1.msra.mxu0 0.0
        %2485 = vmatprep.subr.mxu0 0.0
        %2486 = vmatpush1.msra.mxu0 0.0
        %2487 = vmatprep.subr.mxu0 0.0
        %2488 = vmatpush1.msra.mxu0 0.0
        %2489 = vmatprep.subr.mxu0 0.0
        %2490 = vmatpush1.msra.mxu0 0.0
        %2491 = vmatprep.subr.mxu0 0.0
        %2492 = vmatpush1.msra.mxu0 0.0
        %2493 = vmatprep.subr.mxu0 0.0
        %2494 = vmatpush1.msra.mxu0 0.0
        %2495 = vmatprep.subr.mxu0 0.0
        %2496 = vmatpush1.msra.mxu0 0.0
        %2497 = vmatprep.subr.mxu0 0.0
        %2498 = vmatpush1.msra.mxu0 0.0
        %2499 = vmatprep.subr.mxu0 0.0
        %2500 = vmatpush1.msra.mxu0 0.0
        %2501 = vmatprep.subr.mxu0 0.0
        %2502 = vmatpush1.msra.mxu0 0.0
        %2503 = vmatprep.subr.mxu0 0.0
        %2504 = vmatpush1.msra.mxu0 %v2471
        %2505 = vmatprep.subr.mxu0 0.0
        %2506 = vmatpush2.msra.mxu0 0.0
        %2507 = vmatprep.subr.mxu0 0.0
        %2508 = vmatpush2.msra.mxu0 0.0
        %2509 = vmatprep.subr.mxu0 0.0
        %2510 = vmatpush2.msra.mxu0 0.0
        %2511 = vmatprep.subr.mxu0 0.0
        %2512 = vmatpush2.msra.mxu0 0.0
        %2513 = vmatprep.subr.mxu0 0.0
        %2514 = vmatpush2.msra.mxu0 0.0
        %2515 = vmatprep.subr.mxu0 0.0
        %2516 = vmatpush2.msra.mxu0 0.0
        %2517 = vmatprep.subr.mxu0 0.0
        %2518 = vmatpush2.msra.mxu0 0.0
        %2519 = vmatprep.subr.mxu0 0.0
        %2520 = vmatpush2.msra.mxu0 0.0
        %2521 = vmatprep.subr.mxu0 0.0
        %2522 = vmatpush2.msra.mxu0 0.0
        %2523 = vmatprep.subr.mxu0 0.0
        %2524 = vmatpush2.msra.mxu0 0.0
        %2525 = vmatprep.subr.mxu0 0.0
        %2526 = vmatpush2.msra.mxu0 0.0
        %2527 = vmatprep.subr.mxu0 0.0
        %2528 = vmatpush2.msra.mxu0 0.0
        %2529 = vmatprep.subr.mxu0 0.0
        %2530 = vmatpush2.msra.mxu0 0.0
        %2531 = vmatprep.subr.mxu0 0.0
        %2532 = vmatpush2.msra.mxu0 0.0
        %2533 = vmatprep.subr.mxu0 0.0
        %2534 = vmatpush2.msra.mxu0 0.0
        %2535 = vmatprep.subr.mxu0 0.0
        %2536 = vmatpush2.msra.mxu0 0.0
        %2537 = vmatprep.mubr.f32.mxu0 0.0
        %2538 = vmatmul.mubr.f32.gmra.mxu0 %v2375
        %v2539 = vpop.f32.mrf.mxu0
        %v2540 = vadd.f32 0.0, %v2539
        %v2541 = vpop.f32.mrf.mxu0
        %2542 = vmatprep.mubr.f32.mxu0 0.0
        %2543 = vmatmul.mubr.f32.gmra.mxu0 %v2378
        %v2544 = vpop.f32.mrf.mxu0
        %v2545 = vadd.f32 0.0, %v2544
        %v2546 = vpop.f32.mrf.mxu0
        %2547 = vmatprep.mubr.f32.mxu0 0.0
        %2548 = vmatmul.mubr.f32.gmra.mxu0 %v2381
        %v2549 = vpop.f32.mrf.mxu0
        %v2550 = vadd.f32 0.0, %v2549
        %v2551 = vpop.f32.mrf.mxu0
        %2552 = vmatprep.mubr.f32.mxu0 0.0
        %2553 = vmatmul.mubr.f32.gmra.mxu0 %v2384
        %v2554 = vpop.f32.mrf.mxu0
        %v2555 = vadd.f32 0.0, %v2554
        %v2556 = vpop.f32.mrf.mxu0
        %2557 = vmatprep.mubr.f32.mxu0 0.0
        %2558 = vmatmul.mubr.f32.gmra.mxu0 %v2387
        %v2559 = vpop.f32.mrf.mxu0
        %v2560 = vadd.f32 0.0, %v2559
        %v2561 = vpop.f32.mrf.mxu0
        %2562 = vmatprep.mubr.f32.mxu0 0.0
        %2563 = vmatmul.mubr.f32.gmra.mxu0 %v2390
        %v2564 = vpop.f32.mrf.mxu0
        %v2565 = vadd.f32 0.0, %v2564
        %v2566 = vpop.f32.mrf.mxu0
        %2567 = vmatprep.mubr.f32.mxu0 0.0
        %2568 = vmatmul.mubr.f32.gmra.mxu0 %v2393
        %v2569 = vpop.f32.mrf.mxu0
        %v2570 = vadd.f32 0.0, %v2569
        %v2571 = vpop.f32.mrf.mxu0
        %2572 = vmatprep.mubr.f32.mxu0 0.0
        %2573 = vmatmul.mubr.f32.gmra.mxu0 %v2396
        %v2574 = vpop.f32.mrf.mxu0
        %v2575 = vadd.f32 0.0, %v2574
        %v2576 = vpop.f32.mrf.mxu0
        %2577 = vmatprep.mubr.f32.mxu0 0.0
        %2578 = vmatmul.mubr.f32.gmra.mxu0 %v2399
        %v2579 = vpop.f32.mrf.mxu0
        %v2580 = vadd.f32 0.0, %v2579
        %v2581 = vpop.f32.mrf.mxu0
        %2582 = vmatprep.mubr.f32.mxu0 0.0
        %2583 = vmatmul.mubr.f32.gmra.mxu0 %v2402
        %v2584 = vpop.f32.mrf.mxu0
        %v2585 = vadd.f32 0.0, %v2584
        %v2586 = vpop.f32.mrf.mxu0
        %2587 = vmatprep.mubr.f32.mxu0 0.0
        %2588 = vmatmul.mubr.f32.gmra.mxu0 %v2405
        %v2589 = vpop.f32.mrf.mxu0
        %v2590 = vadd.f32 0.0, %v2589
        %v2591 = vpop.f32.mrf.mxu0
        %2592 = vmatprep.mubr.f32.mxu0 0.0
        %2593 = vmatmul.mubr.f32.gmra.mxu0 %v2408
        %v2594 = vpop.f32.mrf.mxu0
        %v2595 = vadd.f32 0.0, %v2594
        %v2596 = vpop.f32.mrf.mxu0
        %2597 = vmatprep.mubr.f32.mxu0 0.0
        %2598 = vmatmul.mubr.f32.gmra.mxu0 %v2411
        %v2599 = vpop.f32.mrf.mxu0
        %v2600 = vadd.f32 0.0, %v2599
        %v2601 = vpop.f32.mrf.mxu0
        %2602 = vmatprep.mubr.f32.mxu0 0.0
        %2603 = vmatmul.mubr.f32.gmra.mxu0 %v2414
        %v2604 = vpop.f32.mrf.mxu0
        %v2605 = vadd.f32 0.0, %v2604
        %v2606 = vpop.f32.mrf.mxu0
        %2607 = vmatprep.mubr.f32.mxu0 0.0
        %2608 = vmatmul.mubr.f32.gmra.mxu0 %v2417
        %v2609 = vpop.f32.mrf.mxu0
        %v2610 = vadd.f32 0.0, %v2609
        %v2611 = vpop.f32.mrf.mxu0
        %2612 = vmatprep.mubr.f32.mxu0 0.0
        %2613 = vmatmul.mubr.f32.gmra.mxu0 %v2420
        %v2614 = vpop.f32.mrf.mxu0
        %v2615 = vadd.f32 0.0, %v2614
        %v2616 = vpop.f32.mrf.mxu0
        %2617 = vmatprep.mubr.f32.mxu0 0.0
        %2618 = vmatmul.mubr.f32.gmra.mxu0 %v2423
        %v2619 = vpop.f32.mrf.mxu0
        %v2620 = vadd.f32 0.0, %v2619
        %v2621 = vpop.f32.mrf.mxu0
        %2622 = vmatprep.mubr.f32.mxu0 0.0
        %2623 = vmatmul.mubr.f32.gmra.mxu0 %v2426
        %v2624 = vpop.f32.mrf.mxu0
        %v2625 = vadd.f32 0.0, %v2624
        %v2626 = vpop.f32.mrf.mxu0
        %2627 = vmatprep.mubr.f32.mxu0 0.0
        %2628 = vmatmul.mubr.f32.gmra.mxu0 %v2429
        %v2629 = vpop.f32.mrf.mxu0
        %v2630 = vadd.f32 0.0, %v2629
        %v2631 = vpop.f32.mrf.mxu0
        %2632 = vmatprep.mubr.f32.mxu0 0.0
        %2633 = vmatmul.mubr.f32.gmra.mxu0 %v2432
        %v2634 = vpop.f32.mrf.mxu0
        %v2635 = vadd.f32 0.0, %v2634
        %v2636 = vpop.f32.mrf.mxu0
        %2637 = vmatprep.mubr.f32.mxu0 0.0
        %2638 = vmatmul.mubr.f32.gmra.mxu0 %v2435
        %v2639 = vpop.f32.mrf.mxu0
        %v2640 = vadd.f32 0.0, %v2639
        %v2641 = vpop.f32.mrf.mxu0
        %2642 = vmatprep.mubr.f32.mxu0 0.0
        %2643 = vmatmul.mubr.f32.gmra.mxu0 %v2438
        %v2644 = vpop.f32.mrf.mxu0
        %v2645 = vadd.f32 0.0, %v2644
        %v2646 = vpop.f32.mrf.mxu0
        %2647 = vmatprep.mubr.f32.mxu0 0.0
        %2648 = vmatmul.mubr.f32.gmra.mxu0 %v2441
        %v2649 = vpop.f32.mrf.mxu0
        %v2650 = vadd.f32 0.0, %v2649
        %v2651 = vpop.f32.mrf.mxu0
        %2652 = vmatprep.mubr.f32.mxu0 0.0
        %2653 = vmatmul.mubr.f32.gmra.mxu0 %v2444
        %v2654 = vpop.f32.mrf.mxu0
        %v2655 = vadd.f32 0.0, %v2654
        %v2656 = vpop.f32.mrf.mxu0
        %2657 = vmatprep.mubr.f32.mxu0 0.0
        %2658 = vmatmul.mubr.f32.gmra.mxu0 %v2447
        %v2659 = vpop.f32.mrf.mxu0
        %v2660 = vadd.f32 0.0, %v2659
        %v2661 = vpop.f32.mrf.mxu0
        %2662 = vmatprep.mubr.f32.mxu0 0.0
        %2663 = vmatmul.mubr.f32.gmra.mxu0 %v2450
        %v2664 = vpop.f32.mrf.mxu0
        %v2665 = vadd.f32 0.0, %v2664
        %v2666 = vpop.f32.mrf.mxu0
        %2667 = vmatprep.mubr.f32.mxu0 0.0
        %2668 = vmatmul.mubr.f32.gmra.mxu0 %v2453
        %v2669 = vpop.f32.mrf.mxu0
        %v2670 = vadd.f32 0.0, %v2669
        %v2671 = vpop.f32.mrf.mxu0
        %2672 = vmatprep.mubr.f32.mxu0 0.0
        %2673 = vmatmul.mubr.f32.gmra.mxu0 %v2456
        %v2674 = vpop.f32.mrf.mxu0
        %v2675 = vadd.f32 0.0, %v2674
        %v2676 = vpop.f32.mrf.mxu0
        %2677 = vmatprep.mubr.f32.mxu0 0.0
        %2678 = vmatmul.mubr.f32.gmra.mxu0 %v2459
        %v2679 = vpop.f32.mrf.mxu0
        %v2680 = vadd.f32 0.0, %v2679
        %v2681 = vpop.f32.mrf.mxu0
        %2682 = vmatprep.mubr.f32.mxu0 0.0
        %2683 = vmatmul.mubr.f32.gmra.mxu0 %v2462
        %v2684 = vpop.f32.mrf.mxu0
        %v2685 = vadd.f32 0.0, %v2684
        %v2686 = vpop.f32.mrf.mxu0
        %2687 = vmatprep.mubr.f32.mxu0 0.0
        %2688 = vmatmul.mubr.f32.gmra.mxu0 %v2465
        %v2689 = vpop.f32.mrf.mxu0
        %v2690 = vadd.f32 0.0, %v2689
        %v2691 = vpop.f32.mrf.mxu0
        %2692 = vmatprep.mubr.f32.mxu0 0.0
        %2693 = vmatmul.mubr.f32.gmra.mxu0 %v2468
        %v2694 = vpop.f32.mrf.mxu0
        %v2695 = vadd.f32 0.0, %v2694
        %v2696 = vpop.f32.mrf.mxu0
        %2697 = vdwg.mxu0
        %v2698 = vadd.f32 %v2276, %v2540
        %v2699 = vadd.f32 %v2277, %v2545
        %v2700 = vadd.f32 %v2278, %v2550
        %v2701 = vadd.f32 %v2279, %v2555
        %v2702 = vadd.f32 %v2280, %v2560
        %v2703 = vadd.f32 %v2281, %v2565
        %v2704 = vadd.f32 %v2282, %v2570
        %v2705 = vadd.f32 %v2283, %v2575
        %v2706 = vadd.f32 %v2284, %v2580
        %v2707 = vadd.f32 %v2285, %v2585
        %v2708 = vadd.f32 %v2286, %v2590
        %v2709 = vadd.f32 %v2287, %v2595
        %v2710 = vadd.f32 %v2288, %v2600
        %v2711 = vadd.f32 %v2289, %v2605
        %v2712 = vadd.f32 %v2290, %v2610
        %v2713 = vadd.f32 %v2291, %v2615
        %v2714 = vadd.f32 %v2292, %v2620
        %v2715 = vadd.f32 %v2293, %v2625
        %v2716 = vadd.f32 %v2294, %v2630
        %v2717 = vadd.f32 %v2295, %v2635
        %v2718 = vadd.f32 %v2296, %v2640
        %v2719 = vadd.f32 %v2297, %v2645
        %v2720 = vadd.f32 %v2298, %v2650
        %v2721 = vadd.f32 %v2299, %v2655
        %v2722 = vadd.f32 %v2300, %v2660
        %v2723 = vadd.f32 %v2301, %v2665
        %v2724 = vadd.f32 %v2302, %v2670
        %v2725 = vadd.f32 %v2303, %v2675
        %v2726 = vadd.f32 %v2304, %v2680
        %v2727 = vadd.f32 %v2305, %v2685
        %v2728 = vadd.f32 %v2306, %v2690
        %v2729 = vadd.f32 %v2307, %v2695
        %v2730 = vld [vmem:[#allocation2 + $0x11] sm:$0xff]
        %v2731 = vld [vmem:[#allocation2 + $0x19] sm:$0xff]
        %v2732 = vld [vmem:[#allocation2 + $0x21] sm:$0xff]
        %v2733 = vld [vmem:[#allocation2 + $0x29] sm:$0xff]
        %v2734 = vld [vmem:[#allocation2 + $0x31] sm:$0xff]
        %v2735 = vld [vmem:[#allocation2 + $0x39] sm:$0xff]
        %v2736 = vld [vmem:[#allocation2 + $0x41] sm:$0xff]
        %v2737 = vld [vmem:[#allocation2 + $0x49] sm:$0xff]
        %v2738 = vld [vmem:[#allocation2 + $0x51] sm:$0xff]
        %v2739 = vld [vmem:[#allocation2 + $0x59] sm:$0xff]
        %v2740 = vld [vmem:[#allocation2 + $0x61] sm:$0xff]
        %v2741 = vld [vmem:[#allocation2 + $0x69] sm:$0xff]
        %v2742 = vld [vmem:[#allocation2 + $0x71] sm:$0xff]
        %v2743 = vld [vmem:[#allocation2 + $0x79] sm:$0xff]
        %v2744 = vld [vmem:[#allocation2 + $0x81] sm:$0xff]
        %v2745 = vld [vmem:[#allocation2 + $0x89] sm:$0xff]
        %v2746 = vld [vmem:[#allocation2 + $0x91] sm:$0xff]
        %v2747 = vld [vmem:[#allocation2 + $0x99] sm:$0xff]
        %v2748 = vld [vmem:[#allocation2 + $0xa1] sm:$0xff]
        %v2749 = vld [vmem:[#allocation2 + $0xa9] sm:$0xff]
        %v2750 = vld [vmem:[#allocation2 + $0xb1] sm:$0xff]
        %v2751 = vld [vmem:[#allocation2 + $0xb9] sm:$0xff]
        %v2752 = vld [vmem:[#allocation2 + $0xc1] sm:$0xff]
        %v2753 = vld [vmem:[#allocation2 + $0xc9] sm:$0xff]
        %v2754 = vld [vmem:[#allocation2 + $0xd1] sm:$0xff]
        %v2755 = vld [vmem:[#allocation2 + $0xd9] sm:$0xff]
        %v2756 = vld [vmem:[#allocation2 + $0xe1] sm:$0xff]
        %v2757 = vld [vmem:[#allocation2 + $0xe9] sm:$0xff]
        %v2758 = vld [vmem:[#allocation2 + $0xf1] sm:$0xff]
        %v2759 = vld [vmem:[#allocation2 + $0xf9] sm:$0xff]
        %v2760 = vld [vmem:[#allocation2 + $0x101] sm:$0xff]
        %v2761 = vld [vmem:[#allocation2 + $0x109] sm:$0xff]
        %s2762 = scalar_lea.vmem %s4, 16
        %v2763 = vld [vmem:[%s2762] sm:$0xf]
        %v2765 = vsel %vm643, %v2730, 0
        %v2768 = vsel %vm643, %v2731, 0
        %v2771 = vsel %vm643, %v2732, 0
        %v2774 = vsel %vm643, %v2733, 0
        %v2777 = vsel %vm643, %v2734, 0
        %v2780 = vsel %vm643, %v2735, 0
        %v2783 = vsel %vm643, %v2736, 0
        %v2786 = vsel %vm643, %v2737, 0
        %v2789 = vsel %vm643, %v2738, 0
        %v2792 = vsel %vm643, %v2739, 0
        %v2795 = vsel %vm643, %v2740, 0
        %v2798 = vsel %vm643, %v2741, 0
        %v2801 = vsel %vm643, %v2742, 0
        %v2804 = vsel %vm643, %v2743, 0
        %v2807 = vsel %vm643, %v2744, 0
        %v2810 = vsel %vm643, %v2745, 0
        %v2813 = vsel %vm643, %v2746, 0
        %v2816 = vsel %vm643, %v2747, 0
        %v2819 = vsel %vm643, %v2748, 0
        %v2822 = vsel %vm643, %v2749, 0
        %v2825 = vsel %vm643, %v2750, 0
        %v2828 = vsel %vm643, %v2751, 0
        %v2831 = vsel %vm643, %v2752, 0
        %v2834 = vsel %vm643, %v2753, 0
        %v2837 = vsel %vm643, %v2754, 0
        %v2840 = vsel %vm643, %v2755, 0
        %v2843 = vsel %vm643, %v2756, 0
        %v2846 = vsel %vm643, %v2757, 0
        %v2849 = vsel %vm643, %v2758, 0
        %v2852 = vsel %vm643, %v2759, 0
        %v2855 = vsel %vm643, %v2760, 0
        %v2858 = vsel %vm643, %v2761, 0
        %v2861 = vsel %vm1075, %v2763, 0
        %2863 = vmatprep.subr.mxu0 0.0
        %2864 = vmatpush1.msra.mxu0 0.0
        %2865 = vmatprep.subr.mxu0 0.0
        %2866 = vmatpush1.msra.mxu0 0.0
        %2867 = vmatprep.subr.mxu0 0.0
        %2868 = vmatpush1.msra.mxu0 0.0
        %2869 = vmatprep.subr.mxu0 0.0
        %2870 = vmatpush1.msra.mxu0 0.0
        %2871 = vmatprep.subr.mxu0 0.0
        %2872 = vmatpush1.msra.mxu0 0.0
        %2873 = vmatprep.subr.mxu0 0.0
        %2874 = vmatpush1.msra.mxu0 0.0
        %2875 = vmatprep.subr.mxu0 0.0
        %2876 = vmatpush1.msra.mxu0 0.0
        %2877 = vmatprep.subr.mxu0 0.0
        %2878 = vmatpush1.msra.mxu0 0.0
        %2879 = vmatprep.subr.mxu0 0.0
        %2880 = vmatpush1.msra.mxu0 0.0
        %2881 = vmatprep.subr.mxu0 0.0
        %2882 = vmatpush1.msra.mxu0 0.0
        %2883 = vmatprep.subr.mxu0 0.0
        %2884 = vmatpush1.msra.mxu0 0.0
        %2885 = vmatprep.subr.mxu0 0.0
        %2886 = vmatpush1.msra.mxu0 0.0
        %2887 = vmatprep.subr.mxu0 0.0
        %2888 = vmatpush1.msra.mxu0 0.0
        %2889 = vmatprep.subr.mxu0 0.0
        %2890 = vmatpush1.msra.mxu0 0.0
        %2891 = vmatprep.subr.mxu0 0.0
        %2892 = vmatpush1.msra.mxu0 0.0
        %2893 = vmatprep.subr.mxu0 0.0
        %2894 = vmatpush1.msra.mxu0 %v2861
        %2895 = vmatprep.subr.mxu0 0.0
        %2896 = vmatpush2.msra.mxu0 0.0
        %2897 = vmatprep.subr.mxu0 0.0
        %2898 = vmatpush2.msra.mxu0 0.0
        %2899 = vmatprep.subr.mxu0 0.0
        %2900 = vmatpush2.msra.mxu0 0.0
        %2901 = vmatprep.subr.mxu0 0.0
        %2902 = vmatpush2.msra.mxu0 0.0
        %2903 = vmatprep.subr.mxu0 0.0
        %2904 = vmatpush2.msra.mxu0 0.0
        %2905 = vmatprep.subr.mxu0 0.0
        %2906 = vmatpush2.msra.mxu0 0.0
        %2907 = vmatprep.subr.mxu0 0.0
        %2908 = vmatpush2.msra.mxu0 0.0
        %2909 = vmatprep.subr.mxu0 0.0
        %2910 = vmatpush2.msra.mxu0 0.0
        %2911 = vmatprep.subr.mxu0 0.0
        %2912 = vmatpush2.msra.mxu0 0.0
        %2913 = vmatprep.subr.mxu0 0.0
        %2914 = vmatpush2.msra.mxu0 0.0
        %2915 = vmatprep.subr.mxu0 0.0
        %2916 = vmatpush2.msra.mxu0 0.0
        %2917 = vmatprep.subr.mxu0 0.0
        %2918 = vmatpush2.msra.mxu0 0.0
        %2919 = vmatprep.subr.mxu0 0.0
        %2920 = vmatpush2.msra.mxu0 0.0
        %2921 = vmatprep.subr.mxu0 0.0
        %2922 = vmatpush2.msra.mxu0 0.0
        %2923 = vmatprep.subr.mxu0 0.0
        %2924 = vmatpush2.msra.mxu0 0.0
        %2925 = vmatprep.subr.mxu0 0.0
        %2926 = vmatpush2.msra.mxu0 0.0
        %2927 = vmatprep.mubr.f32.mxu0 0.0
        %2928 = vmatmul.mubr.f32.gmra.mxu0 %v2765
        %v2929 = vpop.f32.mrf.mxu0
        %v2930 = vadd.f32 0.0, %v2929
        %v2931 = vpop.f32.mrf.mxu0
        %2932 = vmatprep.mubr.f32.mxu0 0.0
        %2933 = vmatmul.mubr.f32.gmra.mxu0 %v2768
        %v2934 = vpop.f32.mrf.mxu0
        %v2935 = vadd.f32 0.0, %v2934
        %v2936 = vpop.f32.mrf.mxu0
        %2937 = vmatprep.mubr.f32.mxu0 0.0
        %2938 = vmatmul.mubr.f32.gmra.mxu0 %v2771
        %v2939 = vpop.f32.mrf.mxu0
        %v2940 = vadd.f32 0.0, %v2939
        %v2941 = vpop.f32.mrf.mxu0
        %2942 = vmatprep.mubr.f32.mxu0 0.0
        %2943 = vmatmul.mubr.f32.gmra.mxu0 %v2774
        %v2944 = vpop.f32.mrf.mxu0
        %v2945 = vadd.f32 0.0, %v2944
        %v2946 = vpop.f32.mrf.mxu0
        %2947 = vmatprep.mubr.f32.mxu0 0.0
        %2948 = vmatmul.mubr.f32.gmra.mxu0 %v2777
        %v2949 = vpop.f32.mrf.mxu0
        %v2950 = vadd.f32 0.0, %v2949
        %v2951 = vpop.f32.mrf.mxu0
        %2952 = vmatprep.mubr.f32.mxu0 0.0
        %2953 = vmatmul.mubr.f32.gmra.mxu0 %v2780
        %v2954 = vpop.f32.mrf.mxu0
        %v2955 = vadd.f32 0.0, %v2954
        %v2956 = vpop.f32.mrf.mxu0
        %2957 = vmatprep.mubr.f32.mxu0 0.0
        %2958 = vmatmul.mubr.f32.gmra.mxu0 %v2783
        %v2959 = vpop.f32.mrf.mxu0
        %v2960 = vadd.f32 0.0, %v2959
        %v2961 = vpop.f32.mrf.mxu0
        %2962 = vmatprep.mubr.f32.mxu0 0.0
        %2963 = vmatmul.mubr.f32.gmra.mxu0 %v2786
        %v2964 = vpop.f32.mrf.mxu0
        %v2965 = vadd.f32 0.0, %v2964
        %v2966 = vpop.f32.mrf.mxu0
        %2967 = vmatprep.mubr.f32.mxu0 0.0
        %2968 = vmatmul.mubr.f32.gmra.mxu0 %v2789
        %v2969 = vpop.f32.mrf.mxu0
        %v2970 = vadd.f32 0.0, %v2969
        %v2971 = vpop.f32.mrf.mxu0
        %2972 = vmatprep.mubr.f32.mxu0 0.0
        %2973 = vmatmul.mubr.f32.gmra.mxu0 %v2792
        %v2974 = vpop.f32.mrf.mxu0
        %v2975 = vadd.f32 0.0, %v2974
        %v2976 = vpop.f32.mrf.mxu0
        %2977 = vmatprep.mubr.f32.mxu0 0.0
        %2978 = vmatmul.mubr.f32.gmra.mxu0 %v2795
        %v2979 = vpop.f32.mrf.mxu0
        %v2980 = vadd.f32 0.0, %v2979
        %v2981 = vpop.f32.mrf.mxu0
        %2982 = vmatprep.mubr.f32.mxu0 0.0
        %2983 = vmatmul.mubr.f32.gmra.mxu0 %v2798
        %v2984 = vpop.f32.mrf.mxu0
        %v2985 = vadd.f32 0.0, %v2984
        %v2986 = vpop.f32.mrf.mxu0
        %2987 = vmatprep.mubr.f32.mxu0 0.0
        %2988 = vmatmul.mubr.f32.gmra.mxu0 %v2801
        %v2989 = vpop.f32.mrf.mxu0
        %v2990 = vadd.f32 0.0, %v2989
        %v2991 = vpop.f32.mrf.mxu0
        %2992 = vmatprep.mubr.f32.mxu0 0.0
        %2993 = vmatmul.mubr.f32.gmra.mxu0 %v2804
        %v2994 = vpop.f32.mrf.mxu0
        %v2995 = vadd.f32 0.0, %v2994
        %v2996 = vpop.f32.mrf.mxu0
        %2997 = vmatprep.mubr.f32.mxu0 0.0
        %2998 = vmatmul.mubr.f32.gmra.mxu0 %v2807
        %v2999 = vpop.f32.mrf.mxu0
        %v3000 = vadd.f32 0.0, %v2999
        %v3001 = vpop.f32.mrf.mxu0
        %3002 = vmatprep.mubr.f32.mxu0 0.0
        %3003 = vmatmul.mubr.f32.gmra.mxu0 %v2810
        %v3004 = vpop.f32.mrf.mxu0
        %v3005 = vadd.f32 0.0, %v3004
        %v3006 = vpop.f32.mrf.mxu0
        %3007 = vmatprep.mubr.f32.mxu0 0.0
        %3008 = vmatmul.mubr.f32.gmra.mxu0 %v2813
        %v3009 = vpop.f32.mrf.mxu0
        %v3010 = vadd.f32 0.0, %v3009
        %v3011 = vpop.f32.mrf.mxu0
        %3012 = vmatprep.mubr.f32.mxu0 0.0
        %3013 = vmatmul.mubr.f32.gmra.mxu0 %v2816
        %v3014 = vpop.f32.mrf.mxu0
        %v3015 = vadd.f32 0.0, %v3014
        %v3016 = vpop.f32.mrf.mxu0
        %3017 = vmatprep.mubr.f32.mxu0 0.0
        %3018 = vmatmul.mubr.f32.gmra.mxu0 %v2819
        %v3019 = vpop.f32.mrf.mxu0
        %v3020 = vadd.f32 0.0, %v3019
        %v3021 = vpop.f32.mrf.mxu0
        %3022 = vmatprep.mubr.f32.mxu0 0.0
        %3023 = vmatmul.mubr.f32.gmra.mxu0 %v2822
        %v3024 = vpop.f32.mrf.mxu0
        %v3025 = vadd.f32 0.0, %v3024
        %v3026 = vpop.f32.mrf.mxu0
        %3027 = vmatprep.mubr.f32.mxu0 0.0
        %3028 = vmatmul.mubr.f32.gmra.mxu0 %v2825
        %v3029 = vpop.f32.mrf.mxu0
        %v3030 = vadd.f32 0.0, %v3029
        %v3031 = vpop.f32.mrf.mxu0
        %3032 = vmatprep.mubr.f32.mxu0 0.0
        %3033 = vmatmul.mubr.f32.gmra.mxu0 %v2828
        %v3034 = vpop.f32.mrf.mxu0
        %v3035 = vadd.f32 0.0, %v3034
        %v3036 = vpop.f32.mrf.mxu0
        %3037 = vmatprep.mubr.f32.mxu0 0.0
        %3038 = vmatmul.mubr.f32.gmra.mxu0 %v2831
        %v3039 = vpop.f32.mrf.mxu0
        %v3040 = vadd.f32 0.0, %v3039
        %v3041 = vpop.f32.mrf.mxu0
        %3042 = vmatprep.mubr.f32.mxu0 0.0
        %3043 = vmatmul.mubr.f32.gmra.mxu0 %v2834
        %v3044 = vpop.f32.mrf.mxu0
        %v3045 = vadd.f32 0.0, %v3044
        %v3046 = vpop.f32.mrf.mxu0
        %3047 = vmatprep.mubr.f32.mxu0 0.0
        %3048 = vmatmul.mubr.f32.gmra.mxu0 %v2837
        %v3049 = vpop.f32.mrf.mxu0
        %v3050 = vadd.f32 0.0, %v3049
        %v3051 = vpop.f32.mrf.mxu0
        %3052 = vmatprep.mubr.f32.mxu0 0.0
        %3053 = vmatmul.mubr.f32.gmra.mxu0 %v2840
        %v3054 = vpop.f32.mrf.mxu0
        %v3055 = vadd.f32 0.0, %v3054
        %v3056 = vpop.f32.mrf.mxu0
        %3057 = vmatprep.mubr.f32.mxu0 0.0
        %3058 = vmatmul.mubr.f32.gmra.mxu0 %v2843
        %v3059 = vpop.f32.mrf.mxu0
        %v3060 = vadd.f32 0.0, %v3059
        %v3061 = vpop.f32.mrf.mxu0
        %3062 = vmatprep.mubr.f32.mxu0 0.0
        %3063 = vmatmul.mubr.f32.gmra.mxu0 %v2846
        %v3064 = vpop.f32.mrf.mxu0
        %v3065 = vadd.f32 0.0, %v3064
        %v3066 = vpop.f32.mrf.mxu0
        %3067 = vmatprep.mubr.f32.mxu0 0.0
        %3068 = vmatmul.mubr.f32.gmra.mxu0 %v2849
        %v3069 = vpop.f32.mrf.mxu0
        %v3070 = vadd.f32 0.0, %v3069
        %v3071 = vpop.f32.mrf.mxu0
        %3072 = vmatprep.mubr.f32.mxu0 0.0
        %3073 = vmatmul.mubr.f32.gmra.mxu0 %v2852
        %v3074 = vpop.f32.mrf.mxu0
        %v3075 = vadd.f32 0.0, %v3074
        %v3076 = vpop.f32.mrf.mxu0
        %3077 = vmatprep.mubr.f32.mxu0 0.0
        %3078 = vmatmul.mubr.f32.gmra.mxu0 %v2855
        %v3079 = vpop.f32.mrf.mxu0
        %v3080 = vadd.f32 0.0, %v3079
        %v3081 = vpop.f32.mrf.mxu0
        %3082 = vmatprep.mubr.f32.mxu0 0.0
        %3083 = vmatmul.mubr.f32.gmra.mxu0 %v2858
        %v3084 = vpop.f32.mrf.mxu0
        %v3085 = vadd.f32 0.0, %v3084
        %v3086 = vpop.f32.mrf.mxu0
        %3087 = vdwg.mxu0
        %v3088 = vadd.f32 %v2698, %v2930
        %v3089 = vadd.f32 %v2699, %v2935
        %v3090 = vadd.f32 %v2700, %v2940
        %v3091 = vadd.f32 %v2701, %v2945
        %v3092 = vadd.f32 %v2702, %v2950
        %v3093 = vadd.f32 %v2703, %v2955
        %v3094 = vadd.f32 %v2704, %v2960
        %v3095 = vadd.f32 %v2705, %v2965
        %v3096 = vadd.f32 %v2706, %v2970
        %v3097 = vadd.f32 %v2707, %v2975
        %v3098 = vadd.f32 %v2708, %v2980
        %v3099 = vadd.f32 %v2709, %v2985
        %v3100 = vadd.f32 %v2710, %v2990
        %v3101 = vadd.f32 %v2711, %v2995
        %v3102 = vadd.f32 %v2712, %v3000
        %v3103 = vadd.f32 %v2713, %v3005
        %v3104 = vadd.f32 %v2714, %v3010
        %v3105 = vadd.f32 %v2715, %v3015
        %v3106 = vadd.f32 %v2716, %v3020
        %v3107 = vadd.f32 %v2717, %v3025
        %v3108 = vadd.f32 %v2718, %v3030
        %v3109 = vadd.f32 %v2719, %v3035
        %v3110 = vadd.f32 %v2720, %v3040
        %v3111 = vadd.f32 %v2721, %v3045
        %v3112 = vadd.f32 %v2722, %v3050
        %v3113 = vadd.f32 %v2723, %v3055
        %v3114 = vadd.f32 %v2724, %v3060
        %v3115 = vadd.f32 %v2725, %v3065
        %v3116 = vadd.f32 %v2726, %v3070
        %v3117 = vadd.f32 %v2727, %v3075
        %v3118 = vadd.f32 %v2728, %v3080
        %v3119 = vadd.f32 %v2729, %v3085
        %v3120 = vld [vmem:[#allocation2 + $0x12] sm:$0xff]
        %v3121 = vld [vmem:[#allocation2 + $0x1a] sm:$0xff]
        %v3122 = vld [vmem:[#allocation2 + $0x22] sm:$0xff]
        %v3123 = vld [vmem:[#allocation2 + $0x2a] sm:$0xff]
        %v3124 = vld [vmem:[#allocation2 + $0x32] sm:$0xff]
        %v3125 = vld [vmem:[#allocation2 + $0x3a] sm:$0xff]
        %v3126 = vld [vmem:[#allocation2 + $0x42] sm:$0xff]
        %v3127 = vld [vmem:[#allocation2 + $0x4a] sm:$0xff]
        %v3128 = vld [vmem:[#allocation2 + $0x52] sm:$0xff]
        %v3129 = vld [vmem:[#allocation2 + $0x5a] sm:$0xff]
        %v3130 = vld [vmem:[#allocation2 + $0x62] sm:$0xff]
        %v3131 = vld [vmem:[#allocation2 + $0x6a] sm:$0xff]
        %v3132 = vld [vmem:[#allocation2 + $0x72] sm:$0xff]
        %v3133 = vld [vmem:[#allocation2 + $0x7a] sm:$0xff]
        %v3134 = vld [vmem:[#allocation2 + $0x82] sm:$0xff]
        %v3135 = vld [vmem:[#allocation2 + $0x8a] sm:$0xff]
        %v3136 = vld [vmem:[#allocation2 + $0x92] sm:$0xff]
        %v3137 = vld [vmem:[#allocation2 + $0x9a] sm:$0xff]
        %v3138 = vld [vmem:[#allocation2 + $0xa2] sm:$0xff]
        %v3139 = vld [vmem:[#allocation2 + $0xaa] sm:$0xff]
        %v3140 = vld [vmem:[#allocation2 + $0xb2] sm:$0xff]
        %v3141 = vld [vmem:[#allocation2 + $0xba] sm:$0xff]
        %v3142 = vld [vmem:[#allocation2 + $0xc2] sm:$0xff]
        %v3143 = vld [vmem:[#allocation2 + $0xca] sm:$0xff]
        %v3144 = vld [vmem:[#allocation2 + $0xd2] sm:$0xff]
        %v3145 = vld [vmem:[#allocation2 + $0xda] sm:$0xff]
        %v3146 = vld [vmem:[#allocation2 + $0xe2] sm:$0xff]
        %v3147 = vld [vmem:[#allocation2 + $0xea] sm:$0xff]
        %v3148 = vld [vmem:[#allocation2 + $0xf2] sm:$0xff]
        %v3149 = vld [vmem:[#allocation2 + $0xfa] sm:$0xff]
        %v3150 = vld [vmem:[#allocation2 + $0x102] sm:$0xff]
        %v3151 = vld [vmem:[#allocation2 + $0x10a] sm:$0xff]
        %v3152 = vmul.f32 %v3120, %v1761
        %v3153 = vmul.f32 %v3121, %v1766
        %v3154 = vmul.f32 %v3122, %v1771
        %v3155 = vmul.f32 %v3123, %v1776
        %v3156 = vmul.f32 %v3124, %v1781
        %v3157 = vmul.f32 %v3125, %v1786
        %v3158 = vmul.f32 %v3126, %v1791
        %v3159 = vmul.f32 %v3127, %v1796
        %v3160 = vmul.f32 %v3128, %v1801
        %v3161 = vmul.f32 %v3129, %v1806
        %v3162 = vmul.f32 %v3130, %v1811
        %v3163 = vmul.f32 %v3131, %v1816
        %v3164 = vmul.f32 %v3132, %v1821
        %v3165 = vmul.f32 %v3133, %v1826
        %v3166 = vmul.f32 %v3134, %v1831
        %v3167 = vmul.f32 %v3135, %v1836
        %v3168 = vmul.f32 %v3136, %v1841
        %v3169 = vmul.f32 %v3137, %v1846
        %v3170 = vmul.f32 %v3138, %v1851
        %v3171 = vmul.f32 %v3139, %v1856
        %v3172 = vmul.f32 %v3140, %v1861
        %v3173 = vmul.f32 %v3141, %v1866
        %v3174 = vmul.f32 %v3142, %v1871
        %v3175 = vmul.f32 %v3143, %v1876
        %v3176 = vmul.f32 %v3144, %v1881
        %v3177 = vmul.f32 %v3145, %v1886
        %v3178 = vmul.f32 %v3146, %v1891
        %v3179 = vmul.f32 %v3147, %v1896
        %v3180 = vmul.f32 %v3148, %v1901
        %v3181 = vmul.f32 %v3149, %v1906
        %v3182 = vmul.f32 %v3150, %v1911
        %v3183 = vmul.f32 %v3151, %v1916
        %s3184 = scalar_lea.vmem %s4, 20
        %v3185 = vld [vmem:[%s3184] sm:$0xf]
        %v3187 = vsel %vm643, %v3152, 0
        %v3190 = vsel %vm643, %v3153, 0
        %v3193 = vsel %vm643, %v3154, 0
        %v3196 = vsel %vm643, %v3155, 0
        %v3199 = vsel %vm643, %v3156, 0
        %v3202 = vsel %vm643, %v3157, 0
        %v3205 = vsel %vm643, %v3158, 0
        %v3208 = vsel %vm643, %v3159, 0
        %v3211 = vsel %vm643, %v3160, 0
        %v3214 = vsel %vm643, %v3161, 0
        %v3217 = vsel %vm643, %v3162, 0
        %v3220 = vsel %vm643, %v3163, 0
        %v3223 = vsel %vm643, %v3164, 0
        %v3226 = vsel %vm643, %v3165, 0
        %v3229 = vsel %vm643, %v3166, 0
        %v3232 = vsel %vm643, %v3167, 0
        %v3235 = vsel %vm643, %v3168, 0
        %v3238 = vsel %vm643, %v3169, 0
        %v3241 = vsel %vm643, %v3170, 0
        %v3244 = vsel %vm643, %v3171, 0
        %v3247 = vsel %vm643, %v3172, 0
        %v3250 = vsel %vm643, %v3173, 0
        %v3253 = vsel %vm643, %v3174, 0
        %v3256 = vsel %vm643, %v3175, 0
        %v3259 = vsel %vm643, %v3176, 0
        %v3262 = vsel %vm643, %v3177, 0
        %v3265 = vsel %vm643, %v3178, 0
        %v3268 = vsel %vm643, %v3179, 0
        %v3271 = vsel %vm643, %v3180, 0
        %v3274 = vsel %vm643, %v3181, 0
        %v3277 = vsel %vm643, %v3182, 0
        %v3280 = vsel %vm643, %v3183, 0
        %v3283 = vsel %vm1075, %v3185, 0
        %3285 = vmatprep.subr.mxu0 0.0
        %3286 = vmatpush1.msra.mxu0 0.0
        %3287 = vmatprep.subr.mxu0 0.0
        %3288 = vmatpush1.msra.mxu0 0.0
        %3289 = vmatprep.subr.mxu0 0.0
        %3290 = vmatpush1.msra.mxu0 0.0
        %3291 = vmatprep.subr.mxu0 0.0
        %3292 = vmatpush1.msra.mxu0 0.0
        %3293 = vmatprep.subr.mxu0 0.0
        %3294 = vmatpush1.msra.mxu0 0.0
        %3295 = vmatprep.subr.mxu0 0.0
        %3296 = vmatpush1.msra.mxu0 0.0
        %3297 = vmatprep.subr.mxu0 0.0
        %3298 = vmatpush1.msra.mxu0 0.0
        %3299 = vmatprep.subr.mxu0 0.0
        %3300 = vmatpush1.msra.mxu0 0.0
        %3301 = vmatprep.subr.mxu0 0.0
        %3302 = vmatpush1.msra.mxu0 0.0
        %3303 = vmatprep.subr.mxu0 0.0
        %3304 = vmatpush1.msra.mxu0 0.0
        %3305 = vmatprep.subr.mxu0 0.0
        %3306 = vmatpush1.msra.mxu0 0.0
        %3307 = vmatprep.subr.mxu0 0.0
        %3308 = vmatpush1.msra.mxu0 0.0
        %3309 = vmatprep.subr.mxu0 0.0
        %3310 = vmatpush1.msra.mxu0 0.0
        %3311 = vmatprep.subr.mxu0 0.0
        %3312 = vmatpush1.msra.mxu0 0.0
        %3313 = vmatprep.subr.mxu0 0.0
        %3314 = vmatpush1.msra.mxu0 0.0
        %3315 = vmatprep.subr.mxu0 0.0
        %3316 = vmatpush1.msra.mxu0 %v3283
        %3317 = vmatprep.subr.mxu0 0.0
        %3318 = vmatpush2.msra.mxu0 0.0
        %3319 = vmatprep.subr.mxu0 0.0
        %3320 = vmatpush2.msra.mxu0 0.0
        %3321 = vmatprep.subr.mxu0 0.0
        %3322 = vmatpush2.msra.mxu0 0.0
        %3323 = vmatprep.subr.mxu0 0.0
        %3324 = vmatpush2.msra.mxu0 0.0
        %3325 = vmatprep.subr.mxu0 0.0
        %3326 = vmatpush2.msra.mxu0 0.0
        %3327 = vmatprep.subr.mxu0 0.0
        %3328 = vmatpush2.msra.mxu0 0.0
        %3329 = vmatprep.subr.mxu0 0.0
        %3330 = vmatpush2.msra.mxu0 0.0
        %3331 = vmatprep.subr.mxu0 0.0
        %3332 = vmatpush2.msra.mxu0 0.0
        %3333 = vmatprep.subr.mxu0 0.0
        %3334 = vmatpush2.msra.mxu0 0.0
        %3335 = vmatprep.subr.mxu0 0.0
        %3336 = vmatpush2.msra.mxu0 0.0
        %3337 = vmatprep.subr.mxu0 0.0
        %3338 = vmatpush2.msra.mxu0 0.0
        %3339 = vmatprep.subr.mxu0 0.0
        %3340 = vmatpush2.msra.mxu0 0.0
        %3341 = vmatprep.subr.mxu0 0.0
        %3342 = vmatpush2.msra.mxu0 0.0
        %3343 = vmatprep.subr.mxu0 0.0
        %3344 = vmatpush2.msra.mxu0 0.0
        %3345 = vmatprep.subr.mxu0 0.0
        %3346 = vmatpush2.msra.mxu0 0.0
        %3347 = vmatprep.subr.mxu0 0.0
        %3348 = vmatpush2.msra.mxu0 0.0
        %3349 = vmatprep.mubr.f32.mxu0 0.0
        %3350 = vmatmul.mubr.f32.gmra.mxu0 %v3187
        %v3351 = vpop.f32.mrf.mxu0
        %v3352 = vadd.f32 0.0, %v3351
        %v3353 = vpop.f32.mrf.mxu0
        %3354 = vmatprep.mubr.f32.mxu0 0.0
        %3355 = vmatmul.mubr.f32.gmra.mxu0 %v3190
        %v3356 = vpop.f32.mrf.mxu0
        %v3357 = vadd.f32 0.0, %v3356
        %v3358 = vpop.f32.mrf.mxu0
        %3359 = vmatprep.mubr.f32.mxu0 0.0
        %3360 = vmatmul.mubr.f32.gmra.mxu0 %v3193
        %v3361 = vpop.f32.mrf.mxu0
        %v3362 = vadd.f32 0.0, %v3361
        %v3363 = vpop.f32.mrf.mxu0
        %3364 = vmatprep.mubr.f32.mxu0 0.0
        %3365 = vmatmul.mubr.f32.gmra.mxu0 %v3196
        %v3366 = vpop.f32.mrf.mxu0
        %v3367 = vadd.f32 0.0, %v3366
        %v3368 = vpop.f32.mrf.mxu0
        %3369 = vmatprep.mubr.f32.mxu0 0.0
        %3370 = vmatmul.mubr.f32.gmra.mxu0 %v3199
        %v3371 = vpop.f32.mrf.mxu0
        %v3372 = vadd.f32 0.0, %v3371
        %v3373 = vpop.f32.mrf.mxu0
        %3374 = vmatprep.mubr.f32.mxu0 0.0
        %3375 = vmatmul.mubr.f32.gmra.mxu0 %v3202
        %v3376 = vpop.f32.mrf.mxu0
        %v3377 = vadd.f32 0.0, %v3376
        %v3378 = vpop.f32.mrf.mxu0
        %3379 = vmatprep.mubr.f32.mxu0 0.0
        %3380 = vmatmul.mubr.f32.gmra.mxu0 %v3205
        %v3381 = vpop.f32.mrf.mxu0
        %v3382 = vadd.f32 0.0, %v3381
        %v3383 = vpop.f32.mrf.mxu0
        %3384 = vmatprep.mubr.f32.mxu0 0.0
        %3385 = vmatmul.mubr.f32.gmra.mxu0 %v3208
        %v3386 = vpop.f32.mrf.mxu0
        %v3387 = vadd.f32 0.0, %v3386
        %v3388 = vpop.f32.mrf.mxu0
        %3389 = vmatprep.mubr.f32.mxu0 0.0
        %3390 = vmatmul.mubr.f32.gmra.mxu0 %v3211
        %v3391 = vpop.f32.mrf.mxu0
        %v3392 = vadd.f32 0.0, %v3391
        %v3393 = vpop.f32.mrf.mxu0
        %3394 = vmatprep.mubr.f32.mxu0 0.0
        %3395 = vmatmul.mubr.f32.gmra.mxu0 %v3214
        %v3396 = vpop.f32.mrf.mxu0
        %v3397 = vadd.f32 0.0, %v3396
        %v3398 = vpop.f32.mrf.mxu0
        %3399 = vmatprep.mubr.f32.mxu0 0.0
        %3400 = vmatmul.mubr.f32.gmra.mxu0 %v3217
        %v3401 = vpop.f32.mrf.mxu0
        %v3402 = vadd.f32 0.0, %v3401
        %v3403 = vpop.f32.mrf.mxu0
        %3404 = vmatprep.mubr.f32.mxu0 0.0
        %3405 = vmatmul.mubr.f32.gmra.mxu0 %v3220
        %v3406 = vpop.f32.mrf.mxu0
        %v3407 = vadd.f32 0.0, %v3406
        %v3408 = vpop.f32.mrf.mxu0
        %3409 = vmatprep.mubr.f32.mxu0 0.0
        %3410 = vmatmul.mubr.f32.gmra.mxu0 %v3223
        %v3411 = vpop.f32.mrf.mxu0
        %v3412 = vadd.f32 0.0, %v3411
        %v3413 = vpop.f32.mrf.mxu0
        %3414 = vmatprep.mubr.f32.mxu0 0.0
        %3415 = vmatmul.mubr.f32.gmra.mxu0 %v3226
        %v3416 = vpop.f32.mrf.mxu0
        %v3417 = vadd.f32 0.0, %v3416
        %v3418 = vpop.f32.mrf.mxu0
        %3419 = vmatprep.mubr.f32.mxu0 0.0
        %3420 = vmatmul.mubr.f32.gmra.mxu0 %v3229
        %v3421 = vpop.f32.mrf.mxu0
        %v3422 = vadd.f32 0.0, %v3421
        %v3423 = vpop.f32.mrf.mxu0
        %3424 = vmatprep.mubr.f32.mxu0 0.0
        %3425 = vmatmul.mubr.f32.gmra.mxu0 %v3232
        %v3426 = vpop.f32.mrf.mxu0
        %v3427 = vadd.f32 0.0, %v3426
        %v3428 = vpop.f32.mrf.mxu0
        %3429 = vmatprep.mubr.f32.mxu0 0.0
        %3430 = vmatmul.mubr.f32.gmra.mxu0 %v3235
        %v3431 = vpop.f32.mrf.mxu0
        %v3432 = vadd.f32 0.0, %v3431
        %v3433 = vpop.f32.mrf.mxu0
        %3434 = vmatprep.mubr.f32.mxu0 0.0
        %3435 = vmatmul.mubr.f32.gmra.mxu0 %v3238
        %v3436 = vpop.f32.mrf.mxu0
        %v3437 = vadd.f32 0.0, %v3436
        %v3438 = vpop.f32.mrf.mxu0
        %3439 = vmatprep.mubr.f32.mxu0 0.0
        %3440 = vmatmul.mubr.f32.gmra.mxu0 %v3241
        %v3441 = vpop.f32.mrf.mxu0
        %v3442 = vadd.f32 0.0, %v3441
        %v3443 = vpop.f32.mrf.mxu0
        %3444 = vmatprep.mubr.f32.mxu0 0.0
        %3445 = vmatmul.mubr.f32.gmra.mxu0 %v3244
        %v3446 = vpop.f32.mrf.mxu0
        %v3447 = vadd.f32 0.0, %v3446
        %v3448 = vpop.f32.mrf.mxu0
        %3449 = vmatprep.mubr.f32.mxu0 0.0
        %3450 = vmatmul.mubr.f32.gmra.mxu0 %v3247
        %v3451 = vpop.f32.mrf.mxu0
        %v3452 = vadd.f32 0.0, %v3451
        %v3453 = vpop.f32.mrf.mxu0
        %3454 = vmatprep.mubr.f32.mxu0 0.0
        %3455 = vmatmul.mubr.f32.gmra.mxu0 %v3250
        %v3456 = vpop.f32.mrf.mxu0
        %v3457 = vadd.f32 0.0, %v3456
        %v3458 = vpop.f32.mrf.mxu0
        %3459 = vmatprep.mubr.f32.mxu0 0.0
        %3460 = vmatmul.mubr.f32.gmra.mxu0 %v3253
        %v3461 = vpop.f32.mrf.mxu0
        %v3462 = vadd.f32 0.0, %v3461
        %v3463 = vpop.f32.mrf.mxu0
        %3464 = vmatprep.mubr.f32.mxu0 0.0
        %3465 = vmatmul.mubr.f32.gmra.mxu0 %v3256
        %v3466 = vpop.f32.mrf.mxu0
        %v3467 = vadd.f32 0.0, %v3466
        %v3468 = vpop.f32.mrf.mxu0
        %3469 = vmatprep.mubr.f32.mxu0 0.0
        %3470 = vmatmul.mubr.f32.gmra.mxu0 %v3259
        %v3471 = vpop.f32.mrf.mxu0
        %v3472 = vadd.f32 0.0, %v3471
        %v3473 = vpop.f32.mrf.mxu0
        %3474 = vmatprep.mubr.f32.mxu0 0.0
        %3475 = vmatmul.mubr.f32.gmra.mxu0 %v3262
        %v3476 = vpop.f32.mrf.mxu0
        %v3477 = vadd.f32 0.0, %v3476
        %v3478 = vpop.f32.mrf.mxu0
        %3479 = vmatprep.mubr.f32.mxu0 0.0
        %3480 = vmatmul.mubr.f32.gmra.mxu0 %v3265
        %v3481 = vpop.f32.mrf.mxu0
        %v3482 = vadd.f32 0.0, %v3481
        %v3483 = vpop.f32.mrf.mxu0
        %3484 = vmatprep.mubr.f32.mxu0 0.0
        %3485 = vmatmul.mubr.f32.gmra.mxu0 %v3268
        %v3486 = vpop.f32.mrf.mxu0
        %v3487 = vadd.f32 0.0, %v3486
        %v3488 = vpop.f32.mrf.mxu0
        %3489 = vmatprep.mubr.f32.mxu0 0.0
        %3490 = vmatmul.mubr.f32.gmra.mxu0 %v3271
        %v3491 = vpop.f32.mrf.mxu0
        %v3492 = vadd.f32 0.0, %v3491
        %v3493 = vpop.f32.mrf.mxu0
        %3494 = vmatprep.mubr.f32.mxu0 0.0
        %3495 = vmatmul.mubr.f32.gmra.mxu0 %v3274
        %v3496 = vpop.f32.mrf.mxu0
        %v3497 = vadd.f32 0.0, %v3496
        %v3498 = vpop.f32.mrf.mxu0
        %3499 = vmatprep.mubr.f32.mxu0 0.0
        %3500 = vmatmul.mubr.f32.gmra.mxu0 %v3277
        %v3501 = vpop.f32.mrf.mxu0
        %v3502 = vadd.f32 0.0, %v3501
        %v3503 = vpop.f32.mrf.mxu0
        %3504 = vmatprep.mubr.f32.mxu0 0.0
        %3505 = vmatmul.mubr.f32.gmra.mxu0 %v3280
        %v3506 = vpop.f32.mrf.mxu0
        %v3507 = vadd.f32 0.0, %v3506
        %v3508 = vpop.f32.mrf.mxu0
        %3509 = vdwg.mxu0
        %v3510 = vadd.f32 %v3088, %v3352
        %v3511 = vadd.f32 %v3089, %v3357
        %v3512 = vadd.f32 %v3090, %v3362
        %v3513 = vadd.f32 %v3091, %v3367
        %v3514 = vadd.f32 %v3092, %v3372
        %v3515 = vadd.f32 %v3093, %v3377
        %v3516 = vadd.f32 %v3094, %v3382
        %v3517 = vadd.f32 %v3095, %v3387
        %v3518 = vadd.f32 %v3096, %v3392
        %v3519 = vadd.f32 %v3097, %v3397
        %v3520 = vadd.f32 %v3098, %v3402
        %v3521 = vadd.f32 %v3099, %v3407
        %v3522 = vadd.f32 %v3100, %v3412
        %v3523 = vadd.f32 %v3101, %v3417
        %v3524 = vadd.f32 %v3102, %v3422
        %v3525 = vadd.f32 %v3103, %v3427
        %v3526 = vadd.f32 %v3104, %v3432
        %v3527 = vadd.f32 %v3105, %v3437
        %v3528 = vadd.f32 %v3106, %v3442
        %v3529 = vadd.f32 %v3107, %v3447
        %v3530 = vadd.f32 %v3108, %v3452
        %v3531 = vadd.f32 %v3109, %v3457
        %v3532 = vadd.f32 %v3110, %v3462
        %v3533 = vadd.f32 %v3111, %v3467
        %v3534 = vadd.f32 %v3112, %v3472
        %v3535 = vadd.f32 %v3113, %v3477
        %v3536 = vadd.f32 %v3114, %v3482
        %v3537 = vadd.f32 %v3115, %v3487
        %v3538 = vadd.f32 %v3116, %v3492
        %v3539 = vadd.f32 %v3117, %v3497
        %v3540 = vadd.f32 %v3118, %v3502
        %v3541 = vadd.f32 %v3119, %v3507
        %v3542 = vld [vmem:[#allocation2 + $0x20] sm:$0xff]
        %v3543 = vld [vmem:[#allocation2 + $0x28] sm:$0xff]
        %v3544 = vld [vmem:[#allocation2 + $0x30] sm:$0xff]
        %v3545 = vld [vmem:[#allocation2 + $0x38] sm:$0xff]
        %v3546 = vld [vmem:[#allocation2 + $0x40] sm:$0xff]
        %v3547 = vld [vmem:[#allocation2 + $0x48] sm:$0xff]
        %v3548 = vld [vmem:[#allocation2 + $0x50] sm:$0xff]
        %v3549 = vld [vmem:[#allocation2 + $0x58] sm:$0xff]
        %v3550 = vld [vmem:[#allocation2 + $0x60] sm:$0xff]
        %v3551 = vld [vmem:[#allocation2 + $0x68] sm:$0xff]
        %v3552 = vld [vmem:[#allocation2 + $0x70] sm:$0xff]
        %v3553 = vld [vmem:[#allocation2 + $0x78] sm:$0xff]
        %v3554 = vld [vmem:[#allocation2 + $0x80] sm:$0xff]
        %v3555 = vld [vmem:[#allocation2 + $0x88] sm:$0xff]
        %v3556 = vld [vmem:[#allocation2 + $0x90] sm:$0xff]
        %v3557 = vld [vmem:[#allocation2 + $0x98] sm:$0xff]
        %v3558 = vld [vmem:[#allocation2 + $0xa0] sm:$0xff]
        %v3559 = vld [vmem:[#allocation2 + $0xa8] sm:$0xff]
        %v3560 = vld [vmem:[#allocation2 + $0xb0] sm:$0xff]
        %v3561 = vld [vmem:[#allocation2 + $0xb8] sm:$0xff]
        %v3562 = vld [vmem:[#allocation2 + $0xc0] sm:$0xff]
        %v3563 = vld [vmem:[#allocation2 + $0xc8] sm:$0xff]
        %v3564 = vld [vmem:[#allocation2 + $0xd0] sm:$0xff]
        %v3565 = vld [vmem:[#allocation2 + $0xd8] sm:$0xff]
        %v3566 = vld [vmem:[#allocation2 + $0xe0] sm:$0xff]
        %v3567 = vld [vmem:[#allocation2 + $0xe8] sm:$0xff]
        %v3568 = vld [vmem:[#allocation2 + $0xf0] sm:$0xff]
        %v3569 = vld [vmem:[#allocation2 + $0xf8] sm:$0xff]
        %v3570 = vld [vmem:[#allocation2 + $0x100] sm:$0xff]
        %v3571 = vld [vmem:[#allocation2 + $0x108] sm:$0xff]
        %v3572 = vld [vmem:[#allocation2 + $0x110] sm:$0xff]
        %v3573 = vld [vmem:[#allocation2 + $0x118] sm:$0xff]
        %v3574 = vmul.f32 %v3542, %v789
        %v3575 = vmul.f32 %v3543, %v794
        %v3576 = vmul.f32 %v3544, %v799
        %v3577 = vmul.f32 %v3545, %v804
        %v3578 = vmul.f32 %v3546, %v809
        %v3579 = vmul.f32 %v3547, %v814
        %v3580 = vmul.f32 %v3548, %v819
        %v3581 = vmul.f32 %v3549, %v824
        %v3582 = vmul.f32 %v3550, %v829
        %v3583 = vmul.f32 %v3551, %v834
        %v3584 = vmul.f32 %v3552, %v839
        %v3585 = vmul.f32 %v3553, %v844
        %v3586 = vmul.f32 %v3554, %v849
        %v3587 = vmul.f32 %v3555, %v854
        %v3588 = vmul.f32 %v3556, %v859
        %v3589 = vmul.f32 %v3557, %v864
        %v3590 = vmul.f32 %v3558, %v869
        %v3591 = vmul.f32 %v3559, %v874
        %v3592 = vmul.f32 %v3560, %v879
        %v3593 = vmul.f32 %v3561, %v884
        %v3594 = vmul.f32 %v3562, %v889
        %v3595 = vmul.f32 %v3563, %v894
        %v3596 = vmul.f32 %v3564, %v899
        %v3597 = vmul.f32 %v3565, %v904
        %v3598 = vmul.f32 %v3566, %v909
        %v3599 = vmul.f32 %v3567, %v914
        %v3600 = vmul.f32 %v3568, %v919
        %v3601 = vmul.f32 %v3569, %v924
        %v3602 = vmul.f32 %v3570, %v929
        %v3603 = vmul.f32 %v3571, %v934
        %v3604 = vmul.f32 %v3572, %v939
        %v3605 = vmul.f32 %v3573, %v944
        %s3606 = scalar_lea.vmem %s4, 24
        %v3607 = vld [vmem:[%s3606] sm:$0xf]
        %v3609 = vsel %vm643, %v3574, 0
        %v3612 = vsel %vm643, %v3575, 0
        %v3615 = vsel %vm643, %v3576, 0
        %v3618 = vsel %vm643, %v3577, 0
        %v3621 = vsel %vm643, %v3578, 0
        %v3624 = vsel %vm643, %v3579, 0
        %v3627 = vsel %vm643, %v3580, 0
        %v3630 = vsel %vm643, %v3581, 0
        %v3633 = vsel %vm643, %v3582, 0
        %v3636 = vsel %vm643, %v3583, 0
        %v3639 = vsel %vm643, %v3584, 0
        %v3642 = vsel %vm643, %v3585, 0
        %v3645 = vsel %vm643, %v3586, 0
        %v3648 = vsel %vm643, %v3587, 0
        %v3651 = vsel %vm643, %v3588, 0
        %v3654 = vsel %vm643, %v3589, 0
        %v3657 = vsel %vm643, %v3590, 0
        %v3660 = vsel %vm643, %v3591, 0
        %v3663 = vsel %vm643, %v3592, 0
        %v3666 = vsel %vm643, %v3593, 0
        %v3669 = vsel %vm643, %v3594, 0
        %v3672 = vsel %vm643, %v3595, 0
        %v3675 = vsel %vm643, %v3596, 0
        %v3678 = vsel %vm643, %v3597, 0
        %v3681 = vsel %vm643, %v3598, 0
        %v3684 = vsel %vm643, %v3599, 0
        %v3687 = vsel %vm643, %v3600, 0
        %v3690 = vsel %vm643, %v3601, 0
        %v3693 = vsel %vm643, %v3602, 0
        %v3696 = vsel %vm643, %v3603, 0
        %v3699 = vsel %vm643, %v3604, 0
        %v3702 = vsel %vm643, %v3605, 0
        %v3705 = vsel %vm1075, %v3607, 0
        %3707 = vmatprep.subr.mxu0 0.0
        %3708 = vmatpush1.msra.mxu0 0.0
        %3709 = vmatprep.subr.mxu0 0.0
        %3710 = vmatpush1.msra.mxu0 0.0
        %3711 = vmatprep.subr.mxu0 0.0
        %3712 = vmatpush1.msra.mxu0 0.0
        %3713 = vmatprep.subr.mxu0 0.0
        %3714 = vmatpush1.msra.mxu0 0.0
        %3715 = vmatprep.subr.mxu0 0.0
        %3716 = vmatpush1.msra.mxu0 0.0
        %3717 = vmatprep.subr.mxu0 0.0
        %3718 = vmatpush1.msra.mxu0 0.0
        %3719 = vmatprep.subr.mxu0 0.0
        %3720 = vmatpush1.msra.mxu0 0.0
        %3721 = vmatprep.subr.mxu0 0.0
        %3722 = vmatpush1.msra.mxu0 0.0
        %3723 = vmatprep.subr.mxu0 0.0
        %3724 = vmatpush1.msra.mxu0 0.0
        %3725 = vmatprep.subr.mxu0 0.0
        %3726 = vmatpush1.msra.mxu0 0.0
        %3727 = vmatprep.subr.mxu0 0.0
        %3728 = vmatpush1.msra.mxu0 0.0
        %3729 = vmatprep.subr.mxu0 0.0
        %3730 = vmatpush1.msra.mxu0 0.0
        %3731 = vmatprep.subr.mxu0 0.0
        %3732 = vmatpush1.msra.mxu0 0.0
        %3733 = vmatprep.subr.mxu0 0.0
        %3734 = vmatpush1.msra.mxu0 0.0
        %3735 = vmatprep.subr.mxu0 0.0
        %3736 = vmatpush1.msra.mxu0 0.0
        %3737 = vmatprep.subr.mxu0 0.0
        %3738 = vmatpush1.msra.mxu0 %v3705
        %3739 = vmatprep.subr.mxu0 0.0
        %3740 = vmatpush2.msra.mxu0 0.0
        %3741 = vmatprep.subr.mxu0 0.0
        %3742 = vmatpush2.msra.mxu0 0.0
        %3743 = vmatprep.subr.mxu0 0.0
        %3744 = vmatpush2.msra.mxu0 0.0
        %3745 = vmatprep.subr.mxu0 0.0
        %3746 = vmatpush2.msra.mxu0 0.0
        %3747 = vmatprep.subr.mxu0 0.0
        %3748 = vmatpush2.msra.mxu0 0.0
        %3749 = vmatprep.subr.mxu0 0.0
        %3750 = vmatpush2.msra.mxu0 0.0
        %3751 = vmatprep.subr.mxu0 0.0
        %3752 = vmatpush2.msra.mxu0 0.0
        %3753 = vmatprep.subr.mxu0 0.0
        %3754 = vmatpush2.msra.mxu0 0.0
        %3755 = vmatprep.subr.mxu0 0.0
        %3756 = vmatpush2.msra.mxu0 0.0
        %3757 = vmatprep.subr.mxu0 0.0
        %3758 = vmatpush2.msra.mxu0 0.0
        %3759 = vmatprep.subr.mxu0 0.0
        %3760 = vmatpush2.msra.mxu0 0.0
        %3761 = vmatprep.subr.mxu0 0.0
        %3762 = vmatpush2.msra.mxu0 0.0
        %3763 = vmatprep.subr.mxu0 0.0
        %3764 = vmatpush2.msra.mxu0 0.0
        %3765 = vmatprep.subr.mxu0 0.0
        %3766 = vmatpush2.msra.mxu0 0.0
        %3767 = vmatprep.subr.mxu0 0.0
        %3768 = vmatpush2.msra.mxu0 0.0
        %3769 = vmatprep.subr.mxu0 0.0
        %3770 = vmatpush2.msra.mxu0 0.0
        %3771 = vmatprep.mubr.f32.mxu0 0.0
        %3772 = vmatmul.mubr.f32.gmra.mxu0 %v3609
        %v3773 = vpop.f32.mrf.mxu0
        %v3774 = vadd.f32 0.0, %v3773
        %v3775 = vpop.f32.mrf.mxu0
        %3776 = vmatprep.mubr.f32.mxu0 0.0
        %3777 = vmatmul.mubr.f32.gmra.mxu0 %v3612
        %v3778 = vpop.f32.mrf.mxu0
        %v3779 = vadd.f32 0.0, %v3778
        %v3780 = vpop.f32.mrf.mxu0
        %3781 = vmatprep.mubr.f32.mxu0 0.0
        %3782 = vmatmul.mubr.f32.gmra.mxu0 %v3615
        %v3783 = vpop.f32.mrf.mxu0
        %v3784 = vadd.f32 0.0, %v3783
        %v3785 = vpop.f32.mrf.mxu0
        %3786 = vmatprep.mubr.f32.mxu0 0.0
        %3787 = vmatmul.mubr.f32.gmra.mxu0 %v3618
        %v3788 = vpop.f32.mrf.mxu0
        %v3789 = vadd.f32 0.0, %v3788
        %v3790 = vpop.f32.mrf.mxu0
        %3791 = vmatprep.mubr.f32.mxu0 0.0
        %3792 = vmatmul.mubr.f32.gmra.mxu0 %v3621
        %v3793 = vpop.f32.mrf.mxu0
        %v3794 = vadd.f32 0.0, %v3793
        %v3795 = vpop.f32.mrf.mxu0
        %3796 = vmatprep.mubr.f32.mxu0 0.0
        %3797 = vmatmul.mubr.f32.gmra.mxu0 %v3624
        %v3798 = vpop.f32.mrf.mxu0
        %v3799 = vadd.f32 0.0, %v3798
        %v3800 = vpop.f32.mrf.mxu0
        %3801 = vmatprep.mubr.f32.mxu0 0.0
        %3802 = vmatmul.mubr.f32.gmra.mxu0 %v3627
        %v3803 = vpop.f32.mrf.mxu0
        %v3804 = vadd.f32 0.0, %v3803
        %v3805 = vpop.f32.mrf.mxu0
        %3806 = vmatprep.mubr.f32.mxu0 0.0
        %3807 = vmatmul.mubr.f32.gmra.mxu0 %v3630
        %v3808 = vpop.f32.mrf.mxu0
        %v3809 = vadd.f32 0.0, %v3808
        %v3810 = vpop.f32.mrf.mxu0
        %3811 = vmatprep.mubr.f32.mxu0 0.0
        %3812 = vmatmul.mubr.f32.gmra.mxu0 %v3633
        %v3813 = vpop.f32.mrf.mxu0
        %v3814 = vadd.f32 0.0, %v3813
        %v3815 = vpop.f32.mrf.mxu0
        %3816 = vmatprep.mubr.f32.mxu0 0.0
        %3817 = vmatmul.mubr.f32.gmra.mxu0 %v3636
        %v3818 = vpop.f32.mrf.mxu0
        %v3819 = vadd.f32 0.0, %v3818
        %v3820 = vpop.f32.mrf.mxu0
        %3821 = vmatprep.mubr.f32.mxu0 0.0
        %3822 = vmatmul.mubr.f32.gmra.mxu0 %v3639
        %v3823 = vpop.f32.mrf.mxu0
        %v3824 = vadd.f32 0.0, %v3823
        %v3825 = vpop.f32.mrf.mxu0
        %3826 = vmatprep.mubr.f32.mxu0 0.0
        %3827 = vmatmul.mubr.f32.gmra.mxu0 %v3642
        %v3828 = vpop.f32.mrf.mxu0
        %v3829 = vadd.f32 0.0, %v3828
        %v3830 = vpop.f32.mrf.mxu0
        %3831 = vmatprep.mubr.f32.mxu0 0.0
        %3832 = vmatmul.mubr.f32.gmra.mxu0 %v3645
        %v3833 = vpop.f32.mrf.mxu0
        %v3834 = vadd.f32 0.0, %v3833
        %v3835 = vpop.f32.mrf.mxu0
        %3836 = vmatprep.mubr.f32.mxu0 0.0
        %3837 = vmatmul.mubr.f32.gmra.mxu0 %v3648
        %v3838 = vpop.f32.mrf.mxu0
        %v3839 = vadd.f32 0.0, %v3838
        %v3840 = vpop.f32.mrf.mxu0
        %3841 = vmatprep.mubr.f32.mxu0 0.0
        %3842 = vmatmul.mubr.f32.gmra.mxu0 %v3651
        %v3843 = vpop.f32.mrf.mxu0
        %v3844 = vadd.f32 0.0, %v3843
        %v3845 = vpop.f32.mrf.mxu0
        %3846 = vmatprep.mubr.f32.mxu0 0.0
        %3847 = vmatmul.mubr.f32.gmra.mxu0 %v3654
        %v3848 = vpop.f32.mrf.mxu0
        %v3849 = vadd.f32 0.0, %v3848
        %v3850 = vpop.f32.mrf.mxu0
        %3851 = vmatprep.mubr.f32.mxu0 0.0
        %3852 = vmatmul.mubr.f32.gmra.mxu0 %v3657
        %v3853 = vpop.f32.mrf.mxu0
        %v3854 = vadd.f32 0.0, %v3853
        %v3855 = vpop.f32.mrf.mxu0
        %3856 = vmatprep.mubr.f32.mxu0 0.0
        %3857 = vmatmul.mubr.f32.gmra.mxu0 %v3660
        %v3858 = vpop.f32.mrf.mxu0
        %v3859 = vadd.f32 0.0, %v3858
        %v3860 = vpop.f32.mrf.mxu0
        %3861 = vmatprep.mubr.f32.mxu0 0.0
        %3862 = vmatmul.mubr.f32.gmra.mxu0 %v3663
        %v3863 = vpop.f32.mrf.mxu0
        %v3864 = vadd.f32 0.0, %v3863
        %v3865 = vpop.f32.mrf.mxu0
        %3866 = vmatprep.mubr.f32.mxu0 0.0
        %3867 = vmatmul.mubr.f32.gmra.mxu0 %v3666
        %v3868 = vpop.f32.mrf.mxu0
        %v3869 = vadd.f32 0.0, %v3868
        %v3870 = vpop.f32.mrf.mxu0
        %3871 = vmatprep.mubr.f32.mxu0 0.0
        %3872 = vmatmul.mubr.f32.gmra.mxu0 %v3669
        %v3873 = vpop.f32.mrf.mxu0
        %v3874 = vadd.f32 0.0, %v3873
        %v3875 = vpop.f32.mrf.mxu0
        %3876 = vmatprep.mubr.f32.mxu0 0.0
        %3877 = vmatmul.mubr.f32.gmra.mxu0 %v3672
        %v3878 = vpop.f32.mrf.mxu0
        %v3879 = vadd.f32 0.0, %v3878
        %v3880 = vpop.f32.mrf.mxu0
        %3881 = vmatprep.mubr.f32.mxu0 0.0
        %3882 = vmatmul.mubr.f32.gmra.mxu0 %v3675
        %v3883 = vpop.f32.mrf.mxu0
        %v3884 = vadd.f32 0.0, %v3883
        %v3885 = vpop.f32.mrf.mxu0
        %3886 = vmatprep.mubr.f32.mxu0 0.0
        %3887 = vmatmul.mubr.f32.gmra.mxu0 %v3678
        %v3888 = vpop.f32.mrf.mxu0
        %v3889 = vadd.f32 0.0, %v3888
        %v3890 = vpop.f32.mrf.mxu0
        %3891 = vmatprep.mubr.f32.mxu0 0.0
        %3892 = vmatmul.mubr.f32.gmra.mxu0 %v3681
        %v3893 = vpop.f32.mrf.mxu0
        %v3894 = vadd.f32 0.0, %v3893
        %v3895 = vpop.f32.mrf.mxu0
        %3896 = vmatprep.mubr.f32.mxu0 0.0
        %3897 = vmatmul.mubr.f32.gmra.mxu0 %v3684
        %v3898 = vpop.f32.mrf.mxu0
        %v3899 = vadd.f32 0.0, %v3898
        %v3900 = vpop.f32.mrf.mxu0
        %3901 = vmatprep.mubr.f32.mxu0 0.0
        %3902 = vmatmul.mubr.f32.gmra.mxu0 %v3687
        %v3903 = vpop.f32.mrf.mxu0
        %v3904 = vadd.f32 0.0, %v3903
        %v3905 = vpop.f32.mrf.mxu0
        %3906 = vmatprep.mubr.f32.mxu0 0.0
        %3907 = vmatmul.mubr.f32.gmra.mxu0 %v3690
        %v3908 = vpop.f32.mrf.mxu0
        %v3909 = vadd.f32 0.0, %v3908
        %v3910 = vpop.f32.mrf.mxu0
        %3911 = vmatprep.mubr.f32.mxu0 0.0
        %3912 = vmatmul.mubr.f32.gmra.mxu0 %v3693
        %v3913 = vpop.f32.mrf.mxu0
        %v3914 = vadd.f32 0.0, %v3913
        %v3915 = vpop.f32.mrf.mxu0
        %3916 = vmatprep.mubr.f32.mxu0 0.0
        %3917 = vmatmul.mubr.f32.gmra.mxu0 %v3696
        %v3918 = vpop.f32.mrf.mxu0
        %v3919 = vadd.f32 0.0, %v3918
        %v3920 = vpop.f32.mrf.mxu0
        %3921 = vmatprep.mubr.f32.mxu0 0.0
        %3922 = vmatmul.mubr.f32.gmra.mxu0 %v3699
        %v3923 = vpop.f32.mrf.mxu0
        %v3924 = vadd.f32 0.0, %v3923
        %v3925 = vpop.f32.mrf.mxu0
        %3926 = vmatprep.mubr.f32.mxu0 0.0
        %3927 = vmatmul.mubr.f32.gmra.mxu0 %v3702
        %v3928 = vpop.f32.mrf.mxu0
        %v3929 = vadd.f32 0.0, %v3928
        %v3930 = vpop.f32.mrf.mxu0
        %3931 = vdwg.mxu0
        %v3932 = vadd.f32 %v3510, %v3774
        %v3933 = vadd.f32 %v3511, %v3779
        %v3934 = vadd.f32 %v3512, %v3784
        %v3935 = vadd.f32 %v3513, %v3789
        %v3936 = vadd.f32 %v3514, %v3794
        %v3937 = vadd.f32 %v3515, %v3799
        %v3938 = vadd.f32 %v3516, %v3804
        %v3939 = vadd.f32 %v3517, %v3809
        %v3940 = vadd.f32 %v3518, %v3814
        %v3941 = vadd.f32 %v3519, %v3819
        %v3942 = vadd.f32 %v3520, %v3824
        %v3943 = vadd.f32 %v3521, %v3829
        %v3944 = vadd.f32 %v3522, %v3834
        %v3945 = vadd.f32 %v3523, %v3839
        %v3946 = vadd.f32 %v3524, %v3844
        %v3947 = vadd.f32 %v3525, %v3849
        %v3948 = vadd.f32 %v3526, %v3854
        %v3949 = vadd.f32 %v3527, %v3859
        %v3950 = vadd.f32 %v3528, %v3864
        %v3951 = vadd.f32 %v3529, %v3869
        %v3952 = vadd.f32 %v3530, %v3874
        %v3953 = vadd.f32 %v3531, %v3879
        %v3954 = vadd.f32 %v3532, %v3884
        %v3955 = vadd.f32 %v3533, %v3889
        %v3956 = vadd.f32 %v3534, %v3894
        %v3957 = vadd.f32 %v3535, %v3899
        %v3958 = vadd.f32 %v3536, %v3904
        %v3959 = vadd.f32 %v3537, %v3909
        %v3960 = vadd.f32 %v3538, %v3914
        %v3961 = vadd.f32 %v3539, %v3919
        %v3962 = vadd.f32 %v3540, %v3924
        %v3963 = vadd.f32 %v3541, %v3929
        %v3964 = vld [vmem:[#allocation2 + $0x21] sm:$0xff]
        %v3965 = vld [vmem:[#allocation2 + $0x29] sm:$0xff]
        %v3966 = vld [vmem:[#allocation2 + $0x31] sm:$0xff]
        %v3967 = vld [vmem:[#allocation2 + $0x39] sm:$0xff]
        %v3968 = vld [vmem:[#allocation2 + $0x41] sm:$0xff]
        %v3969 = vld [vmem:[#allocation2 + $0x49] sm:$0xff]
        %v3970 = vld [vmem:[#allocation2 + $0x51] sm:$0xff]
        %v3971 = vld [vmem:[#allocation2 + $0x59] sm:$0xff]
        %v3972 = vld [vmem:[#allocation2 + $0x61] sm:$0xff]
        %v3973 = vld [vmem:[#allocation2 + $0x69] sm:$0xff]
        %v3974 = vld [vmem:[#allocation2 + $0x71] sm:$0xff]
        %v3975 = vld [vmem:[#allocation2 + $0x79] sm:$0xff]
        %v3976 = vld [vmem:[#allocation2 + $0x81] sm:$0xff]
        %v3977 = vld [vmem:[#allocation2 + $0x89] sm:$0xff]
        %v3978 = vld [vmem:[#allocation2 + $0x91] sm:$0xff]
        %v3979 = vld [vmem:[#allocation2 + $0x99] sm:$0xff]
        %v3980 = vld [vmem:[#allocation2 + $0xa1] sm:$0xff]
        %v3981 = vld [vmem:[#allocation2 + $0xa9] sm:$0xff]
        %v3982 = vld [vmem:[#allocation2 + $0xb1] sm:$0xff]
        %v3983 = vld [vmem:[#allocation2 + $0xb9] sm:$0xff]
        %v3984 = vld [vmem:[#allocation2 + $0xc1] sm:$0xff]
        %v3985 = vld [vmem:[#allocation2 + $0xc9] sm:$0xff]
        %v3986 = vld [vmem:[#allocation2 + $0xd1] sm:$0xff]
        %v3987 = vld [vmem:[#allocation2 + $0xd9] sm:$0xff]
        %v3988 = vld [vmem:[#allocation2 + $0xe1] sm:$0xff]
        %v3989 = vld [vmem:[#allocation2 + $0xe9] sm:$0xff]
        %v3990 = vld [vmem:[#allocation2 + $0xf1] sm:$0xff]
        %v3991 = vld [vmem:[#allocation2 + $0xf9] sm:$0xff]
        %v3992 = vld [vmem:[#allocation2 + $0x101] sm:$0xff]
        %v3993 = vld [vmem:[#allocation2 + $0x109] sm:$0xff]
        %v3994 = vld [vmem:[#allocation2 + $0x111] sm:$0xff]
        %v3995 = vld [vmem:[#allocation2 + $0x119] sm:$0xff]
        %s3996 = scalar_lea.vmem %s4, 28
        %v3997 = vld [vmem:[%s3996] sm:$0xf]
        %v3999 = vsel %vm643, %v3964, 0
        %v4002 = vsel %vm643, %v3965, 0
        %v4005 = vsel %vm643, %v3966, 0
        %v4008 = vsel %vm643, %v3967, 0
        %v4011 = vsel %vm643, %v3968, 0
        %v4014 = vsel %vm643, %v3969, 0
        %v4017 = vsel %vm643, %v3970, 0
        %v4020 = vsel %vm643, %v3971, 0
        %v4023 = vsel %vm643, %v3972, 0
        %v4026 = vsel %vm643, %v3973, 0
        %v4029 = vsel %vm643, %v3974, 0
        %v4032 = vsel %vm643, %v3975, 0
        %v4035 = vsel %vm643, %v3976, 0
        %v4038 = vsel %vm643, %v3977, 0
        %v4041 = vsel %vm643, %v3978, 0
        %v4044 = vsel %vm643, %v3979, 0
        %v4047 = vsel %vm643, %v3980, 0
        %v4050 = vsel %vm643, %v3981, 0
        %v4053 = vsel %vm643, %v3982, 0
        %v4056 = vsel %vm643, %v3983, 0
        %v4059 = vsel %vm643, %v3984, 0
        %v4062 = vsel %vm643, %v3985, 0
        %v4065 = vsel %vm643, %v3986, 0
        %v4068 = vsel %vm643, %v3987, 0
        %v4071 = vsel %vm643, %v3988, 0
        %v4074 = vsel %vm643, %v3989, 0
        %v4077 = vsel %vm643, %v3990, 0
        %v4080 = vsel %vm643, %v3991, 0
        %v4083 = vsel %vm643, %v3992, 0
        %v4086 = vsel %vm643, %v3993, 0
        %v4089 = vsel %vm643, %v3994, 0
        %v4092 = vsel %vm643, %v3995, 0
        %v4095 = vsel %vm1075, %v3997, 0
        %4097 = vmatprep.subr.mxu0 0.0
        %4098 = vmatpush1.msra.mxu0 0.0
        %4099 = vmatprep.subr.mxu0 0.0
        %4100 = vmatpush1.msra.mxu0 0.0
        %4101 = vmatprep.subr.mxu0 0.0
        %4102 = vmatpush1.msra.mxu0 0.0
        %4103 = vmatprep.subr.mxu0 0.0
        %4104 = vmatpush1.msra.mxu0 0.0
        %4105 = vmatprep.subr.mxu0 0.0
        %4106 = vmatpush1.msra.mxu0 0.0
        %4107 = vmatprep.subr.mxu0 0.0
        %4108 = vmatpush1.msra.mxu0 0.0
        %4109 = vmatprep.subr.mxu0 0.0
        %4110 = vmatpush1.msra.mxu0 0.0
        %4111 = vmatprep.subr.mxu0 0.0
        %4112 = vmatpush1.msra.mxu0 0.0
        %4113 = vmatprep.subr.mxu0 0.0
        %4114 = vmatpush1.msra.mxu0 0.0
        %4115 = vmatprep.subr.mxu0 0.0
        %4116 = vmatpush1.msra.mxu0 0.0
        %4117 = vmatprep.subr.mxu0 0.0
        %4118 = vmatpush1.msra.mxu0 0.0
        %4119 = vmatprep.subr.mxu0 0.0
        %4120 = vmatpush1.msra.mxu0 0.0
        %4121 = vmatprep.subr.mxu0 0.0
        %4122 = vmatpush1.msra.mxu0 0.0
        %4123 = vmatprep.subr.mxu0 0.0
        %4124 = vmatpush1.msra.mxu0 0.0
        %4125 = vmatprep.subr.mxu0 0.0
        %4126 = vmatpush1.msra.mxu0 0.0
        %4127 = vmatprep.subr.mxu0 0.0
        %4128 = vmatpush1.msra.mxu0 %v4095
        %4129 = vmatprep.subr.mxu0 0.0
        %4130 = vmatpush2.msra.mxu0 0.0
        %4131 = vmatprep.subr.mxu0 0.0
        %4132 = vmatpush2.msra.mxu0 0.0
        %4133 = vmatprep.subr.mxu0 0.0
        %4134 = vmatpush2.msra.mxu0 0.0
        %4135 = vmatprep.subr.mxu0 0.0
        %4136 = vmatpush2.msra.mxu0 0.0
        %4137 = vmatprep.subr.mxu0 0.0
        %4138 = vmatpush2.msra.mxu0 0.0
        %4139 = vmatprep.subr.mxu0 0.0
        %4140 = vmatpush2.msra.mxu0 0.0
        %4141 = vmatprep.subr.mxu0 0.0
        %4142 = vmatpush2.msra.mxu0 0.0
        %4143 = vmatprep.subr.mxu0 0.0
        %4144 = vmatpush2.msra.mxu0 0.0
        %4145 = vmatprep.subr.mxu0 0.0
        %4146 = vmatpush2.msra.mxu0 0.0
        %4147 = vmatprep.subr.mxu0 0.0
        %4148 = vmatpush2.msra.mxu0 0.0
        %4149 = vmatprep.subr.mxu0 0.0
        %4150 = vmatpush2.msra.mxu0 0.0
        %4151 = vmatprep.subr.mxu0 0.0
        %4152 = vmatpush2.msra.mxu0 0.0
        %4153 = vmatprep.subr.mxu0 0.0
        %4154 = vmatpush2.msra.mxu0 0.0
        %4155 = vmatprep.subr.mxu0 0.0
        %4156 = vmatpush2.msra.mxu0 0.0
        %4157 = vmatprep.subr.mxu0 0.0
        %4158 = vmatpush2.msra.mxu0 0.0
        %4159 = vmatprep.subr.mxu0 0.0
        %4160 = vmatpush2.msra.mxu0 0.0
        %4161 = vmatprep.mubr.f32.mxu0 0.0
        %4162 = vmatmul.mubr.f32.gmra.mxu0 %v3999
        %v4163 = vpop.f32.mrf.mxu0
        %v4164 = vadd.f32 0.0, %v4163
        %v4165 = vpop.f32.mrf.mxu0
        %4166 = vmatprep.mubr.f32.mxu0 0.0
        %4167 = vmatmul.mubr.f32.gmra.mxu0 %v4002
        %v4168 = vpop.f32.mrf.mxu0
        %v4169 = vadd.f32 0.0, %v4168
        %v4170 = vpop.f32.mrf.mxu0
        %4171 = vmatprep.mubr.f32.mxu0 0.0
        %4172 = vmatmul.mubr.f32.gmra.mxu0 %v4005
        %v4173 = vpop.f32.mrf.mxu0
        %v4174 = vadd.f32 0.0, %v4173
        %v4175 = vpop.f32.mrf.mxu0
        %4176 = vmatprep.mubr.f32.mxu0 0.0
        %4177 = vmatmul.mubr.f32.gmra.mxu0 %v4008
        %v4178 = vpop.f32.mrf.mxu0
        %v4179 = vadd.f32 0.0, %v4178
        %v4180 = vpop.f32.mrf.mxu0
        %4181 = vmatprep.mubr.f32.mxu0 0.0
        %4182 = vmatmul.mubr.f32.gmra.mxu0 %v4011
        %v4183 = vpop.f32.mrf.mxu0
        %v4184 = vadd.f32 0.0, %v4183
        %v4185 = vpop.f32.mrf.mxu0
        %4186 = vmatprep.mubr.f32.mxu0 0.0
        %4187 = vmatmul.mubr.f32.gmra.mxu0 %v4014
        %v4188 = vpop.f32.mrf.mxu0
        %v4189 = vadd.f32 0.0, %v4188
        %v4190 = vpop.f32.mrf.mxu0
        %4191 = vmatprep.mubr.f32.mxu0 0.0
        %4192 = vmatmul.mubr.f32.gmra.mxu0 %v4017
        %v4193 = vpop.f32.mrf.mxu0
        %v4194 = vadd.f32 0.0, %v4193
        %v4195 = vpop.f32.mrf.mxu0
        %4196 = vmatprep.mubr.f32.mxu0 0.0
        %4197 = vmatmul.mubr.f32.gmra.mxu0 %v4020
        %v4198 = vpop.f32.mrf.mxu0
        %v4199 = vadd.f32 0.0, %v4198
        %v4200 = vpop.f32.mrf.mxu0
        %4201 = vmatprep.mubr.f32.mxu0 0.0
        %4202 = vmatmul.mubr.f32.gmra.mxu0 %v4023
        %v4203 = vpop.f32.mrf.mxu0
        %v4204 = vadd.f32 0.0, %v4203
        %v4205 = vpop.f32.mrf.mxu0
        %4206 = vmatprep.mubr.f32.mxu0 0.0
        %4207 = vmatmul.mubr.f32.gmra.mxu0 %v4026
        %v4208 = vpop.f32.mrf.mxu0
        %v4209 = vadd.f32 0.0, %v4208
        %v4210 = vpop.f32.mrf.mxu0
        %4211 = vmatprep.mubr.f32.mxu0 0.0
        %4212 = vmatmul.mubr.f32.gmra.mxu0 %v4029
        %v4213 = vpop.f32.mrf.mxu0
        %v4214 = vadd.f32 0.0, %v4213
        %v4215 = vpop.f32.mrf.mxu0
        %4216 = vmatprep.mubr.f32.mxu0 0.0
        %4217 = vmatmul.mubr.f32.gmra.mxu0 %v4032
        %v4218 = vpop.f32.mrf.mxu0
        %v4219 = vadd.f32 0.0, %v4218
        %v4220 = vpop.f32.mrf.mxu0
        %4221 = vmatprep.mubr.f32.mxu0 0.0
        %4222 = vmatmul.mubr.f32.gmra.mxu0 %v4035
        %v4223 = vpop.f32.mrf.mxu0
        %v4224 = vadd.f32 0.0, %v4223
        %v4225 = vpop.f32.mrf.mxu0
        %4226 = vmatprep.mubr.f32.mxu0 0.0
        %4227 = vmatmul.mubr.f32.gmra.mxu0 %v4038
        %v4228 = vpop.f32.mrf.mxu0
        %v4229 = vadd.f32 0.0, %v4228
        %v4230 = vpop.f32.mrf.mxu0
        %4231 = vmatprep.mubr.f32.mxu0 0.0
        %4232 = vmatmul.mubr.f32.gmra.mxu0 %v4041
        %v4233 = vpop.f32.mrf.mxu0
        %v4234 = vadd.f32 0.0, %v4233
        %v4235 = vpop.f32.mrf.mxu0
        %4236 = vmatprep.mubr.f32.mxu0 0.0
        %4237 = vmatmul.mubr.f32.gmra.mxu0 %v4044
        %v4238 = vpop.f32.mrf.mxu0
        %v4239 = vadd.f32 0.0, %v4238
        %v4240 = vpop.f32.mrf.mxu0
        %4241 = vmatprep.mubr.f32.mxu0 0.0
        %4242 = vmatmul.mubr.f32.gmra.mxu0 %v4047
        %v4243 = vpop.f32.mrf.mxu0
        %v4244 = vadd.f32 0.0, %v4243
        %v4245 = vpop.f32.mrf.mxu0
        %4246 = vmatprep.mubr.f32.mxu0 0.0
        %4247 = vmatmul.mubr.f32.gmra.mxu0 %v4050
        %v4248 = vpop.f32.mrf.mxu0
        %v4249 = vadd.f32 0.0, %v4248
        %v4250 = vpop.f32.mrf.mxu0
        %4251 = vmatprep.mubr.f32.mxu0 0.0
        %4252 = vmatmul.mubr.f32.gmra.mxu0 %v4053
        %v4253 = vpop.f32.mrf.mxu0
        %v4254 = vadd.f32 0.0, %v4253
        %v4255 = vpop.f32.mrf.mxu0
        %4256 = vmatprep.mubr.f32.mxu0 0.0
        %4257 = vmatmul.mubr.f32.gmra.mxu0 %v4056
        %v4258 = vpop.f32.mrf.mxu0
        %v4259 = vadd.f32 0.0, %v4258
        %v4260 = vpop.f32.mrf.mxu0
        %4261 = vmatprep.mubr.f32.mxu0 0.0
        %4262 = vmatmul.mubr.f32.gmra.mxu0 %v4059
        %v4263 = vpop.f32.mrf.mxu0
        %v4264 = vadd.f32 0.0, %v4263
        %v4265 = vpop.f32.mrf.mxu0
        %4266 = vmatprep.mubr.f32.mxu0 0.0
        %4267 = vmatmul.mubr.f32.gmra.mxu0 %v4062
        %v4268 = vpop.f32.mrf.mxu0
        %v4269 = vadd.f32 0.0, %v4268
        %v4270 = vpop.f32.mrf.mxu0
        %4271 = vmatprep.mubr.f32.mxu0 0.0
        %4272 = vmatmul.mubr.f32.gmra.mxu0 %v4065
        %v4273 = vpop.f32.mrf.mxu0
        %v4274 = vadd.f32 0.0, %v4273
        %v4275 = vpop.f32.mrf.mxu0
        %4276 = vmatprep.mubr.f32.mxu0 0.0
        %4277 = vmatmul.mubr.f32.gmra.mxu0 %v4068
        %v4278 = vpop.f32.mrf.mxu0
        %v4279 = vadd.f32 0.0, %v4278
        %v4280 = vpop.f32.mrf.mxu0
        %4281 = vmatprep.mubr.f32.mxu0 0.0
        %4282 = vmatmul.mubr.f32.gmra.mxu0 %v4071
        %v4283 = vpop.f32.mrf.mxu0
        %v4284 = vadd.f32 0.0, %v4283
        %v4285 = vpop.f32.mrf.mxu0
        %4286 = vmatprep.mubr.f32.mxu0 0.0
        %4287 = vmatmul.mubr.f32.gmra.mxu0 %v4074
        %v4288 = vpop.f32.mrf.mxu0
        %v4289 = vadd.f32 0.0, %v4288
        %v4290 = vpop.f32.mrf.mxu0
        %4291 = vmatprep.mubr.f32.mxu0 0.0
        %4292 = vmatmul.mubr.f32.gmra.mxu0 %v4077
        %v4293 = vpop.f32.mrf.mxu0
        %v4294 = vadd.f32 0.0, %v4293
        %v4295 = vpop.f32.mrf.mxu0
        %4296 = vmatprep.mubr.f32.mxu0 0.0
        %4297 = vmatmul.mubr.f32.gmra.mxu0 %v4080
        %v4298 = vpop.f32.mrf.mxu0
        %v4299 = vadd.f32 0.0, %v4298
        %v4300 = vpop.f32.mrf.mxu0
        %4301 = vmatprep.mubr.f32.mxu0 0.0
        %4302 = vmatmul.mubr.f32.gmra.mxu0 %v4083
        %v4303 = vpop.f32.mrf.mxu0
        %v4304 = vadd.f32 0.0, %v4303
        %v4305 = vpop.f32.mrf.mxu0
        %4306 = vmatprep.mubr.f32.mxu0 0.0
        %4307 = vmatmul.mubr.f32.gmra.mxu0 %v4086
        %v4308 = vpop.f32.mrf.mxu0
        %v4309 = vadd.f32 0.0, %v4308
        %v4310 = vpop.f32.mrf.mxu0
        %4311 = vmatprep.mubr.f32.mxu0 0.0
        %4312 = vmatmul.mubr.f32.gmra.mxu0 %v4089
        %v4313 = vpop.f32.mrf.mxu0
        %v4314 = vadd.f32 0.0, %v4313
        %v4315 = vpop.f32.mrf.mxu0
        %4316 = vmatprep.mubr.f32.mxu0 0.0
        %4317 = vmatmul.mubr.f32.gmra.mxu0 %v4092
        %v4318 = vpop.f32.mrf.mxu0
        %v4319 = vadd.f32 0.0, %v4318
        %v4320 = vpop.f32.mrf.mxu0
        %4321 = vdwg.mxu0
        %v4322 = vadd.f32 %v3932, %v4164
        %v4323 = vadd.f32 %v3933, %v4169
        %v4324 = vadd.f32 %v3934, %v4174
        %v4325 = vadd.f32 %v3935, %v4179
        %v4326 = vadd.f32 %v3936, %v4184
        %v4327 = vadd.f32 %v3937, %v4189
        %v4328 = vadd.f32 %v3938, %v4194
        %v4329 = vadd.f32 %v3939, %v4199
        %v4330 = vadd.f32 %v3940, %v4204
        %v4331 = vadd.f32 %v3941, %v4209
        %v4332 = vadd.f32 %v3942, %v4214
        %v4333 = vadd.f32 %v3943, %v4219
        %v4334 = vadd.f32 %v3944, %v4224
        %v4335 = vadd.f32 %v3945, %v4229
        %v4336 = vadd.f32 %v3946, %v4234
        %v4337 = vadd.f32 %v3947, %v4239
        %v4338 = vadd.f32 %v3948, %v4244
        %v4339 = vadd.f32 %v3949, %v4249
        %v4340 = vadd.f32 %v3950, %v4254
        %v4341 = vadd.f32 %v3951, %v4259
        %v4342 = vadd.f32 %v3952, %v4264
        %v4343 = vadd.f32 %v3953, %v4269
        %v4344 = vadd.f32 %v3954, %v4274
        %v4345 = vadd.f32 %v3955, %v4279
        %v4346 = vadd.f32 %v3956, %v4284
        %v4347 = vadd.f32 %v3957, %v4289
        %v4348 = vadd.f32 %v3958, %v4294
        %v4349 = vadd.f32 %v3959, %v4299
        %v4350 = vadd.f32 %v3960, %v4304
        %v4351 = vadd.f32 %v3961, %v4309
        %v4352 = vadd.f32 %v3962, %v4314
        %v4353 = vadd.f32 %v3963, %v4319
        %v4354 = vld [vmem:[#allocation2 + $0x22] sm:$0xff]
        %v4355 = vld [vmem:[#allocation2 + $0x2a] sm:$0xff]
        %v4356 = vld [vmem:[#allocation2 + $0x32] sm:$0xff]
        %v4357 = vld [vmem:[#allocation2 + $0x3a] sm:$0xff]
        %v4358 = vld [vmem:[#allocation2 + $0x42] sm:$0xff]
        %v4359 = vld [vmem:[#allocation2 + $0x4a] sm:$0xff]
        %v4360 = vld [vmem:[#allocation2 + $0x52] sm:$0xff]
        %v4361 = vld [vmem:[#allocation2 + $0x5a] sm:$0xff]
        %v4362 = vld [vmem:[#allocation2 + $0x62] sm:$0xff]
        %v4363 = vld [vmem:[#allocation2 + $0x6a] sm:$0xff]
        %v4364 = vld [vmem:[#allocation2 + $0x72] sm:$0xff]
        %v4365 = vld [vmem:[#allocation2 + $0x7a] sm:$0xff]
        %v4366 = vld [vmem:[#allocation2 + $0x82] sm:$0xff]
        %v4367 = vld [vmem:[#allocation2 + $0x8a] sm:$0xff]
        %v4368 = vld [vmem:[#allocation2 + $0x92] sm:$0xff]
        %v4369 = vld [vmem:[#allocation2 + $0x9a] sm:$0xff]
        %v4370 = vld [vmem:[#allocation2 + $0xa2] sm:$0xff]
        %v4371 = vld [vmem:[#allocation2 + $0xaa] sm:$0xff]
        %v4372 = vld [vmem:[#allocation2 + $0xb2] sm:$0xff]
        %v4373 = vld [vmem:[#allocation2 + $0xba] sm:$0xff]
        %v4374 = vld [vmem:[#allocation2 + $0xc2] sm:$0xff]
        %v4375 = vld [vmem:[#allocation2 + $0xca] sm:$0xff]
        %v4376 = vld [vmem:[#allocation2 + $0xd2] sm:$0xff]
        %v4377 = vld [vmem:[#allocation2 + $0xda] sm:$0xff]
        %v4378 = vld [vmem:[#allocation2 + $0xe2] sm:$0xff]
        %v4379 = vld [vmem:[#allocation2 + $0xea] sm:$0xff]
        %v4380 = vld [vmem:[#allocation2 + $0xf2] sm:$0xff]
        %v4381 = vld [vmem:[#allocation2 + $0xfa] sm:$0xff]
        %v4382 = vld [vmem:[#allocation2 + $0x102] sm:$0xff]
        %v4383 = vld [vmem:[#allocation2 + $0x10a] sm:$0xff]
        %v4384 = vld [vmem:[#allocation2 + $0x112] sm:$0xff]
        %v4385 = vld [vmem:[#allocation2 + $0x11a] sm:$0xff]
        %v4386 = vmul.f32 %v4354, %v1761
        %v4387 = vmul.f32 %v4355, %v1766
        %v4388 = vmul.f32 %v4356, %v1771
        %v4389 = vmul.f32 %v4357, %v1776
        %v4390 = vmul.f32 %v4358, %v1781
        %v4391 = vmul.f32 %v4359, %v1786
        %v4392 = vmul.f32 %v4360, %v1791
        %v4393 = vmul.f32 %v4361, %v1796
        %v4394 = vmul.f32 %v4362, %v1801
        %v4395 = vmul.f32 %v4363, %v1806
        %v4396 = vmul.f32 %v4364, %v1811
        %v4397 = vmul.f32 %v4365, %v1816
        %v4398 = vmul.f32 %v4366, %v1821
        %v4399 = vmul.f32 %v4367, %v1826
        %v4400 = vmul.f32 %v4368, %v1831
        %v4401 = vmul.f32 %v4369, %v1836
        %v4402 = vmul.f32 %v4370, %v1841
        %v4403 = vmul.f32 %v4371, %v1846
        %v4404 = vmul.f32 %v4372, %v1851
        %v4405 = vmul.f32 %v4373, %v1856
        %v4406 = vmul.f32 %v4374, %v1861
        %v4407 = vmul.f32 %v4375, %v1866
        %v4408 = vmul.f32 %v4376, %v1871
        %v4409 = vmul.f32 %v4377, %v1876
        %v4410 = vmul.f32 %v4378, %v1881
        %v4411 = vmul.f32 %v4379, %v1886
        %v4412 = vmul.f32 %v4380, %v1891
        %v4413 = vmul.f32 %v4381, %v1896
        %v4414 = vmul.f32 %v4382, %v1901
        %v4415 = vmul.f32 %v4383, %v1906
        %v4416 = vmul.f32 %v4384, %v1911
        %v4417 = vmul.f32 %v4385, %v1916
        %s4418 = scalar_lea.vmem %s4, 32
        %v4419 = vld [vmem:[%s4418] sm:$0xf]
        %v4421 = vsel %vm643, %v4386, 0
        %v4424 = vsel %vm643, %v4387, 0
        %v4427 = vsel %vm643, %v4388, 0
        %v4430 = vsel %vm643, %v4389, 0
        %v4433 = vsel %vm643, %v4390, 0
        %v4436 = vsel %vm643, %v4391, 0
        %v4439 = vsel %vm643, %v4392, 0
        %v4442 = vsel %vm643, %v4393, 0
        %v4445 = vsel %vm643, %v4394, 0
        %v4448 = vsel %vm643, %v4395, 0
        %v4451 = vsel %vm643, %v4396, 0
        %v4454 = vsel %vm643, %v4397, 0
        %v4457 = vsel %vm643, %v4398, 0
        %v4460 = vsel %vm643, %v4399, 0
        %v4463 = vsel %vm643, %v4400, 0
        %v4466 = vsel %vm643, %v4401, 0
        %v4469 = vsel %vm643, %v4402, 0
        %v4472 = vsel %vm643, %v4403, 0
        %v4475 = vsel %vm643, %v4404, 0
        %v4478 = vsel %vm643, %v4405, 0
        %v4481 = vsel %vm643, %v4406, 0
        %v4484 = vsel %vm643, %v4407, 0
        %v4487 = vsel %vm643, %v4408, 0
        %v4490 = vsel %vm643, %v4409, 0
        %v4493 = vsel %vm643, %v4410, 0
        %v4496 = vsel %vm643, %v4411, 0
        %v4499 = vsel %vm643, %v4412, 0
        %v4502 = vsel %vm643, %v4413, 0
        %v4505 = vsel %vm643, %v4414, 0
        %v4508 = vsel %vm643, %v4415, 0
        %v4511 = vsel %vm643, %v4416, 0
        %v4514 = vsel %vm643, %v4417, 0
        %v4517 = vsel %vm1075, %v4419, 0
        %4519 = vmatprep.subr.mxu0 0.0
        %4520 = vmatpush1.msra.mxu0 0.0
        %4521 = vmatprep.subr.mxu0 0.0
        %4522 = vmatpush1.msra.mxu0 0.0
        %4523 = vmatprep.subr.mxu0 0.0
        %4524 = vmatpush1.msra.mxu0 0.0
        %4525 = vmatprep.subr.mxu0 0.0
        %4526 = vmatpush1.msra.mxu0 0.0
        %4527 = vmatprep.subr.mxu0 0.0
        %4528 = vmatpush1.msra.mxu0 0.0
        %4529 = vmatprep.subr.mxu0 0.0
        %4530 = vmatpush1.msra.mxu0 0.0
        %4531 = vmatprep.subr.mxu0 0.0
        %4532 = vmatpush1.msra.mxu0 0.0
        %4533 = vmatprep.subr.mxu0 0.0
        %4534 = vmatpush1.msra.mxu0 0.0
        %4535 = vmatprep.subr.mxu0 0.0
        %4536 = vmatpush1.msra.mxu0 0.0
        %4537 = vmatprep.subr.mxu0 0.0
        %4538 = vmatpush1.msra.mxu0 0.0
        %4539 = vmatprep.subr.mxu0 0.0
        %4540 = vmatpush1.msra.mxu0 0.0
        %4541 = vmatprep.subr.mxu0 0.0
        %4542 = vmatpush1.msra.mxu0 0.0
        %4543 = vmatprep.subr.mxu0 0.0
        %4544 = vmatpush1.msra.mxu0 0.0
        %4545 = vmatprep.subr.mxu0 0.0
        %4546 = vmatpush1.msra.mxu0 0.0
        %4547 = vmatprep.subr.mxu0 0.0
        %4548 = vmatpush1.msra.mxu0 0.0
        %4549 = vmatprep.subr.mxu0 0.0
        %4550 = vmatpush1.msra.mxu0 %v4517
        %4551 = vmatprep.subr.mxu0 0.0
        %4552 = vmatpush2.msra.mxu0 0.0
        %4553 = vmatprep.subr.mxu0 0.0
        %4554 = vmatpush2.msra.mxu0 0.0
        %4555 = vmatprep.subr.mxu0 0.0
        %4556 = vmatpush2.msra.mxu0 0.0
        %4557 = vmatprep.subr.mxu0 0.0
        %4558 = vmatpush2.msra.mxu0 0.0
        %4559 = vmatprep.subr.mxu0 0.0
        %4560 = vmatpush2.msra.mxu0 0.0
        %4561 = vmatprep.subr.mxu0 0.0
        %4562 = vmatpush2.msra.mxu0 0.0
        %4563 = vmatprep.subr.mxu0 0.0
        %4564 = vmatpush2.msra.mxu0 0.0
        %4565 = vmatprep.subr.mxu0 0.0
        %4566 = vmatpush2.msra.mxu0 0.0
        %4567 = vmatprep.subr.mxu0 0.0
        %4568 = vmatpush2.msra.mxu0 0.0
        %4569 = vmatprep.subr.mxu0 0.0
        %4570 = vmatpush2.msra.mxu0 0.0
        %4571 = vmatprep.subr.mxu0 0.0
        %4572 = vmatpush2.msra.mxu0 0.0
        %4573 = vmatprep.subr.mxu0 0.0
        %4574 = vmatpush2.msra.mxu0 0.0
        %4575 = vmatprep.subr.mxu0 0.0
        %4576 = vmatpush2.msra.mxu0 0.0
        %4577 = vmatprep.subr.mxu0 0.0
        %4578 = vmatpush2.msra.mxu0 0.0
        %4579 = vmatprep.subr.mxu0 0.0
        %4580 = vmatpush2.msra.mxu0 0.0
        %4581 = vmatprep.subr.mxu0 0.0
        %4582 = vmatpush2.msra.mxu0 0.0
        %4583 = vmatprep.mubr.f32.mxu0 0.0
        %4584 = vmatmul.mubr.f32.gmra.mxu0 %v4421
        %v4585 = vpop.f32.mrf.mxu0
        %v4586 = vadd.f32 0.0, %v4585
        %v4587 = vpop.f32.mrf.mxu0
        %4588 = vmatprep.mubr.f32.mxu0 0.0
        %4589 = vmatmul.mubr.f32.gmra.mxu0 %v4424
        %v4590 = vpop.f32.mrf.mxu0
        %v4591 = vadd.f32 0.0, %v4590
        %v4592 = vpop.f32.mrf.mxu0
        %4593 = vmatprep.mubr.f32.mxu0 0.0
        %4594 = vmatmul.mubr.f32.gmra.mxu0 %v4427
        %v4595 = vpop.f32.mrf.mxu0
        %v4596 = vadd.f32 0.0, %v4595
        %v4597 = vpop.f32.mrf.mxu0
        %4598 = vmatprep.mubr.f32.mxu0 0.0
        %4599 = vmatmul.mubr.f32.gmra.mxu0 %v4430
        %v4600 = vpop.f32.mrf.mxu0
        %v4601 = vadd.f32 0.0, %v4600
        %v4602 = vpop.f32.mrf.mxu0
        %4603 = vmatprep.mubr.f32.mxu0 0.0
        %4604 = vmatmul.mubr.f32.gmra.mxu0 %v4433
        %v4605 = vpop.f32.mrf.mxu0
        %v4606 = vadd.f32 0.0, %v4605
        %v4607 = vpop.f32.mrf.mxu0
        %4608 = vmatprep.mubr.f32.mxu0 0.0
        %4609 = vmatmul.mubr.f32.gmra.mxu0 %v4436
        %v4610 = vpop.f32.mrf.mxu0
        %v4611 = vadd.f32 0.0, %v4610
        %v4612 = vpop.f32.mrf.mxu0
        %4613 = vmatprep.mubr.f32.mxu0 0.0
        %4614 = vmatmul.mubr.f32.gmra.mxu0 %v4439
        %v4615 = vpop.f32.mrf.mxu0
        %v4616 = vadd.f32 0.0, %v4615
        %v4617 = vpop.f32.mrf.mxu0
        %4618 = vmatprep.mubr.f32.mxu0 0.0
        %4619 = vmatmul.mubr.f32.gmra.mxu0 %v4442
        %v4620 = vpop.f32.mrf.mxu0
        %v4621 = vadd.f32 0.0, %v4620
        %v4622 = vpop.f32.mrf.mxu0
        %4623 = vmatprep.mubr.f32.mxu0 0.0
        %4624 = vmatmul.mubr.f32.gmra.mxu0 %v4445
        %v4625 = vpop.f32.mrf.mxu0
        %v4626 = vadd.f32 0.0, %v4625
        %v4627 = vpop.f32.mrf.mxu0
        %4628 = vmatprep.mubr.f32.mxu0 0.0
        %4629 = vmatmul.mubr.f32.gmra.mxu0 %v4448
        %v4630 = vpop.f32.mrf.mxu0
        %v4631 = vadd.f32 0.0, %v4630
        %v4632 = vpop.f32.mrf.mxu0
        %4633 = vmatprep.mubr.f32.mxu0 0.0
        %4634 = vmatmul.mubr.f32.gmra.mxu0 %v4451
        %v4635 = vpop.f32.mrf.mxu0
        %v4636 = vadd.f32 0.0, %v4635
        %v4637 = vpop.f32.mrf.mxu0
        %4638 = vmatprep.mubr.f32.mxu0 0.0
        %4639 = vmatmul.mubr.f32.gmra.mxu0 %v4454
        %v4640 = vpop.f32.mrf.mxu0
        %v4641 = vadd.f32 0.0, %v4640
        %v4642 = vpop.f32.mrf.mxu0
        %4643 = vmatprep.mubr.f32.mxu0 0.0
        %4644 = vmatmul.mubr.f32.gmra.mxu0 %v4457
        %v4645 = vpop.f32.mrf.mxu0
        %v4646 = vadd.f32 0.0, %v4645
        %v4647 = vpop.f32.mrf.mxu0
        %4648 = vmatprep.mubr.f32.mxu0 0.0
        %4649 = vmatmul.mubr.f32.gmra.mxu0 %v4460
        %v4650 = vpop.f32.mrf.mxu0
        %v4651 = vadd.f32 0.0, %v4650
        %v4652 = vpop.f32.mrf.mxu0
        %4653 = vmatprep.mubr.f32.mxu0 0.0
        %4654 = vmatmul.mubr.f32.gmra.mxu0 %v4463
        %v4655 = vpop.f32.mrf.mxu0
        %v4656 = vadd.f32 0.0, %v4655
        %v4657 = vpop.f32.mrf.mxu0
        %4658 = vmatprep.mubr.f32.mxu0 0.0
        %4659 = vmatmul.mubr.f32.gmra.mxu0 %v4466
        %v4660 = vpop.f32.mrf.mxu0
        %v4661 = vadd.f32 0.0, %v4660
        %v4662 = vpop.f32.mrf.mxu0
        %4663 = vmatprep.mubr.f32.mxu0 0.0
        %4664 = vmatmul.mubr.f32.gmra.mxu0 %v4469
        %v4665 = vpop.f32.mrf.mxu0
        %v4666 = vadd.f32 0.0, %v4665
        %v4667 = vpop.f32.mrf.mxu0
        %4668 = vmatprep.mubr.f32.mxu0 0.0
        %4669 = vmatmul.mubr.f32.gmra.mxu0 %v4472
        %v4670 = vpop.f32.mrf.mxu0
        %v4671 = vadd.f32 0.0, %v4670
        %v4672 = vpop.f32.mrf.mxu0
        %4673 = vmatprep.mubr.f32.mxu0 0.0
        %4674 = vmatmul.mubr.f32.gmra.mxu0 %v4475
        %v4675 = vpop.f32.mrf.mxu0
        %v4676 = vadd.f32 0.0, %v4675
        %v4677 = vpop.f32.mrf.mxu0
        %4678 = vmatprep.mubr.f32.mxu0 0.0
        %4679 = vmatmul.mubr.f32.gmra.mxu0 %v4478
        %v4680 = vpop.f32.mrf.mxu0
        %v4681 = vadd.f32 0.0, %v4680
        %v4682 = vpop.f32.mrf.mxu0
        %4683 = vmatprep.mubr.f32.mxu0 0.0
        %4684 = vmatmul.mubr.f32.gmra.mxu0 %v4481
        %v4685 = vpop.f32.mrf.mxu0
        %v4686 = vadd.f32 0.0, %v4685
        %v4687 = vpop.f32.mrf.mxu0
        %4688 = vmatprep.mubr.f32.mxu0 0.0
        %4689 = vmatmul.mubr.f32.gmra.mxu0 %v4484
        %v4690 = vpop.f32.mrf.mxu0
        %v4691 = vadd.f32 0.0, %v4690
        %v4692 = vpop.f32.mrf.mxu0
        %4693 = vmatprep.mubr.f32.mxu0 0.0
        %4694 = vmatmul.mubr.f32.gmra.mxu0 %v4487
        %v4695 = vpop.f32.mrf.mxu0
        %v4696 = vadd.f32 0.0, %v4695
        %v4697 = vpop.f32.mrf.mxu0
        %4698 = vmatprep.mubr.f32.mxu0 0.0
        %4699 = vmatmul.mubr.f32.gmra.mxu0 %v4490
        %v4700 = vpop.f32.mrf.mxu0
        %v4701 = vadd.f32 0.0, %v4700
        %v4702 = vpop.f32.mrf.mxu0
        %4703 = vmatprep.mubr.f32.mxu0 0.0
        %4704 = vmatmul.mubr.f32.gmra.mxu0 %v4493
        %v4705 = vpop.f32.mrf.mxu0
        %v4706 = vadd.f32 0.0, %v4705
        %v4707 = vpop.f32.mrf.mxu0
        %4708 = vmatprep.mubr.f32.mxu0 0.0
        %4709 = vmatmul.mubr.f32.gmra.mxu0 %v4496
        %v4710 = vpop.f32.mrf.mxu0
        %v4711 = vadd.f32 0.0, %v4710
        %v4712 = vpop.f32.mrf.mxu0
        %4713 = vmatprep.mubr.f32.mxu0 0.0
        %4714 = vmatmul.mubr.f32.gmra.mxu0 %v4499
        %v4715 = vpop.f32.mrf.mxu0
        %v4716 = vadd.f32 0.0, %v4715
        %v4717 = vpop.f32.mrf.mxu0
        %4718 = vmatprep.mubr.f32.mxu0 0.0
        %4719 = vmatmul.mubr.f32.gmra.mxu0 %v4502
        %v4720 = vpop.f32.mrf.mxu0
        %v4721 = vadd.f32 0.0, %v4720
        %v4722 = vpop.f32.mrf.mxu0
        %4723 = vmatprep.mubr.f32.mxu0 0.0
        %4724 = vmatmul.mubr.f32.gmra.mxu0 %v4505
        %v4725 = vpop.f32.mrf.mxu0
        %v4726 = vadd.f32 0.0, %v4725
        %v4727 = vpop.f32.mrf.mxu0
        %4728 = vmatprep.mubr.f32.mxu0 0.0
        %4729 = vmatmul.mubr.f32.gmra.mxu0 %v4508
        %v4730 = vpop.f32.mrf.mxu0
        %v4731 = vadd.f32 0.0, %v4730
        %v4732 = vpop.f32.mrf.mxu0
        %4733 = vmatprep.mubr.f32.mxu0 0.0
        %4734 = vmatmul.mubr.f32.gmra.mxu0 %v4511
        %v4735 = vpop.f32.mrf.mxu0
        %v4736 = vadd.f32 0.0, %v4735
        %v4737 = vpop.f32.mrf.mxu0
        %4738 = vmatprep.mubr.f32.mxu0 0.0
        %4739 = vmatmul.mubr.f32.gmra.mxu0 %v4514
        %v4740 = vpop.f32.mrf.mxu0
        %v4741 = vadd.f32 0.0, %v4740
        %v4742 = vpop.f32.mrf.mxu0
        %4743 = vdwg.mxu0
        %v4744 = vadd.f32 %v4322, %v4586
        %v4745 = vadd.f32 %v4323, %v4591
        %v4746 = vadd.f32 %v4324, %v4596
        %v4747 = vadd.f32 %v4325, %v4601
        %v4748 = vadd.f32 %v4326, %v4606
        %v4749 = vadd.f32 %v4327, %v4611
        %v4750 = vadd.f32 %v4328, %v4616
        %v4751 = vadd.f32 %v4329, %v4621
        %v4752 = vadd.f32 %v4330, %v4626
        %v4753 = vadd.f32 %v4331, %v4631
        %v4754 = vadd.f32 %v4332, %v4636
        %v4755 = vadd.f32 %v4333, %v4641
        %v4756 = vadd.f32 %v4334, %v4646
        %v4757 = vadd.f32 %v4335, %v4651
        %v4758 = vadd.f32 %v4336, %v4656
        %v4759 = vadd.f32 %v4337, %v4661
        %v4760 = vadd.f32 %v4338, %v4666
        %v4761 = vadd.f32 %v4339, %v4671
        %v4762 = vadd.f32 %v4340, %v4676
        %v4763 = vadd.f32 %v4341, %v4681
        %v4764 = vadd.f32 %v4342, %v4686
        %v4765 = vadd.f32 %v4343, %v4691
        %v4766 = vadd.f32 %v4344, %v4696
        %v4767 = vadd.f32 %v4345, %v4701
        %v4768 = vadd.f32 %v4346, %v4706
        %v4769 = vadd.f32 %v4347, %v4711
        %v4770 = vadd.f32 %v4348, %v4716
        %v4771 = vadd.f32 %v4349, %v4721
        %v4772 = vadd.f32 %v4350, %v4726
        %v4773 = vadd.f32 %v4351, %v4731
        %v4774 = vadd.f32 %v4352, %v4736
        %v4775 = vadd.f32 %v4353, %v4741
        %v4776 = vmax.f32 %v4744, 0.0
        %v4777 = vmax.f32 %v4745, 0.0
        %v4778 = vmax.f32 %v4746, 0.0
        %v4779 = vmax.f32 %v4747, 0.0
        %v4780 = vmax.f32 %v4748, 0.0
        %v4781 = vmax.f32 %v4749, 0.0
        %v4782 = vmax.f32 %v4750, 0.0
        %v4783 = vmax.f32 %v4751, 0.0
        %v4784 = vmax.f32 %v4752, 0.0
        %v4785 = vmax.f32 %v4753, 0.0
        %v4786 = vmax.f32 %v4754, 0.0
        %v4787 = vmax.f32 %v4755, 0.0
        %v4788 = vmax.f32 %v4756, 0.0
        %v4789 = vmax.f32 %v4757, 0.0
        %v4790 = vmax.f32 %v4758, 0.0
        %v4791 = vmax.f32 %v4759, 0.0
        %v4792 = vmax.f32 %v4760, 0.0
        %v4793 = vmax.f32 %v4761, 0.0
        %v4794 = vmax.f32 %v4762, 0.0
        %v4795 = vmax.f32 %v4763, 0.0
        %v4796 = vmax.f32 %v4764, 0.0
        %v4797 = vmax.f32 %v4765, 0.0
        %v4798 = vmax.f32 %v4766, 0.0
        %v4799 = vmax.f32 %v4767, 0.0
        %v4800 = vmax.f32 %v4768, 0.0
        %v4801 = vmax.f32 %v4769, 0.0
        %v4802 = vmax.f32 %v4770, 0.0
        %v4803 = vmax.f32 %v4771, 0.0
        %v4804 = vmax.f32 %v4772, 0.0
        %v4805 = vmax.f32 %v4773, 0.0
        %v4806 = vmax.f32 %v4774, 0.0
        %v4807 = vmax.f32 %v4775, 0.0
        %vm4808 = vcmask 654336
        %4809 = vst.msk [vmem:[#allocation3] sm:$0xff] %vm4808, 0.0
        %4810 = vst.msk [vmem:[#allocation3 + $0x8] sm:$0xff] %vm4808, 0.0
        %vm4811 = vcmask 647168
        %4812 = vst.msk [vmem:[#allocation3 + $0x10] sm:$0x1] %vm4811, 0.0
        %4813 = vst.msk [vmem:[#allocation3 + $0x111] sm:$0xff] %vm4808, 0.0
        %4814 = vst.msk [vmem:[#allocation3 + $0x119] sm:$0xff] %vm4808, 0.0
        %4815 = vst.msk [vmem:[#allocation3 + $0x121] sm:$0x1] %vm4811, 0.0
        %4816 = vst.msk [vmem:[#allocation3 + $0x11] sm:$0xff] %vm4808, %v4776
        %4817 = vst.msk [vmem:[#allocation3 + $0x19] sm:$0xff] %vm4808, %v4777
        %4818 = vst.msk [vmem:[#allocation3 + $0x21] sm:$0xff] %vm4808, %v4778
        %4819 = vst.msk [vmem:[#allocation3 + $0x29] sm:$0xff] %vm4808, %v4779
        %4820 = vst.msk [vmem:[#allocation3 + $0x31] sm:$0xff] %vm4808, %v4780
        %4821 = vst.msk [vmem:[#allocation3 + $0x39] sm:$0xff] %vm4808, %v4781
        %4822 = vst.msk [vmem:[#allocation3 + $0x41] sm:$0xff] %vm4808, %v4782
        %4823 = vst.msk [vmem:[#allocation3 + $0x49] sm:$0xff] %vm4808, %v4783
        %4824 = vst.msk [vmem:[#allocation3 + $0x51] sm:$0xff] %vm4808, %v4784
        %4825 = vst.msk [vmem:[#allocation3 + $0x59] sm:$0xff] %vm4808, %v4785
        %4826 = vst.msk [vmem:[#allocation3 + $0x61] sm:$0xff] %vm4808, %v4786
        %4827 = vst.msk [vmem:[#allocation3 + $0x69] sm:$0xff] %vm4808, %v4787
        %4828 = vst.msk [vmem:[#allocation3 + $0x71] sm:$0xff] %vm4808, %v4788
        %4829 = vst.msk [vmem:[#allocation3 + $0x79] sm:$0xff] %vm4808, %v4789
        %4830 = vst.msk [vmem:[#allocation3 + $0x81] sm:$0xff] %vm4808, %v4790
        %4831 = vst.msk [vmem:[#allocation3 + $0x89] sm:$0xff] %vm4808, %v4791
        %4832 = vst.msk [vmem:[#allocation3 + $0x91] sm:$0xff] %vm4808, %v4792
        %4833 = vst.msk [vmem:[#allocation3 + $0x99] sm:$0xff] %vm4808, %v4793
        %4834 = vst.msk [vmem:[#allocation3 + $0xa1] sm:$0xff] %vm4808, %v4794
        %4835 = vst.msk [vmem:[#allocation3 + $0xa9] sm:$0xff] %vm4808, %v4795
        %4836 = vst.msk [vmem:[#allocation3 + $0xb1] sm:$0xff] %vm4808, %v4796
        %4837 = vst.msk [vmem:[#allocation3 + $0xb9] sm:$0xff] %vm4808, %v4797
        %4838 = vst.msk [vmem:[#allocation3 + $0xc1] sm:$0xff] %vm4808, %v4798
        %4839 = vst.msk [vmem:[#allocation3 + $0xc9] sm:$0xff] %vm4808, %v4799
        %4840 = vst.msk [vmem:[#allocation3 + $0xd1] sm:$0xff] %vm4808, %v4800
        %4841 = vst.msk [vmem:[#allocation3 + $0xd9] sm:$0xff] %vm4808, %v4801
        %4842 = vst.msk [vmem:[#allocation3 + $0xe1] sm:$0xff] %vm4808, %v4802
        %4843 = vst.msk [vmem:[#allocation3 + $0xe9] sm:$0xff] %vm4808, %v4803
        %4844 = vst.msk [vmem:[#allocation3 + $0xf1] sm:$0xff] %vm4808, %v4804
        %4845 = vst.msk [vmem:[#allocation3 + $0xf9] sm:$0xff] %vm4808, %v4805
        %4846 = vst.msk [vmem:[#allocation3 + $0x101] sm:$0xff] %vm4808, %v4806
        %4847 = vst.msk [vmem:[#allocation3 + $0x109] sm:$0xff] %vm4808, %v4807
        %v4848 = vld [vmem:[%s7] sm:$0xff]
        %4850 = vset.pattern.permute.xlu0 0
        %4851 = vperm.xlu0 %4850, %v4848
        %v4852 = vpop.permute.xlu0 %4851
        %v4854 = vld [vmem:[#allocation3] sm:$0xff]
        %v4855 = vld [vmem:[#allocation3 + $0x8] sm:$0xff]
        %v4856 = vld [vmem:[#allocation3 + $0x10] sm:$0xff]
        %v4857 = vld [vmem:[#allocation3 + $0x18] sm:$0xff]
        %v4858 = vld [vmem:[#allocation3 + $0x20] sm:$0xff]
        %v4859 = vld [vmem:[#allocation3 + $0x28] sm:$0xff]
        %v4860 = vld [vmem:[#allocation3 + $0x30] sm:$0xff]
        %v4861 = vld [vmem:[#allocation3 + $0x38] sm:$0xff]
        %v4862 = vld [vmem:[#allocation3 + $0x40] sm:$0xff]
        %v4863 = vld [vmem:[#allocation3 + $0x48] sm:$0xff]
        %v4864 = vld [vmem:[#allocation3 + $0x50] sm:$0xff]
        %v4865 = vld [vmem:[#allocation3 + $0x58] sm:$0xff]
        %v4866 = vld [vmem:[#allocation3 + $0x60] sm:$0xff]
        %v4867 = vld [vmem:[#allocation3 + $0x68] sm:$0xff]
        %v4868 = vld [vmem:[#allocation3 + $0x70] sm:$0xff]
        %v4869 = vld [vmem:[#allocation3 + $0x78] sm:$0xff]
        %v4870 = vld [vmem:[#allocation3 + $0x80] sm:$0xff]
        %v4871 = vld [vmem:[#allocation3 + $0x88] sm:$0xff]
        %v4872 = vld [vmem:[#allocation3 + $0x90] sm:$0xff]
        %v4873 = vld [vmem:[#allocation3 + $0x98] sm:$0xff]
        %v4874 = vld [vmem:[#allocation3 + $0xa0] sm:$0xff]
        %v4875 = vld [vmem:[#allocation3 + $0xa8] sm:$0xff]
        %v4876 = vld [vmem:[#allocation3 + $0xb0] sm:$0xff]
        %v4877 = vld [vmem:[#allocation3 + $0xb8] sm:$0xff]
        %v4878 = vld [vmem:[#allocation3 + $0xc0] sm:$0xff]
        %v4879 = vld [vmem:[#allocation3 + $0xc8] sm:$0xff]
        %v4880 = vld [vmem:[#allocation3 + $0xd0] sm:$0xff]
        %v4881 = vld [vmem:[#allocation3 + $0xd8] sm:$0xff]
        %v4882 = vld [vmem:[#allocation3 + $0xe0] sm:$0xff]
        %v4883 = vld [vmem:[#allocation3 + $0xe8] sm:$0xff]
        %v4884 = vld [vmem:[#allocation3 + $0xf0] sm:$0xff]
        %v4885 = vld [vmem:[#allocation3 + $0xf8] sm:$0xff]
        %v4886 = vmul.f32 %v4854, %v789
        %v4887 = vmul.f32 %v4855, %v794
        %v4888 = vmul.f32 %v4856, %v799
        %v4889 = vmul.f32 %v4857, %v804
        %v4890 = vmul.f32 %v4858, %v809
        %v4891 = vmul.f32 %v4859, %v814
        %v4892 = vmul.f32 %v4860, %v819
        %v4893 = vmul.f32 %v4861, %v824
        %v4894 = vmul.f32 %v4862, %v829
        %v4895 = vmul.f32 %v4863, %v834
        %v4896 = vmul.f32 %v4864, %v839
        %v4897 = vmul.f32 %v4865, %v844
        %v4898 = vmul.f32 %v4866, %v849
        %v4899 = vmul.f32 %v4867, %v854
        %v4900 = vmul.f32 %v4868, %v859
        %v4901 = vmul.f32 %v4869, %v864
        %v4902 = vmul.f32 %v4870, %v869
        %v4903 = vmul.f32 %v4871, %v874
        %v4904 = vmul.f32 %v4872, %v879
        %v4905 = vmul.f32 %v4873, %v884
        %v4906 = vmul.f32 %v4874, %v889
        %v4907 = vmul.f32 %v4875, %v894
        %v4908 = vmul.f32 %v4876, %v899
        %v4909 = vmul.f32 %v4877, %v904
        %v4910 = vmul.f32 %v4878, %v909
        %v4911 = vmul.f32 %v4879, %v914
        %v4912 = vmul.f32 %v4880, %v919
        %v4913 = vmul.f32 %v4881, %v924
        %v4914 = vmul.f32 %v4882, %v929
        %v4915 = vmul.f32 %v4883, %v934
        %v4916 = vmul.f32 %v4884, %v939
        %v4917 = vmul.f32 %v4885, %v944
        %v4918 = vld [vmem:[%s6] sm:$0xff]
        %v4920 = vsel %vm4808, %v4918, 0
        %v4923 = vsel %vm4808, %v4886, 0
        %v4926 = vsel %vm4808, %v4887, 0
        %v4929 = vsel %vm4808, %v4888, 0
        %v4932 = vsel %vm4808, %v4889, 0
        %v4935 = vsel %vm4808, %v4890, 0
        %v4938 = vsel %vm4808, %v4891, 0
        %v4941 = vsel %vm4808, %v4892, 0
        %v4944 = vsel %vm4808, %v4893, 0
        %v4947 = vsel %vm4808, %v4894, 0
        %v4950 = vsel %vm4808, %v4895, 0
        %v4953 = vsel %vm4808, %v4896, 0
        %v4956 = vsel %vm4808, %v4897, 0
        %v4959 = vsel %vm4808, %v4898, 0
        %v4962 = vsel %vm4808, %v4899, 0
        %v4965 = vsel %vm4808, %v4900, 0
        %v4968 = vsel %vm4808, %v4901, 0
        %v4971 = vsel %vm4808, %v4902, 0
        %v4974 = vsel %vm4808, %v4903, 0
        %v4977 = vsel %vm4808, %v4904, 0
        %v4980 = vsel %vm4808, %v4905, 0
        %v4983 = vsel %vm4808, %v4906, 0
        %v4986 = vsel %vm4808, %v4907, 0
        %v4989 = vsel %vm4808, %v4908, 0
        %v4992 = vsel %vm4808, %v4909, 0
        %v4995 = vsel %vm4808, %v4910, 0
        %v4998 = vsel %vm4808, %v4911, 0
        %v5001 = vsel %vm4808, %v4912, 0
        %v5004 = vsel %vm4808, %v4913, 0
        %v5007 = vsel %vm4808, %v4914, 0
        %v5010 = vsel %vm4808, %v4915, 0
        %v5013 = vsel %vm4808, %v4916, 0
        %v5016 = vsel %vm4808, %v4917, 0
        %5018 = vmatprep.subr.mxu0 0.0
        %5019 = vmatpush1.xpose.msra.mxu0 %v4968
        %5020 = vmatprep.subr.mxu0 0.0
        %5021 = vmatpush1.xpose.msra.mxu0 %v4965
        %5022 = vmatprep.subr.mxu0 0.0
        %5023 = vmatpush1.xpose.msra.mxu0 %v4962
        %5024 = vmatprep.subr.mxu0 0.0
        %5025 = vmatpush1.xpose.msra.mxu0 %v4959
        %5026 = vmatprep.subr.mxu0 0.0
        %5027 = vmatpush1.xpose.msra.mxu0 %v4956
        %5028 = vmatprep.subr.mxu0 0.0
        %5029 = vmatpush1.xpose.msra.mxu0 %v4953
        %5030 = vmatprep.subr.mxu0 0.0
        %5031 = vmatpush1.xpose.msra.mxu0 %v4950
        %5032 = vmatprep.subr.mxu0 0.0
        %5033 = vmatpush1.xpose.msra.mxu0 %v4947
        %5034 = vmatprep.subr.mxu0 0.0
        %5035 = vmatpush1.xpose.msra.mxu0 %v4944
        %5036 = vmatprep.subr.mxu0 0.0
        %5037 = vmatpush1.xpose.msra.mxu0 %v4941
        %5038 = vmatprep.subr.mxu0 0.0
        %5039 = vmatpush1.xpose.msra.mxu0 %v4938
        %5040 = vmatprep.subr.mxu0 0.0
        %5041 = vmatpush1.xpose.msra.mxu0 %v4935
        %5042 = vmatprep.subr.mxu0 0.0
        %5043 = vmatpush1.xpose.msra.mxu0 %v4932
        %5044 = vmatprep.subr.mxu0 0.0
        %5045 = vmatpush1.xpose.msra.mxu0 %v4929
        %5046 = vmatprep.subr.mxu0 0.0
        %5047 = vmatpush1.xpose.msra.mxu0 %v4926
        %5048 = vmatprep.subr.mxu0 0.0
        %5049 = vmatpush1.xpose.msra.mxu0 %v4923
        %5050 = vmatprep.subr.mxu0 0.0
        %5051 = vmatpush2.xpose.msra.mxu0 %v5016
        %5052 = vmatprep.subr.mxu0 0.0
        %5053 = vmatpush2.xpose.msra.mxu0 %v5013
        %5054 = vmatprep.subr.mxu0 0.0
        %5055 = vmatpush2.xpose.msra.mxu0 %v5010
        %5056 = vmatprep.subr.mxu0 0.0
        %5057 = vmatpush2.xpose.msra.mxu0 %v5007
        %5058 = vmatprep.subr.mxu0 0.0
        %5059 = vmatpush2.xpose.msra.mxu0 %v5004
        %5060 = vmatprep.subr.mxu0 0.0
        %5061 = vmatpush2.xpose.msra.mxu0 %v5001
        %5062 = vmatprep.subr.mxu0 0.0
        %5063 = vmatpush2.xpose.msra.mxu0 %v4998
        %5064 = vmatprep.subr.mxu0 0.0
        %5065 = vmatpush2.xpose.msra.mxu0 %v4995
        %5066 = vmatprep.subr.mxu0 0.0
        %5067 = vmatpush2.xpose.msra.mxu0 %v4992
        %5068 = vmatprep.subr.mxu0 0.0
        %5069 = vmatpush2.xpose.msra.mxu0 %v4989
        %5070 = vmatprep.subr.mxu0 0.0
        %5071 = vmatpush2.xpose.msra.mxu0 %v4986
        %5072 = vmatprep.subr.mxu0 0.0
        %5073 = vmatpush2.xpose.msra.mxu0 %v4983
        %5074 = vmatprep.subr.mxu0 0.0
        %5075 = vmatpush2.xpose.msra.mxu0 %v4980
        %5076 = vmatprep.subr.mxu0 0.0
        %5077 = vmatpush2.xpose.msra.mxu0 %v4977
        %5078 = vmatprep.subr.mxu0 0.0
        %5079 = vmatpush2.xpose.msra.mxu0 %v4974
        %5080 = vmatprep.subr.mxu0 0.0
        %5081 = vmatpush2.xpose.msra.mxu0 %v4971
        %5082 = vmatprep.mubr.f32.mxu0 0.0
        %5083 = vmatmul.mubr.f32.gmra.mxu0 %v4920
        %v5084 = vpop.f32.mrf.mxu0
        %v5085 = vadd.f32 0.0, %v5084
        %v5086 = vpop.f32.mrf.mxu0
        %v5087 = vadd.f32 0.0, %v5086
        %5088 = vdwg.mxu0
        %v5089 = vadd.f32 %v4852, %v5085
        %v5090 = vadd.f32 %v4852, %v5087
        %v5091 = vld [vmem:[#allocation3 + $0x1] sm:$0xff]
        %v5092 = vld [vmem:[#allocation3 + $0x9] sm:$0xff]
        %v5093 = vld [vmem:[#allocation3 + $0x11] sm:$0xff]
        %v5094 = vld [vmem:[#allocation3 + $0x19] sm:$0xff]
        %v5095 = vld [vmem:[#allocation3 + $0x21] sm:$0xff]
        %v5096 = vld [vmem:[#allocation3 + $0x29] sm:$0xff]
        %v5097 = vld [vmem:[#allocation3 + $0x31] sm:$0xff]
        %v5098 = vld [vmem:[#allocation3 + $0x39] sm:$0xff]
        %v5099 = vld [vmem:[#allocation3 + $0x41] sm:$0xff]
        %v5100 = vld [vmem:[#allocation3 + $0x49] sm:$0xff]
        %v5101 = vld [vmem:[#allocation3 + $0x51] sm:$0xff]
        %v5102 = vld [vmem:[#allocation3 + $0x59] sm:$0xff]
        %v5103 = vld [vmem:[#allocation3 + $0x61] sm:$0xff]
        %v5104 = vld [vmem:[#allocation3 + $0x69] sm:$0xff]
        %v5105 = vld [vmem:[#allocation3 + $0x71] sm:$0xff]
        %v5106 = vld [vmem:[#allocation3 + $0x79] sm:$0xff]
        %v5107 = vld [vmem:[#allocation3 + $0x81] sm:$0xff]
        %v5108 = vld [vmem:[#allocation3 + $0x89] sm:$0xff]
        %v5109 = vld [vmem:[#allocation3 + $0x91] sm:$0xff]
        %v5110 = vld [vmem:[#allocation3 + $0x99] sm:$0xff]
        %v5111 = vld [vmem:[#allocation3 + $0xa1] sm:$0xff]
        %v5112 = vld [vmem:[#allocation3 + $0xa9] sm:$0xff]
        %v5113 = vld [vmem:[#allocation3 + $0xb1] sm:$0xff]
        %v5114 = vld [vmem:[#allocation3 + $0xb9] sm:$0xff]
        %v5115 = vld [vmem:[#allocation3 + $0xc1] sm:$0xff]
        %v5116 = vld [vmem:[#allocation3 + $0xc9] sm:$0xff]
        %v5117 = vld [vmem:[#allocation3 + $0xd1] sm:$0xff]
        %v5118 = vld [vmem:[#allocation3 + $0xd9] sm:$0xff]
        %v5119 = vld [vmem:[#allocation3 + $0xe1] sm:$0xff]
        %v5120 = vld [vmem:[#allocation3 + $0xe9] sm:$0xff]
        %v5121 = vld [vmem:[#allocation3 + $0xf1] sm:$0xff]
        %v5122 = vld [vmem:[#allocation3 + $0xf9] sm:$0xff]
        %s5123 = scalar_lea.vmem %s6, 8
        %v5124 = vld [vmem:[%s5123] sm:$0xff]
        %v5126 = vsel %vm4808, %v5124, 0
        %v5129 = vsel %vm4808, %v5091, 0
        %v5132 = vsel %vm4808, %v5092, 0
        %v5135 = vsel %vm4808, %v5093, 0
        %v5138 = vsel %vm4808, %v5094, 0
        %v5141 = vsel %vm4808, %v5095, 0
        %v5144 = vsel %vm4808, %v5096, 0
        %v5147 = vsel %vm4808, %v5097, 0
        %v5150 = vsel %vm4808, %v5098, 0
        %v5153 = vsel %vm4808, %v5099, 0
        %v5156 = vsel %vm4808, %v5100, 0
        %v5159 = vsel %vm4808, %v5101, 0
        %v5162 = vsel %vm4808, %v5102, 0
        %v5165 = vsel %vm4808, %v5103, 0
        %v5168 = vsel %vm4808, %v5104, 0
        %v5171 = vsel %vm4808, %v5105, 0
        %v5174 = vsel %vm4808, %v5106, 0
        %v5177 = vsel %vm4808, %v5107, 0
        %v5180 = vsel %vm4808, %v5108, 0
        %v5183 = vsel %vm4808, %v5109, 0
        %v5186 = vsel %vm4808, %v5110, 0
        %v5189 = vsel %vm4808, %v5111, 0
        %v5192 = vsel %vm4808, %v5112, 0
        %v5195 = vsel %vm4808, %v5113, 0
        %v5198 = vsel %vm4808, %v5114, 0
        %v5201 = vsel %vm4808, %v5115, 0
        %v5204 = vsel %vm4808, %v5116, 0
        %v5207 = vsel %vm4808, %v5117, 0
        %v5210 = vsel %vm4808, %v5118, 0
        %v5213 = vsel %vm4808, %v5119, 0
        %v5216 = vsel %vm4808, %v5120, 0
        %v5219 = vsel %vm4808, %v5121, 0
        %v5222 = vsel %vm4808, %v5122, 0
        %5224 = vmatprep.subr.mxu0 0.0
        %5225 = vmatpush1.xpose.msra.mxu0 %v5174
        %5226 = vmatprep.subr.mxu0 0.0
        %5227 = vmatpush1.xpose.msra.mxu0 %v5171
        %5228 = vmatprep.subr.mxu0 0.0
        %5229 = vmatpush1.xpose.msra.mxu0 %v5168
        %5230 = vmatprep.subr.mxu0 0.0
        %5231 = vmatpush1.xpose.msra.mxu0 %v5165
        %5232 = vmatprep.subr.mxu0 0.0
        %5233 = vmatpush1.xpose.msra.mxu0 %v5162
        %5234 = vmatprep.subr.mxu0 0.0
        %5235 = vmatpush1.xpose.msra.mxu0 %v5159
        %5236 = vmatprep.subr.mxu0 0.0
        %5237 = vmatpush1.xpose.msra.mxu0 %v5156
        %5238 = vmatprep.subr.mxu0 0.0
        %5239 = vmatpush1.xpose.msra.mxu0 %v5153
        %5240 = vmatprep.subr.mxu0 0.0
        %5241 = vmatpush1.xpose.msra.mxu0 %v5150
        %5242 = vmatprep.subr.mxu0 0.0
        %5243 = vmatpush1.xpose.msra.mxu0 %v5147
        %5244 = vmatprep.subr.mxu0 0.0
        %5245 = vmatpush1.xpose.msra.mxu0 %v5144
        %5246 = vmatprep.subr.mxu0 0.0
        %5247 = vmatpush1.xpose.msra.mxu0 %v5141
        %5248 = vmatprep.subr.mxu0 0.0
        %5249 = vmatpush1.xpose.msra.mxu0 %v5138
        %5250 = vmatprep.subr.mxu0 0.0
        %5251 = vmatpush1.xpose.msra.mxu0 %v5135
        %5252 = vmatprep.subr.mxu0 0.0
        %5253 = vmatpush1.xpose.msra.mxu0 %v5132
        %5254 = vmatprep.subr.mxu0 0.0
        %5255 = vmatpush1.xpose.msra.mxu0 %v5129
        %5256 = vmatprep.subr.mxu0 0.0
        %5257 = vmatpush2.xpose.msra.mxu0 %v5222
        %5258 = vmatprep.subr.mxu0 0.0
        %5259 = vmatpush2.xpose.msra.mxu0 %v5219
        %5260 = vmatprep.subr.mxu0 0.0
        %5261 = vmatpush2.xpose.msra.mxu0 %v5216
        %5262 = vmatprep.subr.mxu0 0.0
        %5263 = vmatpush2.xpose.msra.mxu0 %v5213
        %5264 = vmatprep.subr.mxu0 0.0
        %5265 = vmatpush2.xpose.msra.mxu0 %v5210
        %5266 = vmatprep.subr.mxu0 0.0
        %5267 = vmatpush2.xpose.msra.mxu0 %v5207
        %5268 = vmatprep.subr.mxu0 0.0
        %5269 = vmatpush2.xpose.msra.mxu0 %v5204
        %5270 = vmatprep.subr.mxu0 0.0
        %5271 = vmatpush2.xpose.msra.mxu0 %v5201
        %5272 = vmatprep.subr.mxu0 0.0
        %5273 = vmatpush2.xpose.msra.mxu0 %v5198
        %5274 = vmatprep.subr.mxu0 0.0
        %5275 = vmatpush2.xpose.msra.mxu0 %v5195
        %5276 = vmatprep.subr.mxu0 0.0
        %5277 = vmatpush2.xpose.msra.mxu0 %v5192
        %5278 = vmatprep.subr.mxu0 0.0
        %5279 = vmatpush2.xpose.msra.mxu0 %v5189
        %5280 = vmatprep.subr.mxu0 0.0
        %5281 = vmatpush2.xpose.msra.mxu0 %v5186
        %5282 = vmatprep.subr.mxu0 0.0
        %5283 = vmatpush2.xpose.msra.mxu0 %v5183
        %5284 = vmatprep.subr.mxu0 0.0
        %5285 = vmatpush2.xpose.msra.mxu0 %v5180
        %5286 = vmatprep.subr.mxu0 0.0
        %5287 = vmatpush2.xpose.msra.mxu0 %v5177
        %5288 = vmatprep.mubr.f32.mxu0 0.0
        %5289 = vmatmul.mubr.f32.gmra.mxu0 %v5126
        %v5290 = vpop.f32.mrf.mxu0
        %v5291 = vadd.f32 0.0, %v5290
        %v5292 = vpop.f32.mrf.mxu0
        %v5293 = vadd.f32 0.0, %v5292
        %5294 = vdwg.mxu0
        %v5295 = vadd.f32 %v5089, %v5291
        %v5296 = vadd.f32 %v5090, %v5293
        %v5297 = vld [vmem:[#allocation3 + $0x2] sm:$0xff]
        %v5298 = vld [vmem:[#allocation3 + $0xa] sm:$0xff]
        %v5299 = vld [vmem:[#allocation3 + $0x12] sm:$0xff]
        %v5300 = vld [vmem:[#allocation3 + $0x1a] sm:$0xff]
        %v5301 = vld [vmem:[#allocation3 + $0x22] sm:$0xff]
        %v5302 = vld [vmem:[#allocation3 + $0x2a] sm:$0xff]
        %v5303 = vld [vmem:[#allocation3 + $0x32] sm:$0xff]
        %v5304 = vld [vmem:[#allocation3 + $0x3a] sm:$0xff]
        %v5305 = vld [vmem:[#allocation3 + $0x42] sm:$0xff]
        %v5306 = vld [vmem:[#allocation3 + $0x4a] sm:$0xff]
        %v5307 = vld [vmem:[#allocation3 + $0x52] sm:$0xff]
        %v5308 = vld [vmem:[#allocation3 + $0x5a] sm:$0xff]
        %v5309 = vld [vmem:[#allocation3 + $0x62] sm:$0xff]
        %v5310 = vld [vmem:[#allocation3 + $0x6a] sm:$0xff]
        %v5311 = vld [vmem:[#allocation3 + $0x72] sm:$0xff]
        %v5312 = vld [vmem:[#allocation3 + $0x7a] sm:$0xff]
        %v5313 = vld [vmem:[#allocation3 + $0x82] sm:$0xff]
        %v5314 = vld [vmem:[#allocation3 + $0x8a] sm:$0xff]
        %v5315 = vld [vmem:[#allocation3 + $0x92] sm:$0xff]
        %v5316 = vld [vmem:[#allocation3 + $0x9a] sm:$0xff]
        %v5317 = vld [vmem:[#allocation3 + $0xa2] sm:$0xff]
        %v5318 = vld [vmem:[#allocation3 + $0xaa] sm:$0xff]
        %v5319 = vld [vmem:[#allocation3 + $0xb2] sm:$0xff]
        %v5320 = vld [vmem:[#allocation3 + $0xba] sm:$0xff]
        %v5321 = vld [vmem:[#allocation3 + $0xc2] sm:$0xff]
        %v5322 = vld [vmem:[#allocation3 + $0xca] sm:$0xff]
        %v5323 = vld [vmem:[#allocation3 + $0xd2] sm:$0xff]
        %v5324 = vld [vmem:[#allocation3 + $0xda] sm:$0xff]
        %v5325 = vld [vmem:[#allocation3 + $0xe2] sm:$0xff]
        %v5326 = vld [vmem:[#allocation3 + $0xea] sm:$0xff]
        %v5327 = vld [vmem:[#allocation3 + $0xf2] sm:$0xff]
        %v5328 = vld [vmem:[#allocation3 + $0xfa] sm:$0xff]
        %v5329 = vmul.f32 %v5297, %v1761
        %v5330 = vmul.f32 %v5298, %v1766
        %v5331 = vmul.f32 %v5299, %v1771
        %v5332 = vmul.f32 %v5300, %v1776
        %v5333 = vmul.f32 %v5301, %v1781
        %v5334 = vmul.f32 %v5302, %v1786
        %v5335 = vmul.f32 %v5303, %v1791
        %v5336 = vmul.f32 %v5304, %v1796
        %v5337 = vmul.f32 %v5305, %v1801
        %v5338 = vmul.f32 %v5306, %v1806
        %v5339 = vmul.f32 %v5307, %v1811
        %v5340 = vmul.f32 %v5308, %v1816
        %v5341 = vmul.f32 %v5309, %v1821
        %v5342 = vmul.f32 %v5310, %v1826
        %v5343 = vmul.f32 %v5311, %v1831
        %v5344 = vmul.f32 %v5312, %v1836
        %v5345 = vmul.f32 %v5313, %v1841
        %v5346 = vmul.f32 %v5314, %v1846
        %v5347 = vmul.f32 %v5315, %v1851
        %v5348 = vmul.f32 %v5316, %v1856
        %v5349 = vmul.f32 %v5317, %v1861
        %v5350 = vmul.f32 %v5318, %v1866
        %v5351 = vmul.f32 %v5319, %v1871
        %v5352 = vmul.f32 %v5320, %v1876
        %v5353 = vmul.f32 %v5321, %v1881
        %v5354 = vmul.f32 %v5322, %v1886
        %v5355 = vmul.f32 %v5323, %v1891
        %v5356 = vmul.f32 %v5324, %v1896
        %v5357 = vmul.f32 %v5325, %v1901
        %v5358 = vmul.f32 %v5326, %v1906
        %v5359 = vmul.f32 %v5327, %v1911
        %v5360 = vmul.f32 %v5328, %v1916
        %s5361 = scalar_lea.vmem %s6, 16
        %v5362 = vld [vmem:[%s5361] sm:$0xff]
        %v5364 = vsel %vm4808, %v5362, 0
        %v5367 = vsel %vm4808, %v5329, 0
        %v5370 = vsel %vm4808, %v5330, 0
        %v5373 = vsel %vm4808, %v5331, 0
        %v5376 = vsel %vm4808, %v5332, 0
        %v5379 = vsel %vm4808, %v5333, 0
        %v5382 = vsel %vm4808, %v5334, 0
        %v5385 = vsel %vm4808, %v5335, 0
        %v5388 = vsel %vm4808, %v5336, 0
        %v5391 = vsel %vm4808, %v5337, 0
        %v5394 = vsel %vm4808, %v5338, 0
        %v5397 = vsel %vm4808, %v5339, 0
        %v5400 = vsel %vm4808, %v5340, 0
        %v5403 = vsel %vm4808, %v5341, 0
        %v5406 = vsel %vm4808, %v5342, 0
        %v5409 = vsel %vm4808, %v5343, 0
        %v5412 = vsel %vm4808, %v5344, 0
        %v5415 = vsel %vm4808, %v5345, 0
        %v5418 = vsel %vm4808, %v5346, 0
        %v5421 = vsel %vm4808, %v5347, 0
        %v5424 = vsel %vm4808, %v5348, 0
        %v5427 = vsel %vm4808, %v5349, 0
        %v5430 = vsel %vm4808, %v5350, 0
        %v5433 = vsel %vm4808, %v5351, 0
        %v5436 = vsel %vm4808, %v5352, 0
        %v5439 = vsel %vm4808, %v5353, 0
        %v5442 = vsel %vm4808, %v5354, 0
        %v5445 = vsel %vm4808, %v5355, 0
        %v5448 = vsel %vm4808, %v5356, 0
        %v5451 = vsel %vm4808, %v5357, 0
        %v5454 = vsel %vm4808, %v5358, 0
        %v5457 = vsel %vm4808, %v5359, 0
        %v5460 = vsel %vm4808, %v5360, 0
        %5462 = vmatprep.subr.mxu0 0.0
        %5463 = vmatpush1.xpose.msra.mxu0 %v5412
        %5464 = vmatprep.subr.mxu0 0.0
        %5465 = vmatpush1.xpose.msra.mxu0 %v5409
        %5466 = vmatprep.subr.mxu0 0.0
        %5467 = vmatpush1.xpose.msra.mxu0 %v5406
        %5468 = vmatprep.subr.mxu0 0.0
        %5469 = vmatpush1.xpose.msra.mxu0 %v5403
        %5470 = vmatprep.subr.mxu0 0.0
        %5471 = vmatpush1.xpose.msra.mxu0 %v5400
        %5472 = vmatprep.subr.mxu0 0.0
        %5473 = vmatpush1.xpose.msra.mxu0 %v5397
        %5474 = vmatprep.subr.mxu0 0.0
        %5475 = vmatpush1.xpose.msra.mxu0 %v5394
        %5476 = vmatprep.subr.mxu0 0.0
        %5477 = vmatpush1.xpose.msra.mxu0 %v5391
        %5478 = vmatprep.subr.mxu0 0.0
        %5479 = vmatpush1.xpose.msra.mxu0 %v5388
        %5480 = vmatprep.subr.mxu0 0.0
        %5481 = vmatpush1.xpose.msra.mxu0 %v5385
        %5482 = vmatprep.subr.mxu0 0.0
        %5483 = vmatpush1.xpose.msra.mxu0 %v5382
        %5484 = vmatprep.subr.mxu0 0.0
        %5485 = vmatpush1.xpose.msra.mxu0 %v5379
        %5486 = vmatprep.subr.mxu0 0.0
        %5487 = vmatpush1.xpose.msra.mxu0 %v5376
        %5488 = vmatprep.subr.mxu0 0.0
        %5489 = vmatpush1.xpose.msra.mxu0 %v5373
        %5490 = vmatprep.subr.mxu0 0.0
        %5491 = vmatpush1.xpose.msra.mxu0 %v5370
        %5492 = vmatprep.subr.mxu0 0.0
        %5493 = vmatpush1.xpose.msra.mxu0 %v5367
        %5494 = vmatprep.subr.mxu0 0.0
        %5495 = vmatpush2.xpose.msra.mxu0 %v5460
        %5496 = vmatprep.subr.mxu0 0.0
        %5497 = vmatpush2.xpose.msra.mxu0 %v5457
        %5498 = vmatprep.subr.mxu0 0.0
        %5499 = vmatpush2.xpose.msra.mxu0 %v5454
        %5500 = vmatprep.subr.mxu0 0.0
        %5501 = vmatpush2.xpose.msra.mxu0 %v5451
        %5502 = vmatprep.subr.mxu0 0.0
        %5503 = vmatpush2.xpose.msra.mxu0 %v5448
        %5504 = vmatprep.subr.mxu0 0.0
        %5505 = vmatpush2.xpose.msra.mxu0 %v5445
        %5506 = vmatprep.subr.mxu0 0.0
        %5507 = vmatpush2.xpose.msra.mxu0 %v5442
        %5508 = vmatprep.subr.mxu0 0.0
        %5509 = vmatpush2.xpose.msra.mxu0 %v5439
        %5510 = vmatprep.subr.mxu0 0.0
        %5511 = vmatpush2.xpose.msra.mxu0 %v5436
        %5512 = vmatprep.subr.mxu0 0.0
        %5513 = vmatpush2.xpose.msra.mxu0 %v5433
        %5514 = vmatprep.subr.mxu0 0.0
        %5515 = vmatpush2.xpose.msra.mxu0 %v5430
        %5516 = vmatprep.subr.mxu0 0.0
        %5517 = vmatpush2.xpose.msra.mxu0 %v5427
        %5518 = vmatprep.subr.mxu0 0.0
        %5519 = vmatpush2.xpose.msra.mxu0 %v5424
        %5520 = vmatprep.subr.mxu0 0.0
        %5521 = vmatpush2.xpose.msra.mxu0 %v5421
        %5522 = vmatprep.subr.mxu0 0.0
        %5523 = vmatpush2.xpose.msra.mxu0 %v5418
        %5524 = vmatprep.subr.mxu0 0.0
        %5525 = vmatpush2.xpose.msra.mxu0 %v5415
        %5526 = vmatprep.mubr.f32.mxu0 0.0
        %5527 = vmatmul.mubr.f32.gmra.mxu0 %v5364
        %v5528 = vpop.f32.mrf.mxu0
        %v5529 = vadd.f32 0.0, %v5528
        %v5530 = vpop.f32.mrf.mxu0
        %v5531 = vadd.f32 0.0, %v5530
        %5532 = vdwg.mxu0
        %v5533 = vadd.f32 %v5295, %v5529
        %v5534 = vadd.f32 %v5296, %v5531
        %v5535 = vld [vmem:[#allocation3 + $0x10] sm:$0xff]
        %v5536 = vld [vmem:[#allocation3 + $0x18] sm:$0xff]
        %v5537 = vld [vmem:[#allocation3 + $0x20] sm:$0xff]
        %v5538 = vld [vmem:[#allocation3 + $0x28] sm:$0xff]
        %v5539 = vld [vmem:[#allocation3 + $0x30] sm:$0xff]
        %v5540 = vld [vmem:[#allocation3 + $0x38] sm:$0xff]
        %v5541 = vld [vmem:[#allocation3 + $0x40] sm:$0xff]
        %v5542 = vld [vmem:[#allocation3 + $0x48] sm:$0xff]
        %v5543 = vld [vmem:[#allocation3 + $0x50] sm:$0xff]
        %v5544 = vld [vmem:[#allocation3 + $0x58] sm:$0xff]
        %v5545 = vld [vmem:[#allocation3 + $0x60] sm:$0xff]
        %v5546 = vld [vmem:[#allocation3 + $0x68] sm:$0xff]
        %v5547 = vld [vmem:[#allocation3 + $0x70] sm:$0xff]
        %v5548 = vld [vmem:[#allocation3 + $0x78] sm:$0xff]
        %v5549 = vld [vmem:[#allocation3 + $0x80] sm:$0xff]
        %v5550 = vld [vmem:[#allocation3 + $0x88] sm:$0xff]
        %v5551 = vld [vmem:[#allocation3 + $0x90] sm:$0xff]
        %v5552 = vld [vmem:[#allocation3 + $0x98] sm:$0xff]
        %v5553 = vld [vmem:[#allocation3 + $0xa0] sm:$0xff]
        %v5554 = vld [vmem:[#allocation3 + $0xa8] sm:$0xff]
        %v5555 = vld [vmem:[#allocation3 + $0xb0] sm:$0xff]
        %v5556 = vld [vmem:[#allocation3 + $0xb8] sm:$0xff]
        %v5557 = vld [vmem:[#allocation3 + $0xc0] sm:$0xff]
        %v5558 = vld [vmem:[#allocation3 + $0xc8] sm:$0xff]
        %v5559 = vld [vmem:[#allocation3 + $0xd0] sm:$0xff]
        %v5560 = vld [vmem:[#allocation3 + $0xd8] sm:$0xff]
        %v5561 = vld [vmem:[#allocation3 + $0xe0] sm:$0xff]
        %v5562 = vld [vmem:[#allocation3 + $0xe8] sm:$0xff]
        %v5563 = vld [vmem:[#allocation3 + $0xf0] sm:$0xff]
        %v5564 = vld [vmem:[#allocation3 + $0xf8] sm:$0xff]
        %v5565 = vld [vmem:[#allocation3 + $0x100] sm:$0xff]
        %v5566 = vld [vmem:[#allocation3 + $0x108] sm:$0xff]
        %v5567 = vmul.f32 %v5535, %v789
        %v5568 = vmul.f32 %v5536, %v794
        %v5569 = vmul.f32 %v5537, %v799
        %v5570 = vmul.f32 %v5538, %v804
        %v5571 = vmul.f32 %v5539, %v809
        %v5572 = vmul.f32 %v5540, %v814
        %v5573 = vmul.f32 %v5541, %v819
        %v5574 = vmul.f32 %v5542, %v824
        %v5575 = vmul.f32 %v5543, %v829
        %v5576 = vmul.f32 %v5544, %v834
        %v5577 = vmul.f32 %v5545, %v839
        %v5578 = vmul.f32 %v5546, %v844
        %v5579 = vmul.f32 %v5547, %v849
        %v5580 = vmul.f32 %v5548, %v854
        %v5581 = vmul.f32 %v5549, %v859
        %v5582 = vmul.f32 %v5550, %v864
        %v5583 = vmul.f32 %v5551, %v869
        %v5584 = vmul.f32 %v5552, %v874
        %v5585 = vmul.f32 %v5553, %v879
        %v5586 = vmul.f32 %v5554, %v884
        %v5587 = vmul.f32 %v5555, %v889
        %v5588 = vmul.f32 %v5556, %v894
        %v5589 = vmul.f32 %v5557, %v899
        %v5590 = vmul.f32 %v5558, %v904
        %v5591 = vmul.f32 %v5559, %v909
        %v5592 = vmul.f32 %v5560, %v914
        %v5593 = vmul.f32 %v5561, %v919
        %v5594 = vmul.f32 %v5562, %v924
        %v5595 = vmul.f32 %v5563, %v929
        %v5596 = vmul.f32 %v5564, %v934
        %v5597 = vmul.f32 %v5565, %v939
        %v5598 = vmul.f32 %v5566, %v944
        %s5599 = scalar_lea.vmem %s6, 24
        %v5600 = vld [vmem:[%s5599] sm:$0xff]
        %v5602 = vsel %vm4808, %v5600, 0
        %v5605 = vsel %vm4808, %v5567, 0
        %v5608 = vsel %vm4808, %v5568, 0
        %v5611 = vsel %vm4808, %v5569, 0
        %v5614 = vsel %vm4808, %v5570, 0
        %v5617 = vsel %vm4808, %v5571, 0
        %v5620 = vsel %vm4808, %v5572, 0
        %v5623 = vsel %vm4808, %v5573, 0
        %v5626 = vsel %vm4808, %v5574, 0
        %v5629 = vsel %vm4808, %v5575, 0
        %v5632 = vsel %vm4808, %v5576, 0
        %v5635 = vsel %vm4808, %v5577, 0
        %v5638 = vsel %vm4808, %v5578, 0
        %v5641 = vsel %vm4808, %v5579, 0
        %v5644 = vsel %vm4808, %v5580, 0
        %v5647 = vsel %vm4808, %v5581, 0
        %v5650 = vsel %vm4808, %v5582, 0
        %v5653 = vsel %vm4808, %v5583, 0
        %v5656 = vsel %vm4808, %v5584, 0
        %v5659 = vsel %vm4808, %v5585, 0
        %v5662 = vsel %vm4808, %v5586, 0
        %v5665 = vsel %vm4808, %v5587, 0
        %v5668 = vsel %vm4808, %v5588, 0
        %v5671 = vsel %vm4808, %v5589, 0
        %v5674 = vsel %vm4808, %v5590, 0
        %v5677 = vsel %vm4808, %v5591, 0
        %v5680 = vsel %vm4808, %v5592, 0
        %v5683 = vsel %vm4808, %v5593, 0
        %v5686 = vsel %vm4808, %v5594, 0
        %v5689 = vsel %vm4808, %v5595, 0
        %v5692 = vsel %vm4808, %v5596, 0
        %v5695 = vsel %vm4808, %v5597, 0
        %v5698 = vsel %vm4808, %v5598, 0
        %5700 = vmatprep.subr.mxu0 0.0
        %5701 = vmatpush1.xpose.msra.mxu0 %v5650
        %5702 = vmatprep.subr.mxu0 0.0
        %5703 = vmatpush1.xpose.msra.mxu0 %v5647
        %5704 = vmatprep.subr.mxu0 0.0
        %5705 = vmatpush1.xpose.msra.mxu0 %v5644
        %5706 = vmatprep.subr.mxu0 0.0
        %5707 = vmatpush1.xpose.msra.mxu0 %v5641
        %5708 = vmatprep.subr.mxu0 0.0
        %5709 = vmatpush1.xpose.msra.mxu0 %v5638
        %5710 = vmatprep.subr.mxu0 0.0
        %5711 = vmatpush1.xpose.msra.mxu0 %v5635
        %5712 = vmatprep.subr.mxu0 0.0
        %5713 = vmatpush1.xpose.msra.mxu0 %v5632
        %5714 = vmatprep.subr.mxu0 0.0
        %5715 = vmatpush1.xpose.msra.mxu0 %v5629
        %5716 = vmatprep.subr.mxu0 0.0
        %5717 = vmatpush1.xpose.msra.mxu0 %v5626
        %5718 = vmatprep.subr.mxu0 0.0
        %5719 = vmatpush1.xpose.msra.mxu0 %v5623
        %5720 = vmatprep.subr.mxu0 0.0
        %5721 = vmatpush1.xpose.msra.mxu0 %v5620
        %5722 = vmatprep.subr.mxu0 0.0
        %5723 = vmatpush1.xpose.msra.mxu0 %v5617
        %5724 = vmatprep.subr.mxu0 0.0
        %5725 = vmatpush1.xpose.msra.mxu0 %v5614
        %5726 = vmatprep.subr.mxu0 0.0
        %5727 = vmatpush1.xpose.msra.mxu0 %v5611
        %5728 = vmatprep.subr.mxu0 0.0
        %5729 = vmatpush1.xpose.msra.mxu0 %v5608
        %5730 = vmatprep.subr.mxu0 0.0
        %5731 = vmatpush1.xpose.msra.mxu0 %v5605
        %5732 = vmatprep.subr.mxu0 0.0
        %5733 = vmatpush2.xpose.msra.mxu0 %v5698
        %5734 = vmatprep.subr.mxu0 0.0
        %5735 = vmatpush2.xpose.msra.mxu0 %v5695
        %5736 = vmatprep.subr.mxu0 0.0
        %5737 = vmatpush2.xpose.msra.mxu0 %v5692
        %5738 = vmatprep.subr.mxu0 0.0
        %5739 = vmatpush2.xpose.msra.mxu0 %v5689
        %5740 = vmatprep.subr.mxu0 0.0
        %5741 = vmatpush2.xpose.msra.mxu0 %v5686
        %5742 = vmatprep.subr.mxu0 0.0
        %5743 = vmatpush2.xpose.msra.mxu0 %v5683
        %5744 = vmatprep.subr.mxu0 0.0
        %5745 = vmatpush2.xpose.msra.mxu0 %v5680
        %5746 = vmatprep.subr.mxu0 0.0
        %5747 = vmatpush2.xpose.msra.mxu0 %v5677
        %5748 = vmatprep.subr.mxu0 0.0
        %5749 = vmatpush2.xpose.msra.mxu0 %v5674
        %5750 = vmatprep.subr.mxu0 0.0
        %5751 = vmatpush2.xpose.msra.mxu0 %v5671
        %5752 = vmatprep.subr.mxu0 0.0
        %5753 = vmatpush2.xpose.msra.mxu0 %v5668
        %5754 = vmatprep.subr.mxu0 0.0
        %5755 = vmatpush2.xpose.msra.mxu0 %v5665
        %5756 = vmatprep.subr.mxu0 0.0
        %5757 = vmatpush2.xpose.msra.mxu0 %v5662
        %5758 = vmatprep.subr.mxu0 0.0
        %5759 = vmatpush2.xpose.msra.mxu0 %v5659
        %5760 = vmatprep.subr.mxu0 0.0
        %5761 = vmatpush2.xpose.msra.mxu0 %v5656
        %5762 = vmatprep.subr.mxu0 0.0
        %5763 = vmatpush2.xpose.msra.mxu0 %v5653
        %5764 = vmatprep.mubr.f32.mxu0 0.0
        %5765 = vmatmul.mubr.f32.gmra.mxu0 %v5602
        %v5766 = vpop.f32.mrf.mxu0
        %v5767 = vadd.f32 0.0, %v5766
        %v5768 = vpop.f32.mrf.mxu0
        %v5769 = vadd.f32 0.0, %v5768
        %5770 = vdwg.mxu0
        %v5771 = vadd.f32 %v5533, %v5767
        %v5772 = vadd.f32 %v5534, %v5769
        %v5773 = vld [vmem:[#allocation3 + $0x11] sm:$0xff]
        %v5774 = vld [vmem:[#allocation3 + $0x19] sm:$0xff]
        %v5775 = vld [vmem:[#allocation3 + $0x21] sm:$0xff]
        %v5776 = vld [vmem:[#allocation3 + $0x29] sm:$0xff]
        %v5777 = vld [vmem:[#allocation3 + $0x31] sm:$0xff]
        %v5778 = vld [vmem:[#allocation3 + $0x39] sm:$0xff]
        %v5779 = vld [vmem:[#allocation3 + $0x41] sm:$0xff]
        %v5780 = vld [vmem:[#allocation3 + $0x49] sm:$0xff]
        %v5781 = vld [vmem:[#allocation3 + $0x51] sm:$0xff]
        %v5782 = vld [vmem:[#allocation3 + $0x59] sm:$0xff]
        %v5783 = vld [vmem:[#allocation3 + $0x61] sm:$0xff]
        %v5784 = vld [vmem:[#allocation3 + $0x69] sm:$0xff]
        %v5785 = vld [vmem:[#allocation3 + $0x71] sm:$0xff]
        %v5786 = vld [vmem:[#allocation3 + $0x79] sm:$0xff]
        %v5787 = vld [vmem:[#allocation3 + $0x81] sm:$0xff]
        %v5788 = vld [vmem:[#allocation3 + $0x89] sm:$0xff]
        %v5789 = vld [vmem:[#allocation3 + $0x91] sm:$0xff]
        %v5790 = vld [vmem:[#allocation3 + $0x99] sm:$0xff]
        %v5791 = vld [vmem:[#allocation3 + $0xa1] sm:$0xff]
        %v5792 = vld [vmem:[#allocation3 + $0xa9] sm:$0xff]
        %v5793 = vld [vmem:[#allocation3 + $0xb1] sm:$0xff]
        %v5794 = vld [vmem:[#allocation3 + $0xb9] sm:$0xff]
        %v5795 = vld [vmem:[#allocation3 + $0xc1] sm:$0xff]
        %v5796 = vld [vmem:[#allocation3 + $0xc9] sm:$0xff]
        %v5797 = vld [vmem:[#allocation3 + $0xd1] sm:$0xff]
        %v5798 = vld [vmem:[#allocation3 + $0xd9] sm:$0xff]
        %v5799 = vld [vmem:[#allocation3 + $0xe1] sm:$0xff]
        %v5800 = vld [vmem:[#allocation3 + $0xe9] sm:$0xff]
        %v5801 = vld [vmem:[#allocation3 + $0xf1] sm:$0xff]
        %v5802 = vld [vmem:[#allocation3 + $0xf9] sm:$0xff]
        %v5803 = vld [vmem:[#allocation3 + $0x101] sm:$0xff]
        %v5804 = vld [vmem:[#allocation3 + $0x109] sm:$0xff]
        %s5805 = scalar_lea.vmem %s6, 32
        %v5806 = vld [vmem:[%s5805] sm:$0xff]
        %v5808 = vsel %vm4808, %v5806, 0
        %v5811 = vsel %vm4808, %v5773, 0
        %v5814 = vsel %vm4808, %v5774, 0
        %v5817 = vsel %vm4808, %v5775, 0
        %v5820 = vsel %vm4808, %v5776, 0
        %v5823 = vsel %vm4808, %v5777, 0
        %v5826 = vsel %vm4808, %v5778, 0
        %v5829 = vsel %vm4808, %v5779, 0
        %v5832 = vsel %vm4808, %v5780, 0
        %v5835 = vsel %vm4808, %v5781, 0
        %v5838 = vsel %vm4808, %v5782, 0
        %v5841 = vsel %vm4808, %v5783, 0
        %v5844 = vsel %vm4808, %v5784, 0
        %v5847 = vsel %vm4808, %v5785, 0
        %v5850 = vsel %vm4808, %v5786, 0
        %v5853 = vsel %vm4808, %v5787, 0
        %v5856 = vsel %vm4808, %v5788, 0
        %v5859 = vsel %vm4808, %v5789, 0
        %v5862 = vsel %vm4808, %v5790, 0
        %v5865 = vsel %vm4808, %v5791, 0
        %v5868 = vsel %vm4808, %v5792, 0
        %v5871 = vsel %vm4808, %v5793, 0
        %v5874 = vsel %vm4808, %v5794, 0
        %v5877 = vsel %vm4808, %v5795, 0
        %v5880 = vsel %vm4808, %v5796, 0
        %v5883 = vsel %vm4808, %v5797, 0
        %v5886 = vsel %vm4808, %v5798, 0
        %v5889 = vsel %vm4808, %v5799, 0
        %v5892 = vsel %vm4808, %v5800, 0
        %v5895 = vsel %vm4808, %v5801, 0
        %v5898 = vsel %vm4808, %v5802, 0
        %v5901 = vsel %vm4808, %v5803, 0
        %v5904 = vsel %vm4808, %v5804, 0
        %5906 = vmatprep.subr.mxu0 0.0
        %5907 = vmatpush1.xpose.msra.mxu0 %v5856
        %5908 = vmatprep.subr.mxu0 0.0
        %5909 = vmatpush1.xpose.msra.mxu0 %v5853
        %5910 = vmatprep.subr.mxu0 0.0
        %5911 = vmatpush1.xpose.msra.mxu0 %v5850
        %5912 = vmatprep.subr.mxu0 0.0
        %5913 = vmatpush1.xpose.msra.mxu0 %v5847
        %5914 = vmatprep.subr.mxu0 0.0
        %5915 = vmatpush1.xpose.msra.mxu0 %v5844
        %5916 = vmatprep.subr.mxu0 0.0
        %5917 = vmatpush1.xpose.msra.mxu0 %v5841
        %5918 = vmatprep.subr.mxu0 0.0
        %5919 = vmatpush1.xpose.msra.mxu0 %v5838
        %5920 = vmatprep.subr.mxu0 0.0
        %5921 = vmatpush1.xpose.msra.mxu0 %v5835
        %5922 = vmatprep.subr.mxu0 0.0
        %5923 = vmatpush1.xpose.msra.mxu0 %v5832
        %5924 = vmatprep.subr.mxu0 0.0
        %5925 = vmatpush1.xpose.msra.mxu0 %v5829
        %5926 = vmatprep.subr.mxu0 0.0
        %5927 = vmatpush1.xpose.msra.mxu0 %v5826
        %5928 = vmatprep.subr.mxu0 0.0
        %5929 = vmatpush1.xpose.msra.mxu0 %v5823
        %5930 = vmatprep.subr.mxu0 0.0
        %5931 = vmatpush1.xpose.msra.mxu0 %v5820
        %5932 = vmatprep.subr.mxu0 0.0
        %5933 = vmatpush1.xpose.msra.mxu0 %v5817
        %5934 = vmatprep.subr.mxu0 0.0
        %5935 = vmatpush1.xpose.msra.mxu0 %v5814
        %5936 = vmatprep.subr.mxu0 0.0
        %5937 = vmatpush1.xpose.msra.mxu0 %v5811
        %5938 = vmatprep.subr.mxu0 0.0
        %5939 = vmatpush2.xpose.msra.mxu0 %v5904
        %5940 = vmatprep.subr.mxu0 0.0
        %5941 = vmatpush2.xpose.msra.mxu0 %v5901
        %5942 = vmatprep.subr.mxu0 0.0
        %5943 = vmatpush2.xpose.msra.mxu0 %v5898
        %5944 = vmatprep.subr.mxu0 0.0
        %5945 = vmatpush2.xpose.msra.mxu0 %v5895
        %5946 = vmatprep.subr.mxu0 0.0
        %5947 = vmatpush2.xpose.msra.mxu0 %v5892
        %5948 = vmatprep.subr.mxu0 0.0
        %5949 = vmatpush2.xpose.msra.mxu0 %v5889
        %5950 = vmatprep.subr.mxu0 0.0
        %5951 = vmatpush2.xpose.msra.mxu0 %v5886
        %5952 = vmatprep.subr.mxu0 0.0
        %5953 = vmatpush2.xpose.msra.mxu0 %v5883
        %5954 = vmatprep.subr.mxu0 0.0
        %5955 = vmatpush2.xpose.msra.mxu0 %v5880
        %5956 = vmatprep.subr.mxu0 0.0
        %5957 = vmatpush2.xpose.msra.mxu0 %v5877
        %5958 = vmatprep.subr.mxu0 0.0
        %5959 = vmatpush2.xpose.msra.mxu0 %v5874
        %5960 = vmatprep.subr.mxu0 0.0
        %5961 = vmatpush2.xpose.msra.mxu0 %v5871
        %5962 = vmatprep.subr.mxu0 0.0
        %5963 = vmatpush2.xpose.msra.mxu0 %v5868
        %5964 = vmatprep.subr.mxu0 0.0
        %5965 = vmatpush2.xpose.msra.mxu0 %v5865
        %5966 = vmatprep.subr.mxu0 0.0
        %5967 = vmatpush2.xpose.msra.mxu0 %v5862
        %5968 = vmatprep.subr.mxu0 0.0
        %5969 = vmatpush2.xpose.msra.mxu0 %v5859
        %5970 = vmatprep.mubr.f32.mxu0 0.0
        %5971 = vmatmul.mubr.f32.gmra.mxu0 %v5808
        %v5972 = vpop.f32.mrf.mxu0
        %v5973 = vadd.f32 0.0, %v5972
        %v5974 = vpop.f32.mrf.mxu0
        %v5975 = vadd.f32 0.0, %v5974
        %5976 = vdwg.mxu0
        %v5977 = vadd.f32 %v5771, %v5973
        %v5978 = vadd.f32 %v5772, %v5975
        %v5979 = vld [vmem:[#allocation3 + $0x12] sm:$0xff]
        %v5980 = vld [vmem:[#allocation3 + $0x1a] sm:$0xff]
        %v5981 = vld [vmem:[#allocation3 + $0x22] sm:$0xff]
        %v5982 = vld [vmem:[#allocation3 + $0x2a] sm:$0xff]
        %v5983 = vld [vmem:[#allocation3 + $0x32] sm:$0xff]
        %v5984 = vld [vmem:[#allocation3 + $0x3a] sm:$0xff]
        %v5985 = vld [vmem:[#allocation3 + $0x42] sm:$0xff]
        %v5986 = vld [vmem:[#allocation3 + $0x4a] sm:$0xff]
        %v5987 = vld [vmem:[#allocation3 + $0x52] sm:$0xff]
        %v5988 = vld [vmem:[#allocation3 + $0x5a] sm:$0xff]
        %v5989 = vld [vmem:[#allocation3 + $0x62] sm:$0xff]
        %v5990 = vld [vmem:[#allocation3 + $0x6a] sm:$0xff]
        %v5991 = vld [vmem:[#allocation3 + $0x72] sm:$0xff]
        %v5992 = vld [vmem:[#allocation3 + $0x7a] sm:$0xff]
        %v5993 = vld [vmem:[#allocation3 + $0x82] sm:$0xff]
        %v5994 = vld [vmem:[#allocation3 + $0x8a] sm:$0xff]
        %v5995 = vld [vmem:[#allocation3 + $0x92] sm:$0xff]
        %v5996 = vld [vmem:[#allocation3 + $0x9a] sm:$0xff]
        %v5997 = vld [vmem:[#allocation3 + $0xa2] sm:$0xff]
        %v5998 = vld [vmem:[#allocation3 + $0xaa] sm:$0xff]
        %v5999 = vld [vmem:[#allocation3 + $0xb2] sm:$0xff]
        %v6000 = vld [vmem:[#allocation3 + $0xba] sm:$0xff]
        %v6001 = vld [vmem:[#allocation3 + $0xc2] sm:$0xff]
        %v6002 = vld [vmem:[#allocation3 + $0xca] sm:$0xff]
        %v6003 = vld [vmem:[#allocation3 + $0xd2] sm:$0xff]
        %v6004 = vld [vmem:[#allocation3 + $0xda] sm:$0xff]
        %v6005 = vld [vmem:[#allocation3 + $0xe2] sm:$0xff]
        %v6006 = vld [vmem:[#allocation3 + $0xea] sm:$0xff]
        %v6007 = vld [vmem:[#allocation3 + $0xf2] sm:$0xff]
        %v6008 = vld [vmem:[#allocation3 + $0xfa] sm:$0xff]
        %v6009 = vld [vmem:[#allocation3 + $0x102] sm:$0xff]
        %v6010 = vld [vmem:[#allocation3 + $0x10a] sm:$0xff]
        %v6011 = vmul.f32 %v5979, %v1761
        %v6012 = vmul.f32 %v5980, %v1766
        %v6013 = vmul.f32 %v5981, %v1771
        %v6014 = vmul.f32 %v5982, %v1776
        %v6015 = vmul.f32 %v5983, %v1781
        %v6016 = vmul.f32 %v5984, %v1786
        %v6017 = vmul.f32 %v5985, %v1791
        %v6018 = vmul.f32 %v5986, %v1796
        %v6019 = vmul.f32 %v5987, %v1801
        %v6020 = vmul.f32 %v5988, %v1806
        %v6021 = vmul.f32 %v5989, %v1811
        %v6022 = vmul.f32 %v5990, %v1816
        %v6023 = vmul.f32 %v5991, %v1821
        %v6024 = vmul.f32 %v5992, %v1826
        %v6025 = vmul.f32 %v5993, %v1831
        %v6026 = vmul.f32 %v5994, %v1836
        %v6027 = vmul.f32 %v5995, %v1841
        %v6028 = vmul.f32 %v5996, %v1846
        %v6029 = vmul.f32 %v5997, %v1851
        %v6030 = vmul.f32 %v5998, %v1856
        %v6031 = vmul.f32 %v5999, %v1861
        %v6032 = vmul.f32 %v6000, %v1866
        %v6033 = vmul.f32 %v6001, %v1871
        %v6034 = vmul.f32 %v6002, %v1876
        %v6035 = vmul.f32 %v6003, %v1881
        %v6036 = vmul.f32 %v6004, %v1886
        %v6037 = vmul.f32 %v6005, %v1891
        %v6038 = vmul.f32 %v6006, %v1896
        %v6039 = vmul.f32 %v6007, %v1901
        %v6040 = vmul.f32 %v6008, %v1906
        %v6041 = vmul.f32 %v6009, %v1911
        %v6042 = vmul.f32 %v6010, %v1916
        %s6043 = scalar_lea.vmem %s6, 40
        %v6044 = vld [vmem:[%s6043] sm:$0xff]
        %v6046 = vsel %vm4808, %v6044, 0
        %v6049 = vsel %vm4808, %v6011, 0
        %v6052 = vsel %vm4808, %v6012, 0
        %v6055 = vsel %vm4808, %v6013, 0
        %v6058 = vsel %vm4808, %v6014, 0
        %v6061 = vsel %vm4808, %v6015, 0
        %v6064 = vsel %vm4808, %v6016, 0
        %v6067 = vsel %vm4808, %v6017, 0
        %v6070 = vsel %vm4808, %v6018, 0
        %v6073 = vsel %vm4808, %v6019, 0
        %v6076 = vsel %vm4808, %v6020, 0
        %v6079 = vsel %vm4808, %v6021, 0
        %v6082 = vsel %vm4808, %v6022, 0
        %v6085 = vsel %vm4808, %v6023, 0
        %v6088 = vsel %vm4808, %v6024, 0
        %v6091 = vsel %vm4808, %v6025, 0
        %v6094 = vsel %vm4808, %v6026, 0
        %v6097 = vsel %vm4808, %v6027, 0
        %v6100 = vsel %vm4808, %v6028, 0
        %v6103 = vsel %vm4808, %v6029, 0
        %v6106 = vsel %vm4808, %v6030, 0
        %v6109 = vsel %vm4808, %v6031, 0
        %v6112 = vsel %vm4808, %v6032, 0
        %v6115 = vsel %vm4808, %v6033, 0
        %v6118 = vsel %vm4808, %v6034, 0
        %v6121 = vsel %vm4808, %v6035, 0
        %v6124 = vsel %vm4808, %v6036, 0
        %v6127 = vsel %vm4808, %v6037, 0
        %v6130 = vsel %vm4808, %v6038, 0
        %v6133 = vsel %vm4808, %v6039, 0
        %v6136 = vsel %vm4808, %v6040, 0
        %v6139 = vsel %vm4808, %v6041, 0
        %v6142 = vsel %vm4808, %v6042, 0
        %6144 = vmatprep.subr.mxu0 0.0
        %6145 = vmatpush1.xpose.msra.mxu0 %v6094
        %6146 = vmatprep.subr.mxu0 0.0
        %6147 = vmatpush1.xpose.msra.mxu0 %v6091
        %6148 = vmatprep.subr.mxu0 0.0
        %6149 = vmatpush1.xpose.msra.mxu0 %v6088
        %6150 = vmatprep.subr.mxu0 0.0
        %6151 = vmatpush1.xpose.msra.mxu0 %v6085
        %6152 = vmatprep.subr.mxu0 0.0
        %6153 = vmatpush1.xpose.msra.mxu0 %v6082
        %6154 = vmatprep.subr.mxu0 0.0
        %6155 = vmatpush1.xpose.msra.mxu0 %v6079
        %6156 = vmatprep.subr.mxu0 0.0
        %6157 = vmatpush1.xpose.msra.mxu0 %v6076
        %6158 = vmatprep.subr.mxu0 0.0
        %6159 = vmatpush1.xpose.msra.mxu0 %v6073
        %6160 = vmatprep.subr.mxu0 0.0
        %6161 = vmatpush1.xpose.msra.mxu0 %v6070
        %6162 = vmatprep.subr.mxu0 0.0
        %6163 = vmatpush1.xpose.msra.mxu0 %v6067
        %6164 = vmatprep.subr.mxu0 0.0
        %6165 = vmatpush1.xpose.msra.mxu0 %v6064
        %6166 = vmatprep.subr.mxu0 0.0
        %6167 = vmatpush1.xpose.msra.mxu0 %v6061
        %6168 = vmatprep.subr.mxu0 0.0
        %6169 = vmatpush1.xpose.msra.mxu0 %v6058
        %6170 = vmatprep.subr.mxu0 0.0
        %6171 = vmatpush1.xpose.msra.mxu0 %v6055
        %6172 = vmatprep.subr.mxu0 0.0
        %6173 = vmatpush1.xpose.msra.mxu0 %v6052
        %6174 = vmatprep.subr.mxu0 0.0
        %6175 = vmatpush1.xpose.msra.mxu0 %v6049
        %6176 = vmatprep.subr.mxu0 0.0
        %6177 = vmatpush2.xpose.msra.mxu0 %v6142
        %6178 = vmatprep.subr.mxu0 0.0
        %6179 = vmatpush2.xpose.msra.mxu0 %v6139
        %6180 = vmatprep.subr.mxu0 0.0
        %6181 = vmatpush2.xpose.msra.mxu0 %v6136
        %6182 = vmatprep.subr.mxu0 0.0
        %6183 = vmatpush2.xpose.msra.mxu0 %v6133
        %6184 = vmatprep.subr.mxu0 0.0
        %6185 = vmatpush2.xpose.msra.mxu0 %v6130
        %6186 = vmatprep.subr.mxu0 0.0
        %6187 = vmatpush2.xpose.msra.mxu0 %v6127
        %6188 = vmatprep.subr.mxu0 0.0
        %6189 = vmatpush2.xpose.msra.mxu0 %v6124
        %6190 = vmatprep.subr.mxu0 0.0
        %6191 = vmatpush2.xpose.msra.mxu0 %v6121
        %6192 = vmatprep.subr.mxu0 0.0
        %6193 = vmatpush2.xpose.msra.mxu0 %v6118
        %6194 = vmatprep.subr.mxu0 0.0
        %6195 = vmatpush2.xpose.msra.mxu0 %v6115
        %6196 = vmatprep.subr.mxu0 0.0
        %6197 = vmatpush2.xpose.msra.mxu0 %v6112
        %6198 = vmatprep.subr.mxu0 0.0
        %6199 = vmatpush2.xpose.msra.mxu0 %v6109
        %6200 = vmatprep.subr.mxu0 0.0
        %6201 = vmatpush2.xpose.msra.mxu0 %v6106
        %6202 = vmatprep.subr.mxu0 0.0
        %6203 = vmatpush2.xpose.msra.mxu0 %v6103
        %6204 = vmatprep.subr.mxu0 0.0
        %6205 = vmatpush2.xpose.msra.mxu0 %v6100
        %6206 = vmatprep.subr.mxu0 0.0
        %6207 = vmatpush2.xpose.msra.mxu0 %v6097
        %6208 = vmatprep.mubr.f32.mxu0 0.0
        %6209 = vmatmul.mubr.f32.gmra.mxu0 %v6046
        %v6210 = vpop.f32.mrf.mxu0
        %v6211 = vadd.f32 0.0, %v6210
        %v6212 = vpop.f32.mrf.mxu0
        %v6213 = vadd.f32 0.0, %v6212
        %6214 = vdwg.mxu0
        %v6215 = vadd.f32 %v5977, %v6211
        %v6216 = vadd.f32 %v5978, %v6213
        %v6217 = vld [vmem:[#allocation3 + $0x20] sm:$0xff]
        %v6218 = vld [vmem:[#allocation3 + $0x28] sm:$0xff]
        %v6219 = vld [vmem:[#allocation3 + $0x30] sm:$0xff]
        %v6220 = vld [vmem:[#allocation3 + $0x38] sm:$0xff]
        %v6221 = vld [vmem:[#allocation3 + $0x40] sm:$0xff]
        %v6222 = vld [vmem:[#allocation3 + $0x48] sm:$0xff]
        %v6223 = vld [vmem:[#allocation3 + $0x50] sm:$0xff]
        %v6224 = vld [vmem:[#allocation3 + $0x58] sm:$0xff]
        %v6225 = vld [vmem:[#allocation3 + $0x60] sm:$0xff]
        %v6226 = vld [vmem:[#allocation3 + $0x68] sm:$0xff]
        %v6227 = vld [vmem:[#allocation3 + $0x70] sm:$0xff]
        %v6228 = vld [vmem:[#allocation3 + $0x78] sm:$0xff]
        %v6229 = vld [vmem:[#allocation3 + $0x80] sm:$0xff]
        %v6230 = vld [vmem:[#allocation3 + $0x88] sm:$0xff]
        %v6231 = vld [vmem:[#allocation3 + $0x90] sm:$0xff]
        %v6232 = vld [vmem:[#allocation3 + $0x98] sm:$0xff]
        %v6233 = vld [vmem:[#allocation3 + $0xa0] sm:$0xff]
        %v6234 = vld [vmem:[#allocation3 + $0xa8] sm:$0xff]
        %v6235 = vld [vmem:[#allocation3 + $0xb0] sm:$0xff]
        %v6236 = vld [vmem:[#allocation3 + $0xb8] sm:$0xff]
        %v6237 = vld [vmem:[#allocation3 + $0xc0] sm:$0xff]
        %v6238 = vld [vmem:[#allocation3 + $0xc8] sm:$0xff]
        %v6239 = vld [vmem:[#allocation3 + $0xd0] sm:$0xff]
        %v6240 = vld [vmem:[#allocation3 + $0xd8] sm:$0xff]
        %v6241 = vld [vmem:[#allocation3 + $0xe0] sm:$0xff]
        %v6242 = vld [vmem:[#allocation3 + $0xe8] sm:$0xff]
        %v6243 = vld [vmem:[#allocation3 + $0xf0] sm:$0xff]
        %v6244 = vld [vmem:[#allocation3 + $0xf8] sm:$0xff]
        %v6245 = vld [vmem:[#allocation3 + $0x100] sm:$0xff]
        %v6246 = vld [vmem:[#allocation3 + $0x108] sm:$0xff]
        %v6247 = vld [vmem:[#allocation3 + $0x110] sm:$0xff]
        %v6248 = vld [vmem:[#allocation3 + $0x118] sm:$0xff]
        %v6249 = vmul.f32 %v6217, %v789
        %v6250 = vmul.f32 %v6218, %v794
        %v6251 = vmul.f32 %v6219, %v799
        %v6252 = vmul.f32 %v6220, %v804
        %v6253 = vmul.f32 %v6221, %v809
        %v6254 = vmul.f32 %v6222, %v814
        %v6255 = vmul.f32 %v6223, %v819
        %v6256 = vmul.f32 %v6224, %v824
        %v6257 = vmul.f32 %v6225, %v829
        %v6258 = vmul.f32 %v6226, %v834
        %v6259 = vmul.f32 %v6227, %v839
        %v6260 = vmul.f32 %v6228, %v844
        %v6261 = vmul.f32 %v6229, %v849
        %v6262 = vmul.f32 %v6230, %v854
        %v6263 = vmul.f32 %v6231, %v859
        %v6264 = vmul.f32 %v6232, %v864
        %v6265 = vmul.f32 %v6233, %v869
        %v6266 = vmul.f32 %v6234, %v874
        %v6267 = vmul.f32 %v6235, %v879
        %v6268 = vmul.f32 %v6236, %v884
        %v6269 = vmul.f32 %v6237, %v889
        %v6270 = vmul.f32 %v6238, %v894
        %v6271 = vmul.f32 %v6239, %v899
        %v6272 = vmul.f32 %v6240, %v904
        %v6273 = vmul.f32 %v6241, %v909
        %v6274 = vmul.f32 %v6242, %v914
        %v6275 = vmul.f32 %v6243, %v919
        %v6276 = vmul.f32 %v6244, %v924
        %v6277 = vmul.f32 %v6245, %v929
        %v6278 = vmul.f32 %v6246, %v934
        %v6279 = vmul.f32 %v6247, %v939
        %v6280 = vmul.f32 %v6248, %v944
        %s6281 = scalar_lea.vmem %s6, 48
        %v6282 = vld [vmem:[%s6281] sm:$0xff]
        %v6284 = vsel %vm4808, %v6282, 0
        %v6287 = vsel %vm4808, %v6249, 0
        %v6290 = vsel %vm4808, %v6250, 0
        %v6293 = vsel %vm4808, %v6251, 0
        %v6296 = vsel %vm4808, %v6252, 0
        %v6299 = vsel %vm4808, %v6253, 0
        %v6302 = vsel %vm4808, %v6254, 0
        %v6305 = vsel %vm4808, %v6255, 0
        %v6308 = vsel %vm4808, %v6256, 0
        %v6311 = vsel %vm4808, %v6257, 0
        %v6314 = vsel %vm4808, %v6258, 0
        %v6317 = vsel %vm4808, %v6259, 0
        %v6320 = vsel %vm4808, %v6260, 0
        %v6323 = vsel %vm4808, %v6261, 0
        %v6326 = vsel %vm4808, %v6262, 0
        %v6329 = vsel %vm4808, %v6263, 0
        %v6332 = vsel %vm4808, %v6264, 0
        %v6335 = vsel %vm4808, %v6265, 0
        %v6338 = vsel %vm4808, %v6266, 0
        %v6341 = vsel %vm4808, %v6267, 0
        %v6344 = vsel %vm4808, %v6268, 0
        %v6347 = vsel %vm4808, %v6269, 0
        %v6350 = vsel %vm4808, %v6270, 0
        %v6353 = vsel %vm4808, %v6271, 0
        %v6356 = vsel %vm4808, %v6272, 0
        %v6359 = vsel %vm4808, %v6273, 0
        %v6362 = vsel %vm4808, %v6274, 0
        %v6365 = vsel %vm4808, %v6275, 0
        %v6368 = vsel %vm4808, %v6276, 0
        %v6371 = vsel %vm4808, %v6277, 0
        %v6374 = vsel %vm4808, %v6278, 0
        %v6377 = vsel %vm4808, %v6279, 0
        %v6380 = vsel %vm4808, %v6280, 0
        %6382 = vmatprep.subr.mxu0 0.0
        %6383 = vmatpush1.xpose.msra.mxu0 %v6332
        %6384 = vmatprep.subr.mxu0 0.0
        %6385 = vmatpush1.xpose.msra.mxu0 %v6329
        %6386 = vmatprep.subr.mxu0 0.0
        %6387 = vmatpush1.xpose.msra.mxu0 %v6326
        %6388 = vmatprep.subr.mxu0 0.0
        %6389 = vmatpush1.xpose.msra.mxu0 %v6323
        %6390 = vmatprep.subr.mxu0 0.0
        %6391 = vmatpush1.xpose.msra.mxu0 %v6320
        %6392 = vmatprep.subr.mxu0 0.0
        %6393 = vmatpush1.xpose.msra.mxu0 %v6317
        %6394 = vmatprep.subr.mxu0 0.0
        %6395 = vmatpush1.xpose.msra.mxu0 %v6314
        %6396 = vmatprep.subr.mxu0 0.0
        %6397 = vmatpush1.xpose.msra.mxu0 %v6311
        %6398 = vmatprep.subr.mxu0 0.0
        %6399 = vmatpush1.xpose.msra.mxu0 %v6308
        %6400 = vmatprep.subr.mxu0 0.0
        %6401 = vmatpush1.xpose.msra.mxu0 %v6305
        %6402 = vmatprep.subr.mxu0 0.0
        %6403 = vmatpush1.xpose.msra.mxu0 %v6302
        %6404 = vmatprep.subr.mxu0 0.0
        %6405 = vmatpush1.xpose.msra.mxu0 %v6299
        %6406 = vmatprep.subr.mxu0 0.0
        %6407 = vmatpush1.xpose.msra.mxu0 %v6296
        %6408 = vmatprep.subr.mxu0 0.0
        %6409 = vmatpush1.xpose.msra.mxu0 %v6293
        %6410 = vmatprep.subr.mxu0 0.0
        %6411 = vmatpush1.xpose.msra.mxu0 %v6290
        %6412 = vmatprep.subr.mxu0 0.0
        %6413 = vmatpush1.xpose.msra.mxu0 %v6287
        %6414 = vmatprep.subr.mxu0 0.0
        %6415 = vmatpush2.xpose.msra.mxu0 %v6380
        %6416 = vmatprep.subr.mxu0 0.0
        %6417 = vmatpush2.xpose.msra.mxu0 %v6377
        %6418 = vmatprep.subr.mxu0 0.0
        %6419 = vmatpush2.xpose.msra.mxu0 %v6374
        %6420 = vmatprep.subr.mxu0 0.0
        %6421 = vmatpush2.xpose.msra.mxu0 %v6371
        %6422 = vmatprep.subr.mxu0 0.0
        %6423 = vmatpush2.xpose.msra.mxu0 %v6368
        %6424 = vmatprep.subr.mxu0 0.0
        %6425 = vmatpush2.xpose.msra.mxu0 %v6365
        %6426 = vmatprep.subr.mxu0 0.0
        %6427 = vmatpush2.xpose.msra.mxu0 %v6362
        %6428 = vmatprep.subr.mxu0 0.0
        %6429 = vmatpush2.xpose.msra.mxu0 %v6359
        %6430 = vmatprep.subr.mxu0 0.0
        %6431 = vmatpush2.xpose.msra.mxu0 %v6356
        %6432 = vmatprep.subr.mxu0 0.0
        %6433 = vmatpush2.xpose.msra.mxu0 %v6353
        %6434 = vmatprep.subr.mxu0 0.0
        %6435 = vmatpush2.xpose.msra.mxu0 %v6350
        %6436 = vmatprep.subr.mxu0 0.0
        %6437 = vmatpush2.xpose.msra.mxu0 %v6347
        %6438 = vmatprep.subr.mxu0 0.0
        %6439 = vmatpush2.xpose.msra.mxu0 %v6344
        %6440 = vmatprep.subr.mxu0 0.0
        %6441 = vmatpush2.xpose.msra.mxu0 %v6341
        %6442 = vmatprep.subr.mxu0 0.0
        %6443 = vmatpush2.xpose.msra.mxu0 %v6338
        %6444 = vmatprep.subr.mxu0 0.0
        %6445 = vmatpush2.xpose.msra.mxu0 %v6335
        %6446 = vmatprep.mubr.f32.mxu0 0.0
        %6447 = vmatmul.mubr.f32.gmra.mxu0 %v6284
        %v6448 = vpop.f32.mrf.mxu0
        %v6449 = vadd.f32 0.0, %v6448
        %v6450 = vpop.f32.mrf.mxu0
        %v6451 = vadd.f32 0.0, %v6450
        %6452 = vdwg.mxu0
        %v6453 = vadd.f32 %v6215, %v6449
        %v6454 = vadd.f32 %v6216, %v6451
        %v6455 = vld [vmem:[#allocation3 + $0x21] sm:$0xff]
        %v6456 = vld [vmem:[#allocation3 + $0x29] sm:$0xff]
        %v6457 = vld [vmem:[#allocation3 + $0x31] sm:$0xff]
        %v6458 = vld [vmem:[#allocation3 + $0x39] sm:$0xff]
        %v6459 = vld [vmem:[#allocation3 + $0x41] sm:$0xff]
        %v6460 = vld [vmem:[#allocation3 + $0x49] sm:$0xff]
        %v6461 = vld [vmem:[#allocation3 + $0x51] sm:$0xff]
        %v6462 = vld [vmem:[#allocation3 + $0x59] sm:$0xff]
        %v6463 = vld [vmem:[#allocation3 + $0x61] sm:$0xff]
        %v6464 = vld [vmem:[#allocation3 + $0x69] sm:$0xff]
        %v6465 = vld [vmem:[#allocation3 + $0x71] sm:$0xff]
        %v6466 = vld [vmem:[#allocation3 + $0x79] sm:$0xff]
        %v6467 = vld [vmem:[#allocation3 + $0x81] sm:$0xff]
        %v6468 = vld [vmem:[#allocation3 + $0x89] sm:$0xff]
        %v6469 = vld [vmem:[#allocation3 + $0x91] sm:$0xff]
        %v6470 = vld [vmem:[#allocation3 + $0x99] sm:$0xff]
        %v6471 = vld [vmem:[#allocation3 + $0xa1] sm:$0xff]
        %v6472 = vld [vmem:[#allocation3 + $0xa9] sm:$0xff]
        %v6473 = vld [vmem:[#allocation3 + $0xb1] sm:$0xff]
        %v6474 = vld [vmem:[#allocation3 + $0xb9] sm:$0xff]
        %v6475 = vld [vmem:[#allocation3 + $0xc1] sm:$0xff]
        %v6476 = vld [vmem:[#allocation3 + $0xc9] sm:$0xff]
        %v6477 = vld [vmem:[#allocation3 + $0xd1] sm:$0xff]
        %v6478 = vld [vmem:[#allocation3 + $0xd9] sm:$0xff]
        %v6479 = vld [vmem:[#allocation3 + $0xe1] sm:$0xff]
        %v6480 = vld [vmem:[#allocation3 + $0xe9] sm:$0xff]
        %v6481 = vld [vmem:[#allocation3 + $0xf1] sm:$0xff]
        %v6482 = vld [vmem:[#allocation3 + $0xf9] sm:$0xff]
        %v6483 = vld [vmem:[#allocation3 + $0x101] sm:$0xff]
        %v6484 = vld [vmem:[#allocation3 + $0x109] sm:$0xff]
        %v6485 = vld [vmem:[#allocation3 + $0x111] sm:$0xff]
        %v6486 = vld [vmem:[#allocation3 + $0x119] sm:$0xff]
        %s6487 = scalar_lea.vmem %s6, 56
        %v6488 = vld [vmem:[%s6487] sm:$0xff]
        %v6490 = vsel %vm4808, %v6488, 0
        %v6493 = vsel %vm4808, %v6455, 0
        %v6496 = vsel %vm4808, %v6456, 0
        %v6499 = vsel %vm4808, %v6457, 0
        %v6502 = vsel %vm4808, %v6458, 0
        %v6505 = vsel %vm4808, %v6459, 0
        %v6508 = vsel %vm4808, %v6460, 0
        %v6511 = vsel %vm4808, %v6461, 0
        %v6514 = vsel %vm4808, %v6462, 0
        %v6517 = vsel %vm4808, %v6463, 0
        %v6520 = vsel %vm4808, %v6464, 0
        %v6523 = vsel %vm4808, %v6465, 0
        %v6526 = vsel %vm4808, %v6466, 0
        %v6529 = vsel %vm4808, %v6467, 0
        %v6532 = vsel %vm4808, %v6468, 0
        %v6535 = vsel %vm4808, %v6469, 0
        %v6538 = vsel %vm4808, %v6470, 0
        %v6541 = vsel %vm4808, %v6471, 0
        %v6544 = vsel %vm4808, %v6472, 0
        %v6547 = vsel %vm4808, %v6473, 0
        %v6550 = vsel %vm4808, %v6474, 0
        %v6553 = vsel %vm4808, %v6475, 0
        %v6556 = vsel %vm4808, %v6476, 0
        %v6559 = vsel %vm4808, %v6477, 0
        %v6562 = vsel %vm4808, %v6478, 0
        %v6565 = vsel %vm4808, %v6479, 0
        %v6568 = vsel %vm4808, %v6480, 0
        %v6571 = vsel %vm4808, %v6481, 0
        %v6574 = vsel %vm4808, %v6482, 0
        %v6577 = vsel %vm4808, %v6483, 0
        %v6580 = vsel %vm4808, %v6484, 0
        %v6583 = vsel %vm4808, %v6485, 0
        %v6586 = vsel %vm4808, %v6486, 0
        %6588 = vmatprep.subr.mxu0 0.0
        %6589 = vmatpush1.xpose.msra.mxu0 %v6538
        %6590 = vmatprep.subr.mxu0 0.0
        %6591 = vmatpush1.xpose.msra.mxu0 %v6535
        %6592 = vmatprep.subr.mxu0 0.0
        %6593 = vmatpush1.xpose.msra.mxu0 %v6532
        %6594 = vmatprep.subr.mxu0 0.0
        %6595 = vmatpush1.xpose.msra.mxu0 %v6529
        %6596 = vmatprep.subr.mxu0 0.0
        %6597 = vmatpush1.xpose.msra.mxu0 %v6526
        %6598 = vmatprep.subr.mxu0 0.0
        %6599 = vmatpush1.xpose.msra.mxu0 %v6523
        %6600 = vmatprep.subr.mxu0 0.0
        %6601 = vmatpush1.xpose.msra.mxu0 %v6520
        %6602 = vmatprep.subr.mxu0 0.0
        %6603 = vmatpush1.xpose.msra.mxu0 %v6517
        %6604 = vmatprep.subr.mxu0 0.0
        %6605 = vmatpush1.xpose.msra.mxu0 %v6514
        %6606 = vmatprep.subr.mxu0 0.0
        %6607 = vmatpush1.xpose.msra.mxu0 %v6511
        %6608 = vmatprep.subr.mxu0 0.0
        %6609 = vmatpush1.xpose.msra.mxu0 %v6508
        %6610 = vmatprep.subr.mxu0 0.0
        %6611 = vmatpush1.xpose.msra.mxu0 %v6505
        %6612 = vmatprep.subr.mxu0 0.0
        %6613 = vmatpush1.xpose.msra.mxu0 %v6502
        %6614 = vmatprep.subr.mxu0 0.0
        %6615 = vmatpush1.xpose.msra.mxu0 %v6499
        %6616 = vmatprep.subr.mxu0 0.0
        %6617 = vmatpush1.xpose.msra.mxu0 %v6496
        %6618 = vmatprep.subr.mxu0 0.0
        %6619 = vmatpush1.xpose.msra.mxu0 %v6493
        %6620 = vmatprep.subr.mxu0 0.0
        %6621 = vmatpush2.xpose.msra.mxu0 %v6586
        %6622 = vmatprep.subr.mxu0 0.0
        %6623 = vmatpush2.xpose.msra.mxu0 %v6583
        %6624 = vmatprep.subr.mxu0 0.0
        %6625 = vmatpush2.xpose.msra.mxu0 %v6580
        %6626 = vmatprep.subr.mxu0 0.0
        %6627 = vmatpush2.xpose.msra.mxu0 %v6577
        %6628 = vmatprep.subr.mxu0 0.0
        %6629 = vmatpush2.xpose.msra.mxu0 %v6574
        %6630 = vmatprep.subr.mxu0 0.0
        %6631 = vmatpush2.xpose.msra.mxu0 %v6571
        %6632 = vmatprep.subr.mxu0 0.0
        %6633 = vmatpush2.xpose.msra.mxu0 %v6568
        %6634 = vmatprep.subr.mxu0 0.0
        %6635 = vmatpush2.xpose.msra.mxu0 %v6565
        %6636 = vmatprep.subr.mxu0 0.0
        %6637 = vmatpush2.xpose.msra.mxu0 %v6562
        %6638 = vmatprep.subr.mxu0 0.0
        %6639 = vmatpush2.xpose.msra.mxu0 %v6559
        %6640 = vmatprep.subr.mxu0 0.0
        %6641 = vmatpush2.xpose.msra.mxu0 %v6556
        %6642 = vmatprep.subr.mxu0 0.0
        %6643 = vmatpush2.xpose.msra.mxu0 %v6553
        %6644 = vmatprep.subr.mxu0 0.0
        %6645 = vmatpush2.xpose.msra.mxu0 %v6550
        %6646 = vmatprep.subr.mxu0 0.0
        %6647 = vmatpush2.xpose.msra.mxu0 %v6547
        %6648 = vmatprep.subr.mxu0 0.0
        %6649 = vmatpush2.xpose.msra.mxu0 %v6544
        %6650 = vmatprep.subr.mxu0 0.0
        %6651 = vmatpush2.xpose.msra.mxu0 %v6541
        %6652 = vmatprep.mubr.f32.mxu0 0.0
        %6653 = vmatmul.mubr.f32.gmra.mxu0 %v6490
        %v6654 = vpop.f32.mrf.mxu0
        %v6655 = vadd.f32 0.0, %v6654
        %v6656 = vpop.f32.mrf.mxu0
        %v6657 = vadd.f32 0.0, %v6656
        %6658 = vdwg.mxu0
        %v6659 = vadd.f32 %v6453, %v6655
        %v6660 = vadd.f32 %v6454, %v6657
        %v6661 = vld [vmem:[#allocation3 + $0x22] sm:$0xff]
        %v6662 = vld [vmem:[#allocation3 + $0x2a] sm:$0xff]
        %v6663 = vld [vmem:[#allocation3 + $0x32] sm:$0xff]
        %v6664 = vld [vmem:[#allocation3 + $0x3a] sm:$0xff]
        %v6665 = vld [vmem:[#allocation3 + $0x42] sm:$0xff]
        %v6666 = vld [vmem:[#allocation3 + $0x4a] sm:$0xff]
        %v6667 = vld [vmem:[#allocation3 + $0x52] sm:$0xff]
        %v6668 = vld [vmem:[#allocation3 + $0x5a] sm:$0xff]
        %v6669 = vld [vmem:[#allocation3 + $0x62] sm:$0xff]
        %v6670 = vld [vmem:[#allocation3 + $0x6a] sm:$0xff]
        %v6671 = vld [vmem:[#allocation3 + $0x72] sm:$0xff]
        %v6672 = vld [vmem:[#allocation3 + $0x7a] sm:$0xff]
        %v6673 = vld [vmem:[#allocation3 + $0x82] sm:$0xff]
        %v6674 = vld [vmem:[#allocation3 + $0x8a] sm:$0xff]
        %v6675 = vld [vmem:[#allocation3 + $0x92] sm:$0xff]
        %v6676 = vld [vmem:[#allocation3 + $0x9a] sm:$0xff]
        %v6677 = vld [vmem:[#allocation3 + $0xa2] sm:$0xff]
        %v6678 = vld [vmem:[#allocation3 + $0xaa] sm:$0xff]
        %v6679 = vld [vmem:[#allocation3 + $0xb2] sm:$0xff]
        %v6680 = vld [vmem:[#allocation3 + $0xba] sm:$0xff]
        %v6681 = vld [vmem:[#allocation3 + $0xc2] sm:$0xff]
        %v6682 = vld [vmem:[#allocation3 + $0xca] sm:$0xff]
        %v6683 = vld [vmem:[#allocation3 + $0xd2] sm:$0xff]
        %v6684 = vld [vmem:[#allocation3 + $0xda] sm:$0xff]
        %v6685 = vld [vmem:[#allocation3 + $0xe2] sm:$0xff]
        %v6686 = vld [vmem:[#allocation3 + $0xea] sm:$0xff]
        %v6687 = vld [vmem:[#allocation3 + $0xf2] sm:$0xff]
        %v6688 = vld [vmem:[#allocation3 + $0xfa] sm:$0xff]
        %v6689 = vld [vmem:[#allocation3 + $0x102] sm:$0xff]
        %v6690 = vld [vmem:[#allocation3 + $0x10a] sm:$0xff]
        %v6691 = vld [vmem:[#allocation3 + $0x112] sm:$0xff]
        %v6692 = vld [vmem:[#allocation3 + $0x11a] sm:$0xff]
        %v6693 = vmul.f32 %v6661, %v1761
        %v6694 = vmul.f32 %v6662, %v1766
        %v6695 = vmul.f32 %v6663, %v1771
        %v6696 = vmul.f32 %v6664, %v1776
        %v6697 = vmul.f32 %v6665, %v1781
        %v6698 = vmul.f32 %v6666, %v1786
        %v6699 = vmul.f32 %v6667, %v1791
        %v6700 = vmul.f32 %v6668, %v1796
        %v6701 = vmul.f32 %v6669, %v1801
        %v6702 = vmul.f32 %v6670, %v1806
        %v6703 = vmul.f32 %v6671, %v1811
        %v6704 = vmul.f32 %v6672, %v1816
        %v6705 = vmul.f32 %v6673, %v1821
        %v6706 = vmul.f32 %v6674, %v1826
        %v6707 = vmul.f32 %v6675, %v1831
        %v6708 = vmul.f32 %v6676, %v1836
        %v6709 = vmul.f32 %v6677, %v1841
        %v6710 = vmul.f32 %v6678, %v1846
        %v6711 = vmul.f32 %v6679, %v1851
        %v6712 = vmul.f32 %v6680, %v1856
        %v6713 = vmul.f32 %v6681, %v1861
        %v6714 = vmul.f32 %v6682, %v1866
        %v6715 = vmul.f32 %v6683, %v1871
        %v6716 = vmul.f32 %v6684, %v1876
        %v6717 = vmul.f32 %v6685, %v1881
        %v6718 = vmul.f32 %v6686, %v1886
        %v6719 = vmul.f32 %v6687, %v1891
        %v6720 = vmul.f32 %v6688, %v1896
        %v6721 = vmul.f32 %v6689, %v1901
        %v6722 = vmul.f32 %v6690, %v1906
        %v6723 = vmul.f32 %v6691, %v1911
        %v6724 = vmul.f32 %v6692, %v1916
        %s6725 = scalar_lea.vmem %s6, 64
        %v6726 = vld [vmem:[%s6725] sm:$0xff]
        %v6728 = vsel %vm4808, %v6726, 0
        %v6731 = vsel %vm4808, %v6693, 0
        %v6734 = vsel %vm4808, %v6694, 0
        %v6737 = vsel %vm4808, %v6695, 0
        %v6740 = vsel %vm4808, %v6696, 0
        %v6743 = vsel %vm4808, %v6697, 0
        %v6746 = vsel %vm4808, %v6698, 0
        %v6749 = vsel %vm4808, %v6699, 0
        %v6752 = vsel %vm4808, %v6700, 0
        %v6755 = vsel %vm4808, %v6701, 0
        %v6758 = vsel %vm4808, %v6702, 0
        %v6761 = vsel %vm4808, %v6703, 0
        %v6764 = vsel %vm4808, %v6704, 0
        %v6767 = vsel %vm4808, %v6705, 0
        %v6770 = vsel %vm4808, %v6706, 0
        %v6773 = vsel %vm4808, %v6707, 0
        %v6776 = vsel %vm4808, %v6708, 0
        %v6779 = vsel %vm4808, %v6709, 0
        %v6782 = vsel %vm4808, %v6710, 0
        %v6785 = vsel %vm4808, %v6711, 0
        %v6788 = vsel %vm4808, %v6712, 0
        %v6791 = vsel %vm4808, %v6713, 0
        %v6794 = vsel %vm4808, %v6714, 0
        %v6797 = vsel %vm4808, %v6715, 0
        %v6800 = vsel %vm4808, %v6716, 0
        %v6803 = vsel %vm4808, %v6717, 0
        %v6806 = vsel %vm4808, %v6718, 0
        %v6809 = vsel %vm4808, %v6719, 0
        %v6812 = vsel %vm4808, %v6720, 0
        %v6815 = vsel %vm4808, %v6721, 0
        %v6818 = vsel %vm4808, %v6722, 0
        %v6821 = vsel %vm4808, %v6723, 0
        %v6824 = vsel %vm4808, %v6724, 0
        %6826 = vmatprep.subr.mxu0 0.0
        %6827 = vmatpush1.xpose.msra.mxu0 %v6776
        %6828 = vmatprep.subr.mxu0 0.0
        %6829 = vmatpush1.xpose.msra.mxu0 %v6773
        %6830 = vmatprep.subr.mxu0 0.0
        %6831 = vmatpush1.xpose.msra.mxu0 %v6770
        %6832 = vmatprep.subr.mxu0 0.0
        %6833 = vmatpush1.xpose.msra.mxu0 %v6767
        %6834 = vmatprep.subr.mxu0 0.0
        %6835 = vmatpush1.xpose.msra.mxu0 %v6764
        %6836 = vmatprep.subr.mxu0 0.0
        %6837 = vmatpush1.xpose.msra.mxu0 %v6761
        %6838 = vmatprep.subr.mxu0 0.0
        %6839 = vmatpush1.xpose.msra.mxu0 %v6758
        %6840 = vmatprep.subr.mxu0 0.0
        %6841 = vmatpush1.xpose.msra.mxu0 %v6755
        %6842 = vmatprep.subr.mxu0 0.0
        %6843 = vmatpush1.xpose.msra.mxu0 %v6752
        %6844 = vmatprep.subr.mxu0 0.0
        %6845 = vmatpush1.xpose.msra.mxu0 %v6749
        %6846 = vmatprep.subr.mxu0 0.0
        %6847 = vmatpush1.xpose.msra.mxu0 %v6746
        %6848 = vmatprep.subr.mxu0 0.0
        %6849 = vmatpush1.xpose.msra.mxu0 %v6743
        %6850 = vmatprep.subr.mxu0 0.0
        %6851 = vmatpush1.xpose.msra.mxu0 %v6740
        %6852 = vmatprep.subr.mxu0 0.0
        %6853 = vmatpush1.xpose.msra.mxu0 %v6737
        %6854 = vmatprep.subr.mxu0 0.0
        %6855 = vmatpush1.xpose.msra.mxu0 %v6734
        %6856 = vmatprep.subr.mxu0 0.0
        %6857 = vmatpush1.xpose.msra.mxu0 %v6731
        %6858 = vmatprep.subr.mxu0 0.0
        %6859 = vmatpush2.xpose.msra.mxu0 %v6824
        %6860 = vmatprep.subr.mxu0 0.0
        %6861 = vmatpush2.xpose.msra.mxu0 %v6821
        %6862 = vmatprep.subr.mxu0 0.0
        %6863 = vmatpush2.xpose.msra.mxu0 %v6818
        %6864 = vmatprep.subr.mxu0 0.0
        %6865 = vmatpush2.xpose.msra.mxu0 %v6815
        %6866 = vmatprep.subr.mxu0 0.0
        %6867 = vmatpush2.xpose.msra.mxu0 %v6812
        %6868 = vmatprep.subr.mxu0 0.0
        %6869 = vmatpush2.xpose.msra.mxu0 %v6809
        %6870 = vmatprep.subr.mxu0 0.0
        %6871 = vmatpush2.xpose.msra.mxu0 %v6806
        %6872 = vmatprep.subr.mxu0 0.0
        %6873 = vmatpush2.xpose.msra.mxu0 %v6803
        %6874 = vmatprep.subr.mxu0 0.0
        %6875 = vmatpush2.xpose.msra.mxu0 %v6800
        %6876 = vmatprep.subr.mxu0 0.0
        %6877 = vmatpush2.xpose.msra.mxu0 %v6797
        %6878 = vmatprep.subr.mxu0 0.0
        %6879 = vmatpush2.xpose.msra.mxu0 %v6794
        %6880 = vmatprep.subr.mxu0 0.0
        %6881 = vmatpush2.xpose.msra.mxu0 %v6791
        %6882 = vmatprep.subr.mxu0 0.0
        %6883 = vmatpush2.xpose.msra.mxu0 %v6788
        %6884 = vmatprep.subr.mxu0 0.0
        %6885 = vmatpush2.xpose.msra.mxu0 %v6785
        %6886 = vmatprep.subr.mxu0 0.0
        %6887 = vmatpush2.xpose.msra.mxu0 %v6782
        %6888 = vmatprep.subr.mxu0 0.0
        %6889 = vmatpush2.xpose.msra.mxu0 %v6779
        %6890 = vmatprep.mubr.f32.mxu0 0.0
        %6891 = vmatmul.mubr.f32.gmra.mxu0 %v6728
        %v6892 = vpop.f32.mrf.mxu0
        %v6893 = vadd.f32 0.0, %v6892
        %v6894 = vpop.f32.mrf.mxu0
        %v6895 = vadd.f32 0.0, %v6894
        %6896 = vdwg.mxu0
        %v6897 = vadd.f32 %v6659, %v6893
        %v6898 = vadd.f32 %v6660, %v6895
        %6899 = vst [vmem:[%s349] sm:$0xff] %v6897
        %6900 = vst [vmem:[%s349 + $0x8] sm:$0xff] %v6898
        %s6901 = scalar_lea.vmem %s349, 5
        %v6902 = vld [vmem:[%s6901] ss:$8 sm:$0x3]
        %s6903 = scalar_lea.vmem %s349, 6
        %v6904 = vld [vmem:[%s6903] ss:$8 sm:$0x3]
        %s6905 = scalar_lea.vmem %s349, 7
        %v6906 = vld [vmem:[%s6905] ss:$8 sm:$0x3]
        %v6907 = vmax.f32 %v6902, %v6904
        %v6908 = vmax.f32 %v6907, %v6906
        %v6909 = vsub.f32 %v6902, %v6908
        %v6910 = vmul.f32 %v6909, 1.442695
        %v6911 = vpow.pop %v6910
        %v6912 = vsub.f32 %v6904, %v6908
        %v6913 = vmul.f32 %v6912, 1.442695
        %v6914 = vpow.pop %v6913
        %v6915 = vadd.f32 %v6911, %v6914
        %v6916 = vsub.f32 %v6906, %v6908
        %v6917 = vmul.f32 %v6916, 1.442695
        %v6918 = vpow.pop %v6917
        %v6919 = vadd.f32 %v6915, %v6918
        %v6920 = vlog2.pop %v6919
        %v6921 = vmul.f32 %v6920, 0.6931472
        %v6922 = vadd.f32 %v6921, %v6908
        %v6923 = vsub.f32 %v6922, %v6902
        %v6924 = vlaneseq
        %vm6925 = vcmp.ge.s32.totalorder %v6924, 0
        %vm6926 = vcmp.lt.s32.totalorder %v6924, 256
        %vm6927 = vmand %vm6925, %vm6926
        %6928 = vst.msk [vmem:[%s6901] ss:$8 sm:$0x3] %vm6927, %v6923
        %6929 = vst.msk [vmem:[%s6901] ss:$8 sm:$0x0] %vm6927, %v6923
        %v6930 = vsub.f32 %v6922, %v6904
        %6931 = vst.msk [vmem:[%s6903] ss:$8 sm:$0x3] %vm6927, %v6930
        %6932 = vst.msk [vmem:[%s6903] ss:$8 sm:$0x0] %vm6927, %v6930
        %v6933 = vsub.f32 %v6922, %v6906
        %6934 = vst.msk [vmem:[%s6905] ss:$8 sm:$0x3] %vm6927, %v6933
        %6935 = vst.msk [vmem:[%s6905] ss:$8 sm:$0x0] %vm6927, %v6933
        %p6936 = scmp.lt.s32.totalorder %s21, 1
        %s6937 = scalar_select %p6936, %s21, 1
        %s6938 = smul.addr %s6937, 2
        %s6939 = smul.addr %s6938, 8
        %s6940 = scalar_lea.vmem %s8, %s6939
        // Predicated region
        $region65: #{net2_forward_nchw.1} parent=51 // pred_check
          %p6941 = pneg %p212
        $region66: #{net2_forward_nchw.1} parent=51 // pred_check_branch
          %6943 = sbr.rel (%p6941) target = $region68
        $region67: #{net2_forward_nchw.1} parent=51 // pred_region
          _
        $region68: #{net2_forward_nchw.1} parent=51 // pred_fallthru
          _
      $region52: #{net2_forward_nchw.1} parent=5 // pred_fallthru
        _
      %p6944 = scmp.le.s32.totalorder 2, %s16
      // Predicated region
      $region69: #{net2_forward_nchw.1} parent=5 // pred_check
        %p6945 = pneg %p6944
      $region70: #{net2_forward_nchw.1} parent=5 // pred_check_branch
        %6947 = sbr.rel (%p6945) target = $region72
      $region71: #{net2_forward_nchw.1} parent=5 // pred_region
        %s6948 = ssub.s32 %s16, 2
        // Predicated region
        $region73: #{net2_forward_nchw.1} parent=71 // pred_check
          %p6949 = pneg %p218
        $region74: #{net2_forward_nchw.1} parent=71 // pred_check_branch
          %6951 = sbr.rel (%p6949) target = $region76
        $region75: #{net2_forward_nchw.1} parent=71 // pred_region
          %p6952 = scmp.lt.s32.totalorder %s22, 1
          %s6953 = scalar_select %p6952, %s22, 1
          %s6954 = smul.addr %s6953, 2
          %s6955 = smul.addr %s6954, 8
          %s6956 = scalar_lea.vmem %s8, %s6955
        $region76: #{net2_forward_nchw.1} parent=71 // pred_fallthru
          _
      $region72: #{net2_forward_nchw.1} parent=5 // pred_fallthru
        _
    $region6: #{net2_forward_nchw.1} parent=1 // loop_footer
      %s20 = sadd.s32 1, %s16
    $region7: #{net2_forward_nchw.1} parent=1 // loop_footer_branch
      %15 = sbr.rel target = $region3
    $region8: #{net2_forward_nchw.1} parent=1 // loop_exit
      _
    %6957 = vsyncpa [#allocation5], 1
    %s6958 = scalar_lea.sflag [#allocation5], 1
    %6959 = vsyncpa %s6958, 1
    %6960 = vsyncpa [#allocation7], 1

</llo_original>
